<compile_context>
chip_gen: v7x
topology: tpu7x:2x2x1
jax: 0.10.0
libtpu: 0.0.40
codegen_flags: <defaults>
</compile_context>

<pallas_src>
import functools

import jax
import jax.numpy as jnp
from jax.experimental import pallas as pl
from jax.experimental.pallas import tpu as pltpu

KH = KW = 3          # conv kernel size (fixed by the module)
C_OUT = 32           # conv out channels (fixed by the module)
HIDDEN = 64          # fc hidden size (fixed by the module)
N_TAPS = KH * KW


# ---------------------------------------------------------------------------
# Fused kernel: tap build (XLU) + conv (VPU) + ReLU + fc1 (single MXU matmul)
#               + ReLU + fc2 (MXU) — all activations stay in VMEM.
# ---------------------------------------------------------------------------
def _make_fused_kernel(B, H, W, hidden):
    HW = H * W

    def kernel(wc_ref, bc_ref, m_ref, x_ref, w1_ref, b1_ref, w2_ref, b2_ref,
               o_ref, taps_ref, act_ref):
        # ---- build the 9 shifted+masked conv taps from the single input plane.
        # tap_o[:, p] = x[:, p + s_o] masked at image borders, with
        # s_o = (dh-1)*W + (dw-1).  Rolls run on the XLU (slack slot), the
        # border masks come precomputed from the wrapper ((1, HW), broadcast
        # over sublanes).  Taps are staged in VMEM, not held in vregs.
        x = x_ref[...]                                           # (B, HW) f32
        for o in range(N_TAPS):
            oh, ow = o // KW - 1, o % KW - 1
            s = oh * W + ow
            shifted = x if s == 0 else pltpu.roll(x, (-s) % HW, axis=1)
            taps_ref[o] = shifted * m_ref[o]

        # ---- conv + ReLU: 9 scalar-broadcast FMAs per channel on the VPU
        # (conv weights/bias live in SMEM).  Taps are re-read from VMEM inside
        # the loop (cheap vld) so the live set is just `acc`.  Each channel's
        # relu'd activation is written bf16 into the (B, 32*HW) scratch, which
        # never touches HBM.
        for c in range(C_OUT):
            acc = taps_ref[0] * wc_ref[c * N_TAPS]
            for o in range(1, N_TAPS):
                acc = acc + taps_ref[o] * wc_ref[c * N_TAPS + o]
            acc = jnp.maximum(acc + bc_ref[c], 0.0)              # (B, HW) f32
            act_ref[:, c * HW:(c + 1) * HW] = acc.astype(jnp.bfloat16)

        # ---- fc1: ONE K = 32*HW bf16 matmul with f32 accumulation.
        h = jnp.dot(act_ref[...], w1_ref[...],
                    preferred_element_type=jnp.float32)          # (B, hidden)
        h = jnp.maximum(h + b1_ref[...], 0.0)

        # ---- fc2: bf16 matmul; class dim padded to 128 -> lane-dense store.
        o_ref[...] = (jnp.dot(h.astype(jnp.bfloat16), w2_ref[...],
                              preferred_element_type=jnp.float32)
                      + b2_ref[...])

    return kernel


# ---------------------------------------------------------------------------
# Full forward pass: layout prep in plain JAX (XLA), hot path in one pallas_call.
# ---------------------------------------------------------------------------
@functools.partial(jax.jit, static_argnames=("batch_tile",))
def classification_cnn1_forward(x, params, *, batch_tile=128):
    """x: (N, 1, H, W) float32, PyTorch NCHW semantics with C_in = 1.

    batch_tile: images per grid step (MXU row fill).  128 is a good default;
    use 256 on v6e/v7x at large N (re-check the VMEM estimate below), and keep
    the grid >= 2 steps so v7x's two TensorCores both get work.  It is clamped
    to the (8-rounded) batch for tiny inputs.
    """
    wc, bc, w1, b1, w2, b2 = params
    N, _, H, W = x.shape
    HW = H * W
    class_num = w2.shape[0]
    CP = ((class_num + 127) // 128) * 128          # lane-dense padded class dim
    B = max(8, min(batch_tile, ((N + 7) // 8) * 8))
    N_pad = ((N + B - 1) // B) * B

    # --- input: single flattened plane, no im2col blow-up ---------------------
    xf = x[:, 0, :, :].reshape(N, HW).astype(jnp.float32)
    xf = jnp.pad(xf, ((0, N_pad - N), (0, 0)))                    # (N_pad, HW)

    # --- conv weights / bias as SMEM scalars ----------------------------------
    wc_flat = wc.reshape(C_OUT * N_TAPS).astype(jnp.float32)      # [c*9 + dh*3 + dw]
    bc_vec = bc.astype(jnp.float32)                               # (32,)

    # --- per-tap border-validity masks (position-only, tiny, VMEM-resident) ---
    rows = jnp.arange(HW, dtype=jnp.int32) // W
    cols = jnp.arange(HW, dtype=jnp.int32) % W
    masks = []
    for o in range(N_TAPS):
        oh, ow = o // KW - 1, o % KW - 1
        valid = ((rows + oh >= 0) & (rows + oh < H)
                 & (cols + ow >= 0) & (cols + ow < W))
        masks.append(valid.astype(jnp.float32))
    tap_masks = jnp.stack(masks).reshape(N_TAPS, 1, HW)           # (9, 1, HW)

    # --- fc weights: bf16 MXU operands (f32 accumulation in-kernel) -----------
    # PyTorch flatten order of the conv output is (c, p) -> column c*HW + p,
    # which matches the activation-scratch layout, so fc1 is just w1.T.
    w1_bf = w1.T.astype(jnp.bfloat16)                             # (32*HW, 64)
    b1_2d = b1.reshape(1, HIDDEN).astype(jnp.float32)
    w2_p = jnp.zeros((HIDDEN, CP), jnp.bfloat16).at[:, :class_num].set(
        w2.T.astype(jnp.bfloat16))
    b2_p = jnp.zeros((1, CP), jnp.float32).at[:, :class_num].set(
        b2.reshape(1, -1).astype(jnp.float32))

    # --- explicit VMEM budget (matters on v7x's 64 MiB / 32 MiB scoped default)
    vmem_est = (2 * B * HW * 4                      # x, double-buffered
                + 2 * B * CP * 4                    # out, double-buffered
                + N_TAPS * B * HW * 4               # tap scratch (f32)
                + B * C_OUT * HW * 2                # activation scratch (bf16)
                + 2 * (C_OUT * HW * HIDDEN + HIDDEN * CP) * 2  # fc weights (bf16)
                + (1 << 20))                        # biases/masks/temporaries
    vmem_limit = int(min(max(2 * vmem_est, 32 * 2 ** 20), 128 * 2 ** 20))

    out = pl.pallas_call(
        _make_fused_kernel(B, H, W, HIDDEN),
        out_shape=jax.ShapeDtypeStruct((N_pad, CP), jnp.float32),
        grid_spec=pltpu.PrefetchScalarGridSpec(
            num_scalar_prefetch=0,
            grid=(N_pad // B,),
            in_specs=[
                # conv weights / bias as SMEM scalars for VPU broadcast-FMAs
                pl.BlockSpec(memory_space=pltpu.MemorySpace.SMEM),    # wc (288,)
                pl.BlockSpec(memory_space=pltpu.MemorySpace.SMEM),    # bc (32,)
                # tap border masks: constant index_map -> VMEM-resident
                pl.BlockSpec((N_TAPS, 1, HW), lambda i: (0, 0, 0)),
                # batch-tiled flattened input plane
                pl.BlockSpec((B, HW), lambda i: (i, 0)),
                # fc weights/biases: constant index_map -> VMEM-resident
                pl.BlockSpec((C_OUT * HW, HIDDEN), lambda i: (0, 0)),
                pl.BlockSpec((1, HIDDEN), lambda i: (0, 0)),
                pl.BlockSpec((HIDDEN, CP), lambda i: (0, 0)),
                pl.BlockSpec((1, CP), lambda i: (0, 0)),
            ],
            out_specs=pl.BlockSpec((B, CP), lambda i: (i, 0)),
            scratch_shapes=[
                pltpu.VMEM((N_TAPS, B, HW), jnp.float32),     # conv taps
                pltpu.VMEM((B, C_OUT * HW), jnp.bfloat16),    # relu(conv) acts
            ],
        ),
        compiler_params=pltpu.CompilerParams(
            dimension_semantics=("parallel",),
            vmem_limit_bytes=vmem_limit),
    )(wc_flat, bc_vec, tap_masks, xf, w1_bf, b1_2d, w2_p, b2_p)

    return out[:N, :class_num]


# ---------------------------------------------------------------------------
# Pure-JAX reference (PyTorch semantics) for correctness checking.
# ---------------------------------------------------------------------------
def reference_forward(x, params):
    wc, bc, w1, b1, w2, b2 = params
    y = jax.lax.conv_general_dilated(
        x, wc, window_strides=(1, 1), padding="SAME",
        dimension_numbers=("NCHW", "OIHW", "NCHW"),
        precision=jax.lax.Precision.HIGHEST)
    y = jax.nn.relu(y + bc.reshape(1, C_OUT, 1, 1))
    y = y.reshape(y.shape[0], -1)
    h = jax.nn.relu(y @ w1.T + b1)
    return h @ w2.T + b2


if __name__ == "__main__":
    # Module hyper-parameters: feature (= width), k (= height), class_num
    N, k, feature, class_num = 2, 8, 16, 10
    D = C_OUT * k * feature

    key = jax.random.PRNGKey(0)
    kx, kwc, kbc, kw1, kb1, kw2, kb2 = jax.random.split(key, 7)

    x = jax.random.normal(kx, (N, 1, k, feature), dtype=jnp.float32)

    wc = jax.random.normal(kwc, (C_OUT, 1, KH, KW), dtype=jnp.float32) * 0.1
    bc = jax.random.normal(kbc, (C_OUT,), dtype=jnp.float32) * 0.1
    w1 = jax.random.normal(kw1, (HIDDEN, D), dtype=jnp.float32) * 0.02
    b1 = jax.random.normal(kb1, (HIDDEN,), dtype=jnp.float32) * 0.02
    w2 = jax.random.normal(kw2, (class_num, HIDDEN), dtype=jnp.float32) * 0.05
    b2 = jax.random.normal(kb2, (class_num,), dtype=jnp.float32) * 0.05

    params = (wc, bc, w1, b1, w2, b2)

    out = jax.block_until_ready(classification_cnn1_forward(x, params))
    ref = jax.block_until_ready(reference_forward(x, params))

    assert out.shape == (N, class_num), out.shape
    # Tolerance accounts for bf16 MXU operands (f32 accumulation) in fc1/fc2;
    # the conv itself is computed exactly in f32.
    assert jnp.allclose(out, ref, atol=2e-2, rtol=2e-2), (
        float(jnp.max(jnp.abs(out - ref))))
    print("KERNEL_OK")
</pallas_src>

<mosaic_0001>
module attributes {stable_mosaic.version = 11 : i64} {
  func.func @kernel(%arg0: i32, %arg1: memref<288xf32, #tpu.memory_space<smem>>, %arg2: memref<32xf32, #tpu.memory_space<smem>>, %arg3: memref<9x1x128xf32, #tpu.memory_space<vmem>>, %arg4: memref<8x128xf32, #tpu.memory_space<vmem>>, %arg5: memref<4096x64xbf16, #tpu.memory_space<vmem>>, %arg6: memref<1x64xf32, #tpu.memory_space<vmem>>, %arg7: memref<64x128xbf16, #tpu.memory_space<vmem>>, %arg8: memref<1x128xf32, #tpu.memory_space<vmem>>, %arg9: memref<8x128xf32, #tpu.memory_space<vmem>>, %arg10: memref<9x8x128xf32, #tpu.memory_space<vmem>>, %arg11: memref<8x4096xbf16, #tpu.memory_space<vmem>>) attributes {dimension_semantics = [#tpu.dimension_semantics<parallel>], iteration_bounds = array<i64: 1>, scalar_prefetch = 0 : i64, scratch_operands = 2 : i64, tpu.core_type = #tpu.core_type<tc>, window_params = [{transform_indices = @transform_0, window_bounds = array<i64: 288>}, {transform_indices = @transform_1, window_bounds = array<i64: 32>}, {pipeline_mode = #tpu.pipeline_mode<synchronous>, transform_indices = @transform_2, window_bounds = array<i64: 9, 1, 128>}, {transform_indices = @transform_3, window_bounds = array<i64: 8, 128>}, {pipeline_mode = #tpu.pipeline_mode<synchronous>, transform_indices = @transform_4, window_bounds = array<i64: 4096, 64>}, {pipeline_mode = #tpu.pipeline_mode<synchronous>, transform_indices = @transform_5, window_bounds = array<i64: 1, 64>}, {pipeline_mode = #tpu.pipeline_mode<synchronous>, transform_indices = @transform_6, window_bounds = array<i64: 64, 128>}, {pipeline_mode = #tpu.pipeline_mode<synchronous>, transform_indices = @transform_7, window_bounds = array<i64: 1, 128>}, {transform_indices = @transform_8, window_bounds = array<i64: 8, 128>}]} {
    %c0 = arith.constant 0 : index
    %c0_0 = arith.constant 0 : index
    %0 = vector.load %arg4[%c0, %c0_0] : memref<8x128xf32, #tpu.memory_space<vmem>>, vector<8x128xf32>
    %c17_i32 = arith.constant 17 : i32
    %1 = tpu.dynamic_rotate %0 by %c17_i32 dim 1 : vector<8x128xf32>, i32 -> vector<8x128xf32>
    %c0_1 = arith.constant 0 : index
    %c0_2 = arith.constant 0 : index
    %c0_3 = arith.constant 0 : index
    %2 = vector.load %arg3[%c0_1, %c0_2, %c0_3] : memref<9x1x128xf32, #tpu.memory_space<vmem>>, vector<1x1x128xf32>
    %3 = vector.shape_cast %2 : vector<1x1x128xf32> to vector<1x128xf32>
    %4 = vector.broadcast %3 : vector<1x128xf32> to vector<8x128xf32>
    %5 = arith.mulf %1, %4 : vector<8x128xf32>
    %c0_4 = arith.constant 0 : index
    %c0_5 = arith.constant 0 : index
    %c0_6 = arith.constant 0 : index
    %6 = vector.load %arg10[%c0_4, %c0_5, %c0_6] : memref<9x8x128xf32, #tpu.memory_space<vmem>>, vector<1x8x128xf32>
    %7 = vector.shape_cast %6 : vector<1x8x128xf32> to vector<8x128xf32>
    %8 = vector.shape_cast %5 : vector<8x128xf32> to vector<1x8x128xf32>
    tpu.vector_store %arg10[%c0_4, %c0_5, %c0_6], %8 {strides = array<i32>} : memref<9x8x128xf32, #tpu.memory_space<vmem>>, vector<1x8x128xf32>,
    %c16_i32 = arith.constant 16 : i32
    %9 = tpu.dynamic_rotate %0 by %c16_i32 dim 1 : vector<8x128xf32>, i32 -> vector<8x128xf32>
    %c1 = arith.constant 1 : index
    %c0_7 = arith.constant 0 : index
    %c0_8 = arith.constant 0 : index
    %10 = vector.load %arg3[%c1, %c0_7, %c0_8] : memref<9x1x128xf32, #tpu.memory_space<vmem>>, vector<1x1x128xf32>
    %11 = vector.shape_cast %10 : vector<1x1x128xf32> to vector<1x128xf32>
    %12 = vector.broadcast %11 : vector<1x128xf32> to vector<8x128xf32>
    %13 = arith.mulf %9, %12 : vector<8x128xf32>
    %c1_9 = arith.constant 1 : index
    %c0_10 = arith.constant 0 : index
    %c0_11 = arith.constant 0 : index
    %14 = vector.load %arg10[%c1_9, %c0_10, %c0_11] : memref<9x8x128xf32, #tpu.memory_space<vmem>>, vector<1x8x128xf32>
    %15 = vector.shape_cast %14 : vector<1x8x128xf32> to vector<8x128xf32>
    %16 = vector.shape_cast %13 : vector<8x128xf32> to vector<1x8x128xf32>
    tpu.vector_store %arg10[%c1_9, %c0_10, %c0_11], %16 {strides = array<i32>} : memref<9x8x128xf32, #tpu.memory_space<vmem>>, vector<1x8x128xf32>,
    %c15_i32 = arith.constant 15 : i32
    %17 = tpu.dynamic_rotate %0 by %c15_i32 dim 1 : vector<8x128xf32>, i32 -> vector<8x128xf32>
    %c2 = arith.constant 2 : index
    %c0_12 = arith.constant 0 : index
    %c0_13 = arith.constant 0 : index
    %18 = vector.load %arg3[%c2, %c0_12, %c0_13] : memref<9x1x128xf32, #tpu.memory_space<vmem>>, vector<1x1x128xf32>
    %19 = vector.shape_cast %18 : vector<1x1x128xf32> to vector<1x128xf32>
    %20 = vector.broadcast %19 : vector<1x128xf32> to vector<8x128xf32>
    %21 = arith.mulf %17, %20 : vector<8x128xf32>
    %c2_14 = arith.constant 2 : index
    %c0_15 = arith.constant 0 : index
    %c0_16 = arith.constant 0 : index
    %22 = vector.load %arg10[%c2_14, %c0_15, %c0_16] : memref<9x8x128xf32, #tpu.memory_space<vmem>>, vector<1x8x128xf32>
    %23 = vector.shape_cast %22 : vector<1x8x128xf32> to vector<8x128xf32>
    %24 = vector.shape_cast %21 : vector<8x128xf32> to vector<1x8x128xf32>
    tpu.vector_store %arg10[%c2_14, %c0_15, %c0_16], %24 {strides = array<i32>} : memref<9x8x128xf32, #tpu.memory_space<vmem>>, vector<1x8x128xf32>,
    %c1_i32 = arith.constant 1 : i32
    %25 = tpu.dynamic_rotate %0 by %c1_i32 dim 1 : vector<8x128xf32>, i32 -> vector<8x128xf32>
    %c3 = arith.constant 3 : index
    %c0_17 = arith.constant 0 : index
    %c0_18 = arith.constant 0 : index
    %26 = vector.load %arg3[%c3, %c0_17, %c0_18] : memref<9x1x128xf32, #tpu.memory_space<vmem>>, vector<1x1x128xf32>
    %27 = vector.shape_cast %26 : vector<1x1x128xf32> to vector<1x128xf32>
    %28 = vector.broadcast %27 : vector<1x128xf32> to vector<8x128xf32>
    %29 = arith.mulf %25, %28 : vector<8x128xf32>
    %c3_19 = arith.constant 3 : index
    %c0_20 = arith.constant 0 : index
    %c0_21 = arith.constant 0 : index
    %30 = vector.load %arg10[%c3_19, %c0_20, %c0_21] : memref<9x8x128xf32, #tpu.memory_space<vmem>>, vector<1x8x128xf32>
    %31 = vector.shape_cast %30 : vector<1x8x128xf32> to vector<8x128xf32>
    %32 = vector.shape_cast %29 : vector<8x128xf32> to vector<1x8x128xf32>
    tpu.vector_store %arg10[%c3_19, %c0_20, %c0_21], %32 {strides = array<i32>} : memref<9x8x128xf32, #tpu.memory_space<vmem>>, vector<1x8x128xf32>,
    %c4 = arith.constant 4 : index
    %c0_22 = arith.constant 0 : index
    %c0_23 = arith.constant 0 : index
    %33 = vector.load %arg3[%c4, %c0_22, %c0_23] : memref<9x1x128xf32, #tpu.memory_space<vmem>>, vector<1x1x128xf32>
    %34 = vector.shape_cast %33 : vector<1x1x128xf32> to vector<1x128xf32>
    %35 = vector.broadcast %34 : vector<1x128xf32> to vector<8x128xf32>
    %36 = arith.mulf %0, %35 : vector<8x128xf32>
    %c4_24 = arith.constant 4 : index
    %c0_25 = arith.constant 0 : index
    %c0_26 = arith.constant 0 : index
    %37 = vector.load %arg10[%c4_24, %c0_25, %c0_26] : memref<9x8x128xf32, #tpu.memory_space<vmem>>, vector<1x8x128xf32>
    %38 = vector.shape_cast %37 : vector<1x8x128xf32> to vector<8x128xf32>
    %39 = vector.shape_cast %36 : vector<8x128xf32> to vector<1x8x128xf32>
    tpu.vector_store %arg10[%c4_24, %c0_25, %c0_26], %39 {strides = array<i32>} : memref<9x8x128xf32, #tpu.memory_space<vmem>>, vector<1x8x128xf32>,
    %c127_i32 = arith.constant 127 : i32
    %40 = tpu.dynamic_rotate %0 by %c127_i32 dim 1 : vector<8x128xf32>, i32 -> vector<8x128xf32>
    %c5 = arith.constant 5 : index
    %c0_27 = arith.constant 0 : index
    %c0_28 = arith.constant 0 : index
    %41 = vector.load %arg3[%c5, %c0_27, %c0_28] : memref<9x1x128xf32, #tpu.memory_space<vmem>>, vector<1x1x128xf32>
    %42 = vector.shape_cast %41 : vector<1x1x128xf32> to vector<1x128xf32>
    %43 = vector.broadcast %42 : vector<1x128xf32> to vector<8x128xf32>
    %44 = arith.mulf %40, %43 : vector<8x128xf32>
    %c5_29 = arith.constant 5 : index
    %c0_30 = arith.constant 0 : index
    %c0_31 = arith.constant 0 : index
    %45 = vector.load %arg10[%c5_29, %c0_30, %c0_31] : memref<9x8x128xf32, #tpu.memory_space<vmem>>, vector<1x8x128xf32>
    %46 = vector.shape_cast %45 : vector<1x8x128xf32> to vector<8x128xf32>
    %47 = vector.shape_cast %44 : vector<8x128xf32> to vector<1x8x128xf32>
    tpu.vector_store %arg10[%c5_29, %c0_30, %c0_31], %47 {strides = array<i32>} : memref<9x8x128xf32, #tpu.memory_space<vmem>>, vector<1x8x128xf32>,
    %c113_i32 = arith.constant 113 : i32
    %48 = tpu.dynamic_rotate %0 by %c113_i32 dim 1 : vector<8x128xf32>, i32 -> vector<8x128xf32>
    %c6 = arith.constant 6 : index
    %c0_32 = arith.constant 0 : index
    %c0_33 = arith.constant 0 : index
    %49 = vector.load %arg3[%c6, %c0_32, %c0_33] : memref<9x1x128xf32, #tpu.memory_space<vmem>>, vector<1x1x128xf32>
    %50 = vector.shape_cast %49 : vector<1x1x128xf32> to vector<1x128xf32>
    %51 = vector.broadcast %50 : vector<1x128xf32> to vector<8x128xf32>
    %52 = arith.mulf %48, %51 : vector<8x128xf32>
    %c6_34 = arith.constant 6 : index
    %c0_35 = arith.constant 0 : index
    %c0_36 = arith.constant 0 : index
    %53 = vector.load %arg10[%c6_34, %c0_35, %c0_36] : memref<9x8x128xf32, #tpu.memory_space<vmem>>, vector<1x8x128xf32>
    %54 = vector.shape_cast %53 : vector<1x8x128xf32> to vector<8x128xf32>
    %55 = vector.shape_cast %52 : vector<8x128xf32> to vector<1x8x128xf32>
    tpu.vector_store %arg10[%c6_34, %c0_35, %c0_36], %55 {strides = array<i32>} : memref<9x8x128xf32, #tpu.memory_space<vmem>>, vector<1x8x128xf32>,
    %c112_i32 = arith.constant 112 : i32
    %56 = tpu.dynamic_rotate %0 by %c112_i32 dim 1 : vector<8x128xf32>, i32 -> vector<8x128xf32>
    %c7 = arith.constant 7 : index
    %c0_37 = arith.constant 0 : index
    %c0_38 = arith.constant 0 : index
    %57 = vector.load %arg3[%c7, %c0_37, %c0_38] : memref<9x1x128xf32, #tpu.memory_space<vmem>>, vector<1x1x128xf32>
    %58 = vector.shape_cast %57 : vector<1x1x128xf32> to vector<1x128xf32>
    %59 = vector.broadcast %58 : vector<1x128xf32> to vector<8x128xf32>
    %60 = arith.mulf %56, %59 : vector<8x128xf32>
    %c7_39 = arith.constant 7 : index
    %c0_40 = arith.constant 0 : index
    %c0_41 = arith.constant 0 : index
    %61 = vector.load %arg10[%c7_39, %c0_40, %c0_41] : memref<9x8x128xf32, #tpu.memory_space<vmem>>, vector<1x8x128xf32>
    %62 = vector.shape_cast %61 : vector<1x8x128xf32> to vector<8x128xf32>
    %63 = vector.shape_cast %60 : vector<8x128xf32> to vector<1x8x128xf32>
    tpu.vector_store %arg10[%c7_39, %c0_40, %c0_41], %63 {strides = array<i32>} : memref<9x8x128xf32, #tpu.memory_space<vmem>>, vector<1x8x128xf32>,
    %c111_i32 = arith.constant 111 : i32
    %64 = tpu.dynamic_rotate %0 by %c111_i32 dim 1 : vector<8x128xf32>, i32 -> vector<8x128xf32>
    %c8 = arith.constant 8 : index
    %c0_42 = arith.constant 0 : index
    %c0_43 = arith.constant 0 : index
    %65 = vector.load %arg3[%c8, %c0_42, %c0_43] : memref<9x1x128xf32, #tpu.memory_space<vmem>>, vector<1x1x128xf32>
    %66 = vector.shape_cast %65 : vector<1x1x128xf32> to vector<1x128xf32>
    %67 = vector.broadcast %66 : vector<1x128xf32> to vector<8x128xf32>
    %68 = arith.mulf %64, %67 : vector<8x128xf32>
    %c8_44 = arith.constant 8 : index
    %c0_45 = arith.constant 0 : index
    %c0_46 = arith.constant 0 : index
    %69 = vector.load %arg10[%c8_44, %c0_45, %c0_46] : memref<9x8x128xf32, #tpu.memory_space<vmem>>, vector<1x8x128xf32>
    %70 = vector.shape_cast %69 : vector<1x8x128xf32> to vector<8x128xf32>
    %71 = vector.shape_cast %68 : vector<8x128xf32> to vector<1x8x128xf32>
    tpu.vector_store %arg10[%c8_44, %c0_45, %c0_46], %71 {strides = array<i32>} : memref<9x8x128xf32, #tpu.memory_space<vmem>>, vector<1x8x128xf32>,
    %c0_47 = arith.constant 0 : index
    %c0_48 = arith.constant 0 : index
    %c0_49 = arith.constant 0 : index
    %72 = vector.load %arg10[%c0_47, %c0_48, %c0_49] : memref<9x8x128xf32, #tpu.memory_space<vmem>>, vector<1x8x128xf32>
    %73 = vector.shape_cast %72 : vector<1x8x128xf32> to vector<8x128xf32>
    %c0_50 = arith.constant 0 : index
    %74 = memref.load %arg1[%c0_50] : memref<288xf32, #tpu.memory_space<smem>>
    %75 = vector.broadcast %74 : f32 to vector<8x128xf32>
    %76 = arith.mulf %73, %75 : vector<8x128xf32>
    %c1_51 = arith.constant 1 : index
    %c0_52 = arith.constant 0 : index
    %c0_53 = arith.constant 0 : index
    %77 = vector.load %arg10[%c1_51, %c0_52, %c0_53] : memref<9x8x128xf32, #tpu.memory_space<vmem>>, vector<1x8x128xf32>
    %78 = vector.shape_cast %77 : vector<1x8x128xf32> to vector<8x128xf32>
    %c1_54 = arith.constant 1 : index
    %79 = memref.load %arg1[%c1_54] : memref<288xf32, #tpu.memory_space<smem>>
    %80 = vector.broadcast %79 : f32 to vector<8x128xf32>
    %81 = arith.mulf %78, %80 : vector<8x128xf32>
    %82 = arith.addf %76, %81 : vector<8x128xf32>
    %c2_55 = arith.constant 2 : index
    %c0_56 = arith.constant 0 : index
    %c0_57 = arith.constant 0 : index
    %83 = vector.load %arg10[%c2_55, %c0_56, %c0_57] : memref<9x8x128xf32, #tpu.memory_space<vmem>>, vector<1x8x128xf32>
    %84 = vector.shape_cast %83 : vector<1x8x128xf32> to vector<8x128xf32>
    %c2_58 = arith.constant 2 : index
    %85 = memref.load %arg1[%c2_58] : memref<288xf32, #tpu.memory_space<smem>>
    %86 = vector.broadcast %85 : f32 to vector<8x128xf32>
    %87 = arith.mulf %84, %86 : vector<8x128xf32>
    %88 = arith.addf %82, %87 : vector<8x128xf32>
    %c3_59 = arith.constant 3 : index
    %c0_60 = arith.constant 0 : index
    %c0_61 = arith.constant 0 : index
    %89 = vector.load %arg10[%c3_59, %c0_60, %c0_61] : memref<9x8x128xf32, #tpu.memory_space<vmem>>, vector<1x8x128xf32>
    %90 = vector.shape_cast %89 : vector<1x8x128xf32> to vector<8x128xf32>
    %c3_62 = arith.constant 3 : index
    %91 = memref.load %arg1[%c3_62] : memref<288xf32, #tpu.memory_space<smem>>
    %92 = vector.broadcast %91 : f32 to vector<8x128xf32>
    %93 = arith.mulf %90, %92 : vector<8x128xf32>
    %94 = arith.addf %88, %93 : vector<8x128xf32>
    %c4_63 = arith.constant 4 : index
    %c0_64 = arith.constant 0 : index
    %c0_65 = arith.constant 0 : index
    %95 = vector.load %arg10[%c4_63, %c0_64, %c0_65] : memref<9x8x128xf32, #tpu.memory_space<vmem>>, vector<1x8x128xf32>
    %96 = vector.shape_cast %95 : vector<1x8x128xf32> to vector<8x128xf32>
    %c4_66 = arith.constant 4 : index
    %97 = memref.load %arg1[%c4_66] : memref<288xf32, #tpu.memory_space<smem>>
    %98 = vector.broadcast %97 : f32 to vector<8x128xf32>
    %99 = arith.mulf %96, %98 : vector<8x128xf32>
    %100 = arith.addf %94, %99 : vector<8x128xf32>
    %c5_67 = arith.constant 5 : index
    %c0_68 = arith.constant 0 : index
    %c0_69 = arith.constant 0 : index
    %101 = vector.load %arg10[%c5_67, %c0_68, %c0_69] : memref<9x8x128xf32, #tpu.memory_space<vmem>>, vector<1x8x128xf32>
    %102 = vector.shape_cast %101 : vector<1x8x128xf32> to vector<8x128xf32>
    %c5_70 = arith.constant 5 : index
    %103 = memref.load %arg1[%c5_70] : memref<288xf32, #tpu.memory_space<smem>>
    %104 = vector.broadcast %103 : f32 to vector<8x128xf32>
    %105 = arith.mulf %102, %104 : vector<8x128xf32>
    %106 = arith.addf %100, %105 : vector<8x128xf32>
    %c6_71 = arith.constant 6 : index
    %c0_72 = arith.constant 0 : index
    %c0_73 = arith.constant 0 : index
    %107 = vector.load %arg10[%c6_71, %c0_72, %c0_73] : memref<9x8x128xf32, #tpu.memory_space<vmem>>, vector<1x8x128xf32>
    %108 = vector.shape_cast %107 : vector<1x8x128xf32> to vector<8x128xf32>
    %c6_74 = arith.constant 6 : index
    %109 = memref.load %arg1[%c6_74] : memref<288xf32, #tpu.memory_space<smem>>
    %110 = vector.broadcast %109 : f32 to vector<8x128xf32>
    %111 = arith.mulf %108, %110 : vector<8x128xf32>
    %112 = arith.addf %106, %111 : vector<8x128xf32>
    %c7_75 = arith.constant 7 : index
    %c0_76 = arith.constant 0 : index
    %c0_77 = arith.constant 0 : index
    %113 = vector.load %arg10[%c7_75, %c0_76, %c0_77] : memref<9x8x128xf32, #tpu.memory_space<vmem>>, vector<1x8x128xf32>
    %114 = vector.shape_cast %113 : vector<1x8x128xf32> to vector<8x128xf32>
    %c7_78 = arith.constant 7 : index
    %115 = memref.load %arg1[%c7_78] : memref<288xf32, #tpu.memory_space<smem>>
    %116 = vector.broadcast %115 : f32 to vector<8x128xf32>
    %117 = arith.mulf %114, %116 : vector<8x128xf32>
    %118 = arith.addf %112, %117 : vector<8x128xf32>
    %c8_79 = arith.constant 8 : index
    %c0_80 = arith.constant 0 : index
    %c0_81 = arith.constant 0 : index
    %119 = vector.load %arg10[%c8_79, %c0_80, %c0_81] : memref<9x8x128xf32, #tpu.memory_space<vmem>>, vector<1x8x128xf32>
    %120 = vector.shape_cast %119 : vector<1x8x128xf32> to vector<8x128xf32>
    %c8_82 = arith.constant 8 : index
    %121 = memref.load %arg1[%c8_82] : memref<288xf32, #tpu.memory_space<smem>>
    %122 = vector.broadcast %121 : f32 to vector<8x128xf32>
    %123 = arith.mulf %120, %122 : vector<8x128xf32>
    %124 = arith.addf %118, %123 : vector<8x128xf32>
    %c0_83 = arith.constant 0 : index
    %125 = memref.load %arg2[%c0_83] : memref<32xf32, #tpu.memory_space<smem>>
    %126 = vector.broadcast %125 : f32 to vector<8x128xf32>
    %127 = arith.addf %124, %126 : vector<8x128xf32>
    %cst = arith.constant 0.000000e+00 : f32
    %128 = vector.broadcast %cst : f32 to vector<8x128xf32>
    %129 = arith.maximumf %127, %128 : vector<8x128xf32>
    %130 = arith.truncf %129 : vector<8x128xf32> to vector<8x128xbf16>
    %c0_84 = arith.constant 0 : index
    %c0_85 = arith.constant 0 : index
    %131 = vector.load %arg11[%c0_84, %c0_85] : memref<8x4096xbf16, #tpu.memory_space<vmem>>, vector<8x128xbf16>
    tpu.vector_store %arg11[%c0_84, %c0_85], %130 {strides = array<i32>} : memref<8x4096xbf16, #tpu.memory_space<vmem>>, vector<8x128xbf16>,
    %c0_86 = arith.constant 0 : index
    %c0_87 = arith.constant 0 : index
    %c0_88 = arith.constant 0 : index
    %132 = vector.load %arg10[%c0_86, %c0_87, %c0_88] : memref<9x8x128xf32, #tpu.memory_space<vmem>>, vector<1x8x128xf32>
    %133 = vector.shape_cast %132 : vector<1x8x128xf32> to vector<8x128xf32>
    %c9 = arith.constant 9 : index
    %134 = memref.load %arg1[%c9] : memref<288xf32, #tpu.memory_space<smem>>
    %135 = vector.broadcast %134 : f32 to vector<8x128xf32>
    %136 = arith.mulf %133, %135 : vector<8x128xf32>
    %c1_89 = arith.constant 1 : index
    %c0_90 = arith.constant 0 : index
    %c0_91 = arith.constant 0 : index
    %137 = vector.load %arg10[%c1_89, %c0_90, %c0_91] : memref<9x8x128xf32, #tpu.memory_space<vmem>>, vector<1x8x128xf32>
    %138 = vector.shape_cast %137 : vector<1x8x128xf32> to vector<8x128xf32>
    %c10 = arith.constant 10 : index
    %139 = memref.load %arg1[%c10] : memref<288xf32, #tpu.memory_space<smem>>
    %140 = vector.broadcast %139 : f32 to vector<8x128xf32>
    %141 = arith.mulf %138, %140 : vector<8x128xf32>
    %142 = arith.addf %136, %141 : vector<8x128xf32>
    %c2_92 = arith.constant 2 : index
    %c0_93 = arith.constant 0 : index
    %c0_94 = arith.constant 0 : index
    %143 = vector.load %arg10[%c2_92, %c0_93, %c0_94] : memref<9x8x128xf32, #tpu.memory_space<vmem>>, vector<1x8x128xf32>
    %144 = vector.shape_cast %143 : vector<1x8x128xf32> to vector<8x128xf32>
    %c11 = arith.constant 11 : index
    %145 = memref.load %arg1[%c11] : memref<288xf32, #tpu.memory_space<smem>>
    %146 = vector.broadcast %145 : f32 to vector<8x128xf32>
    %147 = arith.mulf %144, %146 : vector<8x128xf32>
    %148 = arith.addf %142, %147 : vector<8x128xf32>
    %c3_95 = arith.constant 3 : index
    %c0_96 = arith.constant 0 : index
    %c0_97 = arith.constant 0 : index
    %149 = vector.load %arg10[%c3_95, %c0_96, %c0_97] : memref<9x8x128xf32, #tpu.memory_space<vmem>>, vector<1x8x128xf32>
    %150 = vector.shape_cast %149 : vector<1x8x128xf32> to vector<8x128xf32>
    %c12 = arith.constant 12 : index
    %151 = memref.load %arg1[%c12] : memref<288xf32, #tpu.memory_space<smem>>
    %152 = vector.broadcast %151 : f32 to vector<8x128xf32>
    %153 = arith.mulf %150, %152 : vector<8x128xf32>
    %154 = arith.addf %148, %153 : vector<8x128xf32>
    %c4_98 = arith.constant 4 : index
    %c0_99 = arith.constant 0 : index
    %c0_100 = arith.constant 0 : index
    %155 = vector.load %arg10[%c4_98, %c0_99, %c0_100] : memref<9x8x128xf32, #tpu.memory_space<vmem>>, vector<1x8x128xf32>
    %156 = vector.shape_cast %155 : vector<1x8x128xf32> to vector<8x128xf32>
    %c13 = arith.constant 13 : index
    %157 = memref.load %arg1[%c13] : memref<288xf32, #tpu.memory_space<smem>>
    %158 = vector.broadcast %157 : f32 to vector<8x128xf32>
    %159 = arith.mulf %156, %158 : vector<8x128xf32>
    %160 = arith.addf %154, %159 : vector<8x128xf32>
    %c5_101 = arith.constant 5 : index
    %c0_102 = arith.constant 0 : index
    %c0_103 = arith.constant 0 : index
    %161 = vector.load %arg10[%c5_101, %c0_102, %c0_103] : memref<9x8x128xf32, #tpu.memory_space<vmem>>, vector<1x8x128xf32>
    %162 = vector.shape_cast %161 : vector<1x8x128xf32> to vector<8x128xf32>
    %c14 = arith.constant 14 : index
    %163 = memref.load %arg1[%c14] : memref<288xf32, #tpu.memory_space<smem>>
    %164 = vector.broadcast %163 : f32 to vector<8x128xf32>
    %165 = arith.mulf %162, %164 : vector<8x128xf32>
    %166 = arith.addf %160, %165 : vector<8x128xf32>
    %c6_104 = arith.constant 6 : index
    %c0_105 = arith.constant 0 : index
    %c0_106 = arith.constant 0 : index
    %167 = vector.load %arg10[%c6_104, %c0_105, %c0_106] : memref<9x8x128xf32, #tpu.memory_space<vmem>>, vector<1x8x128xf32>
    %168 = vector.shape_cast %167 : vector<1x8x128xf32> to vector<8x128xf32>
    %c15 = arith.constant 15 : index
    %169 = memref.load %arg1[%c15] : memref<288xf32, #tpu.memory_space<smem>>
    %170 = vector.broadcast %169 : f32 to vector<8x128xf32>
    %171 = arith.mulf %168, %170 : vector<8x128xf32>
    %172 = arith.addf %166, %171 : vector<8x128xf32>
    %c7_107 = arith.constant 7 : index
    %c0_108 = arith.constant 0 : index
    %c0_109 = arith.constant 0 : index
    %173 = vector.load %arg10[%c7_107, %c0_108, %c0_109] : memref<9x8x128xf32, #tpu.memory_space<vmem>>, vector<1x8x128xf32>
    %174 = vector.shape_cast %173 : vector<1x8x128xf32> to vector<8x128xf32>
    %c16 = arith.constant 16 : index
    %175 = memref.load %arg1[%c16] : memref<288xf32, #tpu.memory_space<smem>>
    %176 = vector.broadcast %175 : f32 to vector<8x128xf32>
    %177 = arith.mulf %174, %176 : vector<8x128xf32>
    %178 = arith.addf %172, %177 : vector<8x128xf32>
    %c8_110 = arith.constant 8 : index
    %c0_111 = arith.constant 0 : index
    %c0_112 = arith.constant 0 : index
    %179 = vector.load %arg10[%c8_110, %c0_111, %c0_112] : memref<9x8x128xf32, #tpu.memory_space<vmem>>, vector<1x8x128xf32>
    %180 = vector.shape_cast %179 : vector<1x8x128xf32> to vector<8x128xf32>
    %c17 = arith.constant 17 : index
    %181 = memref.load %arg1[%c17] : memref<288xf32, #tpu.memory_space<smem>>
    %182 = vector.broadcast %181 : f32 to vector<8x128xf32>
    %183 = arith.mulf %180, %182 : vector<8x128xf32>
    %184 = arith.addf %178, %183 : vector<8x128xf32>
    %c1_113 = arith.constant 1 : index
    %185 = memref.load %arg2[%c1_113] : memref<32xf32, #tpu.memory_space<smem>>
    %186 = vector.broadcast %185 : f32 to vector<8x128xf32>
    %187 = arith.addf %184, %186 : vector<8x128xf32>
    %cst_114 = arith.constant 0.000000e+00 : f32
    %188 = vector.broadcast %cst_114 : f32 to vector<8x128xf32>
    %189 = arith.maximumf %187, %188 : vector<8x128xf32>
    %190 = arith.truncf %189 : vector<8x128xf32> to vector<8x128xbf16>
    %c0_115 = arith.constant 0 : index
    %c128 = arith.constant 128 : index
    %191 = vector.load %arg11[%c0_115, %c128] : memref<8x4096xbf16, #tpu.memory_space<vmem>>, vector<8x128xbf16>
    tpu.vector_store %arg11[%c0_115, %c128], %190 {strides = array<i32>} : memref<8x4096xbf16, #tpu.memory_space<vmem>>, vector<8x128xbf16>,
    %c0_116 = arith.constant 0 : index
    %c0_117 = arith.constant 0 : index
    %c0_118 = arith.constant 0 : index
    %192 = vector.load %arg10[%c0_116, %c0_117, %c0_118] : memref<9x8x128xf32, #tpu.memory_space<vmem>>, vector<1x8x128xf32>
    %193 = vector.shape_cast %192 : vector<1x8x128xf32> to vector<8x128xf32>
    %c18 = arith.constant 18 : index
    %194 = memref.load %arg1[%c18] : memref<288xf32, #tpu.memory_space<smem>>
    %195 = vector.broadcast %194 : f32 to vector<8x128xf32>
    %196 = arith.mulf %193, %195 : vector<8x128xf32>
    %c1_119 = arith.constant 1 : index
    %c0_120 = arith.constant 0 : index
    %c0_121 = arith.constant 0 : index
    %197 = vector.load %arg10[%c1_119, %c0_120, %c0_121] : memref<9x8x128xf32, #tpu.memory_space<vmem>>, vector<1x8x128xf32>
    %198 = vector.shape_cast %197 : vector<1x8x128xf32> to vector<8x128xf32>
    %c19 = arith.constant 19 : index
    %199 = memref.load %arg1[%c19] : memref<288xf32, #tpu.memory_space<smem>>
    %200 = vector.broadcast %199 : f32 to vector<8x128xf32>
    %201 = arith.mulf %198, %200 : vector<8x128xf32>
    %202 = arith.addf %196, %201 : vector<8x128xf32>
    %c2_122 = arith.constant 2 : index
    %c0_123 = arith.constant 0 : index
    %c0_124 = arith.constant 0 : index
    %203 = vector.load %arg10[%c2_122, %c0_123, %c0_124] : memref<9x8x128xf32, #tpu.memory_space<vmem>>, vector<1x8x128xf32>
    %204 = vector.shape_cast %203 : vector<1x8x128xf32> to vector<8x128xf32>
    %c20 = arith.constant 20 : index
    %205 = memref.load %arg1[%c20] : memref<288xf32, #tpu.memory_space<smem>>
    %206 = vector.broadcast %205 : f32 to vector<8x128xf32>
    %207 = arith.mulf %204, %206 : vector<8x128xf32>
    %208 = arith.addf %202, %207 : vector<8x128xf32>
    %c3_125 = arith.constant 3 : index
    %c0_126 = arith.constant 0 : index
    %c0_127 = arith.constant 0 : index
    %209 = vector.load %arg10[%c3_125, %c0_126, %c0_127] : memref<9x8x128xf32, #tpu.memory_space<vmem>>, vector<1x8x128xf32>
    %210 = vector.shape_cast %209 : vector<1x8x128xf32> to vector<8x128xf32>
    %c21 = arith.constant 21 : index
    %211 = memref.load %arg1[%c21] : memref<288xf32, #tpu.memory_space<smem>>
    %212 = vector.broadcast %211 : f32 to vector<8x128xf32>
    %213 = arith.mulf %210, %212 : vector<8x128xf32>
    %214 = arith.addf %208, %213 : vector<8x128xf32>
    %c4_128 = arith.constant 4 : index
    %c0_129 = arith.constant 0 : index
    %c0_130 = arith.constant 0 : index
    %215 = vector.load %arg10[%c4_128, %c0_129, %c0_130] : memref<9x8x128xf32, #tpu.memory_space<vmem>>, vector<1x8x128xf32>
    %216 = vector.shape_cast %215 : vector<1x8x128xf32> to vector<8x128xf32>
    %c22 = arith.constant 22 : index
    %217 = memref.load %arg1[%c22] : memref<288xf32, #tpu.memory_space<smem>>
    %218 = vector.broadcast %217 : f32 to vector<8x128xf32>
    %219 = arith.mulf %216, %218 : vector<8x128xf32>
    %220 = arith.addf %214, %219 : vector<8x128xf32>
    %c5_131 = arith.constant 5 : index
    %c0_132 = arith.constant 0 : index
    %c0_133 = arith.constant 0 : index
    %221 = vector.load %arg10[%c5_131, %c0_132, %c0_133] : memref<9x8x128xf32, #tpu.memory_space<vmem>>, vector<1x8x128xf32>
    %222 = vector.shape_cast %221 : vector<1x8x128xf32> to vector<8x128xf32>
    %c23 = arith.constant 23 : index
    %223 = memref.load %arg1[%c23] : memref<288xf32, #tpu.memory_space<smem>>
    %224 = vector.broadcast %223 : f32 to vector<8x128xf32>
    %225 = arith.mulf %222, %224 : vector<8x128xf32>
    %226 = arith.addf %220, %225 : vector<8x128xf32>
    %c6_134 = arith.constant 6 : index
    %c0_135 = arith.constant 0 : index
    %c0_136 = arith.constant 0 : index
    %227 = vector.load %arg10[%c6_134, %c0_135, %c0_136] : memref<9x8x128xf32, #tpu.memory_space<vmem>>, vector<1x8x128xf32>
    %228 = vector.shape_cast %227 : vector<1x8x128xf32> to vector<8x128xf32>
    %c24 = arith.constant 24 : index
    %229 = memref.load %arg1[%c24] : memref<288xf32, #tpu.memory_space<smem>>
    %230 = vector.broadcast %229 : f32 to vector<8x128xf32>
    %231 = arith.mulf %228, %230 : vector<8x128xf32>
    %232 = arith.addf %226, %231 : vector<8x128xf32>
    %c7_137 = arith.constant 7 : index
    %c0_138 = arith.constant 0 : index
    %c0_139 = arith.constant 0 : index
    %233 = vector.load %arg10[%c7_137, %c0_138, %c0_139] : memref<9x8x128xf32, #tpu.memory_space<vmem>>, vector<1x8x128xf32>
    %234 = vector.shape_cast %233 : vector<1x8x128xf32> to vector<8x128xf32>
    %c25 = arith.constant 25 : index
    %235 = memref.load %arg1[%c25] : memref<288xf32, #tpu.memory_space<smem>>
    %236 = vector.broadcast %235 : f32 to vector<8x128xf32>
    %237 = arith.mulf %234, %236 : vector<8x128xf32>
    %238 = arith.addf %232, %237 : vector<8x128xf32>
    %c8_140 = arith.constant 8 : index
    %c0_141 = arith.constant 0 : index
    %c0_142 = arith.constant 0 : index
    %239 = vector.load %arg10[%c8_140, %c0_141, %c0_142] : memref<9x8x128xf32, #tpu.memory_space<vmem>>, vector<1x8x128xf32>
    %240 = vector.shape_cast %239 : vector<1x8x128xf32> to vector<8x128xf32>
    %c26 = arith.constant 26 : index
    %241 = memref.load %arg1[%c26] : memref<288xf32, #tpu.memory_space<smem>>
    %242 = vector.broadcast %241 : f32 to vector<8x128xf32>
    %243 = arith.mulf %240, %242 : vector<8x128xf32>
    %244 = arith.addf %238, %243 : vector<8x128xf32>
    %c2_143 = arith.constant 2 : index
    %245 = memref.load %arg2[%c2_143] : memref<32xf32, #tpu.memory_space<smem>>
    %246 = vector.broadcast %245 : f32 to vector<8x128xf32>
    %247 = arith.addf %244, %246 : vector<8x128xf32>
    %cst_144 = arith.constant 0.000000e+00 : f32
    %248 = vector.broadcast %cst_144 : f32 to vector<8x128xf32>
    %249 = arith.maximumf %247, %248 : vector<8x128xf32>
    %250 = arith.truncf %249 : vector<8x128xf32> to vector<8x128xbf16>
    %c0_145 = arith.constant 0 : index
    %c256 = arith.constant 256 : index
    %251 = vector.load %arg11[%c0_145, %c256] : memref<8x4096xbf16, #tpu.memory_space<vmem>>, vector<8x128xbf16>
    tpu.vector_store %arg11[%c0_145, %c256], %250 {strides = array<i32>} : memref<8x4096xbf16, #tpu.memory_space<vmem>>, vector<8x128xbf16>,
    %c0_146 = arith.constant 0 : index
    %c0_147 = arith.constant 0 : index
    %c0_148 = arith.constant 0 : index
    %252 = vector.load %arg10[%c0_146, %c0_147, %c0_148] : memref<9x8x128xf32, #tpu.memory_space<vmem>>, vector<1x8x128xf32>
    %253 = vector.shape_cast %252 : vector<1x8x128xf32> to vector<8x128xf32>
    %c27 = arith.constant 27 : index
    %254 = memref.load %arg1[%c27] : memref<288xf32, #tpu.memory_space<smem>>
    %255 = vector.broadcast %254 : f32 to vector<8x128xf32>
    %256 = arith.mulf %253, %255 : vector<8x128xf32>
    %c1_149 = arith.constant 1 : index
    %c0_150 = arith.constant 0 : index
    %c0_151 = arith.constant 0 : index
    %257 = vector.load %arg10[%c1_149, %c0_150, %c0_151] : memref<9x8x128xf32, #tpu.memory_space<vmem>>, vector<1x8x128xf32>
    %258 = vector.shape_cast %257 : vector<1x8x128xf32> to vector<8x128xf32>
    %c28 = arith.constant 28 : index
    %259 = memref.load %arg1[%c28] : memref<288xf32, #tpu.memory_space<smem>>
    %260 = vector.broadcast %259 : f32 to vector<8x128xf32>
    %261 = arith.mulf %258, %260 : vector<8x128xf32>
    %262 = arith.addf %256, %261 : vector<8x128xf32>
    %c2_152 = arith.constant 2 : index
    %c0_153 = arith.constant 0 : index
    %c0_154 = arith.constant 0 : index
    %263 = vector.load %arg10[%c2_152, %c0_153, %c0_154] : memref<9x8x128xf32, #tpu.memory_space<vmem>>, vector<1x8x128xf32>
    %264 = vector.shape_cast %263 : vector<1x8x128xf32> to vector<8x128xf32>
    %c29 = arith.constant 29 : index
    %265 = memref.load %arg1[%c29] : memref<288xf32, #tpu.memory_space<smem>>
    %266 = vector.broadcast %265 : f32 to vector<8x128xf32>
    %267 = arith.mulf %264, %266 : vector<8x128xf32>
    %268 = arith.addf %262, %267 : vector<8x128xf32>
    %c3_155 = arith.constant 3 : index
    %c0_156 = arith.constant 0 : index
    %c0_157 = arith.constant 0 : index
    %269 = vector.load %arg10[%c3_155, %c0_156, %c0_157] : memref<9x8x128xf32, #tpu.memory_space<vmem>>, vector<1x8x128xf32>
    %270 = vector.shape_cast %269 : vector<1x8x128xf32> to vector<8x128xf32>
    %c30 = arith.constant 30 : index
    %271 = memref.load %arg1[%c30] : memref<288xf32, #tpu.memory_space<smem>>
    %272 = vector.broadcast %271 : f32 to vector<8x128xf32>
    %273 = arith.mulf %270, %272 : vector<8x128xf32>
    %274 = arith.addf %268, %273 : vector<8x128xf32>
    %c4_158 = arith.constant 4 : index
    %c0_159 = arith.constant 0 : index
    %c0_160 = arith.constant 0 : index
    %275 = vector.load %arg10[%c4_158, %c0_159, %c0_160] : memref<9x8x128xf32, #tpu.memory_space<vmem>>, vector<1x8x128xf32>
    %276 = vector.shape_cast %275 : vector<1x8x128xf32> to vector<8x128xf32>
    %c31 = arith.constant 31 : index
    %277 = memref.load %arg1[%c31] : memref<288xf32, #tpu.memory_space<smem>>
    %278 = vector.broadcast %277 : f32 to vector<8x128xf32>
    %279 = arith.mulf %276, %278 : vector<8x128xf32>
    %280 = arith.addf %274, %279 : vector<8x128xf32>
    %c5_161 = arith.constant 5 : index
    %c0_162 = arith.constant 0 : index
    %c0_163 = arith.constant 0 : index
    %281 = vector.load %arg10[%c5_161, %c0_162, %c0_163] : memref<9x8x128xf32, #tpu.memory_space<vmem>>, vector<1x8x128xf32>
    %282 = vector.shape_cast %281 : vector<1x8x128xf32> to vector<8x128xf32>
    %c32 = arith.constant 32 : index
    %283 = memref.load %arg1[%c32] : memref<288xf32, #tpu.memory_space<smem>>
    %284 = vector.broadcast %283 : f32 to vector<8x128xf32>
    %285 = arith.mulf %282, %284 : vector<8x128xf32>
    %286 = arith.addf %280, %285 : vector<8x128xf32>
    %c6_164 = arith.constant 6 : index
    %c0_165 = arith.constant 0 : index
    %c0_166 = arith.constant 0 : index
    %287 = vector.load %arg10[%c6_164, %c0_165, %c0_166] : memref<9x8x128xf32, #tpu.memory_space<vmem>>, vector<1x8x128xf32>
    %288 = vector.shape_cast %287 : vector<1x8x128xf32> to vector<8x128xf32>
    %c33 = arith.constant 33 : index
    %289 = memref.load %arg1[%c33] : memref<288xf32, #tpu.memory_space<smem>>
    %290 = vector.broadcast %289 : f32 to vector<8x128xf32>
    %291 = arith.mulf %288, %290 : vector<8x128xf32>
    %292 = arith.addf %286, %291 : vector<8x128xf32>
    %c7_167 = arith.constant 7 : index
    %c0_168 = arith.constant 0 : index
    %c0_169 = arith.constant 0 : index
    %293 = vector.load %arg10[%c7_167, %c0_168, %c0_169] : memref<9x8x128xf32, #tpu.memory_space<vmem>>, vector<1x8x128xf32>
    %294 = vector.shape_cast %293 : vector<1x8x128xf32> to vector<8x128xf32>
    %c34 = arith.constant 34 : index
    %295 = memref.load %arg1[%c34] : memref<288xf32, #tpu.memory_space<smem>>
    %296 = vector.broadcast %295 : f32 to vector<8x128xf32>
    %297 = arith.mulf %294, %296 : vector<8x128xf32>
    %298 = arith.addf %292, %297 : vector<8x128xf32>
    %c8_170 = arith.constant 8 : index
    %c0_171 = arith.constant 0 : index
    %c0_172 = arith.constant 0 : index
    %299 = vector.load %arg10[%c8_170, %c0_171, %c0_172] : memref<9x8x128xf32, #tpu.memory_space<vmem>>, vector<1x8x128xf32>
    %300 = vector.shape_cast %299 : vector<1x8x128xf32> to vector<8x128xf32>
    %c35 = arith.constant 35 : index
    %301 = memref.load %arg1[%c35] : memref<288xf32, #tpu.memory_space<smem>>
    %302 = vector.broadcast %301 : f32 to vector<8x128xf32>
    %303 = arith.mulf %300, %302 : vector<8x128xf32>
    %304 = arith.addf %298, %303 : vector<8x128xf32>
    %c3_173 = arith.constant 3 : index
    %305 = memref.load %arg2[%c3_173] : memref<32xf32, #tpu.memory_space<smem>>
    %306 = vector.broadcast %305 : f32 to vector<8x128xf32>
    %307 = arith.addf %304, %306 : vector<8x128xf32>
    %cst_174 = arith.constant 0.000000e+00 : f32
    %308 = vector.broadcast %cst_174 : f32 to vector<8x128xf32>
    %309 = arith.maximumf %307, %308 : vector<8x128xf32>
    %310 = arith.truncf %309 : vector<8x128xf32> to vector<8x128xbf16>
    %c0_175 = arith.constant 0 : index
    %c384 = arith.constant 384 : index
    %311 = vector.load %arg11[%c0_175, %c384] : memref<8x4096xbf16, #tpu.memory_space<vmem>>, vector<8x128xbf16>
    tpu.vector_store %arg11[%c0_175, %c384], %310 {strides = array<i32>} : memref<8x4096xbf16, #tpu.memory_space<vmem>>, vector<8x128xbf16>,
    %c0_176 = arith.constant 0 : index
    %c0_177 = arith.constant 0 : index
    %c0_178 = arith.constant 0 : index
    %312 = vector.load %arg10[%c0_176, %c0_177, %c0_178] : memref<9x8x128xf32, #tpu.memory_space<vmem>>, vector<1x8x128xf32>
    %313 = vector.shape_cast %312 : vector<1x8x128xf32> to vector<8x128xf32>
    %c36 = arith.constant 36 : index
    %314 = memref.load %arg1[%c36] : memref<288xf32, #tpu.memory_space<smem>>
    %315 = vector.broadcast %314 : f32 to vector<8x128xf32>
    %316 = arith.mulf %313, %315 : vector<8x128xf32>
    %c1_179 = arith.constant 1 : index
    %c0_180 = arith.constant 0 : index
    %c0_181 = arith.constant 0 : index
    %317 = vector.load %arg10[%c1_179, %c0_180, %c0_181] : memref<9x8x128xf32, #tpu.memory_space<vmem>>, vector<1x8x128xf32>
    %318 = vector.shape_cast %317 : vector<1x8x128xf32> to vector<8x128xf32>
    %c37 = arith.constant 37 : index
    %319 = memref.load %arg1[%c37] : memref<288xf32, #tpu.memory_space<smem>>
    %320 = vector.broadcast %319 : f32 to vector<8x128xf32>
    %321 = arith.mulf %318, %320 : vector<8x128xf32>
    %322 = arith.addf %316, %321 : vector<8x128xf32>
    %c2_182 = arith.constant 2 : index
    %c0_183 = arith.constant 0 : index
    %c0_184 = arith.constant 0 : index
    %323 = vector.load %arg10[%c2_182, %c0_183, %c0_184] : memref<9x8x128xf32, #tpu.memory_space<vmem>>, vector<1x8x128xf32>
    %324 = vector.shape_cast %323 : vector<1x8x128xf32> to vector<8x128xf32>
    %c38 = arith.constant 38 : index
    %325 = memref.load %arg1[%c38] : memref<288xf32, #tpu.memory_space<smem>>
    %326 = vector.broadcast %325 : f32 to vector<8x128xf32>
    %327 = arith.mulf %324, %326 : vector<8x128xf32>
    %328 = arith.addf %322, %327 : vector<8x128xf32>
    %c3_185 = arith.constant 3 : index
    %c0_186 = arith.constant 0 : index
    %c0_187 = arith.constant 0 : index
    %329 = vector.load %arg10[%c3_185, %c0_186, %c0_187] : memref<9x8x128xf32, #tpu.memory_space<vmem>>, vector<1x8x128xf32>
    %330 = vector.shape_cast %329 : vector<1x8x128xf32> to vector<8x128xf32>
    %c39 = arith.constant 39 : index
    %331 = memref.load %arg1[%c39] : memref<288xf32, #tpu.memory_space<smem>>
    %332 = vector.broadcast %331 : f32 to vector<8x128xf32>
    %333 = arith.mulf %330, %332 : vector<8x128xf32>
    %334 = arith.addf %328, %333 : vector<8x128xf32>
    %c4_188 = arith.constant 4 : index
    %c0_189 = arith.constant 0 : index
    %c0_190 = arith.constant 0 : index
    %335 = vector.load %arg10[%c4_188, %c0_189, %c0_190] : memref<9x8x128xf32, #tpu.memory_space<vmem>>, vector<1x8x128xf32>
    %336 = vector.shape_cast %335 : vector<1x8x128xf32> to vector<8x128xf32>
    %c40 = arith.constant 40 : index
    %337 = memref.load %arg1[%c40] : memref<288xf32, #tpu.memory_space<smem>>
    %338 = vector.broadcast %337 : f32 to vector<8x128xf32>
    %339 = arith.mulf %336, %338 : vector<8x128xf32>
    %340 = arith.addf %334, %339 : vector<8x128xf32>
    %c5_191 = arith.constant 5 : index
    %c0_192 = arith.constant 0 : index
    %c0_193 = arith.constant 0 : index
    %341 = vector.load %arg10[%c5_191, %c0_192, %c0_193] : memref<9x8x128xf32, #tpu.memory_space<vmem>>, vector<1x8x128xf32>
    %342 = vector.shape_cast %341 : vector<1x8x128xf32> to vector<8x128xf32>
    %c41 = arith.constant 41 : index
    %343 = memref.load %arg1[%c41] : memref<288xf32, #tpu.memory_space<smem>>
    %344 = vector.broadcast %343 : f32 to vector<8x128xf32>
    %345 = arith.mulf %342, %344 : vector<8x128xf32>
    %346 = arith.addf %340, %345 : vector<8x128xf32>
    %c6_194 = arith.constant 6 : index
    %c0_195 = arith.constant 0 : index
    %c0_196 = arith.constant 0 : index
    %347 = vector.load %arg10[%c6_194, %c0_195, %c0_196] : memref<9x8x128xf32, #tpu.memory_space<vmem>>, vector<1x8x128xf32>
    %348 = vector.shape_cast %347 : vector<1x8x128xf32> to vector<8x128xf32>
    %c42 = arith.constant 42 : index
    %349 = memref.load %arg1[%c42] : memref<288xf32, #tpu.memory_space<smem>>
    %350 = vector.broadcast %349 : f32 to vector<8x128xf32>
    %351 = arith.mulf %348, %350 : vector<8x128xf32>
    %352 = arith.addf %346, %351 : vector<8x128xf32>
    %c7_197 = arith.constant 7 : index
    %c0_198 = arith.constant 0 : index
    %c0_199 = arith.constant 0 : index
    %353 = vector.load %arg10[%c7_197, %c0_198, %c0_199] : memref<9x8x128xf32, #tpu.memory_space<vmem>>, vector<1x8x128xf32>
    %354 = vector.shape_cast %353 : vector<1x8x128xf32> to vector<8x128xf32>
    %c43 = arith.constant 43 : index
    %355 = memref.load %arg1[%c43] : memref<288xf32, #tpu.memory_space<smem>>
    %356 = vector.broadcast %355 : f32 to vector<8x128xf32>
    %357 = arith.mulf %354, %356 : vector<8x128xf32>
    %358 = arith.addf %352, %357 : vector<8x128xf32>
    %c8_200 = arith.constant 8 : index
    %c0_201 = arith.constant 0 : index
    %c0_202 = arith.constant 0 : index
    %359 = vector.load %arg10[%c8_200, %c0_201, %c0_202] : memref<9x8x128xf32, #tpu.memory_space<vmem>>, vector<1x8x128xf32>
    %360 = vector.shape_cast %359 : vector<1x8x128xf32> to vector<8x128xf32>
    %c44 = arith.constant 44 : index
    %361 = memref.load %arg1[%c44] : memref<288xf32, #tpu.memory_space<smem>>
    %362 = vector.broadcast %361 : f32 to vector<8x128xf32>
    %363 = arith.mulf %360, %362 : vector<8x128xf32>
    %364 = arith.addf %358, %363 : vector<8x128xf32>
    %c4_203 = arith.constant 4 : index
    %365 = memref.load %arg2[%c4_203] : memref<32xf32, #tpu.memory_space<smem>>
    %366 = vector.broadcast %365 : f32 to vector<8x128xf32>
    %367 = arith.addf %364, %366 : vector<8x128xf32>
    %cst_204 = arith.constant 0.000000e+00 : f32
    %368 = vector.broadcast %cst_204 : f32 to vector<8x128xf32>
    %369 = arith.maximumf %367, %368 : vector<8x128xf32>
    %370 = arith.truncf %369 : vector<8x128xf32> to vector<8x128xbf16>
    %c0_205 = arith.constant 0 : index
    %c512 = arith.constant 512 : index
    %371 = vector.load %arg11[%c0_205, %c512] : memref<8x4096xbf16, #tpu.memory_space<vmem>>, vector<8x128xbf16>
    tpu.vector_store %arg11[%c0_205, %c512], %370 {strides = array<i32>} : memref<8x4096xbf16, #tpu.memory_space<vmem>>, vector<8x128xbf16>,
    %c0_206 = arith.constant 0 : index
    %c0_207 = arith.constant 0 : index
    %c0_208 = arith.constant 0 : index
    %372 = vector.load %arg10[%c0_206, %c0_207, %c0_208] : memref<9x8x128xf32, #tpu.memory_space<vmem>>, vector<1x8x128xf32>
    %373 = vector.shape_cast %372 : vector<1x8x128xf32> to vector<8x128xf32>
    %c45 = arith.constant 45 : index
    %374 = memref.load %arg1[%c45] : memref<288xf32, #tpu.memory_space<smem>>
    %375 = vector.broadcast %374 : f32 to vector<8x128xf32>
    %376 = arith.mulf %373, %375 : vector<8x128xf32>
    %c1_209 = arith.constant 1 : index
    %c0_210 = arith.constant 0 : index
    %c0_211 = arith.constant 0 : index
    %377 = vector.load %arg10[%c1_209, %c0_210, %c0_211] : memref<9x8x128xf32, #tpu.memory_space<vmem>>, vector<1x8x128xf32>
    %378 = vector.shape_cast %377 : vector<1x8x128xf32> to vector<8x128xf32>
    %c46 = arith.constant 46 : index
    %379 = memref.load %arg1[%c46] : memref<288xf32, #tpu.memory_space<smem>>
    %380 = vector.broadcast %379 : f32 to vector<8x128xf32>
    %381 = arith.mulf %378, %380 : vector<8x128xf32>
    %382 = arith.addf %376, %381 : vector<8x128xf32>
    %c2_212 = arith.constant 2 : index
    %c0_213 = arith.constant 0 : index
    %c0_214 = arith.constant 0 : index
    %383 = vector.load %arg10[%c2_212, %c0_213, %c0_214] : memref<9x8x128xf32, #tpu.memory_space<vmem>>, vector<1x8x128xf32>
    %384 = vector.shape_cast %383 : vector<1x8x128xf32> to vector<8x128xf32>
    %c47 = arith.constant 47 : index
    %385 = memref.load %arg1[%c47] : memref<288xf32, #tpu.memory_space<smem>>
    %386 = vector.broadcast %385 : f32 to vector<8x128xf32>
    %387 = arith.mulf %384, %386 : vector<8x128xf32>
    %388 = arith.addf %382, %387 : vector<8x128xf32>
    %c3_215 = arith.constant 3 : index
    %c0_216 = arith.constant 0 : index
    %c0_217 = arith.constant 0 : index
    %389 = vector.load %arg10[%c3_215, %c0_216, %c0_217] : memref<9x8x128xf32, #tpu.memory_space<vmem>>, vector<1x8x128xf32>
    %390 = vector.shape_cast %389 : vector<1x8x128xf32> to vector<8x128xf32>
    %c48 = arith.constant 48 : index
    %391 = memref.load %arg1[%c48] : memref<288xf32, #tpu.memory_space<smem>>
    %392 = vector.broadcast %391 : f32 to vector<8x128xf32>
    %393 = arith.mulf %390, %392 : vector<8x128xf32>
    %394 = arith.addf %388, %393 : vector<8x128xf32>
    %c4_218 = arith.constant 4 : index
    %c0_219 = arith.constant 0 : index
    %c0_220 = arith.constant 0 : index
    %395 = vector.load %arg10[%c4_218, %c0_219, %c0_220] : memref<9x8x128xf32, #tpu.memory_space<vmem>>, vector<1x8x128xf32>
    %396 = vector.shape_cast %395 : vector<1x8x128xf32> to vector<8x128xf32>
    %c49 = arith.constant 49 : index
    %397 = memref.load %arg1[%c49] : memref<288xf32, #tpu.memory_space<smem>>
    %398 = vector.broadcast %397 : f32 to vector<8x128xf32>
    %399 = arith.mulf %396, %398 : vector<8x128xf32>
    %400 = arith.addf %394, %399 : vector<8x128xf32>
    %c5_221 = arith.constant 5 : index
    %c0_222 = arith.constant 0 : index
    %c0_223 = arith.constant 0 : index
    %401 = vector.load %arg10[%c5_221, %c0_222, %c0_223] : memref<9x8x128xf32, #tpu.memory_space<vmem>>, vector<1x8x128xf32>
    %402 = vector.shape_cast %401 : vector<1x8x128xf32> to vector<8x128xf32>
    %c50 = arith.constant 50 : index
    %403 = memref.load %arg1[%c50] : memref<288xf32, #tpu.memory_space<smem>>
    %404 = vector.broadcast %403 : f32 to vector<8x128xf32>
    %405 = arith.mulf %402, %404 : vector<8x128xf32>
    %406 = arith.addf %400, %405 : vector<8x128xf32>
    %c6_224 = arith.constant 6 : index
    %c0_225 = arith.constant 0 : index
    %c0_226 = arith.constant 0 : index
    %407 = vector.load %arg10[%c6_224, %c0_225, %c0_226] : memref<9x8x128xf32, #tpu.memory_space<vmem>>, vector<1x8x128xf32>
    %408 = vector.shape_cast %407 : vector<1x8x128xf32> to vector<8x128xf32>
    %c51 = arith.constant 51 : index
    %409 = memref.load %arg1[%c51] : memref<288xf32, #tpu.memory_space<smem>>
    %410 = vector.broadcast %409 : f32 to vector<8x128xf32>
    %411 = arith.mulf %408, %410 : vector<8x128xf32>
    %412 = arith.addf %406, %411 : vector<8x128xf32>
    %c7_227 = arith.constant 7 : index
    %c0_228 = arith.constant 0 : index
    %c0_229 = arith.constant 0 : index
    %413 = vector.load %arg10[%c7_227, %c0_228, %c0_229] : memref<9x8x128xf32, #tpu.memory_space<vmem>>, vector<1x8x128xf32>
    %414 = vector.shape_cast %413 : vector<1x8x128xf32> to vector<8x128xf32>
    %c52 = arith.constant 52 : index
    %415 = memref.load %arg1[%c52] : memref<288xf32, #tpu.memory_space<smem>>
    %416 = vector.broadcast %415 : f32 to vector<8x128xf32>
    %417 = arith.mulf %414, %416 : vector<8x128xf32>
    %418 = arith.addf %412, %417 : vector<8x128xf32>
    %c8_230 = arith.constant 8 : index
    %c0_231 = arith.constant 0 : index
    %c0_232 = arith.constant 0 : index
    %419 = vector.load %arg10[%c8_230, %c0_231, %c0_232] : memref<9x8x128xf32, #tpu.memory_space<vmem>>, vector<1x8x128xf32>
    %420 = vector.shape_cast %419 : vector<1x8x128xf32> to vector<8x128xf32>
    %c53 = arith.constant 53 : index
    %421 = memref.load %arg1[%c53] : memref<288xf32, #tpu.memory_space<smem>>
    %422 = vector.broadcast %421 : f32 to vector<8x128xf32>
    %423 = arith.mulf %420, %422 : vector<8x128xf32>
    %424 = arith.addf %418, %423 : vector<8x128xf32>
    %c5_233 = arith.constant 5 : index
    %425 = memref.load %arg2[%c5_233] : memref<32xf32, #tpu.memory_space<smem>>
    %426 = vector.broadcast %425 : f32 to vector<8x128xf32>
    %427 = arith.addf %424, %426 : vector<8x128xf32>
    %cst_234 = arith.constant 0.000000e+00 : f32
    %428 = vector.broadcast %cst_234 : f32 to vector<8x128xf32>
    %429 = arith.maximumf %427, %428 : vector<8x128xf32>
    %430 = arith.truncf %429 : vector<8x128xf32> to vector<8x128xbf16>
    %c0_235 = arith.constant 0 : index
    %c640 = arith.constant 640 : index
    %431 = vector.load %arg11[%c0_235, %c640] : memref<8x4096xbf16, #tpu.memory_space<vmem>>, vector<8x128xbf16>
    tpu.vector_store %arg11[%c0_235, %c640], %430 {strides = array<i32>} : memref<8x4096xbf16, #tpu.memory_space<vmem>>, vector<8x128xbf16>,
    %c0_236 = arith.constant 0 : index
    %c0_237 = arith.constant 0 : index
    %c0_238 = arith.constant 0 : index
    %432 = vector.load %arg10[%c0_236, %c0_237, %c0_238] : memref<9x8x128xf32, #tpu.memory_space<vmem>>, vector<1x8x128xf32>
    %433 = vector.shape_cast %432 : vector<1x8x128xf32> to vector<8x128xf32>
    %c54 = arith.constant 54 : index
    %434 = memref.load %arg1[%c54] : memref<288xf32, #tpu.memory_space<smem>>
    %435 = vector.broadcast %434 : f32 to vector<8x128xf32>
    %436 = arith.mulf %433, %435 : vector<8x128xf32>
    %c1_239 = arith.constant 1 : index
    %c0_240 = arith.constant 0 : index
    %c0_241 = arith.constant 0 : index
    %437 = vector.load %arg10[%c1_239, %c0_240, %c0_241] : memref<9x8x128xf32, #tpu.memory_space<vmem>>, vector<1x8x128xf32>
    %438 = vector.shape_cast %437 : vector<1x8x128xf32> to vector<8x128xf32>
    %c55 = arith.constant 55 : index
    %439 = memref.load %arg1[%c55] : memref<288xf32, #tpu.memory_space<smem>>
    %440 = vector.broadcast %439 : f32 to vector<8x128xf32>
    %441 = arith.mulf %438, %440 : vector<8x128xf32>
    %442 = arith.addf %436, %441 : vector<8x128xf32>
    %c2_242 = arith.constant 2 : index
    %c0_243 = arith.constant 0 : index
    %c0_244 = arith.constant 0 : index
    %443 = vector.load %arg10[%c2_242, %c0_243, %c0_244] : memref<9x8x128xf32, #tpu.memory_space<vmem>>, vector<1x8x128xf32>
    %444 = vector.shape_cast %443 : vector<1x8x128xf32> to vector<8x128xf32>
    %c56 = arith.constant 56 : index
    %445 = memref.load %arg1[%c56] : memref<288xf32, #tpu.memory_space<smem>>
    %446 = vector.broadcast %445 : f32 to vector<8x128xf32>
    %447 = arith.mulf %444, %446 : vector<8x128xf32>
    %448 = arith.addf %442, %447 : vector<8x128xf32>
    %c3_245 = arith.constant 3 : index
    %c0_246 = arith.constant 0 : index
    %c0_247 = arith.constant 0 : index
    %449 = vector.load %arg10[%c3_245, %c0_246, %c0_247] : memref<9x8x128xf32, #tpu.memory_space<vmem>>, vector<1x8x128xf32>
    %450 = vector.shape_cast %449 : vector<1x8x128xf32> to vector<8x128xf32>
    %c57 = arith.constant 57 : index
    %451 = memref.load %arg1[%c57] : memref<288xf32, #tpu.memory_space<smem>>
    %452 = vector.broadcast %451 : f32 to vector<8x128xf32>
    %453 = arith.mulf %450, %452 : vector<8x128xf32>
    %454 = arith.addf %448, %453 : vector<8x128xf32>
    %c4_248 = arith.constant 4 : index
    %c0_249 = arith.constant 0 : index
    %c0_250 = arith.constant 0 : index
    %455 = vector.load %arg10[%c4_248, %c0_249, %c0_250] : memref<9x8x128xf32, #tpu.memory_space<vmem>>, vector<1x8x128xf32>
    %456 = vector.shape_cast %455 : vector<1x8x128xf32> to vector<8x128xf32>
    %c58 = arith.constant 58 : index
    %457 = memref.load %arg1[%c58] : memref<288xf32, #tpu.memory_space<smem>>
    %458 = vector.broadcast %457 : f32 to vector<8x128xf32>
    %459 = arith.mulf %456, %458 : vector<8x128xf32>
    %460 = arith.addf %454, %459 : vector<8x128xf32>
    %c5_251 = arith.constant 5 : index
    %c0_252 = arith.constant 0 : index
    %c0_253 = arith.constant 0 : index
    %461 = vector.load %arg10[%c5_251, %c0_252, %c0_253] : memref<9x8x128xf32, #tpu.memory_space<vmem>>, vector<1x8x128xf32>
    %462 = vector.shape_cast %461 : vector<1x8x128xf32> to vector<8x128xf32>
    %c59 = arith.constant 59 : index
    %463 = memref.load %arg1[%c59] : memref<288xf32, #tpu.memory_space<smem>>
    %464 = vector.broadcast %463 : f32 to vector<8x128xf32>
    %465 = arith.mulf %462, %464 : vector<8x128xf32>
    %466 = arith.addf %460, %465 : vector<8x128xf32>
    %c6_254 = arith.constant 6 : index
    %c0_255 = arith.constant 0 : index
    %c0_256 = arith.constant 0 : index
    %467 = vector.load %arg10[%c6_254, %c0_255, %c0_256] : memref<9x8x128xf32, #tpu.memory_space<vmem>>, vector<1x8x128xf32>
    %468 = vector.shape_cast %467 : vector<1x8x128xf32> to vector<8x128xf32>
    %c60 = arith.constant 60 : index
    %469 = memref.load %arg1[%c60] : memref<288xf32, #tpu.memory_space<smem>>
    %470 = vector.broadcast %469 : f32 to vector<8x128xf32>
    %471 = arith.mulf %468, %470 : vector<8x128xf32>
    %472 = arith.addf %466, %471 : vector<8x128xf32>
    %c7_257 = arith.constant 7 : index
    %c0_258 = arith.constant 0 : index
    %c0_259 = arith.constant 0 : index
    %473 = vector.load %arg10[%c7_257, %c0_258, %c0_259] : memref<9x8x128xf32, #tpu.memory_space<vmem>>, vector<1x8x128xf32>
    %474 = vector.shape_cast %473 : vector<1x8x128xf32> to vector<8x128xf32>
    %c61 = arith.constant 61 : index
    %475 = memref.load %arg1[%c61] : memref<288xf32, #tpu.memory_space<smem>>
    %476 = vector.broadcast %475 : f32 to vector<8x128xf32>
    %477 = arith.mulf %474, %476 : vector<8x128xf32>
    %478 = arith.addf %472, %477 : vector<8x128xf32>
    %c8_260 = arith.constant 8 : index
    %c0_261 = arith.constant 0 : index
    %c0_262 = arith.constant 0 : index
    %479 = vector.load %arg10[%c8_260, %c0_261, %c0_262] : memref<9x8x128xf32, #tpu.memory_space<vmem>>, vector<1x8x128xf32>
    %480 = vector.shape_cast %479 : vector<1x8x128xf32> to vector<8x128xf32>
    %c62 = arith.constant 62 : index
    %481 = memref.load %arg1[%c62] : memref<288xf32, #tpu.memory_space<smem>>
    %482 = vector.broadcast %481 : f32 to vector<8x128xf32>
    %483 = arith.mulf %480, %482 : vector<8x128xf32>
    %484 = arith.addf %478, %483 : vector<8x128xf32>
    %c6_263 = arith.constant 6 : index
    %485 = memref.load %arg2[%c6_263] : memref<32xf32, #tpu.memory_space<smem>>
    %486 = vector.broadcast %485 : f32 to vector<8x128xf32>
    %487 = arith.addf %484, %486 : vector<8x128xf32>
    %cst_264 = arith.constant 0.000000e+00 : f32
    %488 = vector.broadcast %cst_264 : f32 to vector<8x128xf32>
    %489 = arith.maximumf %487, %488 : vector<8x128xf32>
    %490 = arith.truncf %489 : vector<8x128xf32> to vector<8x128xbf16>
    %c0_265 = arith.constant 0 : index
    %c768 = arith.constant 768 : index
    %491 = vector.load %arg11[%c0_265, %c768] : memref<8x4096xbf16, #tpu.memory_space<vmem>>, vector<8x128xbf16>
    tpu.vector_store %arg11[%c0_265, %c768], %490 {strides = array<i32>} : memref<8x4096xbf16, #tpu.memory_space<vmem>>, vector<8x128xbf16>,
    %c0_266 = arith.constant 0 : index
    %c0_267 = arith.constant 0 : index
    %c0_268 = arith.constant 0 : index
    %492 = vector.load %arg10[%c0_266, %c0_267, %c0_268] : memref<9x8x128xf32, #tpu.memory_space<vmem>>, vector<1x8x128xf32>
    %493 = vector.shape_cast %492 : vector<1x8x128xf32> to vector<8x128xf32>
    %c63 = arith.constant 63 : index
    %494 = memref.load %arg1[%c63] : memref<288xf32, #tpu.memory_space<smem>>
    %495 = vector.broadcast %494 : f32 to vector<8x128xf32>
    %496 = arith.mulf %493, %495 : vector<8x128xf32>
    %c1_269 = arith.constant 1 : index
    %c0_270 = arith.constant 0 : index
    %c0_271 = arith.constant 0 : index
    %497 = vector.load %arg10[%c1_269, %c0_270, %c0_271] : memref<9x8x128xf32, #tpu.memory_space<vmem>>, vector<1x8x128xf32>
    %498 = vector.shape_cast %497 : vector<1x8x128xf32> to vector<8x128xf32>
    %c64 = arith.constant 64 : index
    %499 = memref.load %arg1[%c64] : memref<288xf32, #tpu.memory_space<smem>>
    %500 = vector.broadcast %499 : f32 to vector<8x128xf32>
    %501 = arith.mulf %498, %500 : vector<8x128xf32>
    %502 = arith.addf %496, %501 : vector<8x128xf32>
    %c2_272 = arith.constant 2 : index
    %c0_273 = arith.constant 0 : index
    %c0_274 = arith.constant 0 : index
    %503 = vector.load %arg10[%c2_272, %c0_273, %c0_274] : memref<9x8x128xf32, #tpu.memory_space<vmem>>, vector<1x8x128xf32>
    %504 = vector.shape_cast %503 : vector<1x8x128xf32> to vector<8x128xf32>
    %c65 = arith.constant 65 : index
    %505 = memref.load %arg1[%c65] : memref<288xf32, #tpu.memory_space<smem>>
    %506 = vector.broadcast %505 : f32 to vector<8x128xf32>
    %507 = arith.mulf %504, %506 : vector<8x128xf32>
    %508 = arith.addf %502, %507 : vector<8x128xf32>
    %c3_275 = arith.constant 3 : index
    %c0_276 = arith.constant 0 : index
    %c0_277 = arith.constant 0 : index
    %509 = vector.load %arg10[%c3_275, %c0_276, %c0_277] : memref<9x8x128xf32, #tpu.memory_space<vmem>>, vector<1x8x128xf32>
    %510 = vector.shape_cast %509 : vector<1x8x128xf32> to vector<8x128xf32>
    %c66 = arith.constant 66 : index
    %511 = memref.load %arg1[%c66] : memref<288xf32, #tpu.memory_space<smem>>
    %512 = vector.broadcast %511 : f32 to vector<8x128xf32>
    %513 = arith.mulf %510, %512 : vector<8x128xf32>
    %514 = arith.addf %508, %513 : vector<8x128xf32>
    %c4_278 = arith.constant 4 : index
    %c0_279 = arith.constant 0 : index
    %c0_280 = arith.constant 0 : index
    %515 = vector.load %arg10[%c4_278, %c0_279, %c0_280] : memref<9x8x128xf32, #tpu.memory_space<vmem>>, vector<1x8x128xf32>
    %516 = vector.shape_cast %515 : vector<1x8x128xf32> to vector<8x128xf32>
    %c67 = arith.constant 67 : index
    %517 = memref.load %arg1[%c67] : memref<288xf32, #tpu.memory_space<smem>>
    %518 = vector.broadcast %517 : f32 to vector<8x128xf32>
    %519 = arith.mulf %516, %518 : vector<8x128xf32>
    %520 = arith.addf %514, %519 : vector<8x128xf32>
    %c5_281 = arith.constant 5 : index
    %c0_282 = arith.constant 0 : index
    %c0_283 = arith.constant 0 : index
    %521 = vector.load %arg10[%c5_281, %c0_282, %c0_283] : memref<9x8x128xf32, #tpu.memory_space<vmem>>, vector<1x8x128xf32>
    %522 = vector.shape_cast %521 : vector<1x8x128xf32> to vector<8x128xf32>
    %c68 = arith.constant 68 : index
    %523 = memref.load %arg1[%c68] : memref<288xf32, #tpu.memory_space<smem>>
    %524 = vector.broadcast %523 : f32 to vector<8x128xf32>
    %525 = arith.mulf %522, %524 : vector<8x128xf32>
    %526 = arith.addf %520, %525 : vector<8x128xf32>
    %c6_284 = arith.constant 6 : index
    %c0_285 = arith.constant 0 : index
    %c0_286 = arith.constant 0 : index
    %527 = vector.load %arg10[%c6_284, %c0_285, %c0_286] : memref<9x8x128xf32, #tpu.memory_space<vmem>>, vector<1x8x128xf32>
    %528 = vector.shape_cast %527 : vector<1x8x128xf32> to vector<8x128xf32>
    %c69 = arith.constant 69 : index
    %529 = memref.load %arg1[%c69] : memref<288xf32, #tpu.memory_space<smem>>
    %530 = vector.broadcast %529 : f32 to vector<8x128xf32>
    %531 = arith.mulf %528, %530 : vector<8x128xf32>
    %532 = arith.addf %526, %531 : vector<8x128xf32>
    %c7_287 = arith.constant 7 : index
    %c0_288 = arith.constant 0 : index
    %c0_289 = arith.constant 0 : index
    %533 = vector.load %arg10[%c7_287, %c0_288, %c0_289] : memref<9x8x128xf32, #tpu.memory_space<vmem>>, vector<1x8x128xf32>
    %534 = vector.shape_cast %533 : vector<1x8x128xf32> to vector<8x128xf32>
    %c70 = arith.constant 70 : index
    %535 = memref.load %arg1[%c70] : memref<288xf32, #tpu.memory_space<smem>>
    %536 = vector.broadcast %535 : f32 to vector<8x128xf32>
    %537 = arith.mulf %534, %536 : vector<8x128xf32>
    %538 = arith.addf %532, %537 : vector<8x128xf32>
    %c8_290 = arith.constant 8 : index
    %c0_291 = arith.constant 0 : index
    %c0_292 = arith.constant 0 : index
    %539 = vector.load %arg10[%c8_290, %c0_291, %c0_292] : memref<9x8x128xf32, #tpu.memory_space<vmem>>, vector<1x8x128xf32>
    %540 = vector.shape_cast %539 : vector<1x8x128xf32> to vector<8x128xf32>
    %c71 = arith.constant 71 : index
    %541 = memref.load %arg1[%c71] : memref<288xf32, #tpu.memory_space<smem>>
    %542 = vector.broadcast %541 : f32 to vector<8x128xf32>
    %543 = arith.mulf %540, %542 : vector<8x128xf32>
    %544 = arith.addf %538, %543 : vector<8x128xf32>
    %c7_293 = arith.constant 7 : index
    %545 = memref.load %arg2[%c7_293] : memref<32xf32, #tpu.memory_space<smem>>
    %546 = vector.broadcast %545 : f32 to vector<8x128xf32>
    %547 = arith.addf %544, %546 : vector<8x128xf32>
    %cst_294 = arith.constant 0.000000e+00 : f32
    %548 = vector.broadcast %cst_294 : f32 to vector<8x128xf32>
    %549 = arith.maximumf %547, %548 : vector<8x128xf32>
    %550 = arith.truncf %549 : vector<8x128xf32> to vector<8x128xbf16>
    %c0_295 = arith.constant 0 : index
    %c896 = arith.constant 896 : index
    %551 = vector.load %arg11[%c0_295, %c896] : memref<8x4096xbf16, #tpu.memory_space<vmem>>, vector<8x128xbf16>
    tpu.vector_store %arg11[%c0_295, %c896], %550 {strides = array<i32>} : memref<8x4096xbf16, #tpu.memory_space<vmem>>, vector<8x128xbf16>,
    %c0_296 = arith.constant 0 : index
    %c0_297 = arith.constant 0 : index
    %c0_298 = arith.constant 0 : index
    %552 = vector.load %arg10[%c0_296, %c0_297, %c0_298] : memref<9x8x128xf32, #tpu.memory_space<vmem>>, vector<1x8x128xf32>
    %553 = vector.shape_cast %552 : vector<1x8x128xf32> to vector<8x128xf32>
    %c72 = arith.constant 72 : index
    %554 = memref.load %arg1[%c72] : memref<288xf32, #tpu.memory_space<smem>>
    %555 = vector.broadcast %554 : f32 to vector<8x128xf32>
    %556 = arith.mulf %553, %555 : vector<8x128xf32>
    %c1_299 = arith.constant 1 : index
    %c0_300 = arith.constant 0 : index
    %c0_301 = arith.constant 0 : index
    %557 = vector.load %arg10[%c1_299, %c0_300, %c0_301] : memref<9x8x128xf32, #tpu.memory_space<vmem>>, vector<1x8x128xf32>
    %558 = vector.shape_cast %557 : vector<1x8x128xf32> to vector<8x128xf32>
    %c73 = arith.constant 73 : index
    %559 = memref.load %arg1[%c73] : memref<288xf32, #tpu.memory_space<smem>>
    %560 = vector.broadcast %559 : f32 to vector<8x128xf32>
    %561 = arith.mulf %558, %560 : vector<8x128xf32>
    %562 = arith.addf %556, %561 : vector<8x128xf32>
    %c2_302 = arith.constant 2 : index
    %c0_303 = arith.constant 0 : index
    %c0_304 = arith.constant 0 : index
    %563 = vector.load %arg10[%c2_302, %c0_303, %c0_304] : memref<9x8x128xf32, #tpu.memory_space<vmem>>, vector<1x8x128xf32>
    %564 = vector.shape_cast %563 : vector<1x8x128xf32> to vector<8x128xf32>
    %c74 = arith.constant 74 : index
    %565 = memref.load %arg1[%c74] : memref<288xf32, #tpu.memory_space<smem>>
    %566 = vector.broadcast %565 : f32 to vector<8x128xf32>
    %567 = arith.mulf %564, %566 : vector<8x128xf32>
    %568 = arith.addf %562, %567 : vector<8x128xf32>
    %c3_305 = arith.constant 3 : index
    %c0_306 = arith.constant 0 : index
    %c0_307 = arith.constant 0 : index
    %569 = vector.load %arg10[%c3_305, %c0_306, %c0_307] : memref<9x8x128xf32, #tpu.memory_space<vmem>>, vector<1x8x128xf32>
    %570 = vector.shape_cast %569 : vector<1x8x128xf32> to vector<8x128xf32>
    %c75 = arith.constant 75 : index
    %571 = memref.load %arg1[%c75] : memref<288xf32, #tpu.memory_space<smem>>
    %572 = vector.broadcast %571 : f32 to vector<8x128xf32>
    %573 = arith.mulf %570, %572 : vector<8x128xf32>
    %574 = arith.addf %568, %573 : vector<8x128xf32>
    %c4_308 = arith.constant 4 : index
    %c0_309 = arith.constant 0 : index
    %c0_310 = arith.constant 0 : index
    %575 = vector.load %arg10[%c4_308, %c0_309, %c0_310] : memref<9x8x128xf32, #tpu.memory_space<vmem>>, vector<1x8x128xf32>
    %576 = vector.shape_cast %575 : vector<1x8x128xf32> to vector<8x128xf32>
    %c76 = arith.constant 76 : index
    %577 = memref.load %arg1[%c76] : memref<288xf32, #tpu.memory_space<smem>>
    %578 = vector.broadcast %577 : f32 to vector<8x128xf32>
    %579 = arith.mulf %576, %578 : vector<8x128xf32>
    %580 = arith.addf %574, %579 : vector<8x128xf32>
    %c5_311 = arith.constant 5 : index
    %c0_312 = arith.constant 0 : index
    %c0_313 = arith.constant 0 : index
    %581 = vector.load %arg10[%c5_311, %c0_312, %c0_313] : memref<9x8x128xf32, #tpu.memory_space<vmem>>, vector<1x8x128xf32>
    %582 = vector.shape_cast %581 : vector<1x8x128xf32> to vector<8x128xf32>
    %c77 = arith.constant 77 : index
    %583 = memref.load %arg1[%c77] : memref<288xf32, #tpu.memory_space<smem>>
    %584 = vector.broadcast %583 : f32 to vector<8x128xf32>
    %585 = arith.mulf %582, %584 : vector<8x128xf32>
    %586 = arith.addf %580, %585 : vector<8x128xf32>
    %c6_314 = arith.constant 6 : index
    %c0_315 = arith.constant 0 : index
    %c0_316 = arith.constant 0 : index
    %587 = vector.load %arg10[%c6_314, %c0_315, %c0_316] : memref<9x8x128xf32, #tpu.memory_space<vmem>>, vector<1x8x128xf32>
    %588 = vector.shape_cast %587 : vector<1x8x128xf32> to vector<8x128xf32>
    %c78 = arith.constant 78 : index
    %589 = memref.load %arg1[%c78] : memref<288xf32, #tpu.memory_space<smem>>
    %590 = vector.broadcast %589 : f32 to vector<8x128xf32>
    %591 = arith.mulf %588, %590 : vector<8x128xf32>
    %592 = arith.addf %586, %591 : vector<8x128xf32>
    %c7_317 = arith.constant 7 : index
    %c0_318 = arith.constant 0 : index
    %c0_319 = arith.constant 0 : index
    %593 = vector.load %arg10[%c7_317, %c0_318, %c0_319] : memref<9x8x128xf32, #tpu.memory_space<vmem>>, vector<1x8x128xf32>
    %594 = vector.shape_cast %593 : vector<1x8x128xf32> to vector<8x128xf32>
    %c79 = arith.constant 79 : index
    %595 = memref.load %arg1[%c79] : memref<288xf32, #tpu.memory_space<smem>>
    %596 = vector.broadcast %595 : f32 to vector<8x128xf32>
    %597 = arith.mulf %594, %596 : vector<8x128xf32>
    %598 = arith.addf %592, %597 : vector<8x128xf32>
    %c8_320 = arith.constant 8 : index
    %c0_321 = arith.constant 0 : index
    %c0_322 = arith.constant 0 : index
    %599 = vector.load %arg10[%c8_320, %c0_321, %c0_322] : memref<9x8x128xf32, #tpu.memory_space<vmem>>, vector<1x8x128xf32>
    %600 = vector.shape_cast %599 : vector<1x8x128xf32> to vector<8x128xf32>
    %c80 = arith.constant 80 : index
    %601 = memref.load %arg1[%c80] : memref<288xf32, #tpu.memory_space<smem>>
    %602 = vector.broadcast %601 : f32 to vector<8x128xf32>
    %603 = arith.mulf %600, %602 : vector<8x128xf32>
    %604 = arith.addf %598, %603 : vector<8x128xf32>
    %c8_323 = arith.constant 8 : index
    %605 = memref.load %arg2[%c8_323] : memref<32xf32, #tpu.memory_space<smem>>
    %606 = vector.broadcast %605 : f32 to vector<8x128xf32>
    %607 = arith.addf %604, %606 : vector<8x128xf32>
    %cst_324 = arith.constant 0.000000e+00 : f32
    %608 = vector.broadcast %cst_324 : f32 to vector<8x128xf32>
    %609 = arith.maximumf %607, %608 : vector<8x128xf32>
    %610 = arith.truncf %609 : vector<8x128xf32> to vector<8x128xbf16>
    %c0_325 = arith.constant 0 : index
    %c1024 = arith.constant 1024 : index
    %611 = vector.load %arg11[%c0_325, %c1024] : memref<8x4096xbf16, #tpu.memory_space<vmem>>, vector<8x128xbf16>
    tpu.vector_store %arg11[%c0_325, %c1024], %610 {strides = array<i32>} : memref<8x4096xbf16, #tpu.memory_space<vmem>>, vector<8x128xbf16>,
    %c0_326 = arith.constant 0 : index
    %c0_327 = arith.constant 0 : index
    %c0_328 = arith.constant 0 : index
    %612 = vector.load %arg10[%c0_326, %c0_327, %c0_328] : memref<9x8x128xf32, #tpu.memory_space<vmem>>, vector<1x8x128xf32>
    %613 = vector.shape_cast %612 : vector<1x8x128xf32> to vector<8x128xf32>
    %c81 = arith.constant 81 : index
    %614 = memref.load %arg1[%c81] : memref<288xf32, #tpu.memory_space<smem>>
    %615 = vector.broadcast %614 : f32 to vector<8x128xf32>
    %616 = arith.mulf %613, %615 : vector<8x128xf32>
    %c1_329 = arith.constant 1 : index
    %c0_330 = arith.constant 0 : index
    %c0_331 = arith.constant 0 : index
    %617 = vector.load %arg10[%c1_329, %c0_330, %c0_331] : memref<9x8x128xf32, #tpu.memory_space<vmem>>, vector<1x8x128xf32>
    %618 = vector.shape_cast %617 : vector<1x8x128xf32> to vector<8x128xf32>
    %c82 = arith.constant 82 : index
    %619 = memref.load %arg1[%c82] : memref<288xf32, #tpu.memory_space<smem>>
    %620 = vector.broadcast %619 : f32 to vector<8x128xf32>
    %621 = arith.mulf %618, %620 : vector<8x128xf32>
    %622 = arith.addf %616, %621 : vector<8x128xf32>
    %c2_332 = arith.constant 2 : index
    %c0_333 = arith.constant 0 : index
    %c0_334 = arith.constant 0 : index
    %623 = vector.load %arg10[%c2_332, %c0_333, %c0_334] : memref<9x8x128xf32, #tpu.memory_space<vmem>>, vector<1x8x128xf32>
    %624 = vector.shape_cast %623 : vector<1x8x128xf32> to vector<8x128xf32>
    %c83 = arith.constant 83 : index
    %625 = memref.load %arg1[%c83] : memref<288xf32, #tpu.memory_space<smem>>
    %626 = vector.broadcast %625 : f32 to vector<8x128xf32>
    %627 = arith.mulf %624, %626 : vector<8x128xf32>
    %628 = arith.addf %622, %627 : vector<8x128xf32>
    %c3_335 = arith.constant 3 : index
    %c0_336 = arith.constant 0 : index
    %c0_337 = arith.constant 0 : index
    %629 = vector.load %arg10[%c3_335, %c0_336, %c0_337] : memref<9x8x128xf32, #tpu.memory_space<vmem>>, vector<1x8x128xf32>
    %630 = vector.shape_cast %629 : vector<1x8x128xf32> to vector<8x128xf32>
    %c84 = arith.constant 84 : index
    %631 = memref.load %arg1[%c84] : memref<288xf32, #tpu.memory_space<smem>>
    %632 = vector.broadcast %631 : f32 to vector<8x128xf32>
    %633 = arith.mulf %630, %632 : vector<8x128xf32>
    %634 = arith.addf %628, %633 : vector<8x128xf32>
    %c4_338 = arith.constant 4 : index
    %c0_339 = arith.constant 0 : index
    %c0_340 = arith.constant 0 : index
    %635 = vector.load %arg10[%c4_338, %c0_339, %c0_340] : memref<9x8x128xf32, #tpu.memory_space<vmem>>, vector<1x8x128xf32>
    %636 = vector.shape_cast %635 : vector<1x8x128xf32> to vector<8x128xf32>
    %c85 = arith.constant 85 : index
    %637 = memref.load %arg1[%c85] : memref<288xf32, #tpu.memory_space<smem>>
    %638 = vector.broadcast %637 : f32 to vector<8x128xf32>
    %639 = arith.mulf %636, %638 : vector<8x128xf32>
    %640 = arith.addf %634, %639 : vector<8x128xf32>
    %c5_341 = arith.constant 5 : index
    %c0_342 = arith.constant 0 : index
    %c0_343 = arith.constant 0 : index
    %641 = vector.load %arg10[%c5_341, %c0_342, %c0_343] : memref<9x8x128xf32, #tpu.memory_space<vmem>>, vector<1x8x128xf32>
    %642 = vector.shape_cast %641 : vector<1x8x128xf32> to vector<8x128xf32>
    %c86 = arith.constant 86 : index
    %643 = memref.load %arg1[%c86] : memref<288xf32, #tpu.memory_space<smem>>
    %644 = vector.broadcast %643 : f32 to vector<8x128xf32>
    %645 = arith.mulf %642, %644 : vector<8x128xf32>
    %646 = arith.addf %640, %645 : vector<8x128xf32>
    %c6_344 = arith.constant 6 : index
    %c0_345 = arith.constant 0 : index
    %c0_346 = arith.constant 0 : index
    %647 = vector.load %arg10[%c6_344, %c0_345, %c0_346] : memref<9x8x128xf32, #tpu.memory_space<vmem>>, vector<1x8x128xf32>
    %648 = vector.shape_cast %647 : vector<1x8x128xf32> to vector<8x128xf32>
    %c87 = arith.constant 87 : index
    %649 = memref.load %arg1[%c87] : memref<288xf32, #tpu.memory_space<smem>>
    %650 = vector.broadcast %649 : f32 to vector<8x128xf32>
    %651 = arith.mulf %648, %650 : vector<8x128xf32>
    %652 = arith.addf %646, %651 : vector<8x128xf32>
    %c7_347 = arith.constant 7 : index
    %c0_348 = arith.constant 0 : index
    %c0_349 = arith.constant 0 : index
    %653 = vector.load %arg10[%c7_347, %c0_348, %c0_349] : memref<9x8x128xf32, #tpu.memory_space<vmem>>, vector<1x8x128xf32>
    %654 = vector.shape_cast %653 : vector<1x8x128xf32> to vector<8x128xf32>
    %c88 = arith.constant 88 : index
    %655 = memref.load %arg1[%c88] : memref<288xf32, #tpu.memory_space<smem>>
    %656 = vector.broadcast %655 : f32 to vector<8x128xf32>
    %657 = arith.mulf %654, %656 : vector<8x128xf32>
    %658 = arith.addf %652, %657 : vector<8x128xf32>
    %c8_350 = arith.constant 8 : index
    %c0_351 = arith.constant 0 : index
    %c0_352 = arith.constant 0 : index
    %659 = vector.load %arg10[%c8_350, %c0_351, %c0_352] : memref<9x8x128xf32, #tpu.memory_space<vmem>>, vector<1x8x128xf32>
    %660 = vector.shape_cast %659 : vector<1x8x128xf32> to vector<8x128xf32>
    %c89 = arith.constant 89 : index
    %661 = memref.load %arg1[%c89] : memref<288xf32, #tpu.memory_space<smem>>
    %662 = vector.broadcast %661 : f32 to vector<8x128xf32>
    %663 = arith.mulf %660, %662 : vector<8x128xf32>
    %664 = arith.addf %658, %663 : vector<8x128xf32>
    %c9_353 = arith.constant 9 : index
    %665 = memref.load %arg2[%c9_353] : memref<32xf32, #tpu.memory_space<smem>>
    %666 = vector.broadcast %665 : f32 to vector<8x128xf32>
    %667 = arith.addf %664, %666 : vector<8x128xf32>
    %cst_354 = arith.constant 0.000000e+00 : f32
    %668 = vector.broadcast %cst_354 : f32 to vector<8x128xf32>
    %669 = arith.maximumf %667, %668 : vector<8x128xf32>
    %670 = arith.truncf %669 : vector<8x128xf32> to vector<8x128xbf16>
    %c0_355 = arith.constant 0 : index
    %c1152 = arith.constant 1152 : index
    %671 = vector.load %arg11[%c0_355, %c1152] : memref<8x4096xbf16, #tpu.memory_space<vmem>>, vector<8x128xbf16>
    tpu.vector_store %arg11[%c0_355, %c1152], %670 {strides = array<i32>} : memref<8x4096xbf16, #tpu.memory_space<vmem>>, vector<8x128xbf16>,
    %c0_356 = arith.constant 0 : index
    %c0_357 = arith.constant 0 : index
    %c0_358 = arith.constant 0 : index
    %672 = vector.load %arg10[%c0_356, %c0_357, %c0_358] : memref<9x8x128xf32, #tpu.memory_space<vmem>>, vector<1x8x128xf32>
    %673 = vector.shape_cast %672 : vector<1x8x128xf32> to vector<8x128xf32>
    %c90 = arith.constant 90 : index
    %674 = memref.load %arg1[%c90] : memref<288xf32, #tpu.memory_space<smem>>
    %675 = vector.broadcast %674 : f32 to vector<8x128xf32>
    %676 = arith.mulf %673, %675 : vector<8x128xf32>
    %c1_359 = arith.constant 1 : index
    %c0_360 = arith.constant 0 : index
    %c0_361 = arith.constant 0 : index
    %677 = vector.load %arg10[%c1_359, %c0_360, %c0_361] : memref<9x8x128xf32, #tpu.memory_space<vmem>>, vector<1x8x128xf32>
    %678 = vector.shape_cast %677 : vector<1x8x128xf32> to vector<8x128xf32>
    %c91 = arith.constant 91 : index
    %679 = memref.load %arg1[%c91] : memref<288xf32, #tpu.memory_space<smem>>
    %680 = vector.broadcast %679 : f32 to vector<8x128xf32>
    %681 = arith.mulf %678, %680 : vector<8x128xf32>
    %682 = arith.addf %676, %681 : vector<8x128xf32>
    %c2_362 = arith.constant 2 : index
    %c0_363 = arith.constant 0 : index
    %c0_364 = arith.constant 0 : index
    %683 = vector.load %arg10[%c2_362, %c0_363, %c0_364] : memref<9x8x128xf32, #tpu.memory_space<vmem>>, vector<1x8x128xf32>
    %684 = vector.shape_cast %683 : vector<1x8x128xf32> to vector<8x128xf32>
    %c92 = arith.constant 92 : index
    %685 = memref.load %arg1[%c92] : memref<288xf32, #tpu.memory_space<smem>>
    %686 = vector.broadcast %685 : f32 to vector<8x128xf32>
    %687 = arith.mulf %684, %686 : vector<8x128xf32>
    %688 = arith.addf %682, %687 : vector<8x128xf32>
    %c3_365 = arith.constant 3 : index
    %c0_366 = arith.constant 0 : index
    %c0_367 = arith.constant 0 : index
    %689 = vector.load %arg10[%c3_365, %c0_366, %c0_367] : memref<9x8x128xf32, #tpu.memory_space<vmem>>, vector<1x8x128xf32>
    %690 = vector.shape_cast %689 : vector<1x8x128xf32> to vector<8x128xf32>
    %c93 = arith.constant 93 : index
    %691 = memref.load %arg1[%c93] : memref<288xf32, #tpu.memory_space<smem>>
    %692 = vector.broadcast %691 : f32 to vector<8x128xf32>
    %693 = arith.mulf %690, %692 : vector<8x128xf32>
    %694 = arith.addf %688, %693 : vector<8x128xf32>
    %c4_368 = arith.constant 4 : index
    %c0_369 = arith.constant 0 : index
    %c0_370 = arith.constant 0 : index
    %695 = vector.load %arg10[%c4_368, %c0_369, %c0_370] : memref<9x8x128xf32, #tpu.memory_space<vmem>>, vector<1x8x128xf32>
    %696 = vector.shape_cast %695 : vector<1x8x128xf32> to vector<8x128xf32>
    %c94 = arith.constant 94 : index
    %697 = memref.load %arg1[%c94] : memref<288xf32, #tpu.memory_space<smem>>
    %698 = vector.broadcast %697 : f32 to vector<8x128xf32>
    %699 = arith.mulf %696, %698 : vector<8x128xf32>
    %700 = arith.addf %694, %699 : vector<8x128xf32>
    %c5_371 = arith.constant 5 : index
    %c0_372 = arith.constant 0 : index
    %c0_373 = arith.constant 0 : index
    %701 = vector.load %arg10[%c5_371, %c0_372, %c0_373] : memref<9x8x128xf32, #tpu.memory_space<vmem>>, vector<1x8x128xf32>
    %702 = vector.shape_cast %701 : vector<1x8x128xf32> to vector<8x128xf32>
    %c95 = arith.constant 95 : index
    %703 = memref.load %arg1[%c95] : memref<288xf32, #tpu.memory_space<smem>>
    %704 = vector.broadcast %703 : f32 to vector<8x128xf32>
    %705 = arith.mulf %702, %704 : vector<8x128xf32>
    %706 = arith.addf %700, %705 : vector<8x128xf32>
    %c6_374 = arith.constant 6 : index
    %c0_375 = arith.constant 0 : index
    %c0_376 = arith.constant 0 : index
    %707 = vector.load %arg10[%c6_374, %c0_375, %c0_376] : memref<9x8x128xf32, #tpu.memory_space<vmem>>, vector<1x8x128xf32>
    %708 = vector.shape_cast %707 : vector<1x8x128xf32> to vector<8x128xf32>
    %c96 = arith.constant 96 : index
    %709 = memref.load %arg1[%c96] : memref<288xf32, #tpu.memory_space<smem>>
    %710 = vector.broadcast %709 : f32 to vector<8x128xf32>
    %711 = arith.mulf %708, %710 : vector<8x128xf32>
    %712 = arith.addf %706, %711 : vector<8x128xf32>
    %c7_377 = arith.constant 7 : index
    %c0_378 = arith.constant 0 : index
    %c0_379 = arith.constant 0 : index
    %713 = vector.load %arg10[%c7_377, %c0_378, %c0_379] : memref<9x8x128xf32, #tpu.memory_space<vmem>>, vector<1x8x128xf32>
    %714 = vector.shape_cast %713 : vector<1x8x128xf32> to vector<8x128xf32>
    %c97 = arith.constant 97 : index
    %715 = memref.load %arg1[%c97] : memref<288xf32, #tpu.memory_space<smem>>
    %716 = vector.broadcast %715 : f32 to vector<8x128xf32>
    %717 = arith.mulf %714, %716 : vector<8x128xf32>
    %718 = arith.addf %712, %717 : vector<8x128xf32>
    %c8_380 = arith.constant 8 : index
    %c0_381 = arith.constant 0 : index
    %c0_382 = arith.constant 0 : index
    %719 = vector.load %arg10[%c8_380, %c0_381, %c0_382] : memref<9x8x128xf32, #tpu.memory_space<vmem>>, vector<1x8x128xf32>
    %720 = vector.shape_cast %719 : vector<1x8x128xf32> to vector<8x128xf32>
    %c98 = arith.constant 98 : index
    %721 = memref.load %arg1[%c98] : memref<288xf32, #tpu.memory_space<smem>>
    %722 = vector.broadcast %721 : f32 to vector<8x128xf32>
    %723 = arith.mulf %720, %722 : vector<8x128xf32>
    %724 = arith.addf %718, %723 : vector<8x128xf32>
    %c10_383 = arith.constant 10 : index
    %725 = memref.load %arg2[%c10_383] : memref<32xf32, #tpu.memory_space<smem>>
    %726 = vector.broadcast %725 : f32 to vector<8x128xf32>
    %727 = arith.addf %724, %726 : vector<8x128xf32>
    %cst_384 = arith.constant 0.000000e+00 : f32
    %728 = vector.broadcast %cst_384 : f32 to vector<8x128xf32>
    %729 = arith.maximumf %727, %728 : vector<8x128xf32>
    %730 = arith.truncf %729 : vector<8x128xf32> to vector<8x128xbf16>
    %c0_385 = arith.constant 0 : index
    %c1280 = arith.constant 1280 : index
    %731 = vector.load %arg11[%c0_385, %c1280] : memref<8x4096xbf16, #tpu.memory_space<vmem>>, vector<8x128xbf16>
    tpu.vector_store %arg11[%c0_385, %c1280], %730 {strides = array<i32>} : memref<8x4096xbf16, #tpu.memory_space<vmem>>, vector<8x128xbf16>,
    %c0_386 = arith.constant 0 : index
    %c0_387 = arith.constant 0 : index
    %c0_388 = arith.constant 0 : index
    %732 = vector.load %arg10[%c0_386, %c0_387, %c0_388] : memref<9x8x128xf32, #tpu.memory_space<vmem>>, vector<1x8x128xf32>
    %733 = vector.shape_cast %732 : vector<1x8x128xf32> to vector<8x128xf32>
    %c99 = arith.constant 99 : index
    %734 = memref.load %arg1[%c99] : memref<288xf32, #tpu.memory_space<smem>>
    %735 = vector.broadcast %734 : f32 to vector<8x128xf32>
    %736 = arith.mulf %733, %735 : vector<8x128xf32>
    %c1_389 = arith.constant 1 : index
    %c0_390 = arith.constant 0 : index
    %c0_391 = arith.constant 0 : index
    %737 = vector.load %arg10[%c1_389, %c0_390, %c0_391] : memref<9x8x128xf32, #tpu.memory_space<vmem>>, vector<1x8x128xf32>
    %738 = vector.shape_cast %737 : vector<1x8x128xf32> to vector<8x128xf32>
    %c100 = arith.constant 100 : index
    %739 = memref.load %arg1[%c100] : memref<288xf32, #tpu.memory_space<smem>>
    %740 = vector.broadcast %739 : f32 to vector<8x128xf32>
    %741 = arith.mulf %738, %740 : vector<8x128xf32>
    %742 = arith.addf %736, %741 : vector<8x128xf32>
    %c2_392 = arith.constant 2 : index
    %c0_393 = arith.constant 0 : index
    %c0_394 = arith.constant 0 : index
    %743 = vector.load %arg10[%c2_392, %c0_393, %c0_394] : memref<9x8x128xf32, #tpu.memory_space<vmem>>, vector<1x8x128xf32>
    %744 = vector.shape_cast %743 : vector<1x8x128xf32> to vector<8x128xf32>
    %c101 = arith.constant 101 : index
    %745 = memref.load %arg1[%c101] : memref<288xf32, #tpu.memory_space<smem>>
    %746 = vector.broadcast %745 : f32 to vector<8x128xf32>
    %747 = arith.mulf %744, %746 : vector<8x128xf32>
    %748 = arith.addf %742, %747 : vector<8x128xf32>
    %c3_395 = arith.constant 3 : index
    %c0_396 = arith.constant 0 : index
    %c0_397 = arith.constant 0 : index
    %749 = vector.load %arg10[%c3_395, %c0_396, %c0_397] : memref<9x8x128xf32, #tpu.memory_space<vmem>>, vector<1x8x128xf32>
    %750 = vector.shape_cast %749 : vector<1x8x128xf32> to vector<8x128xf32>
    %c102 = arith.constant 102 : index
    %751 = memref.load %arg1[%c102] : memref<288xf32, #tpu.memory_space<smem>>
    %752 = vector.broadcast %751 : f32 to vector<8x128xf32>
    %753 = arith.mulf %750, %752 : vector<8x128xf32>
    %754 = arith.addf %748, %753 : vector<8x128xf32>
    %c4_398 = arith.constant 4 : index
    %c0_399 = arith.constant 0 : index
    %c0_400 = arith.constant 0 : index
    %755 = vector.load %arg10[%c4_398, %c0_399, %c0_400] : memref<9x8x128xf32, #tpu.memory_space<vmem>>, vector<1x8x128xf32>
    %756 = vector.shape_cast %755 : vector<1x8x128xf32> to vector<8x128xf32>
    %c103 = arith.constant 103 : index
    %757 = memref.load %arg1[%c103] : memref<288xf32, #tpu.memory_space<smem>>
    %758 = vector.broadcast %757 : f32 to vector<8x128xf32>
    %759 = arith.mulf %756, %758 : vector<8x128xf32>
    %760 = arith.addf %754, %759 : vector<8x128xf32>
    %c5_401 = arith.constant 5 : index
    %c0_402 = arith.constant 0 : index
    %c0_403 = arith.constant 0 : index
    %761 = vector.load %arg10[%c5_401, %c0_402, %c0_403] : memref<9x8x128xf32, #tpu.memory_space<vmem>>, vector<1x8x128xf32>
    %762 = vector.shape_cast %761 : vector<1x8x128xf32> to vector<8x128xf32>
    %c104 = arith.constant 104 : index
    %763 = memref.load %arg1[%c104] : memref<288xf32, #tpu.memory_space<smem>>
    %764 = vector.broadcast %763 : f32 to vector<8x128xf32>
    %765 = arith.mulf %762, %764 : vector<8x128xf32>
    %766 = arith.addf %760, %765 : vector<8x128xf32>
    %c6_404 = arith.constant 6 : index
    %c0_405 = arith.constant 0 : index
    %c0_406 = arith.constant 0 : index
    %767 = vector.load %arg10[%c6_404, %c0_405, %c0_406] : memref<9x8x128xf32, #tpu.memory_space<vmem>>, vector<1x8x128xf32>
    %768 = vector.shape_cast %767 : vector<1x8x128xf32> to vector<8x128xf32>
    %c105 = arith.constant 105 : index
    %769 = memref.load %arg1[%c105] : memref<288xf32, #tpu.memory_space<smem>>
    %770 = vector.broadcast %769 : f32 to vector<8x128xf32>
    %771 = arith.mulf %768, %770 : vector<8x128xf32>
    %772 = arith.addf %766, %771 : vector<8x128xf32>
    %c7_407 = arith.constant 7 : index
    %c0_408 = arith.constant 0 : index
    %c0_409 = arith.constant 0 : index
    %773 = vector.load %arg10[%c7_407, %c0_408, %c0_409] : memref<9x8x128xf32, #tpu.memory_space<vmem>>, vector<1x8x128xf32>
    %774 = vector.shape_cast %773 : vector<1x8x128xf32> to vector<8x128xf32>
    %c106 = arith.constant 106 : index
    %775 = memref.load %arg1[%c106] : memref<288xf32, #tpu.memory_space<smem>>
    %776 = vector.broadcast %775 : f32 to vector<8x128xf32>
    %777 = arith.mulf %774, %776 : vector<8x128xf32>
    %778 = arith.addf %772, %777 : vector<8x128xf32>
    %c8_410 = arith.constant 8 : index
    %c0_411 = arith.constant 0 : index
    %c0_412 = arith.constant 0 : index
    %779 = vector.load %arg10[%c8_410, %c0_411, %c0_412] : memref<9x8x128xf32, #tpu.memory_space<vmem>>, vector<1x8x128xf32>
    %780 = vector.shape_cast %779 : vector<1x8x128xf32> to vector<8x128xf32>
    %c107 = arith.constant 107 : index
    %781 = memref.load %arg1[%c107] : memref<288xf32, #tpu.memory_space<smem>>
    %782 = vector.broadcast %781 : f32 to vector<8x128xf32>
    %783 = arith.mulf %780, %782 : vector<8x128xf32>
    %784 = arith.addf %778, %783 : vector<8x128xf32>
    %c11_413 = arith.constant 11 : index
    %785 = memref.load %arg2[%c11_413] : memref<32xf32, #tpu.memory_space<smem>>
    %786 = vector.broadcast %785 : f32 to vector<8x128xf32>
    %787 = arith.addf %784, %786 : vector<8x128xf32>
    %cst_414 = arith.constant 0.000000e+00 : f32
    %788 = vector.broadcast %cst_414 : f32 to vector<8x128xf32>
    %789 = arith.maximumf %787, %788 : vector<8x128xf32>
    %790 = arith.truncf %789 : vector<8x128xf32> to vector<8x128xbf16>
    %c0_415 = arith.constant 0 : index
    %c1408 = arith.constant 1408 : index
    %791 = vector.load %arg11[%c0_415, %c1408] : memref<8x4096xbf16, #tpu.memory_space<vmem>>, vector<8x128xbf16>
    tpu.vector_store %arg11[%c0_415, %c1408], %790 {strides = array<i32>} : memref<8x4096xbf16, #tpu.memory_space<vmem>>, vector<8x128xbf16>,
    %c0_416 = arith.constant 0 : index
    %c0_417 = arith.constant 0 : index
    %c0_418 = arith.constant 0 : index
    %792 = vector.load %arg10[%c0_416, %c0_417, %c0_418] : memref<9x8x128xf32, #tpu.memory_space<vmem>>, vector<1x8x128xf32>
    %793 = vector.shape_cast %792 : vector<1x8x128xf32> to vector<8x128xf32>
    %c108 = arith.constant 108 : index
    %794 = memref.load %arg1[%c108] : memref<288xf32, #tpu.memory_space<smem>>
    %795 = vector.broadcast %794 : f32 to vector<8x128xf32>
    %796 = arith.mulf %793, %795 : vector<8x128xf32>
    %c1_419 = arith.constant 1 : index
    %c0_420 = arith.constant 0 : index
    %c0_421 = arith.constant 0 : index
    %797 = vector.load %arg10[%c1_419, %c0_420, %c0_421] : memref<9x8x128xf32, #tpu.memory_space<vmem>>, vector<1x8x128xf32>
    %798 = vector.shape_cast %797 : vector<1x8x128xf32> to vector<8x128xf32>
    %c109 = arith.constant 109 : index
    %799 = memref.load %arg1[%c109] : memref<288xf32, #tpu.memory_space<smem>>
    %800 = vector.broadcast %799 : f32 to vector<8x128xf32>
    %801 = arith.mulf %798, %800 : vector<8x128xf32>
    %802 = arith.addf %796, %801 : vector<8x128xf32>
    %c2_422 = arith.constant 2 : index
    %c0_423 = arith.constant 0 : index
    %c0_424 = arith.constant 0 : index
    %803 = vector.load %arg10[%c2_422, %c0_423, %c0_424] : memref<9x8x128xf32, #tpu.memory_space<vmem>>, vector<1x8x128xf32>
    %804 = vector.shape_cast %803 : vector<1x8x128xf32> to vector<8x128xf32>
    %c110 = arith.constant 110 : index
    %805 = memref.load %arg1[%c110] : memref<288xf32, #tpu.memory_space<smem>>
    %806 = vector.broadcast %805 : f32 to vector<8x128xf32>
    %807 = arith.mulf %804, %806 : vector<8x128xf32>
    %808 = arith.addf %802, %807 : vector<8x128xf32>
    %c3_425 = arith.constant 3 : index
    %c0_426 = arith.constant 0 : index
    %c0_427 = arith.constant 0 : index
    %809 = vector.load %arg10[%c3_425, %c0_426, %c0_427] : memref<9x8x128xf32, #tpu.memory_space<vmem>>, vector<1x8x128xf32>
    %810 = vector.shape_cast %809 : vector<1x8x128xf32> to vector<8x128xf32>
    %c111 = arith.constant 111 : index
    %811 = memref.load %arg1[%c111] : memref<288xf32, #tpu.memory_space<smem>>
    %812 = vector.broadcast %811 : f32 to vector<8x128xf32>
    %813 = arith.mulf %810, %812 : vector<8x128xf32>
    %814 = arith.addf %808, %813 : vector<8x128xf32>
    %c4_428 = arith.constant 4 : index
    %c0_429 = arith.constant 0 : index
    %c0_430 = arith.constant 0 : index
    %815 = vector.load %arg10[%c4_428, %c0_429, %c0_430] : memref<9x8x128xf32, #tpu.memory_space<vmem>>, vector<1x8x128xf32>
    %816 = vector.shape_cast %815 : vector<1x8x128xf32> to vector<8x128xf32>
    %c112 = arith.constant 112 : index
    %817 = memref.load %arg1[%c112] : memref<288xf32, #tpu.memory_space<smem>>
    %818 = vector.broadcast %817 : f32 to vector<8x128xf32>
    %819 = arith.mulf %816, %818 : vector<8x128xf32>
    %820 = arith.addf %814, %819 : vector<8x128xf32>
    %c5_431 = arith.constant 5 : index
    %c0_432 = arith.constant 0 : index
    %c0_433 = arith.constant 0 : index
    %821 = vector.load %arg10[%c5_431, %c0_432, %c0_433] : memref<9x8x128xf32, #tpu.memory_space<vmem>>, vector<1x8x128xf32>
    %822 = vector.shape_cast %821 : vector<1x8x128xf32> to vector<8x128xf32>
    %c113 = arith.constant 113 : index
    %823 = memref.load %arg1[%c113] : memref<288xf32, #tpu.memory_space<smem>>
    %824 = vector.broadcast %823 : f32 to vector<8x128xf32>
    %825 = arith.mulf %822, %824 : vector<8x128xf32>
    %826 = arith.addf %820, %825 : vector<8x128xf32>
    %c6_434 = arith.constant 6 : index
    %c0_435 = arith.constant 0 : index
    %c0_436 = arith.constant 0 : index
    %827 = vector.load %arg10[%c6_434, %c0_435, %c0_436] : memref<9x8x128xf32, #tpu.memory_space<vmem>>, vector<1x8x128xf32>
    %828 = vector.shape_cast %827 : vector<1x8x128xf32> to vector<8x128xf32>
    %c114 = arith.constant 114 : index
    %829 = memref.load %arg1[%c114] : memref<288xf32, #tpu.memory_space<smem>>
    %830 = vector.broadcast %829 : f32 to vector<8x128xf32>
    %831 = arith.mulf %828, %830 : vector<8x128xf32>
    %832 = arith.addf %826, %831 : vector<8x128xf32>
    %c7_437 = arith.constant 7 : index
    %c0_438 = arith.constant 0 : index
    %c0_439 = arith.constant 0 : index
    %833 = vector.load %arg10[%c7_437, %c0_438, %c0_439] : memref<9x8x128xf32, #tpu.memory_space<vmem>>, vector<1x8x128xf32>
    %834 = vector.shape_cast %833 : vector<1x8x128xf32> to vector<8x128xf32>
    %c115 = arith.constant 115 : index
    %835 = memref.load %arg1[%c115] : memref<288xf32, #tpu.memory_space<smem>>
    %836 = vector.broadcast %835 : f32 to vector<8x128xf32>
    %837 = arith.mulf %834, %836 : vector<8x128xf32>
    %838 = arith.addf %832, %837 : vector<8x128xf32>
    %c8_440 = arith.constant 8 : index
    %c0_441 = arith.constant 0 : index
    %c0_442 = arith.constant 0 : index
    %839 = vector.load %arg10[%c8_440, %c0_441, %c0_442] : memref<9x8x128xf32, #tpu.memory_space<vmem>>, vector<1x8x128xf32>
    %840 = vector.shape_cast %839 : vector<1x8x128xf32> to vector<8x128xf32>
    %c116 = arith.constant 116 : index
    %841 = memref.load %arg1[%c116] : memref<288xf32, #tpu.memory_space<smem>>
    %842 = vector.broadcast %841 : f32 to vector<8x128xf32>
    %843 = arith.mulf %840, %842 : vector<8x128xf32>
    %844 = arith.addf %838, %843 : vector<8x128xf32>
    %c12_443 = arith.constant 12 : index
    %845 = memref.load %arg2[%c12_443] : memref<32xf32, #tpu.memory_space<smem>>
    %846 = vector.broadcast %845 : f32 to vector<8x128xf32>
    %847 = arith.addf %844, %846 : vector<8x128xf32>
    %cst_444 = arith.constant 0.000000e+00 : f32
    %848 = vector.broadcast %cst_444 : f32 to vector<8x128xf32>
    %849 = arith.maximumf %847, %848 : vector<8x128xf32>
    %850 = arith.truncf %849 : vector<8x128xf32> to vector<8x128xbf16>
    %c0_445 = arith.constant 0 : index
    %c1536 = arith.constant 1536 : index
    %851 = vector.load %arg11[%c0_445, %c1536] : memref<8x4096xbf16, #tpu.memory_space<vmem>>, vector<8x128xbf16>
    tpu.vector_store %arg11[%c0_445, %c1536], %850 {strides = array<i32>} : memref<8x4096xbf16, #tpu.memory_space<vmem>>, vector<8x128xbf16>,
    %c0_446 = arith.constant 0 : index
    %c0_447 = arith.constant 0 : index
    %c0_448 = arith.constant 0 : index
    %852 = vector.load %arg10[%c0_446, %c0_447, %c0_448] : memref<9x8x128xf32, #tpu.memory_space<vmem>>, vector<1x8x128xf32>
    %853 = vector.shape_cast %852 : vector<1x8x128xf32> to vector<8x128xf32>
    %c117 = arith.constant 117 : index
    %854 = memref.load %arg1[%c117] : memref<288xf32, #tpu.memory_space<smem>>
    %855 = vector.broadcast %854 : f32 to vector<8x128xf32>
    %856 = arith.mulf %853, %855 : vector<8x128xf32>
    %c1_449 = arith.constant 1 : index
    %c0_450 = arith.constant 0 : index
    %c0_451 = arith.constant 0 : index
    %857 = vector.load %arg10[%c1_449, %c0_450, %c0_451] : memref<9x8x128xf32, #tpu.memory_space<vmem>>, vector<1x8x128xf32>
    %858 = vector.shape_cast %857 : vector<1x8x128xf32> to vector<8x128xf32>
    %c118 = arith.constant 118 : index
    %859 = memref.load %arg1[%c118] : memref<288xf32, #tpu.memory_space<smem>>
    %860 = vector.broadcast %859 : f32 to vector<8x128xf32>
    %861 = arith.mulf %858, %860 : vector<8x128xf32>
    %862 = arith.addf %856, %861 : vector<8x128xf32>
    %c2_452 = arith.constant 2 : index
    %c0_453 = arith.constant 0 : index
    %c0_454 = arith.constant 0 : index
    %863 = vector.load %arg10[%c2_452, %c0_453, %c0_454] : memref<9x8x128xf32, #tpu.memory_space<vmem>>, vector<1x8x128xf32>
    %864 = vector.shape_cast %863 : vector<1x8x128xf32> to vector<8x128xf32>
    %c119 = arith.constant 119 : index
    %865 = memref.load %arg1[%c119] : memref<288xf32, #tpu.memory_space<smem>>
    %866 = vector.broadcast %865 : f32 to vector<8x128xf32>
    %867 = arith.mulf %864, %866 : vector<8x128xf32>
    %868 = arith.addf %862, %867 : vector<8x128xf32>
    %c3_455 = arith.constant 3 : index
    %c0_456 = arith.constant 0 : index
    %c0_457 = arith.constant 0 : index
    %869 = vector.load %arg10[%c3_455, %c0_456, %c0_457] : memref<9x8x128xf32, #tpu.memory_space<vmem>>, vector<1x8x128xf32>
    %870 = vector.shape_cast %869 : vector<1x8x128xf32> to vector<8x128xf32>
    %c120 = arith.constant 120 : index
    %871 = memref.load %arg1[%c120] : memref<288xf32, #tpu.memory_space<smem>>
    %872 = vector.broadcast %871 : f32 to vector<8x128xf32>
    %873 = arith.mulf %870, %872 : vector<8x128xf32>
    %874 = arith.addf %868, %873 : vector<8x128xf32>
    %c4_458 = arith.constant 4 : index
    %c0_459 = arith.constant 0 : index
    %c0_460 = arith.constant 0 : index
    %875 = vector.load %arg10[%c4_458, %c0_459, %c0_460] : memref<9x8x128xf32, #tpu.memory_space<vmem>>, vector<1x8x128xf32>
    %876 = vector.shape_cast %875 : vector<1x8x128xf32> to vector<8x128xf32>
    %c121 = arith.constant 121 : index
    %877 = memref.load %arg1[%c121] : memref<288xf32, #tpu.memory_space<smem>>
    %878 = vector.broadcast %877 : f32 to vector<8x128xf32>
    %879 = arith.mulf %876, %878 : vector<8x128xf32>
    %880 = arith.addf %874, %879 : vector<8x128xf32>
    %c5_461 = arith.constant 5 : index
    %c0_462 = arith.constant 0 : index
    %c0_463 = arith.constant 0 : index
    %881 = vector.load %arg10[%c5_461, %c0_462, %c0_463] : memref<9x8x128xf32, #tpu.memory_space<vmem>>, vector<1x8x128xf32>
    %882 = vector.shape_cast %881 : vector<1x8x128xf32> to vector<8x128xf32>
    %c122 = arith.constant 122 : index
    %883 = memref.load %arg1[%c122] : memref<288xf32, #tpu.memory_space<smem>>
    %884 = vector.broadcast %883 : f32 to vector<8x128xf32>
    %885 = arith.mulf %882, %884 : vector<8x128xf32>
    %886 = arith.addf %880, %885 : vector<8x128xf32>
    %c6_464 = arith.constant 6 : index
    %c0_465 = arith.constant 0 : index
    %c0_466 = arith.constant 0 : index
    %887 = vector.load %arg10[%c6_464, %c0_465, %c0_466] : memref<9x8x128xf32, #tpu.memory_space<vmem>>, vector<1x8x128xf32>
    %888 = vector.shape_cast %887 : vector<1x8x128xf32> to vector<8x128xf32>
    %c123 = arith.constant 123 : index
    %889 = memref.load %arg1[%c123] : memref<288xf32, #tpu.memory_space<smem>>
    %890 = vector.broadcast %889 : f32 to vector<8x128xf32>
    %891 = arith.mulf %888, %890 : vector<8x128xf32>
    %892 = arith.addf %886, %891 : vector<8x128xf32>
    %c7_467 = arith.constant 7 : index
    %c0_468 = arith.constant 0 : index
    %c0_469 = arith.constant 0 : index
    %893 = vector.load %arg10[%c7_467, %c0_468, %c0_469] : memref<9x8x128xf32, #tpu.memory_space<vmem>>, vector<1x8x128xf32>
    %894 = vector.shape_cast %893 : vector<1x8x128xf32> to vector<8x128xf32>
    %c124 = arith.constant 124 : index
    %895 = memref.load %arg1[%c124] : memref<288xf32, #tpu.memory_space<smem>>
    %896 = vector.broadcast %895 : f32 to vector<8x128xf32>
    %897 = arith.mulf %894, %896 : vector<8x128xf32>
    %898 = arith.addf %892, %897 : vector<8x128xf32>
    %c8_470 = arith.constant 8 : index
    %c0_471 = arith.constant 0 : index
    %c0_472 = arith.constant 0 : index
    %899 = vector.load %arg10[%c8_470, %c0_471, %c0_472] : memref<9x8x128xf32, #tpu.memory_space<vmem>>, vector<1x8x128xf32>
    %900 = vector.shape_cast %899 : vector<1x8x128xf32> to vector<8x128xf32>
    %c125 = arith.constant 125 : index
    %901 = memref.load %arg1[%c125] : memref<288xf32, #tpu.memory_space<smem>>
    %902 = vector.broadcast %901 : f32 to vector<8x128xf32>
    %903 = arith.mulf %900, %902 : vector<8x128xf32>
    %904 = arith.addf %898, %903 : vector<8x128xf32>
    %c13_473 = arith.constant 13 : index
    %905 = memref.load %arg2[%c13_473] : memref<32xf32, #tpu.memory_space<smem>>
    %906 = vector.broadcast %905 : f32 to vector<8x128xf32>
    %907 = arith.addf %904, %906 : vector<8x128xf32>
    %cst_474 = arith.constant 0.000000e+00 : f32
    %908 = vector.broadcast %cst_474 : f32 to vector<8x128xf32>
    %909 = arith.maximumf %907, %908 : vector<8x128xf32>
    %910 = arith.truncf %909 : vector<8x128xf32> to vector<8x128xbf16>
    %c0_475 = arith.constant 0 : index
    %c1664 = arith.constant 1664 : index
    %911 = vector.load %arg11[%c0_475, %c1664] : memref<8x4096xbf16, #tpu.memory_space<vmem>>, vector<8x128xbf16>
    tpu.vector_store %arg11[%c0_475, %c1664], %910 {strides = array<i32>} : memref<8x4096xbf16, #tpu.memory_space<vmem>>, vector<8x128xbf16>,
    %c0_476 = arith.constant 0 : index
    %c0_477 = arith.constant 0 : index
    %c0_478 = arith.constant 0 : index
    %912 = vector.load %arg10[%c0_476, %c0_477, %c0_478] : memref<9x8x128xf32, #tpu.memory_space<vmem>>, vector<1x8x128xf32>
    %913 = vector.shape_cast %912 : vector<1x8x128xf32> to vector<8x128xf32>
    %c126 = arith.constant 126 : index
    %914 = memref.load %arg1[%c126] : memref<288xf32, #tpu.memory_space<smem>>
    %915 = vector.broadcast %914 : f32 to vector<8x128xf32>
    %916 = arith.mulf %913, %915 : vector<8x128xf32>
    %c1_479 = arith.constant 1 : index
    %c0_480 = arith.constant 0 : index
    %c0_481 = arith.constant 0 : index
    %917 = vector.load %arg10[%c1_479, %c0_480, %c0_481] : memref<9x8x128xf32, #tpu.memory_space<vmem>>, vector<1x8x128xf32>
    %918 = vector.shape_cast %917 : vector<1x8x128xf32> to vector<8x128xf32>
    %c127 = arith.constant 127 : index
    %919 = memref.load %arg1[%c127] : memref<288xf32, #tpu.memory_space<smem>>
    %920 = vector.broadcast %919 : f32 to vector<8x128xf32>
    %921 = arith.mulf %918, %920 : vector<8x128xf32>
    %922 = arith.addf %916, %921 : vector<8x128xf32>
    %c2_482 = arith.constant 2 : index
    %c0_483 = arith.constant 0 : index
    %c0_484 = arith.constant 0 : index
    %923 = vector.load %arg10[%c2_482, %c0_483, %c0_484] : memref<9x8x128xf32, #tpu.memory_space<vmem>>, vector<1x8x128xf32>
    %924 = vector.shape_cast %923 : vector<1x8x128xf32> to vector<8x128xf32>
    %c128_485 = arith.constant 128 : index
    %925 = memref.load %arg1[%c128_485] : memref<288xf32, #tpu.memory_space<smem>>
    %926 = vector.broadcast %925 : f32 to vector<8x128xf32>
    %927 = arith.mulf %924, %926 : vector<8x128xf32>
    %928 = arith.addf %922, %927 : vector<8x128xf32>
    %c3_486 = arith.constant 3 : index
    %c0_487 = arith.constant 0 : index
    %c0_488 = arith.constant 0 : index
    %929 = vector.load %arg10[%c3_486, %c0_487, %c0_488] : memref<9x8x128xf32, #tpu.memory_space<vmem>>, vector<1x8x128xf32>
    %930 = vector.shape_cast %929 : vector<1x8x128xf32> to vector<8x128xf32>
    %c129 = arith.constant 129 : index
    %931 = memref.load %arg1[%c129] : memref<288xf32, #tpu.memory_space<smem>>
    %932 = vector.broadcast %931 : f32 to vector<8x128xf32>
    %933 = arith.mulf %930, %932 : vector<8x128xf32>
    %934 = arith.addf %928, %933 : vector<8x128xf32>
    %c4_489 = arith.constant 4 : index
    %c0_490 = arith.constant 0 : index
    %c0_491 = arith.constant 0 : index
    %935 = vector.load %arg10[%c4_489, %c0_490, %c0_491] : memref<9x8x128xf32, #tpu.memory_space<vmem>>, vector<1x8x128xf32>
    %936 = vector.shape_cast %935 : vector<1x8x128xf32> to vector<8x128xf32>
    %c130 = arith.constant 130 : index
    %937 = memref.load %arg1[%c130] : memref<288xf32, #tpu.memory_space<smem>>
    %938 = vector.broadcast %937 : f32 to vector<8x128xf32>
    %939 = arith.mulf %936, %938 : vector<8x128xf32>
    %940 = arith.addf %934, %939 : vector<8x128xf32>
    %c5_492 = arith.constant 5 : index
    %c0_493 = arith.constant 0 : index
    %c0_494 = arith.constant 0 : index
    %941 = vector.load %arg10[%c5_492, %c0_493, %c0_494] : memref<9x8x128xf32, #tpu.memory_space<vmem>>, vector<1x8x128xf32>
    %942 = vector.shape_cast %941 : vector<1x8x128xf32> to vector<8x128xf32>
    %c131 = arith.constant 131 : index
    %943 = memref.load %arg1[%c131] : memref<288xf32, #tpu.memory_space<smem>>
    %944 = vector.broadcast %943 : f32 to vector<8x128xf32>
    %945 = arith.mulf %942, %944 : vector<8x128xf32>
    %946 = arith.addf %940, %945 : vector<8x128xf32>
    %c6_495 = arith.constant 6 : index
    %c0_496 = arith.constant 0 : index
    %c0_497 = arith.constant 0 : index
    %947 = vector.load %arg10[%c6_495, %c0_496, %c0_497] : memref<9x8x128xf32, #tpu.memory_space<vmem>>, vector<1x8x128xf32>
    %948 = vector.shape_cast %947 : vector<1x8x128xf32> to vector<8x128xf32>
    %c132 = arith.constant 132 : index
    %949 = memref.load %arg1[%c132] : memref<288xf32, #tpu.memory_space<smem>>
    %950 = vector.broadcast %949 : f32 to vector<8x128xf32>
    %951 = arith.mulf %948, %950 : vector<8x128xf32>
    %952 = arith.addf %946, %951 : vector<8x128xf32>
    %c7_498 = arith.constant 7 : index
    %c0_499 = arith.constant 0 : index
    %c0_500 = arith.constant 0 : index
    %953 = vector.load %arg10[%c7_498, %c0_499, %c0_500] : memref<9x8x128xf32, #tpu.memory_space<vmem>>, vector<1x8x128xf32>
    %954 = vector.shape_cast %953 : vector<1x8x128xf32> to vector<8x128xf32>
    %c133 = arith.constant 133 : index
    %955 = memref.load %arg1[%c133] : memref<288xf32, #tpu.memory_space<smem>>
    %956 = vector.broadcast %955 : f32 to vector<8x128xf32>
    %957 = arith.mulf %954, %956 : vector<8x128xf32>
    %958 = arith.addf %952, %957 : vector<8x128xf32>
    %c8_501 = arith.constant 8 : index
    %c0_502 = arith.constant 0 : index
    %c0_503 = arith.constant 0 : index
    %959 = vector.load %arg10[%c8_501, %c0_502, %c0_503] : memref<9x8x128xf32, #tpu.memory_space<vmem>>, vector<1x8x128xf32>
    %960 = vector.shape_cast %959 : vector<1x8x128xf32> to vector<8x128xf32>
    %c134 = arith.constant 134 : index
    %961 = memref.load %arg1[%c134] : memref<288xf32, #tpu.memory_space<smem>>
    %962 = vector.broadcast %961 : f32 to vector<8x128xf32>
    %963 = arith.mulf %960, %962 : vector<8x128xf32>
    %964 = arith.addf %958, %963 : vector<8x128xf32>
    %c14_504 = arith.constant 14 : index
    %965 = memref.load %arg2[%c14_504] : memref<32xf32, #tpu.memory_space<smem>>
    %966 = vector.broadcast %965 : f32 to vector<8x128xf32>
    %967 = arith.addf %964, %966 : vector<8x128xf32>
    %cst_505 = arith.constant 0.000000e+00 : f32
    %968 = vector.broadcast %cst_505 : f32 to vector<8x128xf32>
    %969 = arith.maximumf %967, %968 : vector<8x128xf32>
    %970 = arith.truncf %969 : vector<8x128xf32> to vector<8x128xbf16>
    %c0_506 = arith.constant 0 : index
    %c1792 = arith.constant 1792 : index
    %971 = vector.load %arg11[%c0_506, %c1792] : memref<8x4096xbf16, #tpu.memory_space<vmem>>, vector<8x128xbf16>
    tpu.vector_store %arg11[%c0_506, %c1792], %970 {strides = array<i32>} : memref<8x4096xbf16, #tpu.memory_space<vmem>>, vector<8x128xbf16>,
    %c0_507 = arith.constant 0 : index
    %c0_508 = arith.constant 0 : index
    %c0_509 = arith.constant 0 : index
    %972 = vector.load %arg10[%c0_507, %c0_508, %c0_509] : memref<9x8x128xf32, #tpu.memory_space<vmem>>, vector<1x8x128xf32>
    %973 = vector.shape_cast %972 : vector<1x8x128xf32> to vector<8x128xf32>
    %c135 = arith.constant 135 : index
    %974 = memref.load %arg1[%c135] : memref<288xf32, #tpu.memory_space<smem>>
    %975 = vector.broadcast %974 : f32 to vector<8x128xf32>
    %976 = arith.mulf %973, %975 : vector<8x128xf32>
    %c1_510 = arith.constant 1 : index
    %c0_511 = arith.constant 0 : index
    %c0_512 = arith.constant 0 : index
    %977 = vector.load %arg10[%c1_510, %c0_511, %c0_512] : memref<9x8x128xf32, #tpu.memory_space<vmem>>, vector<1x8x128xf32>
    %978 = vector.shape_cast %977 : vector<1x8x128xf32> to vector<8x128xf32>
    %c136 = arith.constant 136 : index
    %979 = memref.load %arg1[%c136] : memref<288xf32, #tpu.memory_space<smem>>
    %980 = vector.broadcast %979 : f32 to vector<8x128xf32>
    %981 = arith.mulf %978, %980 : vector<8x128xf32>
    %982 = arith.addf %976, %981 : vector<8x128xf32>
    %c2_513 = arith.constant 2 : index
    %c0_514 = arith.constant 0 : index
    %c0_515 = arith.constant 0 : index
    %983 = vector.load %arg10[%c2_513, %c0_514, %c0_515] : memref<9x8x128xf32, #tpu.memory_space<vmem>>, vector<1x8x128xf32>
    %984 = vector.shape_cast %983 : vector<1x8x128xf32> to vector<8x128xf32>
    %c137 = arith.constant 137 : index
    %985 = memref.load %arg1[%c137] : memref<288xf32, #tpu.memory_space<smem>>
    %986 = vector.broadcast %985 : f32 to vector<8x128xf32>
    %987 = arith.mulf %984, %986 : vector<8x128xf32>
    %988 = arith.addf %982, %987 : vector<8x128xf32>
    %c3_516 = arith.constant 3 : index
    %c0_517 = arith.constant 0 : index
    %c0_518 = arith.constant 0 : index
    %989 = vector.load %arg10[%c3_516, %c0_517, %c0_518] : memref<9x8x128xf32, #tpu.memory_space<vmem>>, vector<1x8x128xf32>
    %990 = vector.shape_cast %989 : vector<1x8x128xf32> to vector<8x128xf32>
    %c138 = arith.constant 138 : index
    %991 = memref.load %arg1[%c138] : memref<288xf32, #tpu.memory_space<smem>>
    %992 = vector.broadcast %991 : f32 to vector<8x128xf32>
    %993 = arith.mulf %990, %992 : vector<8x128xf32>
    %994 = arith.addf %988, %993 : vector<8x128xf32>
    %c4_519 = arith.constant 4 : index
    %c0_520 = arith.constant 0 : index
    %c0_521 = arith.constant 0 : index
    %995 = vector.load %arg10[%c4_519, %c0_520, %c0_521] : memref<9x8x128xf32, #tpu.memory_space<vmem>>, vector<1x8x128xf32>
    %996 = vector.shape_cast %995 : vector<1x8x128xf32> to vector<8x128xf32>
    %c139 = arith.constant 139 : index
    %997 = memref.load %arg1[%c139] : memref<288xf32, #tpu.memory_space<smem>>
    %998 = vector.broadcast %997 : f32 to vector<8x128xf32>
    %999 = arith.mulf %996, %998 : vector<8x128xf32>
    %1000 = arith.addf %994, %999 : vector<8x128xf32>
    %c5_522 = arith.constant 5 : index
    %c0_523 = arith.constant 0 : index
    %c0_524 = arith.constant 0 : index
    %1001 = vector.load %arg10[%c5_522, %c0_523, %c0_524] : memref<9x8x128xf32, #tpu.memory_space<vmem>>, vector<1x8x128xf32>
    %1002 = vector.shape_cast %1001 : vector<1x8x128xf32> to vector<8x128xf32>
    %c140 = arith.constant 140 : index
    %1003 = memref.load %arg1[%c140] : memref<288xf32, #tpu.memory_space<smem>>
    %1004 = vector.broadcast %1003 : f32 to vector<8x128xf32>
    %1005 = arith.mulf %1002, %1004 : vector<8x128xf32>
    %1006 = arith.addf %1000, %1005 : vector<8x128xf32>
    %c6_525 = arith.constant 6 : index
    %c0_526 = arith.constant 0 : index
    %c0_527 = arith.constant 0 : index
    %1007 = vector.load %arg10[%c6_525, %c0_526, %c0_527] : memref<9x8x128xf32, #tpu.memory_space<vmem>>, vector<1x8x128xf32>
    %1008 = vector.shape_cast %1007 : vector<1x8x128xf32> to vector<8x128xf32>
    %c141 = arith.constant 141 : index
    %1009 = memref.load %arg1[%c141] : memref<288xf32, #tpu.memory_space<smem>>
    %1010 = vector.broadcast %1009 : f32 to vector<8x128xf32>
    %1011 = arith.mulf %1008, %1010 : vector<8x128xf32>
    %1012 = arith.addf %1006, %1011 : vector<8x128xf32>
    %c7_528 = arith.constant 7 : index
    %c0_529 = arith.constant 0 : index
    %c0_530 = arith.constant 0 : index
    %1013 = vector.load %arg10[%c7_528, %c0_529, %c0_530] : memref<9x8x128xf32, #tpu.memory_space<vmem>>, vector<1x8x128xf32>
    %1014 = vector.shape_cast %1013 : vector<1x8x128xf32> to vector<8x128xf32>
    %c142 = arith.constant 142 : index
    %1015 = memref.load %arg1[%c142] : memref<288xf32, #tpu.memory_space<smem>>
    %1016 = vector.broadcast %1015 : f32 to vector<8x128xf32>
    %1017 = arith.mulf %1014, %1016 : vector<8x128xf32>
    %1018 = arith.addf %1012, %1017 : vector<8x128xf32>
    %c8_531 = arith.constant 8 : index
    %c0_532 = arith.constant 0 : index
    %c0_533 = arith.constant 0 : index
    %1019 = vector.load %arg10[%c8_531, %c0_532, %c0_533] : memref<9x8x128xf32, #tpu.memory_space<vmem>>, vector<1x8x128xf32>
    %1020 = vector.shape_cast %1019 : vector<1x8x128xf32> to vector<8x128xf32>
    %c143 = arith.constant 143 : index
    %1021 = memref.load %arg1[%c143] : memref<288xf32, #tpu.memory_space<smem>>
    %1022 = vector.broadcast %1021 : f32 to vector<8x128xf32>
    %1023 = arith.mulf %1020, %1022 : vector<8x128xf32>
    %1024 = arith.addf %1018, %1023 : vector<8x128xf32>
    %c15_534 = arith.constant 15 : index
    %1025 = memref.load %arg2[%c15_534] : memref<32xf32, #tpu.memory_space<smem>>
    %1026 = vector.broadcast %1025 : f32 to vector<8x128xf32>
    %1027 = arith.addf %1024, %1026 : vector<8x128xf32>
    %cst_535 = arith.constant 0.000000e+00 : f32
    %1028 = vector.broadcast %cst_535 : f32 to vector<8x128xf32>
    %1029 = arith.maximumf %1027, %1028 : vector<8x128xf32>
    %1030 = arith.truncf %1029 : vector<8x128xf32> to vector<8x128xbf16>
    %c0_536 = arith.constant 0 : index
    %c1920 = arith.constant 1920 : index
    %1031 = vector.load %arg11[%c0_536, %c1920] : memref<8x4096xbf16, #tpu.memory_space<vmem>>, vector<8x128xbf16>
    tpu.vector_store %arg11[%c0_536, %c1920], %1030 {strides = array<i32>} : memref<8x4096xbf16, #tpu.memory_space<vmem>>, vector<8x128xbf16>,
    %c0_537 = arith.constant 0 : index
    %c0_538 = arith.constant 0 : index
    %c0_539 = arith.constant 0 : index
    %1032 = vector.load %arg10[%c0_537, %c0_538, %c0_539] : memref<9x8x128xf32, #tpu.memory_space<vmem>>, vector<1x8x128xf32>
    %1033 = vector.shape_cast %1032 : vector<1x8x128xf32> to vector<8x128xf32>
    %c144 = arith.constant 144 : index
    %1034 = memref.load %arg1[%c144] : memref<288xf32, #tpu.memory_space<smem>>
    %1035 = vector.broadcast %1034 : f32 to vector<8x128xf32>
    %1036 = arith.mulf %1033, %1035 : vector<8x128xf32>
    %c1_540 = arith.constant 1 : index
    %c0_541 = arith.constant 0 : index
    %c0_542 = arith.constant 0 : index
    %1037 = vector.load %arg10[%c1_540, %c0_541, %c0_542] : memref<9x8x128xf32, #tpu.memory_space<vmem>>, vector<1x8x128xf32>
    %1038 = vector.shape_cast %1037 : vector<1x8x128xf32> to vector<8x128xf32>
    %c145 = arith.constant 145 : index
    %1039 = memref.load %arg1[%c145] : memref<288xf32, #tpu.memory_space<smem>>
    %1040 = vector.broadcast %1039 : f32 to vector<8x128xf32>
    %1041 = arith.mulf %1038, %1040 : vector<8x128xf32>
    %1042 = arith.addf %1036, %1041 : vector<8x128xf32>
    %c2_543 = arith.constant 2 : index
    %c0_544 = arith.constant 0 : index
    %c0_545 = arith.constant 0 : index
    %1043 = vector.load %arg10[%c2_543, %c0_544, %c0_545] : memref<9x8x128xf32, #tpu.memory_space<vmem>>, vector<1x8x128xf32>
    %1044 = vector.shape_cast %1043 : vector<1x8x128xf32> to vector<8x128xf32>
    %c146 = arith.constant 146 : index
    %1045 = memref.load %arg1[%c146] : memref<288xf32, #tpu.memory_space<smem>>
    %1046 = vector.broadcast %1045 : f32 to vector<8x128xf32>
    %1047 = arith.mulf %1044, %1046 : vector<8x128xf32>
    %1048 = arith.addf %1042, %1047 : vector<8x128xf32>
    %c3_546 = arith.constant 3 : index
    %c0_547 = arith.constant 0 : index
    %c0_548 = arith.constant 0 : index
    %1049 = vector.load %arg10[%c3_546, %c0_547, %c0_548] : memref<9x8x128xf32, #tpu.memory_space<vmem>>, vector<1x8x128xf32>
    %1050 = vector.shape_cast %1049 : vector<1x8x128xf32> to vector<8x128xf32>
    %c147 = arith.constant 147 : index
    %1051 = memref.load %arg1[%c147] : memref<288xf32, #tpu.memory_space<smem>>
    %1052 = vector.broadcast %1051 : f32 to vector<8x128xf32>
    %1053 = arith.mulf %1050, %1052 : vector<8x128xf32>
    %1054 = arith.addf %1048, %1053 : vector<8x128xf32>
    %c4_549 = arith.constant 4 : index
    %c0_550 = arith.constant 0 : index
    %c0_551 = arith.constant 0 : index
    %1055 = vector.load %arg10[%c4_549, %c0_550, %c0_551] : memref<9x8x128xf32, #tpu.memory_space<vmem>>, vector<1x8x128xf32>
    %1056 = vector.shape_cast %1055 : vector<1x8x128xf32> to vector<8x128xf32>
    %c148 = arith.constant 148 : index
    %1057 = memref.load %arg1[%c148] : memref<288xf32, #tpu.memory_space<smem>>
    %1058 = vector.broadcast %1057 : f32 to vector<8x128xf32>
    %1059 = arith.mulf %1056, %1058 : vector<8x128xf32>
    %1060 = arith.addf %1054, %1059 : vector<8x128xf32>
    %c5_552 = arith.constant 5 : index
    %c0_553 = arith.constant 0 : index
    %c0_554 = arith.constant 0 : index
    %1061 = vector.load %arg10[%c5_552, %c0_553, %c0_554] : memref<9x8x128xf32, #tpu.memory_space<vmem>>, vector<1x8x128xf32>
    %1062 = vector.shape_cast %1061 : vector<1x8x128xf32> to vector<8x128xf32>
    %c149 = arith.constant 149 : index
    %1063 = memref.load %arg1[%c149] : memref<288xf32, #tpu.memory_space<smem>>
    %1064 = vector.broadcast %1063 : f32 to vector<8x128xf32>
    %1065 = arith.mulf %1062, %1064 : vector<8x128xf32>
    %1066 = arith.addf %1060, %1065 : vector<8x128xf32>
    %c6_555 = arith.constant 6 : index
    %c0_556 = arith.constant 0 : index
    %c0_557 = arith.constant 0 : index
    %1067 = vector.load %arg10[%c6_555, %c0_556, %c0_557] : memref<9x8x128xf32, #tpu.memory_space<vmem>>, vector<1x8x128xf32>
    %1068 = vector.shape_cast %1067 : vector<1x8x128xf32> to vector<8x128xf32>
    %c150 = arith.constant 150 : index
    %1069 = memref.load %arg1[%c150] : memref<288xf32, #tpu.memory_space<smem>>
    %1070 = vector.broadcast %1069 : f32 to vector<8x128xf32>
    %1071 = arith.mulf %1068, %1070 : vector<8x128xf32>
    %1072 = arith.addf %1066, %1071 : vector<8x128xf32>
    %c7_558 = arith.constant 7 : index
    %c0_559 = arith.constant 0 : index
    %c0_560 = arith.constant 0 : index
    %1073 = vector.load %arg10[%c7_558, %c0_559, %c0_560] : memref<9x8x128xf32, #tpu.memory_space<vmem>>, vector<1x8x128xf32>
    %1074 = vector.shape_cast %1073 : vector<1x8x128xf32> to vector<8x128xf32>
    %c151 = arith.constant 151 : index
    %1075 = memref.load %arg1[%c151] : memref<288xf32, #tpu.memory_space<smem>>
    %1076 = vector.broadcast %1075 : f32 to vector<8x128xf32>
    %1077 = arith.mulf %1074, %1076 : vector<8x128xf32>
    %1078 = arith.addf %1072, %1077 : vector<8x128xf32>
    %c8_561 = arith.constant 8 : index
    %c0_562 = arith.constant 0 : index
    %c0_563 = arith.constant 0 : index
    %1079 = vector.load %arg10[%c8_561, %c0_562, %c0_563] : memref<9x8x128xf32, #tpu.memory_space<vmem>>, vector<1x8x128xf32>
    %1080 = vector.shape_cast %1079 : vector<1x8x128xf32> to vector<8x128xf32>
    %c152 = arith.constant 152 : index
    %1081 = memref.load %arg1[%c152] : memref<288xf32, #tpu.memory_space<smem>>
    %1082 = vector.broadcast %1081 : f32 to vector<8x128xf32>
    %1083 = arith.mulf %1080, %1082 : vector<8x128xf32>
    %1084 = arith.addf %1078, %1083 : vector<8x128xf32>
    %c16_564 = arith.constant 16 : index
    %1085 = memref.load %arg2[%c16_564] : memref<32xf32, #tpu.memory_space<smem>>
    %1086 = vector.broadcast %1085 : f32 to vector<8x128xf32>
    %1087 = arith.addf %1084, %1086 : vector<8x128xf32>
    %cst_565 = arith.constant 0.000000e+00 : f32
    %1088 = vector.broadcast %cst_565 : f32 to vector<8x128xf32>
    %1089 = arith.maximumf %1087, %1088 : vector<8x128xf32>
    %1090 = arith.truncf %1089 : vector<8x128xf32> to vector<8x128xbf16>
    %c0_566 = arith.constant 0 : index
    %c2048 = arith.constant 2048 : index
    %1091 = vector.load %arg11[%c0_566, %c2048] : memref<8x4096xbf16, #tpu.memory_space<vmem>>, vector<8x128xbf16>
    tpu.vector_store %arg11[%c0_566, %c2048], %1090 {strides = array<i32>} : memref<8x4096xbf16, #tpu.memory_space<vmem>>, vector<8x128xbf16>,
    %c0_567 = arith.constant 0 : index
    %c0_568 = arith.constant 0 : index
    %c0_569 = arith.constant 0 : index
    %1092 = vector.load %arg10[%c0_567, %c0_568, %c0_569] : memref<9x8x128xf32, #tpu.memory_space<vmem>>, vector<1x8x128xf32>
    %1093 = vector.shape_cast %1092 : vector<1x8x128xf32> to vector<8x128xf32>
    %c153 = arith.constant 153 : index
    %1094 = memref.load %arg1[%c153] : memref<288xf32, #tpu.memory_space<smem>>
    %1095 = vector.broadcast %1094 : f32 to vector<8x128xf32>
    %1096 = arith.mulf %1093, %1095 : vector<8x128xf32>
    %c1_570 = arith.constant 1 : index
    %c0_571 = arith.constant 0 : index
    %c0_572 = arith.constant 0 : index
    %1097 = vector.load %arg10[%c1_570, %c0_571, %c0_572] : memref<9x8x128xf32, #tpu.memory_space<vmem>>, vector<1x8x128xf32>
    %1098 = vector.shape_cast %1097 : vector<1x8x128xf32> to vector<8x128xf32>
    %c154 = arith.constant 154 : index
    %1099 = memref.load %arg1[%c154] : memref<288xf32, #tpu.memory_space<smem>>
    %1100 = vector.broadcast %1099 : f32 to vector<8x128xf32>
    %1101 = arith.mulf %1098, %1100 : vector<8x128xf32>
    %1102 = arith.addf %1096, %1101 : vector<8x128xf32>
    %c2_573 = arith.constant 2 : index
    %c0_574 = arith.constant 0 : index
    %c0_575 = arith.constant 0 : index
    %1103 = vector.load %arg10[%c2_573, %c0_574, %c0_575] : memref<9x8x128xf32, #tpu.memory_space<vmem>>, vector<1x8x128xf32>
    %1104 = vector.shape_cast %1103 : vector<1x8x128xf32> to vector<8x128xf32>
    %c155 = arith.constant 155 : index
    %1105 = memref.load %arg1[%c155] : memref<288xf32, #tpu.memory_space<smem>>
    %1106 = vector.broadcast %1105 : f32 to vector<8x128xf32>
    %1107 = arith.mulf %1104, %1106 : vector<8x128xf32>
    %1108 = arith.addf %1102, %1107 : vector<8x128xf32>
    %c3_576 = arith.constant 3 : index
    %c0_577 = arith.constant 0 : index
    %c0_578 = arith.constant 0 : index
    %1109 = vector.load %arg10[%c3_576, %c0_577, %c0_578] : memref<9x8x128xf32, #tpu.memory_space<vmem>>, vector<1x8x128xf32>
    %1110 = vector.shape_cast %1109 : vector<1x8x128xf32> to vector<8x128xf32>
    %c156 = arith.constant 156 : index
    %1111 = memref.load %arg1[%c156] : memref<288xf32, #tpu.memory_space<smem>>
    %1112 = vector.broadcast %1111 : f32 to vector<8x128xf32>
    %1113 = arith.mulf %1110, %1112 : vector<8x128xf32>
    %1114 = arith.addf %1108, %1113 : vector<8x128xf32>
    %c4_579 = arith.constant 4 : index
    %c0_580 = arith.constant 0 : index
    %c0_581 = arith.constant 0 : index
    %1115 = vector.load %arg10[%c4_579, %c0_580, %c0_581] : memref<9x8x128xf32, #tpu.memory_space<vmem>>, vector<1x8x128xf32>
    %1116 = vector.shape_cast %1115 : vector<1x8x128xf32> to vector<8x128xf32>
    %c157 = arith.constant 157 : index
    %1117 = memref.load %arg1[%c157] : memref<288xf32, #tpu.memory_space<smem>>
    %1118 = vector.broadcast %1117 : f32 to vector<8x128xf32>
    %1119 = arith.mulf %1116, %1118 : vector<8x128xf32>
    %1120 = arith.addf %1114, %1119 : vector<8x128xf32>
    %c5_582 = arith.constant 5 : index
    %c0_583 = arith.constant 0 : index
    %c0_584 = arith.constant 0 : index
    %1121 = vector.load %arg10[%c5_582, %c0_583, %c0_584] : memref<9x8x128xf32, #tpu.memory_space<vmem>>, vector<1x8x128xf32>
    %1122 = vector.shape_cast %1121 : vector<1x8x128xf32> to vector<8x128xf32>
    %c158 = arith.constant 158 : index
    %1123 = memref.load %arg1[%c158] : memref<288xf32, #tpu.memory_space<smem>>
    %1124 = vector.broadcast %1123 : f32 to vector<8x128xf32>
    %1125 = arith.mulf %1122, %1124 : vector<8x128xf32>
    %1126 = arith.addf %1120, %1125 : vector<8x128xf32>
    %c6_585 = arith.constant 6 : index
    %c0_586 = arith.constant 0 : index
    %c0_587 = arith.constant 0 : index
    %1127 = vector.load %arg10[%c6_585, %c0_586, %c0_587] : memref<9x8x128xf32, #tpu.memory_space<vmem>>, vector<1x8x128xf32>
    %1128 = vector.shape_cast %1127 : vector<1x8x128xf32> to vector<8x128xf32>
    %c159 = arith.constant 159 : index
    %1129 = memref.load %arg1[%c159] : memref<288xf32, #tpu.memory_space<smem>>
    %1130 = vector.broadcast %1129 : f32 to vector<8x128xf32>
    %1131 = arith.mulf %1128, %1130 : vector<8x128xf32>
    %1132 = arith.addf %1126, %1131 : vector<8x128xf32>
    %c7_588 = arith.constant 7 : index
    %c0_589 = arith.constant 0 : index
    %c0_590 = arith.constant 0 : index
    %1133 = vector.load %arg10[%c7_588, %c0_589, %c0_590] : memref<9x8x128xf32, #tpu.memory_space<vmem>>, vector<1x8x128xf32>
    %1134 = vector.shape_cast %1133 : vector<1x8x128xf32> to vector<8x128xf32>
    %c160 = arith.constant 160 : index
    %1135 = memref.load %arg1[%c160] : memref<288xf32, #tpu.memory_space<smem>>
    %1136 = vector.broadcast %1135 : f32 to vector<8x128xf32>
    %1137 = arith.mulf %1134, %1136 : vector<8x128xf32>
    %1138 = arith.addf %1132, %1137 : vector<8x128xf32>
    %c8_591 = arith.constant 8 : index
    %c0_592 = arith.constant 0 : index
    %c0_593 = arith.constant 0 : index
    %1139 = vector.load %arg10[%c8_591, %c0_592, %c0_593] : memref<9x8x128xf32, #tpu.memory_space<vmem>>, vector<1x8x128xf32>
    %1140 = vector.shape_cast %1139 : vector<1x8x128xf32> to vector<8x128xf32>
    %c161 = arith.constant 161 : index
    %1141 = memref.load %arg1[%c161] : memref<288xf32, #tpu.memory_space<smem>>
    %1142 = vector.broadcast %1141 : f32 to vector<8x128xf32>
    %1143 = arith.mulf %1140, %1142 : vector<8x128xf32>
    %1144 = arith.addf %1138, %1143 : vector<8x128xf32>
    %c17_594 = arith.constant 17 : index
    %1145 = memref.load %arg2[%c17_594] : memref<32xf32, #tpu.memory_space<smem>>
    %1146 = vector.broadcast %1145 : f32 to vector<8x128xf32>
    %1147 = arith.addf %1144, %1146 : vector<8x128xf32>
    %cst_595 = arith.constant 0.000000e+00 : f32
    %1148 = vector.broadcast %cst_595 : f32 to vector<8x128xf32>
    %1149 = arith.maximumf %1147, %1148 : vector<8x128xf32>
    %1150 = arith.truncf %1149 : vector<8x128xf32> to vector<8x128xbf16>
    %c0_596 = arith.constant 0 : index
    %c2176 = arith.constant 2176 : index
    %1151 = vector.load %arg11[%c0_596, %c2176] : memref<8x4096xbf16, #tpu.memory_space<vmem>>, vector<8x128xbf16>
    tpu.vector_store %arg11[%c0_596, %c2176], %1150 {strides = array<i32>} : memref<8x4096xbf16, #tpu.memory_space<vmem>>, vector<8x128xbf16>,
    %c0_597 = arith.constant 0 : index
    %c0_598 = arith.constant 0 : index
    %c0_599 = arith.constant 0 : index
    %1152 = vector.load %arg10[%c0_597, %c0_598, %c0_599] : memref<9x8x128xf32, #tpu.memory_space<vmem>>, vector<1x8x128xf32>
    %1153 = vector.shape_cast %1152 : vector<1x8x128xf32> to vector<8x128xf32>
    %c162 = arith.constant 162 : index
    %1154 = memref.load %arg1[%c162] : memref<288xf32, #tpu.memory_space<smem>>
    %1155 = vector.broadcast %1154 : f32 to vector<8x128xf32>
    %1156 = arith.mulf %1153, %1155 : vector<8x128xf32>
    %c1_600 = arith.constant 1 : index
    %c0_601 = arith.constant 0 : index
    %c0_602 = arith.constant 0 : index
    %1157 = vector.load %arg10[%c1_600, %c0_601, %c0_602] : memref<9x8x128xf32, #tpu.memory_space<vmem>>, vector<1x8x128xf32>
    %1158 = vector.shape_cast %1157 : vector<1x8x128xf32> to vector<8x128xf32>
    %c163 = arith.constant 163 : index
    %1159 = memref.load %arg1[%c163] : memref<288xf32, #tpu.memory_space<smem>>
    %1160 = vector.broadcast %1159 : f32 to vector<8x128xf32>
    %1161 = arith.mulf %1158, %1160 : vector<8x128xf32>
    %1162 = arith.addf %1156, %1161 : vector<8x128xf32>
    %c2_603 = arith.constant 2 : index
    %c0_604 = arith.constant 0 : index
    %c0_605 = arith.constant 0 : index
    %1163 = vector.load %arg10[%c2_603, %c0_604, %c0_605] : memref<9x8x128xf32, #tpu.memory_space<vmem>>, vector<1x8x128xf32>
    %1164 = vector.shape_cast %1163 : vector<1x8x128xf32> to vector<8x128xf32>
    %c164 = arith.constant 164 : index
    %1165 = memref.load %arg1[%c164] : memref<288xf32, #tpu.memory_space<smem>>
    %1166 = vector.broadcast %1165 : f32 to vector<8x128xf32>
    %1167 = arith.mulf %1164, %1166 : vector<8x128xf32>
    %1168 = arith.addf %1162, %1167 : vector<8x128xf32>
    %c3_606 = arith.constant 3 : index
    %c0_607 = arith.constant 0 : index
    %c0_608 = arith.constant 0 : index
    %1169 = vector.load %arg10[%c3_606, %c0_607, %c0_608] : memref<9x8x128xf32, #tpu.memory_space<vmem>>, vector<1x8x128xf32>
    %1170 = vector.shape_cast %1169 : vector<1x8x128xf32> to vector<8x128xf32>
    %c165 = arith.constant 165 : index
    %1171 = memref.load %arg1[%c165] : memref<288xf32, #tpu.memory_space<smem>>
    %1172 = vector.broadcast %1171 : f32 to vector<8x128xf32>
    %1173 = arith.mulf %1170, %1172 : vector<8x128xf32>
    %1174 = arith.addf %1168, %1173 : vector<8x128xf32>
    %c4_609 = arith.constant 4 : index
    %c0_610 = arith.constant 0 : index
    %c0_611 = arith.constant 0 : index
    %1175 = vector.load %arg10[%c4_609, %c0_610, %c0_611] : memref<9x8x128xf32, #tpu.memory_space<vmem>>, vector<1x8x128xf32>
    %1176 = vector.shape_cast %1175 : vector<1x8x128xf32> to vector<8x128xf32>
    %c166 = arith.constant 166 : index
    %1177 = memref.load %arg1[%c166] : memref<288xf32, #tpu.memory_space<smem>>
    %1178 = vector.broadcast %1177 : f32 to vector<8x128xf32>
    %1179 = arith.mulf %1176, %1178 : vector<8x128xf32>
    %1180 = arith.addf %1174, %1179 : vector<8x128xf32>
    %c5_612 = arith.constant 5 : index
    %c0_613 = arith.constant 0 : index
    %c0_614 = arith.constant 0 : index
    %1181 = vector.load %arg10[%c5_612, %c0_613, %c0_614] : memref<9x8x128xf32, #tpu.memory_space<vmem>>, vector<1x8x128xf32>
    %1182 = vector.shape_cast %1181 : vector<1x8x128xf32> to vector<8x128xf32>
    %c167 = arith.constant 167 : index
    %1183 = memref.load %arg1[%c167] : memref<288xf32, #tpu.memory_space<smem>>
    %1184 = vector.broadcast %1183 : f32 to vector<8x128xf32>
    %1185 = arith.mulf %1182, %1184 : vector<8x128xf32>
    %1186 = arith.addf %1180, %1185 : vector<8x128xf32>
    %c6_615 = arith.constant 6 : index
    %c0_616 = arith.constant 0 : index
    %c0_617 = arith.constant 0 : index
    %1187 = vector.load %arg10[%c6_615, %c0_616, %c0_617] : memref<9x8x128xf32, #tpu.memory_space<vmem>>, vector<1x8x128xf32>
    %1188 = vector.shape_cast %1187 : vector<1x8x128xf32> to vector<8x128xf32>
    %c168 = arith.constant 168 : index
    %1189 = memref.load %arg1[%c168] : memref<288xf32, #tpu.memory_space<smem>>
    %1190 = vector.broadcast %1189 : f32 to vector<8x128xf32>
    %1191 = arith.mulf %1188, %1190 : vector<8x128xf32>
    %1192 = arith.addf %1186, %1191 : vector<8x128xf32>
    %c7_618 = arith.constant 7 : index
    %c0_619 = arith.constant 0 : index
    %c0_620 = arith.constant 0 : index
    %1193 = vector.load %arg10[%c7_618, %c0_619, %c0_620] : memref<9x8x128xf32, #tpu.memory_space<vmem>>, vector<1x8x128xf32>
    %1194 = vector.shape_cast %1193 : vector<1x8x128xf32> to vector<8x128xf32>
    %c169 = arith.constant 169 : index
    %1195 = memref.load %arg1[%c169] : memref<288xf32, #tpu.memory_space<smem>>
    %1196 = vector.broadcast %1195 : f32 to vector<8x128xf32>
    %1197 = arith.mulf %1194, %1196 : vector<8x128xf32>
    %1198 = arith.addf %1192, %1197 : vector<8x128xf32>
    %c8_621 = arith.constant 8 : index
    %c0_622 = arith.constant 0 : index
    %c0_623 = arith.constant 0 : index
    %1199 = vector.load %arg10[%c8_621, %c0_622, %c0_623] : memref<9x8x128xf32, #tpu.memory_space<vmem>>, vector<1x8x128xf32>
    %1200 = vector.shape_cast %1199 : vector<1x8x128xf32> to vector<8x128xf32>
    %c170 = arith.constant 170 : index
    %1201 = memref.load %arg1[%c170] : memref<288xf32, #tpu.memory_space<smem>>
    %1202 = vector.broadcast %1201 : f32 to vector<8x128xf32>
    %1203 = arith.mulf %1200, %1202 : vector<8x128xf32>
    %1204 = arith.addf %1198, %1203 : vector<8x128xf32>
    %c18_624 = arith.constant 18 : index
    %1205 = memref.load %arg2[%c18_624] : memref<32xf32, #tpu.memory_space<smem>>
    %1206 = vector.broadcast %1205 : f32 to vector<8x128xf32>
    %1207 = arith.addf %1204, %1206 : vector<8x128xf32>
    %cst_625 = arith.constant 0.000000e+00 : f32
    %1208 = vector.broadcast %cst_625 : f32 to vector<8x128xf32>
    %1209 = arith.maximumf %1207, %1208 : vector<8x128xf32>
    %1210 = arith.truncf %1209 : vector<8x128xf32> to vector<8x128xbf16>
    %c0_626 = arith.constant 0 : index
    %c2304 = arith.constant 2304 : index
    %1211 = vector.load %arg11[%c0_626, %c2304] : memref<8x4096xbf16, #tpu.memory_space<vmem>>, vector<8x128xbf16>
    tpu.vector_store %arg11[%c0_626, %c2304], %1210 {strides = array<i32>} : memref<8x4096xbf16, #tpu.memory_space<vmem>>, vector<8x128xbf16>,
    %c0_627 = arith.constant 0 : index
    %c0_628 = arith.constant 0 : index
    %c0_629 = arith.constant 0 : index
    %1212 = vector.load %arg10[%c0_627, %c0_628, %c0_629] : memref<9x8x128xf32, #tpu.memory_space<vmem>>, vector<1x8x128xf32>
    %1213 = vector.shape_cast %1212 : vector<1x8x128xf32> to vector<8x128xf32>
    %c171 = arith.constant 171 : index
    %1214 = memref.load %arg1[%c171] : memref<288xf32, #tpu.memory_space<smem>>
    %1215 = vector.broadcast %1214 : f32 to vector<8x128xf32>
    %1216 = arith.mulf %1213, %1215 : vector<8x128xf32>
    %c1_630 = arith.constant 1 : index
    %c0_631 = arith.constant 0 : index
    %c0_632 = arith.constant 0 : index
    %1217 = vector.load %arg10[%c1_630, %c0_631, %c0_632] : memref<9x8x128xf32, #tpu.memory_space<vmem>>, vector<1x8x128xf32>
    %1218 = vector.shape_cast %1217 : vector<1x8x128xf32> to vector<8x128xf32>
    %c172 = arith.constant 172 : index
    %1219 = memref.load %arg1[%c172] : memref<288xf32, #tpu.memory_space<smem>>
    %1220 = vector.broadcast %1219 : f32 to vector<8x128xf32>
    %1221 = arith.mulf %1218, %1220 : vector<8x128xf32>
    %1222 = arith.addf %1216, %1221 : vector<8x128xf32>
    %c2_633 = arith.constant 2 : index
    %c0_634 = arith.constant 0 : index
    %c0_635 = arith.constant 0 : index
    %1223 = vector.load %arg10[%c2_633, %c0_634, %c0_635] : memref<9x8x128xf32, #tpu.memory_space<vmem>>, vector<1x8x128xf32>
    %1224 = vector.shape_cast %1223 : vector<1x8x128xf32> to vector<8x128xf32>
    %c173 = arith.constant 173 : index
    %1225 = memref.load %arg1[%c173] : memref<288xf32, #tpu.memory_space<smem>>
    %1226 = vector.broadcast %1225 : f32 to vector<8x128xf32>
    %1227 = arith.mulf %1224, %1226 : vector<8x128xf32>
    %1228 = arith.addf %1222, %1227 : vector<8x128xf32>
    %c3_636 = arith.constant 3 : index
    %c0_637 = arith.constant 0 : index
    %c0_638 = arith.constant 0 : index
    %1229 = vector.load %arg10[%c3_636, %c0_637, %c0_638] : memref<9x8x128xf32, #tpu.memory_space<vmem>>, vector<1x8x128xf32>
    %1230 = vector.shape_cast %1229 : vector<1x8x128xf32> to vector<8x128xf32>
    %c174 = arith.constant 174 : index
    %1231 = memref.load %arg1[%c174] : memref<288xf32, #tpu.memory_space<smem>>
    %1232 = vector.broadcast %1231 : f32 to vector<8x128xf32>
    %1233 = arith.mulf %1230, %1232 : vector<8x128xf32>
    %1234 = arith.addf %1228, %1233 : vector<8x128xf32>
    %c4_639 = arith.constant 4 : index
    %c0_640 = arith.constant 0 : index
    %c0_641 = arith.constant 0 : index
    %1235 = vector.load %arg10[%c4_639, %c0_640, %c0_641] : memref<9x8x128xf32, #tpu.memory_space<vmem>>, vector<1x8x128xf32>
    %1236 = vector.shape_cast %1235 : vector<1x8x128xf32> to vector<8x128xf32>
    %c175 = arith.constant 175 : index
    %1237 = memref.load %arg1[%c175] : memref<288xf32, #tpu.memory_space<smem>>
    %1238 = vector.broadcast %1237 : f32 to vector<8x128xf32>
    %1239 = arith.mulf %1236, %1238 : vector<8x128xf32>
    %1240 = arith.addf %1234, %1239 : vector<8x128xf32>
    %c5_642 = arith.constant 5 : index
    %c0_643 = arith.constant 0 : index
    %c0_644 = arith.constant 0 : index
    %1241 = vector.load %arg10[%c5_642, %c0_643, %c0_644] : memref<9x8x128xf32, #tpu.memory_space<vmem>>, vector<1x8x128xf32>
    %1242 = vector.shape_cast %1241 : vector<1x8x128xf32> to vector<8x128xf32>
    %c176 = arith.constant 176 : index
    %1243 = memref.load %arg1[%c176] : memref<288xf32, #tpu.memory_space<smem>>
    %1244 = vector.broadcast %1243 : f32 to vector<8x128xf32>
    %1245 = arith.mulf %1242, %1244 : vector<8x128xf32>
    %1246 = arith.addf %1240, %1245 : vector<8x128xf32>
    %c6_645 = arith.constant 6 : index
    %c0_646 = arith.constant 0 : index
    %c0_647 = arith.constant 0 : index
    %1247 = vector.load %arg10[%c6_645, %c0_646, %c0_647] : memref<9x8x128xf32, #tpu.memory_space<vmem>>, vector<1x8x128xf32>
    %1248 = vector.shape_cast %1247 : vector<1x8x128xf32> to vector<8x128xf32>
    %c177 = arith.constant 177 : index
    %1249 = memref.load %arg1[%c177] : memref<288xf32, #tpu.memory_space<smem>>
    %1250 = vector.broadcast %1249 : f32 to vector<8x128xf32>
    %1251 = arith.mulf %1248, %1250 : vector<8x128xf32>
    %1252 = arith.addf %1246, %1251 : vector<8x128xf32>
    %c7_648 = arith.constant 7 : index
    %c0_649 = arith.constant 0 : index
    %c0_650 = arith.constant 0 : index
    %1253 = vector.load %arg10[%c7_648, %c0_649, %c0_650] : memref<9x8x128xf32, #tpu.memory_space<vmem>>, vector<1x8x128xf32>
    %1254 = vector.shape_cast %1253 : vector<1x8x128xf32> to vector<8x128xf32>
    %c178 = arith.constant 178 : index
    %1255 = memref.load %arg1[%c178] : memref<288xf32, #tpu.memory_space<smem>>
    %1256 = vector.broadcast %1255 : f32 to vector<8x128xf32>
    %1257 = arith.mulf %1254, %1256 : vector<8x128xf32>
    %1258 = arith.addf %1252, %1257 : vector<8x128xf32>
    %c8_651 = arith.constant 8 : index
    %c0_652 = arith.constant 0 : index
    %c0_653 = arith.constant 0 : index
    %1259 = vector.load %arg10[%c8_651, %c0_652, %c0_653] : memref<9x8x128xf32, #tpu.memory_space<vmem>>, vector<1x8x128xf32>
    %1260 = vector.shape_cast %1259 : vector<1x8x128xf32> to vector<8x128xf32>
    %c179 = arith.constant 179 : index
    %1261 = memref.load %arg1[%c179] : memref<288xf32, #tpu.memory_space<smem>>
    %1262 = vector.broadcast %1261 : f32 to vector<8x128xf32>
    %1263 = arith.mulf %1260, %1262 : vector<8x128xf32>
    %1264 = arith.addf %1258, %1263 : vector<8x128xf32>
    %c19_654 = arith.constant 19 : index
    %1265 = memref.load %arg2[%c19_654] : memref<32xf32, #tpu.memory_space<smem>>
    %1266 = vector.broadcast %1265 : f32 to vector<8x128xf32>
    %1267 = arith.addf %1264, %1266 : vector<8x128xf32>
    %cst_655 = arith.constant 0.000000e+00 : f32
    %1268 = vector.broadcast %cst_655 : f32 to vector<8x128xf32>
    %1269 = arith.maximumf %1267, %1268 : vector<8x128xf32>
    %1270 = arith.truncf %1269 : vector<8x128xf32> to vector<8x128xbf16>
    %c0_656 = arith.constant 0 : index
    %c2432 = arith.constant 2432 : index
    %1271 = vector.load %arg11[%c0_656, %c2432] : memref<8x4096xbf16, #tpu.memory_space<vmem>>, vector<8x128xbf16>
    tpu.vector_store %arg11[%c0_656, %c2432], %1270 {strides = array<i32>} : memref<8x4096xbf16, #tpu.memory_space<vmem>>, vector<8x128xbf16>,
    %c0_657 = arith.constant 0 : index
    %c0_658 = arith.constant 0 : index
    %c0_659 = arith.constant 0 : index
    %1272 = vector.load %arg10[%c0_657, %c0_658, %c0_659] : memref<9x8x128xf32, #tpu.memory_space<vmem>>, vector<1x8x128xf32>
    %1273 = vector.shape_cast %1272 : vector<1x8x128xf32> to vector<8x128xf32>
    %c180 = arith.constant 180 : index
    %1274 = memref.load %arg1[%c180] : memref<288xf32, #tpu.memory_space<smem>>
    %1275 = vector.broadcast %1274 : f32 to vector<8x128xf32>
    %1276 = arith.mulf %1273, %1275 : vector<8x128xf32>
    %c1_660 = arith.constant 1 : index
    %c0_661 = arith.constant 0 : index
    %c0_662 = arith.constant 0 : index
    %1277 = vector.load %arg10[%c1_660, %c0_661, %c0_662] : memref<9x8x128xf32, #tpu.memory_space<vmem>>, vector<1x8x128xf32>
    %1278 = vector.shape_cast %1277 : vector<1x8x128xf32> to vector<8x128xf32>
    %c181 = arith.constant 181 : index
    %1279 = memref.load %arg1[%c181] : memref<288xf32, #tpu.memory_space<smem>>
    %1280 = vector.broadcast %1279 : f32 to vector<8x128xf32>
    %1281 = arith.mulf %1278, %1280 : vector<8x128xf32>
    %1282 = arith.addf %1276, %1281 : vector<8x128xf32>
    %c2_663 = arith.constant 2 : index
    %c0_664 = arith.constant 0 : index
    %c0_665 = arith.constant 0 : index
    %1283 = vector.load %arg10[%c2_663, %c0_664, %c0_665] : memref<9x8x128xf32, #tpu.memory_space<vmem>>, vector<1x8x128xf32>
    %1284 = vector.shape_cast %1283 : vector<1x8x128xf32> to vector<8x128xf32>
    %c182 = arith.constant 182 : index
    %1285 = memref.load %arg1[%c182] : memref<288xf32, #tpu.memory_space<smem>>
    %1286 = vector.broadcast %1285 : f32 to vector<8x128xf32>
    %1287 = arith.mulf %1284, %1286 : vector<8x128xf32>
    %1288 = arith.addf %1282, %1287 : vector<8x128xf32>
    %c3_666 = arith.constant 3 : index
    %c0_667 = arith.constant 0 : index
    %c0_668 = arith.constant 0 : index
    %1289 = vector.load %arg10[%c3_666, %c0_667, %c0_668] : memref<9x8x128xf32, #tpu.memory_space<vmem>>, vector<1x8x128xf32>
    %1290 = vector.shape_cast %1289 : vector<1x8x128xf32> to vector<8x128xf32>
    %c183 = arith.constant 183 : index
    %1291 = memref.load %arg1[%c183] : memref<288xf32, #tpu.memory_space<smem>>
    %1292 = vector.broadcast %1291 : f32 to vector<8x128xf32>
    %1293 = arith.mulf %1290, %1292 : vector<8x128xf32>
    %1294 = arith.addf %1288, %1293 : vector<8x128xf32>
    %c4_669 = arith.constant 4 : index
    %c0_670 = arith.constant 0 : index
    %c0_671 = arith.constant 0 : index
    %1295 = vector.load %arg10[%c4_669, %c0_670, %c0_671] : memref<9x8x128xf32, #tpu.memory_space<vmem>>, vector<1x8x128xf32>
    %1296 = vector.shape_cast %1295 : vector<1x8x128xf32> to vector<8x128xf32>
    %c184 = arith.constant 184 : index
    %1297 = memref.load %arg1[%c184] : memref<288xf32, #tpu.memory_space<smem>>
    %1298 = vector.broadcast %1297 : f32 to vector<8x128xf32>
    %1299 = arith.mulf %1296, %1298 : vector<8x128xf32>
    %1300 = arith.addf %1294, %1299 : vector<8x128xf32>
    %c5_672 = arith.constant 5 : index
    %c0_673 = arith.constant 0 : index
    %c0_674 = arith.constant 0 : index
    %1301 = vector.load %arg10[%c5_672, %c0_673, %c0_674] : memref<9x8x128xf32, #tpu.memory_space<vmem>>, vector<1x8x128xf32>
    %1302 = vector.shape_cast %1301 : vector<1x8x128xf32> to vector<8x128xf32>
    %c185 = arith.constant 185 : index
    %1303 = memref.load %arg1[%c185] : memref<288xf32, #tpu.memory_space<smem>>
    %1304 = vector.broadcast %1303 : f32 to vector<8x128xf32>
    %1305 = arith.mulf %1302, %1304 : vector<8x128xf32>
    %1306 = arith.addf %1300, %1305 : vector<8x128xf32>
    %c6_675 = arith.constant 6 : index
    %c0_676 = arith.constant 0 : index
    %c0_677 = arith.constant 0 : index
    %1307 = vector.load %arg10[%c6_675, %c0_676, %c0_677] : memref<9x8x128xf32, #tpu.memory_space<vmem>>, vector<1x8x128xf32>
    %1308 = vector.shape_cast %1307 : vector<1x8x128xf32> to vector<8x128xf32>
    %c186 = arith.constant 186 : index
    %1309 = memref.load %arg1[%c186] : memref<288xf32, #tpu.memory_space<smem>>
    %1310 = vector.broadcast %1309 : f32 to vector<8x128xf32>
    %1311 = arith.mulf %1308, %1310 : vector<8x128xf32>
    %1312 = arith.addf %1306, %1311 : vector<8x128xf32>
    %c7_678 = arith.constant 7 : index
    %c0_679 = arith.constant 0 : index
    %c0_680 = arith.constant 0 : index
    %1313 = vector.load %arg10[%c7_678, %c0_679, %c0_680] : memref<9x8x128xf32, #tpu.memory_space<vmem>>, vector<1x8x128xf32>
    %1314 = vector.shape_cast %1313 : vector<1x8x128xf32> to vector<8x128xf32>
    %c187 = arith.constant 187 : index
    %1315 = memref.load %arg1[%c187] : memref<288xf32, #tpu.memory_space<smem>>
    %1316 = vector.broadcast %1315 : f32 to vector<8x128xf32>
    %1317 = arith.mulf %1314, %1316 : vector<8x128xf32>
    %1318 = arith.addf %1312, %1317 : vector<8x128xf32>
    %c8_681 = arith.constant 8 : index
    %c0_682 = arith.constant 0 : index
    %c0_683 = arith.constant 0 : index
    %1319 = vector.load %arg10[%c8_681, %c0_682, %c0_683] : memref<9x8x128xf32, #tpu.memory_space<vmem>>, vector<1x8x128xf32>
    %1320 = vector.shape_cast %1319 : vector<1x8x128xf32> to vector<8x128xf32>
    %c188 = arith.constant 188 : index
    %1321 = memref.load %arg1[%c188] : memref<288xf32, #tpu.memory_space<smem>>
    %1322 = vector.broadcast %1321 : f32 to vector<8x128xf32>
    %1323 = arith.mulf %1320, %1322 : vector<8x128xf32>
    %1324 = arith.addf %1318, %1323 : vector<8x128xf32>
    %c20_684 = arith.constant 20 : index
    %1325 = memref.load %arg2[%c20_684] : memref<32xf32, #tpu.memory_space<smem>>
    %1326 = vector.broadcast %1325 : f32 to vector<8x128xf32>
    %1327 = arith.addf %1324, %1326 : vector<8x128xf32>
    %cst_685 = arith.constant 0.000000e+00 : f32
    %1328 = vector.broadcast %cst_685 : f32 to vector<8x128xf32>
    %1329 = arith.maximumf %1327, %1328 : vector<8x128xf32>
    %1330 = arith.truncf %1329 : vector<8x128xf32> to vector<8x128xbf16>
    %c0_686 = arith.constant 0 : index
    %c2560 = arith.constant 2560 : index
    %1331 = vector.load %arg11[%c0_686, %c2560] : memref<8x4096xbf16, #tpu.memory_space<vmem>>, vector<8x128xbf16>
    tpu.vector_store %arg11[%c0_686, %c2560], %1330 {strides = array<i32>} : memref<8x4096xbf16, #tpu.memory_space<vmem>>, vector<8x128xbf16>,
    %c0_687 = arith.constant 0 : index
    %c0_688 = arith.constant 0 : index
    %c0_689 = arith.constant 0 : index
    %1332 = vector.load %arg10[%c0_687, %c0_688, %c0_689] : memref<9x8x128xf32, #tpu.memory_space<vmem>>, vector<1x8x128xf32>
    %1333 = vector.shape_cast %1332 : vector<1x8x128xf32> to vector<8x128xf32>
    %c189 = arith.constant 189 : index
    %1334 = memref.load %arg1[%c189] : memref<288xf32, #tpu.memory_space<smem>>
    %1335 = vector.broadcast %1334 : f32 to vector<8x128xf32>
    %1336 = arith.mulf %1333, %1335 : vector<8x128xf32>
    %c1_690 = arith.constant 1 : index
    %c0_691 = arith.constant 0 : index
    %c0_692 = arith.constant 0 : index
    %1337 = vector.load %arg10[%c1_690, %c0_691, %c0_692] : memref<9x8x128xf32, #tpu.memory_space<vmem>>, vector<1x8x128xf32>
    %1338 = vector.shape_cast %1337 : vector<1x8x128xf32> to vector<8x128xf32>
    %c190 = arith.constant 190 : index
    %1339 = memref.load %arg1[%c190] : memref<288xf32, #tpu.memory_space<smem>>
    %1340 = vector.broadcast %1339 : f32 to vector<8x128xf32>
    %1341 = arith.mulf %1338, %1340 : vector<8x128xf32>
    %1342 = arith.addf %1336, %1341 : vector<8x128xf32>
    %c2_693 = arith.constant 2 : index
    %c0_694 = arith.constant 0 : index
    %c0_695 = arith.constant 0 : index
    %1343 = vector.load %arg10[%c2_693, %c0_694, %c0_695] : memref<9x8x128xf32, #tpu.memory_space<vmem>>, vector<1x8x128xf32>
    %1344 = vector.shape_cast %1343 : vector<1x8x128xf32> to vector<8x128xf32>
    %c191 = arith.constant 191 : index
    %1345 = memref.load %arg1[%c191] : memref<288xf32, #tpu.memory_space<smem>>
    %1346 = vector.broadcast %1345 : f32 to vector<8x128xf32>
    %1347 = arith.mulf %1344, %1346 : vector<8x128xf32>
    %1348 = arith.addf %1342, %1347 : vector<8x128xf32>
    %c3_696 = arith.constant 3 : index
    %c0_697 = arith.constant 0 : index
    %c0_698 = arith.constant 0 : index
    %1349 = vector.load %arg10[%c3_696, %c0_697, %c0_698] : memref<9x8x128xf32, #tpu.memory_space<vmem>>, vector<1x8x128xf32>
    %1350 = vector.shape_cast %1349 : vector<1x8x128xf32> to vector<8x128xf32>
    %c192 = arith.constant 192 : index
    %1351 = memref.load %arg1[%c192] : memref<288xf32, #tpu.memory_space<smem>>
    %1352 = vector.broadcast %1351 : f32 to vector<8x128xf32>
    %1353 = arith.mulf %1350, %1352 : vector<8x128xf32>
    %1354 = arith.addf %1348, %1353 : vector<8x128xf32>
    %c4_699 = arith.constant 4 : index
    %c0_700 = arith.constant 0 : index
    %c0_701 = arith.constant 0 : index
    %1355 = vector.load %arg10[%c4_699, %c0_700, %c0_701] : memref<9x8x128xf32, #tpu.memory_space<vmem>>, vector<1x8x128xf32>
    %1356 = vector.shape_cast %1355 : vector<1x8x128xf32> to vector<8x128xf32>
    %c193 = arith.constant 193 : index
    %1357 = memref.load %arg1[%c193] : memref<288xf32, #tpu.memory_space<smem>>
    %1358 = vector.broadcast %1357 : f32 to vector<8x128xf32>
    %1359 = arith.mulf %1356, %1358 : vector<8x128xf32>
    %1360 = arith.addf %1354, %1359 : vector<8x128xf32>
    %c5_702 = arith.constant 5 : index
    %c0_703 = arith.constant 0 : index
    %c0_704 = arith.constant 0 : index
    %1361 = vector.load %arg10[%c5_702, %c0_703, %c0_704] : memref<9x8x128xf32, #tpu.memory_space<vmem>>, vector<1x8x128xf32>
    %1362 = vector.shape_cast %1361 : vector<1x8x128xf32> to vector<8x128xf32>
    %c194 = arith.constant 194 : index
    %1363 = memref.load %arg1[%c194] : memref<288xf32, #tpu.memory_space<smem>>
    %1364 = vector.broadcast %1363 : f32 to vector<8x128xf32>
    %1365 = arith.mulf %1362, %1364 : vector<8x128xf32>
    %1366 = arith.addf %1360, %1365 : vector<8x128xf32>
    %c6_705 = arith.constant 6 : index
    %c0_706 = arith.constant 0 : index
    %c0_707 = arith.constant 0 : index
    %1367 = vector.load %arg10[%c6_705, %c0_706, %c0_707] : memref<9x8x128xf32, #tpu.memory_space<vmem>>, vector<1x8x128xf32>
    %1368 = vector.shape_cast %1367 : vector<1x8x128xf32> to vector<8x128xf32>
    %c195 = arith.constant 195 : index
    %1369 = memref.load %arg1[%c195] : memref<288xf32, #tpu.memory_space<smem>>
    %1370 = vector.broadcast %1369 : f32 to vector<8x128xf32>
    %1371 = arith.mulf %1368, %1370 : vector<8x128xf32>
    %1372 = arith.addf %1366, %1371 : vector<8x128xf32>
    %c7_708 = arith.constant 7 : index
    %c0_709 = arith.constant 0 : index
    %c0_710 = arith.constant 0 : index
    %1373 = vector.load %arg10[%c7_708, %c0_709, %c0_710] : memref<9x8x128xf32, #tpu.memory_space<vmem>>, vector<1x8x128xf32>
    %1374 = vector.shape_cast %1373 : vector<1x8x128xf32> to vector<8x128xf32>
    %c196 = arith.constant 196 : index
    %1375 = memref.load %arg1[%c196] : memref<288xf32, #tpu.memory_space<smem>>
    %1376 = vector.broadcast %1375 : f32 to vector<8x128xf32>
    %1377 = arith.mulf %1374, %1376 : vector<8x128xf32>
    %1378 = arith.addf %1372, %1377 : vector<8x128xf32>
    %c8_711 = arith.constant 8 : index
    %c0_712 = arith.constant 0 : index
    %c0_713 = arith.constant 0 : index
    %1379 = vector.load %arg10[%c8_711, %c0_712, %c0_713] : memref<9x8x128xf32, #tpu.memory_space<vmem>>, vector<1x8x128xf32>
    %1380 = vector.shape_cast %1379 : vector<1x8x128xf32> to vector<8x128xf32>
    %c197 = arith.constant 197 : index
    %1381 = memref.load %arg1[%c197] : memref<288xf32, #tpu.memory_space<smem>>
    %1382 = vector.broadcast %1381 : f32 to vector<8x128xf32>
    %1383 = arith.mulf %1380, %1382 : vector<8x128xf32>
    %1384 = arith.addf %1378, %1383 : vector<8x128xf32>
    %c21_714 = arith.constant 21 : index
    %1385 = memref.load %arg2[%c21_714] : memref<32xf32, #tpu.memory_space<smem>>
    %1386 = vector.broadcast %1385 : f32 to vector<8x128xf32>
    %1387 = arith.addf %1384, %1386 : vector<8x128xf32>
    %cst_715 = arith.constant 0.000000e+00 : f32
    %1388 = vector.broadcast %cst_715 : f32 to vector<8x128xf32>
    %1389 = arith.maximumf %1387, %1388 : vector<8x128xf32>
    %1390 = arith.truncf %1389 : vector<8x128xf32> to vector<8x128xbf16>
    %c0_716 = arith.constant 0 : index
    %c2688 = arith.constant 2688 : index
    %1391 = vector.load %arg11[%c0_716, %c2688] : memref<8x4096xbf16, #tpu.memory_space<vmem>>, vector<8x128xbf16>
    tpu.vector_store %arg11[%c0_716, %c2688], %1390 {strides = array<i32>} : memref<8x4096xbf16, #tpu.memory_space<vmem>>, vector<8x128xbf16>,
    %c0_717 = arith.constant 0 : index
    %c0_718 = arith.constant 0 : index
    %c0_719 = arith.constant 0 : index
    %1392 = vector.load %arg10[%c0_717, %c0_718, %c0_719] : memref<9x8x128xf32, #tpu.memory_space<vmem>>, vector<1x8x128xf32>
    %1393 = vector.shape_cast %1392 : vector<1x8x128xf32> to vector<8x128xf32>
    %c198 = arith.constant 198 : index
    %1394 = memref.load %arg1[%c198] : memref<288xf32, #tpu.memory_space<smem>>
    %1395 = vector.broadcast %1394 : f32 to vector<8x128xf32>
    %1396 = arith.mulf %1393, %1395 : vector<8x128xf32>
    %c1_720 = arith.constant 1 : index
    %c0_721 = arith.constant 0 : index
    %c0_722 = arith.constant 0 : index
    %1397 = vector.load %arg10[%c1_720, %c0_721, %c0_722] : memref<9x8x128xf32, #tpu.memory_space<vmem>>, vector<1x8x128xf32>
    %1398 = vector.shape_cast %1397 : vector<1x8x128xf32> to vector<8x128xf32>
    %c199 = arith.constant 199 : index
    %1399 = memref.load %arg1[%c199] : memref<288xf32, #tpu.memory_space<smem>>
    %1400 = vector.broadcast %1399 : f32 to vector<8x128xf32>
    %1401 = arith.mulf %1398, %1400 : vector<8x128xf32>
    %1402 = arith.addf %1396, %1401 : vector<8x128xf32>
    %c2_723 = arith.constant 2 : index
    %c0_724 = arith.constant 0 : index
    %c0_725 = arith.constant 0 : index
    %1403 = vector.load %arg10[%c2_723, %c0_724, %c0_725] : memref<9x8x128xf32, #tpu.memory_space<vmem>>, vector<1x8x128xf32>
    %1404 = vector.shape_cast %1403 : vector<1x8x128xf32> to vector<8x128xf32>
    %c200 = arith.constant 200 : index
    %1405 = memref.load %arg1[%c200] : memref<288xf32, #tpu.memory_space<smem>>
    %1406 = vector.broadcast %1405 : f32 to vector<8x128xf32>
    %1407 = arith.mulf %1404, %1406 : vector<8x128xf32>
    %1408 = arith.addf %1402, %1407 : vector<8x128xf32>
    %c3_726 = arith.constant 3 : index
    %c0_727 = arith.constant 0 : index
    %c0_728 = arith.constant 0 : index
    %1409 = vector.load %arg10[%c3_726, %c0_727, %c0_728] : memref<9x8x128xf32, #tpu.memory_space<vmem>>, vector<1x8x128xf32>
    %1410 = vector.shape_cast %1409 : vector<1x8x128xf32> to vector<8x128xf32>
    %c201 = arith.constant 201 : index
    %1411 = memref.load %arg1[%c201] : memref<288xf32, #tpu.memory_space<smem>>
    %1412 = vector.broadcast %1411 : f32 to vector<8x128xf32>
    %1413 = arith.mulf %1410, %1412 : vector<8x128xf32>
    %1414 = arith.addf %1408, %1413 : vector<8x128xf32>
    %c4_729 = arith.constant 4 : index
    %c0_730 = arith.constant 0 : index
    %c0_731 = arith.constant 0 : index
    %1415 = vector.load %arg10[%c4_729, %c0_730, %c0_731] : memref<9x8x128xf32, #tpu.memory_space<vmem>>, vector<1x8x128xf32>
    %1416 = vector.shape_cast %1415 : vector<1x8x128xf32> to vector<8x128xf32>
    %c202 = arith.constant 202 : index
    %1417 = memref.load %arg1[%c202] : memref<288xf32, #tpu.memory_space<smem>>
    %1418 = vector.broadcast %1417 : f32 to vector<8x128xf32>
    %1419 = arith.mulf %1416, %1418 : vector<8x128xf32>
    %1420 = arith.addf %1414, %1419 : vector<8x128xf32>
    %c5_732 = arith.constant 5 : index
    %c0_733 = arith.constant 0 : index
    %c0_734 = arith.constant 0 : index
    %1421 = vector.load %arg10[%c5_732, %c0_733, %c0_734] : memref<9x8x128xf32, #tpu.memory_space<vmem>>, vector<1x8x128xf32>
    %1422 = vector.shape_cast %1421 : vector<1x8x128xf32> to vector<8x128xf32>
    %c203 = arith.constant 203 : index
    %1423 = memref.load %arg1[%c203] : memref<288xf32, #tpu.memory_space<smem>>
    %1424 = vector.broadcast %1423 : f32 to vector<8x128xf32>
    %1425 = arith.mulf %1422, %1424 : vector<8x128xf32>
    %1426 = arith.addf %1420, %1425 : vector<8x128xf32>
    %c6_735 = arith.constant 6 : index
    %c0_736 = arith.constant 0 : index
    %c0_737 = arith.constant 0 : index
    %1427 = vector.load %arg10[%c6_735, %c0_736, %c0_737] : memref<9x8x128xf32, #tpu.memory_space<vmem>>, vector<1x8x128xf32>
    %1428 = vector.shape_cast %1427 : vector<1x8x128xf32> to vector<8x128xf32>
    %c204 = arith.constant 204 : index
    %1429 = memref.load %arg1[%c204] : memref<288xf32, #tpu.memory_space<smem>>
    %1430 = vector.broadcast %1429 : f32 to vector<8x128xf32>
    %1431 = arith.mulf %1428, %1430 : vector<8x128xf32>
    %1432 = arith.addf %1426, %1431 : vector<8x128xf32>
    %c7_738 = arith.constant 7 : index
    %c0_739 = arith.constant 0 : index
    %c0_740 = arith.constant 0 : index
    %1433 = vector.load %arg10[%c7_738, %c0_739, %c0_740] : memref<9x8x128xf32, #tpu.memory_space<vmem>>, vector<1x8x128xf32>
    %1434 = vector.shape_cast %1433 : vector<1x8x128xf32> to vector<8x128xf32>
    %c205 = arith.constant 205 : index
    %1435 = memref.load %arg1[%c205] : memref<288xf32, #tpu.memory_space<smem>>
    %1436 = vector.broadcast %1435 : f32 to vector<8x128xf32>
    %1437 = arith.mulf %1434, %1436 : vector<8x128xf32>
    %1438 = arith.addf %1432, %1437 : vector<8x128xf32>
    %c8_741 = arith.constant 8 : index
    %c0_742 = arith.constant 0 : index
    %c0_743 = arith.constant 0 : index
    %1439 = vector.load %arg10[%c8_741, %c0_742, %c0_743] : memref<9x8x128xf32, #tpu.memory_space<vmem>>, vector<1x8x128xf32>
    %1440 = vector.shape_cast %1439 : vector<1x8x128xf32> to vector<8x128xf32>
    %c206 = arith.constant 206 : index
    %1441 = memref.load %arg1[%c206] : memref<288xf32, #tpu.memory_space<smem>>
    %1442 = vector.broadcast %1441 : f32 to vector<8x128xf32>
    %1443 = arith.mulf %1440, %1442 : vector<8x128xf32>
    %1444 = arith.addf %1438, %1443 : vector<8x128xf32>
    %c22_744 = arith.constant 22 : index
    %1445 = memref.load %arg2[%c22_744] : memref<32xf32, #tpu.memory_space<smem>>
    %1446 = vector.broadcast %1445 : f32 to vector<8x128xf32>
    %1447 = arith.addf %1444, %1446 : vector<8x128xf32>
    %cst_745 = arith.constant 0.000000e+00 : f32
    %1448 = vector.broadcast %cst_745 : f32 to vector<8x128xf32>
    %1449 = arith.maximumf %1447, %1448 : vector<8x128xf32>
    %1450 = arith.truncf %1449 : vector<8x128xf32> to vector<8x128xbf16>
    %c0_746 = arith.constant 0 : index
    %c2816 = arith.constant 2816 : index
    %1451 = vector.load %arg11[%c0_746, %c2816] : memref<8x4096xbf16, #tpu.memory_space<vmem>>, vector<8x128xbf16>
    tpu.vector_store %arg11[%c0_746, %c2816], %1450 {strides = array<i32>} : memref<8x4096xbf16, #tpu.memory_space<vmem>>, vector<8x128xbf16>,
    %c0_747 = arith.constant 0 : index
    %c0_748 = arith.constant 0 : index
    %c0_749 = arith.constant 0 : index
    %1452 = vector.load %arg10[%c0_747, %c0_748, %c0_749] : memref<9x8x128xf32, #tpu.memory_space<vmem>>, vector<1x8x128xf32>
    %1453 = vector.shape_cast %1452 : vector<1x8x128xf32> to vector<8x128xf32>
    %c207 = arith.constant 207 : index
    %1454 = memref.load %arg1[%c207] : memref<288xf32, #tpu.memory_space<smem>>
    %1455 = vector.broadcast %1454 : f32 to vector<8x128xf32>
    %1456 = arith.mulf %1453, %1455 : vector<8x128xf32>
    %c1_750 = arith.constant 1 : index
    %c0_751 = arith.constant 0 : index
    %c0_752 = arith.constant 0 : index
    %1457 = vector.load %arg10[%c1_750, %c0_751, %c0_752] : memref<9x8x128xf32, #tpu.memory_space<vmem>>, vector<1x8x128xf32>
    %1458 = vector.shape_cast %1457 : vector<1x8x128xf32> to vector<8x128xf32>
    %c208 = arith.constant 208 : index
    %1459 = memref.load %arg1[%c208] : memref<288xf32, #tpu.memory_space<smem>>
    %1460 = vector.broadcast %1459 : f32 to vector<8x128xf32>
    %1461 = arith.mulf %1458, %1460 : vector<8x128xf32>
    %1462 = arith.addf %1456, %1461 : vector<8x128xf32>
    %c2_753 = arith.constant 2 : index
    %c0_754 = arith.constant 0 : index
    %c0_755 = arith.constant 0 : index
    %1463 = vector.load %arg10[%c2_753, %c0_754, %c0_755] : memref<9x8x128xf32, #tpu.memory_space<vmem>>, vector<1x8x128xf32>
    %1464 = vector.shape_cast %1463 : vector<1x8x128xf32> to vector<8x128xf32>
    %c209 = arith.constant 209 : index
    %1465 = memref.load %arg1[%c209] : memref<288xf32, #tpu.memory_space<smem>>
    %1466 = vector.broadcast %1465 : f32 to vector<8x128xf32>
    %1467 = arith.mulf %1464, %1466 : vector<8x128xf32>
    %1468 = arith.addf %1462, %1467 : vector<8x128xf32>
    %c3_756 = arith.constant 3 : index
    %c0_757 = arith.constant 0 : index
    %c0_758 = arith.constant 0 : index
    %1469 = vector.load %arg10[%c3_756, %c0_757, %c0_758] : memref<9x8x128xf32, #tpu.memory_space<vmem>>, vector<1x8x128xf32>
    %1470 = vector.shape_cast %1469 : vector<1x8x128xf32> to vector<8x128xf32>
    %c210 = arith.constant 210 : index
    %1471 = memref.load %arg1[%c210] : memref<288xf32, #tpu.memory_space<smem>>
    %1472 = vector.broadcast %1471 : f32 to vector<8x128xf32>
    %1473 = arith.mulf %1470, %1472 : vector<8x128xf32>
    %1474 = arith.addf %1468, %1473 : vector<8x128xf32>
    %c4_759 = arith.constant 4 : index
    %c0_760 = arith.constant 0 : index
    %c0_761 = arith.constant 0 : index
    %1475 = vector.load %arg10[%c4_759, %c0_760, %c0_761] : memref<9x8x128xf32, #tpu.memory_space<vmem>>, vector<1x8x128xf32>
    %1476 = vector.shape_cast %1475 : vector<1x8x128xf32> to vector<8x128xf32>
    %c211 = arith.constant 211 : index
    %1477 = memref.load %arg1[%c211] : memref<288xf32, #tpu.memory_space<smem>>
    %1478 = vector.broadcast %1477 : f32 to vector<8x128xf32>
    %1479 = arith.mulf %1476, %1478 : vector<8x128xf32>
    %1480 = arith.addf %1474, %1479 : vector<8x128xf32>
    %c5_762 = arith.constant 5 : index
    %c0_763 = arith.constant 0 : index
    %c0_764 = arith.constant 0 : index
    %1481 = vector.load %arg10[%c5_762, %c0_763, %c0_764] : memref<9x8x128xf32, #tpu.memory_space<vmem>>, vector<1x8x128xf32>
    %1482 = vector.shape_cast %1481 : vector<1x8x128xf32> to vector<8x128xf32>
    %c212 = arith.constant 212 : index
    %1483 = memref.load %arg1[%c212] : memref<288xf32, #tpu.memory_space<smem>>
    %1484 = vector.broadcast %1483 : f32 to vector<8x128xf32>
    %1485 = arith.mulf %1482, %1484 : vector<8x128xf32>
    %1486 = arith.addf %1480, %1485 : vector<8x128xf32>
    %c6_765 = arith.constant 6 : index
    %c0_766 = arith.constant 0 : index
    %c0_767 = arith.constant 0 : index
    %1487 = vector.load %arg10[%c6_765, %c0_766, %c0_767] : memref<9x8x128xf32, #tpu.memory_space<vmem>>, vector<1x8x128xf32>
    %1488 = vector.shape_cast %1487 : vector<1x8x128xf32> to vector<8x128xf32>
    %c213 = arith.constant 213 : index
    %1489 = memref.load %arg1[%c213] : memref<288xf32, #tpu.memory_space<smem>>
    %1490 = vector.broadcast %1489 : f32 to vector<8x128xf32>
    %1491 = arith.mulf %1488, %1490 : vector<8x128xf32>
    %1492 = arith.addf %1486, %1491 : vector<8x128xf32>
    %c7_768 = arith.constant 7 : index
    %c0_769 = arith.constant 0 : index
    %c0_770 = arith.constant 0 : index
    %1493 = vector.load %arg10[%c7_768, %c0_769, %c0_770] : memref<9x8x128xf32, #tpu.memory_space<vmem>>, vector<1x8x128xf32>
    %1494 = vector.shape_cast %1493 : vector<1x8x128xf32> to vector<8x128xf32>
    %c214 = arith.constant 214 : index
    %1495 = memref.load %arg1[%c214] : memref<288xf32, #tpu.memory_space<smem>>
    %1496 = vector.broadcast %1495 : f32 to vector<8x128xf32>
    %1497 = arith.mulf %1494, %1496 : vector<8x128xf32>
    %1498 = arith.addf %1492, %1497 : vector<8x128xf32>
    %c8_771 = arith.constant 8 : index
    %c0_772 = arith.constant 0 : index
    %c0_773 = arith.constant 0 : index
    %1499 = vector.load %arg10[%c8_771, %c0_772, %c0_773] : memref<9x8x128xf32, #tpu.memory_space<vmem>>, vector<1x8x128xf32>
    %1500 = vector.shape_cast %1499 : vector<1x8x128xf32> to vector<8x128xf32>
    %c215 = arith.constant 215 : index
    %1501 = memref.load %arg1[%c215] : memref<288xf32, #tpu.memory_space<smem>>
    %1502 = vector.broadcast %1501 : f32 to vector<8x128xf32>
    %1503 = arith.mulf %1500, %1502 : vector<8x128xf32>
    %1504 = arith.addf %1498, %1503 : vector<8x128xf32>
    %c23_774 = arith.constant 23 : index
    %1505 = memref.load %arg2[%c23_774] : memref<32xf32, #tpu.memory_space<smem>>
    %1506 = vector.broadcast %1505 : f32 to vector<8x128xf32>
    %1507 = arith.addf %1504, %1506 : vector<8x128xf32>
    %cst_775 = arith.constant 0.000000e+00 : f32
    %1508 = vector.broadcast %cst_775 : f32 to vector<8x128xf32>
    %1509 = arith.maximumf %1507, %1508 : vector<8x128xf32>
    %1510 = arith.truncf %1509 : vector<8x128xf32> to vector<8x128xbf16>
    %c0_776 = arith.constant 0 : index
    %c2944 = arith.constant 2944 : index
    %1511 = vector.load %arg11[%c0_776, %c2944] : memref<8x4096xbf16, #tpu.memory_space<vmem>>, vector<8x128xbf16>
    tpu.vector_store %arg11[%c0_776, %c2944], %1510 {strides = array<i32>} : memref<8x4096xbf16, #tpu.memory_space<vmem>>, vector<8x128xbf16>,
    %c0_777 = arith.constant 0 : index
    %c0_778 = arith.constant 0 : index
    %c0_779 = arith.constant 0 : index
    %1512 = vector.load %arg10[%c0_777, %c0_778, %c0_779] : memref<9x8x128xf32, #tpu.memory_space<vmem>>, vector<1x8x128xf32>
    %1513 = vector.shape_cast %1512 : vector<1x8x128xf32> to vector<8x128xf32>
    %c216 = arith.constant 216 : index
    %1514 = memref.load %arg1[%c216] : memref<288xf32, #tpu.memory_space<smem>>
    %1515 = vector.broadcast %1514 : f32 to vector<8x128xf32>
    %1516 = arith.mulf %1513, %1515 : vector<8x128xf32>
    %c1_780 = arith.constant 1 : index
    %c0_781 = arith.constant 0 : index
    %c0_782 = arith.constant 0 : index
    %1517 = vector.load %arg10[%c1_780, %c0_781, %c0_782] : memref<9x8x128xf32, #tpu.memory_space<vmem>>, vector<1x8x128xf32>
    %1518 = vector.shape_cast %1517 : vector<1x8x128xf32> to vector<8x128xf32>
    %c217 = arith.constant 217 : index
    %1519 = memref.load %arg1[%c217] : memref<288xf32, #tpu.memory_space<smem>>
    %1520 = vector.broadcast %1519 : f32 to vector<8x128xf32>
    %1521 = arith.mulf %1518, %1520 : vector<8x128xf32>
    %1522 = arith.addf %1516, %1521 : vector<8x128xf32>
    %c2_783 = arith.constant 2 : index
    %c0_784 = arith.constant 0 : index
    %c0_785 = arith.constant 0 : index
    %1523 = vector.load %arg10[%c2_783, %c0_784, %c0_785] : memref<9x8x128xf32, #tpu.memory_space<vmem>>, vector<1x8x128xf32>
    %1524 = vector.shape_cast %1523 : vector<1x8x128xf32> to vector<8x128xf32>
    %c218 = arith.constant 218 : index
    %1525 = memref.load %arg1[%c218] : memref<288xf32, #tpu.memory_space<smem>>
    %1526 = vector.broadcast %1525 : f32 to vector<8x128xf32>
    %1527 = arith.mulf %1524, %1526 : vector<8x128xf32>
    %1528 = arith.addf %1522, %1527 : vector<8x128xf32>
    %c3_786 = arith.constant 3 : index
    %c0_787 = arith.constant 0 : index
    %c0_788 = arith.constant 0 : index
    %1529 = vector.load %arg10[%c3_786, %c0_787, %c0_788] : memref<9x8x128xf32, #tpu.memory_space<vmem>>, vector<1x8x128xf32>
    %1530 = vector.shape_cast %1529 : vector<1x8x128xf32> to vector<8x128xf32>
    %c219 = arith.constant 219 : index
    %1531 = memref.load %arg1[%c219] : memref<288xf32, #tpu.memory_space<smem>>
    %1532 = vector.broadcast %1531 : f32 to vector<8x128xf32>
    %1533 = arith.mulf %1530, %1532 : vector<8x128xf32>
    %1534 = arith.addf %1528, %1533 : vector<8x128xf32>
    %c4_789 = arith.constant 4 : index
    %c0_790 = arith.constant 0 : index
    %c0_791 = arith.constant 0 : index
    %1535 = vector.load %arg10[%c4_789, %c0_790, %c0_791] : memref<9x8x128xf32, #tpu.memory_space<vmem>>, vector<1x8x128xf32>
    %1536 = vector.shape_cast %1535 : vector<1x8x128xf32> to vector<8x128xf32>
    %c220 = arith.constant 220 : index
    %1537 = memref.load %arg1[%c220] : memref<288xf32, #tpu.memory_space<smem>>
    %1538 = vector.broadcast %1537 : f32 to vector<8x128xf32>
    %1539 = arith.mulf %1536, %1538 : vector<8x128xf32>
    %1540 = arith.addf %1534, %1539 : vector<8x128xf32>
    %c5_792 = arith.constant 5 : index
    %c0_793 = arith.constant 0 : index
    %c0_794 = arith.constant 0 : index
    %1541 = vector.load %arg10[%c5_792, %c0_793, %c0_794] : memref<9x8x128xf32, #tpu.memory_space<vmem>>, vector<1x8x128xf32>
    %1542 = vector.shape_cast %1541 : vector<1x8x128xf32> to vector<8x128xf32>
    %c221 = arith.constant 221 : index
    %1543 = memref.load %arg1[%c221] : memref<288xf32, #tpu.memory_space<smem>>
    %1544 = vector.broadcast %1543 : f32 to vector<8x128xf32>
    %1545 = arith.mulf %1542, %1544 : vector<8x128xf32>
    %1546 = arith.addf %1540, %1545 : vector<8x128xf32>
    %c6_795 = arith.constant 6 : index
    %c0_796 = arith.constant 0 : index
    %c0_797 = arith.constant 0 : index
    %1547 = vector.load %arg10[%c6_795, %c0_796, %c0_797] : memref<9x8x128xf32, #tpu.memory_space<vmem>>, vector<1x8x128xf32>
    %1548 = vector.shape_cast %1547 : vector<1x8x128xf32> to vector<8x128xf32>
    %c222 = arith.constant 222 : index
    %1549 = memref.load %arg1[%c222] : memref<288xf32, #tpu.memory_space<smem>>
    %1550 = vector.broadcast %1549 : f32 to vector<8x128xf32>
    %1551 = arith.mulf %1548, %1550 : vector<8x128xf32>
    %1552 = arith.addf %1546, %1551 : vector<8x128xf32>
    %c7_798 = arith.constant 7 : index
    %c0_799 = arith.constant 0 : index
    %c0_800 = arith.constant 0 : index
    %1553 = vector.load %arg10[%c7_798, %c0_799, %c0_800] : memref<9x8x128xf32, #tpu.memory_space<vmem>>, vector<1x8x128xf32>
    %1554 = vector.shape_cast %1553 : vector<1x8x128xf32> to vector<8x128xf32>
    %c223 = arith.constant 223 : index
    %1555 = memref.load %arg1[%c223] : memref<288xf32, #tpu.memory_space<smem>>
    %1556 = vector.broadcast %1555 : f32 to vector<8x128xf32>
    %1557 = arith.mulf %1554, %1556 : vector<8x128xf32>
    %1558 = arith.addf %1552, %1557 : vector<8x128xf32>
    %c8_801 = arith.constant 8 : index
    %c0_802 = arith.constant 0 : index
    %c0_803 = arith.constant 0 : index
    %1559 = vector.load %arg10[%c8_801, %c0_802, %c0_803] : memref<9x8x128xf32, #tpu.memory_space<vmem>>, vector<1x8x128xf32>
    %1560 = vector.shape_cast %1559 : vector<1x8x128xf32> to vector<8x128xf32>
    %c224 = arith.constant 224 : index
    %1561 = memref.load %arg1[%c224] : memref<288xf32, #tpu.memory_space<smem>>
    %1562 = vector.broadcast %1561 : f32 to vector<8x128xf32>
    %1563 = arith.mulf %1560, %1562 : vector<8x128xf32>
    %1564 = arith.addf %1558, %1563 : vector<8x128xf32>
    %c24_804 = arith.constant 24 : index
    %1565 = memref.load %arg2[%c24_804] : memref<32xf32, #tpu.memory_space<smem>>
    %1566 = vector.broadcast %1565 : f32 to vector<8x128xf32>
    %1567 = arith.addf %1564, %1566 : vector<8x128xf32>
    %cst_805 = arith.constant 0.000000e+00 : f32
    %1568 = vector.broadcast %cst_805 : f32 to vector<8x128xf32>
    %1569 = arith.maximumf %1567, %1568 : vector<8x128xf32>
    %1570 = arith.truncf %1569 : vector<8x128xf32> to vector<8x128xbf16>
    %c0_806 = arith.constant 0 : index
    %c3072 = arith.constant 3072 : index
    %1571 = vector.load %arg11[%c0_806, %c3072] : memref<8x4096xbf16, #tpu.memory_space<vmem>>, vector<8x128xbf16>
    tpu.vector_store %arg11[%c0_806, %c3072], %1570 {strides = array<i32>} : memref<8x4096xbf16, #tpu.memory_space<vmem>>, vector<8x128xbf16>,
    %c0_807 = arith.constant 0 : index
    %c0_808 = arith.constant 0 : index
    %c0_809 = arith.constant 0 : index
    %1572 = vector.load %arg10[%c0_807, %c0_808, %c0_809] : memref<9x8x128xf32, #tpu.memory_space<vmem>>, vector<1x8x128xf32>
    %1573 = vector.shape_cast %1572 : vector<1x8x128xf32> to vector<8x128xf32>
    %c225 = arith.constant 225 : index
    %1574 = memref.load %arg1[%c225] : memref<288xf32, #tpu.memory_space<smem>>
    %1575 = vector.broadcast %1574 : f32 to vector<8x128xf32>
    %1576 = arith.mulf %1573, %1575 : vector<8x128xf32>
    %c1_810 = arith.constant 1 : index
    %c0_811 = arith.constant 0 : index
    %c0_812 = arith.constant 0 : index
    %1577 = vector.load %arg10[%c1_810, %c0_811, %c0_812] : memref<9x8x128xf32, #tpu.memory_space<vmem>>, vector<1x8x128xf32>
    %1578 = vector.shape_cast %1577 : vector<1x8x128xf32> to vector<8x128xf32>
    %c226 = arith.constant 226 : index
    %1579 = memref.load %arg1[%c226] : memref<288xf32, #tpu.memory_space<smem>>
    %1580 = vector.broadcast %1579 : f32 to vector<8x128xf32>
    %1581 = arith.mulf %1578, %1580 : vector<8x128xf32>
    %1582 = arith.addf %1576, %1581 : vector<8x128xf32>
    %c2_813 = arith.constant 2 : index
    %c0_814 = arith.constant 0 : index
    %c0_815 = arith.constant 0 : index
    %1583 = vector.load %arg10[%c2_813, %c0_814, %c0_815] : memref<9x8x128xf32, #tpu.memory_space<vmem>>, vector<1x8x128xf32>
    %1584 = vector.shape_cast %1583 : vector<1x8x128xf32> to vector<8x128xf32>
    %c227 = arith.constant 227 : index
    %1585 = memref.load %arg1[%c227] : memref<288xf32, #tpu.memory_space<smem>>
    %1586 = vector.broadcast %1585 : f32 to vector<8x128xf32>
    %1587 = arith.mulf %1584, %1586 : vector<8x128xf32>
    %1588 = arith.addf %1582, %1587 : vector<8x128xf32>
    %c3_816 = arith.constant 3 : index
    %c0_817 = arith.constant 0 : index
    %c0_818 = arith.constant 0 : index
    %1589 = vector.load %arg10[%c3_816, %c0_817, %c0_818] : memref<9x8x128xf32, #tpu.memory_space<vmem>>, vector<1x8x128xf32>
    %1590 = vector.shape_cast %1589 : vector<1x8x128xf32> to vector<8x128xf32>
    %c228 = arith.constant 228 : index
    %1591 = memref.load %arg1[%c228] : memref<288xf32, #tpu.memory_space<smem>>
    %1592 = vector.broadcast %1591 : f32 to vector<8x128xf32>
    %1593 = arith.mulf %1590, %1592 : vector<8x128xf32>
    %1594 = arith.addf %1588, %1593 : vector<8x128xf32>
    %c4_819 = arith.constant 4 : index
    %c0_820 = arith.constant 0 : index
    %c0_821 = arith.constant 0 : index
    %1595 = vector.load %arg10[%c4_819, %c0_820, %c0_821] : memref<9x8x128xf32, #tpu.memory_space<vmem>>, vector<1x8x128xf32>
    %1596 = vector.shape_cast %1595 : vector<1x8x128xf32> to vector<8x128xf32>
    %c229 = arith.constant 229 : index
    %1597 = memref.load %arg1[%c229] : memref<288xf32, #tpu.memory_space<smem>>
    %1598 = vector.broadcast %1597 : f32 to vector<8x128xf32>
    %1599 = arith.mulf %1596, %1598 : vector<8x128xf32>
    %1600 = arith.addf %1594, %1599 : vector<8x128xf32>
    %c5_822 = arith.constant 5 : index
    %c0_823 = arith.constant 0 : index
    %c0_824 = arith.constant 0 : index
    %1601 = vector.load %arg10[%c5_822, %c0_823, %c0_824] : memref<9x8x128xf32, #tpu.memory_space<vmem>>, vector<1x8x128xf32>
    %1602 = vector.shape_cast %1601 : vector<1x8x128xf32> to vector<8x128xf32>
    %c230 = arith.constant 230 : index
    %1603 = memref.load %arg1[%c230] : memref<288xf32, #tpu.memory_space<smem>>
    %1604 = vector.broadcast %1603 : f32 to vector<8x128xf32>
    %1605 = arith.mulf %1602, %1604 : vector<8x128xf32>
    %1606 = arith.addf %1600, %1605 : vector<8x128xf32>
    %c6_825 = arith.constant 6 : index
    %c0_826 = arith.constant 0 : index
    %c0_827 = arith.constant 0 : index
    %1607 = vector.load %arg10[%c6_825, %c0_826, %c0_827] : memref<9x8x128xf32, #tpu.memory_space<vmem>>, vector<1x8x128xf32>
    %1608 = vector.shape_cast %1607 : vector<1x8x128xf32> to vector<8x128xf32>
    %c231 = arith.constant 231 : index
    %1609 = memref.load %arg1[%c231] : memref<288xf32, #tpu.memory_space<smem>>
    %1610 = vector.broadcast %1609 : f32 to vector<8x128xf32>
    %1611 = arith.mulf %1608, %1610 : vector<8x128xf32>
    %1612 = arith.addf %1606, %1611 : vector<8x128xf32>
    %c7_828 = arith.constant 7 : index
    %c0_829 = arith.constant 0 : index
    %c0_830 = arith.constant 0 : index
    %1613 = vector.load %arg10[%c7_828, %c0_829, %c0_830] : memref<9x8x128xf32, #tpu.memory_space<vmem>>, vector<1x8x128xf32>
    %1614 = vector.shape_cast %1613 : vector<1x8x128xf32> to vector<8x128xf32>
    %c232 = arith.constant 232 : index
    %1615 = memref.load %arg1[%c232] : memref<288xf32, #tpu.memory_space<smem>>
    %1616 = vector.broadcast %1615 : f32 to vector<8x128xf32>
    %1617 = arith.mulf %1614, %1616 : vector<8x128xf32>
    %1618 = arith.addf %1612, %1617 : vector<8x128xf32>
    %c8_831 = arith.constant 8 : index
    %c0_832 = arith.constant 0 : index
    %c0_833 = arith.constant 0 : index
    %1619 = vector.load %arg10[%c8_831, %c0_832, %c0_833] : memref<9x8x128xf32, #tpu.memory_space<vmem>>, vector<1x8x128xf32>
    %1620 = vector.shape_cast %1619 : vector<1x8x128xf32> to vector<8x128xf32>
    %c233 = arith.constant 233 : index
    %1621 = memref.load %arg1[%c233] : memref<288xf32, #tpu.memory_space<smem>>
    %1622 = vector.broadcast %1621 : f32 to vector<8x128xf32>
    %1623 = arith.mulf %1620, %1622 : vector<8x128xf32>
    %1624 = arith.addf %1618, %1623 : vector<8x128xf32>
    %c25_834 = arith.constant 25 : index
    %1625 = memref.load %arg2[%c25_834] : memref<32xf32, #tpu.memory_space<smem>>
    %1626 = vector.broadcast %1625 : f32 to vector<8x128xf32>
    %1627 = arith.addf %1624, %1626 : vector<8x128xf32>
    %cst_835 = arith.constant 0.000000e+00 : f32
    %1628 = vector.broadcast %cst_835 : f32 to vector<8x128xf32>
    %1629 = arith.maximumf %1627, %1628 : vector<8x128xf32>
    %1630 = arith.truncf %1629 : vector<8x128xf32> to vector<8x128xbf16>
    %c0_836 = arith.constant 0 : index
    %c3200 = arith.constant 3200 : index
    %1631 = vector.load %arg11[%c0_836, %c3200] : memref<8x4096xbf16, #tpu.memory_space<vmem>>, vector<8x128xbf16>
    tpu.vector_store %arg11[%c0_836, %c3200], %1630 {strides = array<i32>} : memref<8x4096xbf16, #tpu.memory_space<vmem>>, vector<8x128xbf16>,
    %c0_837 = arith.constant 0 : index
    %c0_838 = arith.constant 0 : index
    %c0_839 = arith.constant 0 : index
    %1632 = vector.load %arg10[%c0_837, %c0_838, %c0_839] : memref<9x8x128xf32, #tpu.memory_space<vmem>>, vector<1x8x128xf32>
    %1633 = vector.shape_cast %1632 : vector<1x8x128xf32> to vector<8x128xf32>
    %c234 = arith.constant 234 : index
    %1634 = memref.load %arg1[%c234] : memref<288xf32, #tpu.memory_space<smem>>
    %1635 = vector.broadcast %1634 : f32 to vector<8x128xf32>
    %1636 = arith.mulf %1633, %1635 : vector<8x128xf32>
    %c1_840 = arith.constant 1 : index
    %c0_841 = arith.constant 0 : index
    %c0_842 = arith.constant 0 : index
    %1637 = vector.load %arg10[%c1_840, %c0_841, %c0_842] : memref<9x8x128xf32, #tpu.memory_space<vmem>>, vector<1x8x128xf32>
    %1638 = vector.shape_cast %1637 : vector<1x8x128xf32> to vector<8x128xf32>
    %c235 = arith.constant 235 : index
    %1639 = memref.load %arg1[%c235] : memref<288xf32, #tpu.memory_space<smem>>
    %1640 = vector.broadcast %1639 : f32 to vector<8x128xf32>
    %1641 = arith.mulf %1638, %1640 : vector<8x128xf32>
    %1642 = arith.addf %1636, %1641 : vector<8x128xf32>
    %c2_843 = arith.constant 2 : index
    %c0_844 = arith.constant 0 : index
    %c0_845 = arith.constant 0 : index
    %1643 = vector.load %arg10[%c2_843, %c0_844, %c0_845] : memref<9x8x128xf32, #tpu.memory_space<vmem>>, vector<1x8x128xf32>
    %1644 = vector.shape_cast %1643 : vector<1x8x128xf32> to vector<8x128xf32>
    %c236 = arith.constant 236 : index
    %1645 = memref.load %arg1[%c236] : memref<288xf32, #tpu.memory_space<smem>>
    %1646 = vector.broadcast %1645 : f32 to vector<8x128xf32>
    %1647 = arith.mulf %1644, %1646 : vector<8x128xf32>
    %1648 = arith.addf %1642, %1647 : vector<8x128xf32>
    %c3_846 = arith.constant 3 : index
    %c0_847 = arith.constant 0 : index
    %c0_848 = arith.constant 0 : index
    %1649 = vector.load %arg10[%c3_846, %c0_847, %c0_848] : memref<9x8x128xf32, #tpu.memory_space<vmem>>, vector<1x8x128xf32>
    %1650 = vector.shape_cast %1649 : vector<1x8x128xf32> to vector<8x128xf32>
    %c237 = arith.constant 237 : index
    %1651 = memref.load %arg1[%c237] : memref<288xf32, #tpu.memory_space<smem>>
    %1652 = vector.broadcast %1651 : f32 to vector<8x128xf32>
    %1653 = arith.mulf %1650, %1652 : vector<8x128xf32>
    %1654 = arith.addf %1648, %1653 : vector<8x128xf32>
    %c4_849 = arith.constant 4 : index
    %c0_850 = arith.constant 0 : index
    %c0_851 = arith.constant 0 : index
    %1655 = vector.load %arg10[%c4_849, %c0_850, %c0_851] : memref<9x8x128xf32, #tpu.memory_space<vmem>>, vector<1x8x128xf32>
    %1656 = vector.shape_cast %1655 : vector<1x8x128xf32> to vector<8x128xf32>
    %c238 = arith.constant 238 : index
    %1657 = memref.load %arg1[%c238] : memref<288xf32, #tpu.memory_space<smem>>
    %1658 = vector.broadcast %1657 : f32 to vector<8x128xf32>
    %1659 = arith.mulf %1656, %1658 : vector<8x128xf32>
    %1660 = arith.addf %1654, %1659 : vector<8x128xf32>
    %c5_852 = arith.constant 5 : index
    %c0_853 = arith.constant 0 : index
    %c0_854 = arith.constant 0 : index
    %1661 = vector.load %arg10[%c5_852, %c0_853, %c0_854] : memref<9x8x128xf32, #tpu.memory_space<vmem>>, vector<1x8x128xf32>
    %1662 = vector.shape_cast %1661 : vector<1x8x128xf32> to vector<8x128xf32>
    %c239 = arith.constant 239 : index
    %1663 = memref.load %arg1[%c239] : memref<288xf32, #tpu.memory_space<smem>>
    %1664 = vector.broadcast %1663 : f32 to vector<8x128xf32>
    %1665 = arith.mulf %1662, %1664 : vector<8x128xf32>
    %1666 = arith.addf %1660, %1665 : vector<8x128xf32>
    %c6_855 = arith.constant 6 : index
    %c0_856 = arith.constant 0 : index
    %c0_857 = arith.constant 0 : index
    %1667 = vector.load %arg10[%c6_855, %c0_856, %c0_857] : memref<9x8x128xf32, #tpu.memory_space<vmem>>, vector<1x8x128xf32>
    %1668 = vector.shape_cast %1667 : vector<1x8x128xf32> to vector<8x128xf32>
    %c240 = arith.constant 240 : index
    %1669 = memref.load %arg1[%c240] : memref<288xf32, #tpu.memory_space<smem>>
    %1670 = vector.broadcast %1669 : f32 to vector<8x128xf32>
    %1671 = arith.mulf %1668, %1670 : vector<8x128xf32>
    %1672 = arith.addf %1666, %1671 : vector<8x128xf32>
    %c7_858 = arith.constant 7 : index
    %c0_859 = arith.constant 0 : index
    %c0_860 = arith.constant 0 : index
    %1673 = vector.load %arg10[%c7_858, %c0_859, %c0_860] : memref<9x8x128xf32, #tpu.memory_space<vmem>>, vector<1x8x128xf32>
    %1674 = vector.shape_cast %1673 : vector<1x8x128xf32> to vector<8x128xf32>
    %c241 = arith.constant 241 : index
    %1675 = memref.load %arg1[%c241] : memref<288xf32, #tpu.memory_space<smem>>
    %1676 = vector.broadcast %1675 : f32 to vector<8x128xf32>
    %1677 = arith.mulf %1674, %1676 : vector<8x128xf32>
    %1678 = arith.addf %1672, %1677 : vector<8x128xf32>
    %c8_861 = arith.constant 8 : index
    %c0_862 = arith.constant 0 : index
    %c0_863 = arith.constant 0 : index
    %1679 = vector.load %arg10[%c8_861, %c0_862, %c0_863] : memref<9x8x128xf32, #tpu.memory_space<vmem>>, vector<1x8x128xf32>
    %1680 = vector.shape_cast %1679 : vector<1x8x128xf32> to vector<8x128xf32>
    %c242 = arith.constant 242 : index
    %1681 = memref.load %arg1[%c242] : memref<288xf32, #tpu.memory_space<smem>>
    %1682 = vector.broadcast %1681 : f32 to vector<8x128xf32>
    %1683 = arith.mulf %1680, %1682 : vector<8x128xf32>
    %1684 = arith.addf %1678, %1683 : vector<8x128xf32>
    %c26_864 = arith.constant 26 : index
    %1685 = memref.load %arg2[%c26_864] : memref<32xf32, #tpu.memory_space<smem>>
    %1686 = vector.broadcast %1685 : f32 to vector<8x128xf32>
    %1687 = arith.addf %1684, %1686 : vector<8x128xf32>
    %cst_865 = arith.constant 0.000000e+00 : f32
    %1688 = vector.broadcast %cst_865 : f32 to vector<8x128xf32>
    %1689 = arith.maximumf %1687, %1688 : vector<8x128xf32>
    %1690 = arith.truncf %1689 : vector<8x128xf32> to vector<8x128xbf16>
    %c0_866 = arith.constant 0 : index
    %c3328 = arith.constant 3328 : index
    %1691 = vector.load %arg11[%c0_866, %c3328] : memref<8x4096xbf16, #tpu.memory_space<vmem>>, vector<8x128xbf16>
    tpu.vector_store %arg11[%c0_866, %c3328], %1690 {strides = array<i32>} : memref<8x4096xbf16, #tpu.memory_space<vmem>>, vector<8x128xbf16>,
    %c0_867 = arith.constant 0 : index
    %c0_868 = arith.constant 0 : index
    %c0_869 = arith.constant 0 : index
    %1692 = vector.load %arg10[%c0_867, %c0_868, %c0_869] : memref<9x8x128xf32, #tpu.memory_space<vmem>>, vector<1x8x128xf32>
    %1693 = vector.shape_cast %1692 : vector<1x8x128xf32> to vector<8x128xf32>
    %c243 = arith.constant 243 : index
    %1694 = memref.load %arg1[%c243] : memref<288xf32, #tpu.memory_space<smem>>
    %1695 = vector.broadcast %1694 : f32 to vector<8x128xf32>
    %1696 = arith.mulf %1693, %1695 : vector<8x128xf32>
    %c1_870 = arith.constant 1 : index
    %c0_871 = arith.constant 0 : index
    %c0_872 = arith.constant 0 : index
    %1697 = vector.load %arg10[%c1_870, %c0_871, %c0_872] : memref<9x8x128xf32, #tpu.memory_space<vmem>>, vector<1x8x128xf32>
    %1698 = vector.shape_cast %1697 : vector<1x8x128xf32> to vector<8x128xf32>
    %c244 = arith.constant 244 : index
    %1699 = memref.load %arg1[%c244] : memref<288xf32, #tpu.memory_space<smem>>
    %1700 = vector.broadcast %1699 : f32 to vector<8x128xf32>
    %1701 = arith.mulf %1698, %1700 : vector<8x128xf32>
    %1702 = arith.addf %1696, %1701 : vector<8x128xf32>
    %c2_873 = arith.constant 2 : index
    %c0_874 = arith.constant 0 : index
    %c0_875 = arith.constant 0 : index
    %1703 = vector.load %arg10[%c2_873, %c0_874, %c0_875] : memref<9x8x128xf32, #tpu.memory_space<vmem>>, vector<1x8x128xf32>
    %1704 = vector.shape_cast %1703 : vector<1x8x128xf32> to vector<8x128xf32>
    %c245 = arith.constant 245 : index
    %1705 = memref.load %arg1[%c245] : memref<288xf32, #tpu.memory_space<smem>>
    %1706 = vector.broadcast %1705 : f32 to vector<8x128xf32>
    %1707 = arith.mulf %1704, %1706 : vector<8x128xf32>
    %1708 = arith.addf %1702, %1707 : vector<8x128xf32>
    %c3_876 = arith.constant 3 : index
    %c0_877 = arith.constant 0 : index
    %c0_878 = arith.constant 0 : index
    %1709 = vector.load %arg10[%c3_876, %c0_877, %c0_878] : memref<9x8x128xf32, #tpu.memory_space<vmem>>, vector<1x8x128xf32>
    %1710 = vector.shape_cast %1709 : vector<1x8x128xf32> to vector<8x128xf32>
    %c246 = arith.constant 246 : index
    %1711 = memref.load %arg1[%c246] : memref<288xf32, #tpu.memory_space<smem>>
    %1712 = vector.broadcast %1711 : f32 to vector<8x128xf32>
    %1713 = arith.mulf %1710, %1712 : vector<8x128xf32>
    %1714 = arith.addf %1708, %1713 : vector<8x128xf32>
    %c4_879 = arith.constant 4 : index
    %c0_880 = arith.constant 0 : index
    %c0_881 = arith.constant 0 : index
    %1715 = vector.load %arg10[%c4_879, %c0_880, %c0_881] : memref<9x8x128xf32, #tpu.memory_space<vmem>>, vector<1x8x128xf32>
    %1716 = vector.shape_cast %1715 : vector<1x8x128xf32> to vector<8x128xf32>
    %c247 = arith.constant 247 : index
    %1717 = memref.load %arg1[%c247] : memref<288xf32, #tpu.memory_space<smem>>
    %1718 = vector.broadcast %1717 : f32 to vector<8x128xf32>
    %1719 = arith.mulf %1716, %1718 : vector<8x128xf32>
    %1720 = arith.addf %1714, %1719 : vector<8x128xf32>
    %c5_882 = arith.constant 5 : index
    %c0_883 = arith.constant 0 : index
    %c0_884 = arith.constant 0 : index
    %1721 = vector.load %arg10[%c5_882, %c0_883, %c0_884] : memref<9x8x128xf32, #tpu.memory_space<vmem>>, vector<1x8x128xf32>
    %1722 = vector.shape_cast %1721 : vector<1x8x128xf32> to vector<8x128xf32>
    %c248 = arith.constant 248 : index
    %1723 = memref.load %arg1[%c248] : memref<288xf32, #tpu.memory_space<smem>>
    %1724 = vector.broadcast %1723 : f32 to vector<8x128xf32>
    %1725 = arith.mulf %1722, %1724 : vector<8x128xf32>
    %1726 = arith.addf %1720, %1725 : vector<8x128xf32>
    %c6_885 = arith.constant 6 : index
    %c0_886 = arith.constant 0 : index
    %c0_887 = arith.constant 0 : index
    %1727 = vector.load %arg10[%c6_885, %c0_886, %c0_887] : memref<9x8x128xf32, #tpu.memory_space<vmem>>, vector<1x8x128xf32>
    %1728 = vector.shape_cast %1727 : vector<1x8x128xf32> to vector<8x128xf32>
    %c249 = arith.constant 249 : index
    %1729 = memref.load %arg1[%c249] : memref<288xf32, #tpu.memory_space<smem>>
    %1730 = vector.broadcast %1729 : f32 to vector<8x128xf32>
    %1731 = arith.mulf %1728, %1730 : vector<8x128xf32>
    %1732 = arith.addf %1726, %1731 : vector<8x128xf32>
    %c7_888 = arith.constant 7 : index
    %c0_889 = arith.constant 0 : index
    %c0_890 = arith.constant 0 : index
    %1733 = vector.load %arg10[%c7_888, %c0_889, %c0_890] : memref<9x8x128xf32, #tpu.memory_space<vmem>>, vector<1x8x128xf32>
    %1734 = vector.shape_cast %1733 : vector<1x8x128xf32> to vector<8x128xf32>
    %c250 = arith.constant 250 : index
    %1735 = memref.load %arg1[%c250] : memref<288xf32, #tpu.memory_space<smem>>
    %1736 = vector.broadcast %1735 : f32 to vector<8x128xf32>
    %1737 = arith.mulf %1734, %1736 : vector<8x128xf32>
    %1738 = arith.addf %1732, %1737 : vector<8x128xf32>
    %c8_891 = arith.constant 8 : index
    %c0_892 = arith.constant 0 : index
    %c0_893 = arith.constant 0 : index
    %1739 = vector.load %arg10[%c8_891, %c0_892, %c0_893] : memref<9x8x128xf32, #tpu.memory_space<vmem>>, vector<1x8x128xf32>
    %1740 = vector.shape_cast %1739 : vector<1x8x128xf32> to vector<8x128xf32>
    %c251 = arith.constant 251 : index
    %1741 = memref.load %arg1[%c251] : memref<288xf32, #tpu.memory_space<smem>>
    %1742 = vector.broadcast %1741 : f32 to vector<8x128xf32>
    %1743 = arith.mulf %1740, %1742 : vector<8x128xf32>
    %1744 = arith.addf %1738, %1743 : vector<8x128xf32>
    %c27_894 = arith.constant 27 : index
    %1745 = memref.load %arg2[%c27_894] : memref<32xf32, #tpu.memory_space<smem>>
    %1746 = vector.broadcast %1745 : f32 to vector<8x128xf32>
    %1747 = arith.addf %1744, %1746 : vector<8x128xf32>
    %cst_895 = arith.constant 0.000000e+00 : f32
    %1748 = vector.broadcast %cst_895 : f32 to vector<8x128xf32>
    %1749 = arith.maximumf %1747, %1748 : vector<8x128xf32>
    %1750 = arith.truncf %1749 : vector<8x128xf32> to vector<8x128xbf16>
    %c0_896 = arith.constant 0 : index
    %c3456 = arith.constant 3456 : index
    %1751 = vector.load %arg11[%c0_896, %c3456] : memref<8x4096xbf16, #tpu.memory_space<vmem>>, vector<8x128xbf16>
    tpu.vector_store %arg11[%c0_896, %c3456], %1750 {strides = array<i32>} : memref<8x4096xbf16, #tpu.memory_space<vmem>>, vector<8x128xbf16>,
    %c0_897 = arith.constant 0 : index
    %c0_898 = arith.constant 0 : index
    %c0_899 = arith.constant 0 : index
    %1752 = vector.load %arg10[%c0_897, %c0_898, %c0_899] : memref<9x8x128xf32, #tpu.memory_space<vmem>>, vector<1x8x128xf32>
    %1753 = vector.shape_cast %1752 : vector<1x8x128xf32> to vector<8x128xf32>
    %c252 = arith.constant 252 : index
    %1754 = memref.load %arg1[%c252] : memref<288xf32, #tpu.memory_space<smem>>
    %1755 = vector.broadcast %1754 : f32 to vector<8x128xf32>
    %1756 = arith.mulf %1753, %1755 : vector<8x128xf32>
    %c1_900 = arith.constant 1 : index
    %c0_901 = arith.constant 0 : index
    %c0_902 = arith.constant 0 : index
    %1757 = vector.load %arg10[%c1_900, %c0_901, %c0_902] : memref<9x8x128xf32, #tpu.memory_space<vmem>>, vector<1x8x128xf32>
    %1758 = vector.shape_cast %1757 : vector<1x8x128xf32> to vector<8x128xf32>
    %c253 = arith.constant 253 : index
    %1759 = memref.load %arg1[%c253] : memref<288xf32, #tpu.memory_space<smem>>
    %1760 = vector.broadcast %1759 : f32 to vector<8x128xf32>
    %1761 = arith.mulf %1758, %1760 : vector<8x128xf32>
    %1762 = arith.addf %1756, %1761 : vector<8x128xf32>
    %c2_903 = arith.constant 2 : index
    %c0_904 = arith.constant 0 : index
    %c0_905 = arith.constant 0 : index
    %1763 = vector.load %arg10[%c2_903, %c0_904, %c0_905] : memref<9x8x128xf32, #tpu.memory_space<vmem>>, vector<1x8x128xf32>
    %1764 = vector.shape_cast %1763 : vector<1x8x128xf32> to vector<8x128xf32>
    %c254 = arith.constant 254 : index
    %1765 = memref.load %arg1[%c254] : memref<288xf32, #tpu.memory_space<smem>>
    %1766 = vector.broadcast %1765 : f32 to vector<8x128xf32>
    %1767 = arith.mulf %1764, %1766 : vector<8x128xf32>
    %1768 = arith.addf %1762, %1767 : vector<8x128xf32>
    %c3_906 = arith.constant 3 : index
    %c0_907 = arith.constant 0 : index
    %c0_908 = arith.constant 0 : index
    %1769 = vector.load %arg10[%c3_906, %c0_907, %c0_908] : memref<9x8x128xf32, #tpu.memory_space<vmem>>, vector<1x8x128xf32>
    %1770 = vector.shape_cast %1769 : vector<1x8x128xf32> to vector<8x128xf32>
    %c255 = arith.constant 255 : index
    %1771 = memref.load %arg1[%c255] : memref<288xf32, #tpu.memory_space<smem>>
    %1772 = vector.broadcast %1771 : f32 to vector<8x128xf32>
    %1773 = arith.mulf %1770, %1772 : vector<8x128xf32>
    %1774 = arith.addf %1768, %1773 : vector<8x128xf32>
    %c4_909 = arith.constant 4 : index
    %c0_910 = arith.constant 0 : index
    %c0_911 = arith.constant 0 : index
    %1775 = vector.load %arg10[%c4_909, %c0_910, %c0_911] : memref<9x8x128xf32, #tpu.memory_space<vmem>>, vector<1x8x128xf32>
    %1776 = vector.shape_cast %1775 : vector<1x8x128xf32> to vector<8x128xf32>
    %c256_912 = arith.constant 256 : index
    %1777 = memref.load %arg1[%c256_912] : memref<288xf32, #tpu.memory_space<smem>>
    %1778 = vector.broadcast %1777 : f32 to vector<8x128xf32>
    %1779 = arith.mulf %1776, %1778 : vector<8x128xf32>
    %1780 = arith.addf %1774, %1779 : vector<8x128xf32>
    %c5_913 = arith.constant 5 : index
    %c0_914 = arith.constant 0 : index
    %c0_915 = arith.constant 0 : index
    %1781 = vector.load %arg10[%c5_913, %c0_914, %c0_915] : memref<9x8x128xf32, #tpu.memory_space<vmem>>, vector<1x8x128xf32>
    %1782 = vector.shape_cast %1781 : vector<1x8x128xf32> to vector<8x128xf32>
    %c257 = arith.constant 257 : index
    %1783 = memref.load %arg1[%c257] : memref<288xf32, #tpu.memory_space<smem>>
    %1784 = vector.broadcast %1783 : f32 to vector<8x128xf32>
    %1785 = arith.mulf %1782, %1784 : vector<8x128xf32>
    %1786 = arith.addf %1780, %1785 : vector<8x128xf32>
    %c6_916 = arith.constant 6 : index
    %c0_917 = arith.constant 0 : index
    %c0_918 = arith.constant 0 : index
    %1787 = vector.load %arg10[%c6_916, %c0_917, %c0_918] : memref<9x8x128xf32, #tpu.memory_space<vmem>>, vector<1x8x128xf32>
    %1788 = vector.shape_cast %1787 : vector<1x8x128xf32> to vector<8x128xf32>
    %c258 = arith.constant 258 : index
    %1789 = memref.load %arg1[%c258] : memref<288xf32, #tpu.memory_space<smem>>
    %1790 = vector.broadcast %1789 : f32 to vector<8x128xf32>
    %1791 = arith.mulf %1788, %1790 : vector<8x128xf32>
    %1792 = arith.addf %1786, %1791 : vector<8x128xf32>
    %c7_919 = arith.constant 7 : index
    %c0_920 = arith.constant 0 : index
    %c0_921 = arith.constant 0 : index
    %1793 = vector.load %arg10[%c7_919, %c0_920, %c0_921] : memref<9x8x128xf32, #tpu.memory_space<vmem>>, vector<1x8x128xf32>
    %1794 = vector.shape_cast %1793 : vector<1x8x128xf32> to vector<8x128xf32>
    %c259 = arith.constant 259 : index
    %1795 = memref.load %arg1[%c259] : memref<288xf32, #tpu.memory_space<smem>>
    %1796 = vector.broadcast %1795 : f32 to vector<8x128xf32>
    %1797 = arith.mulf %1794, %1796 : vector<8x128xf32>
    %1798 = arith.addf %1792, %1797 : vector<8x128xf32>
    %c8_922 = arith.constant 8 : index
    %c0_923 = arith.constant 0 : index
    %c0_924 = arith.constant 0 : index
    %1799 = vector.load %arg10[%c8_922, %c0_923, %c0_924] : memref<9x8x128xf32, #tpu.memory_space<vmem>>, vector<1x8x128xf32>
    %1800 = vector.shape_cast %1799 : vector<1x8x128xf32> to vector<8x128xf32>
    %c260 = arith.constant 260 : index
    %1801 = memref.load %arg1[%c260] : memref<288xf32, #tpu.memory_space<smem>>
    %1802 = vector.broadcast %1801 : f32 to vector<8x128xf32>
    %1803 = arith.mulf %1800, %1802 : vector<8x128xf32>
    %1804 = arith.addf %1798, %1803 : vector<8x128xf32>
    %c28_925 = arith.constant 28 : index
    %1805 = memref.load %arg2[%c28_925] : memref<32xf32, #tpu.memory_space<smem>>
    %1806 = vector.broadcast %1805 : f32 to vector<8x128xf32>
    %1807 = arith.addf %1804, %1806 : vector<8x128xf32>
    %cst_926 = arith.constant 0.000000e+00 : f32
    %1808 = vector.broadcast %cst_926 : f32 to vector<8x128xf32>
    %1809 = arith.maximumf %1807, %1808 : vector<8x128xf32>
    %1810 = arith.truncf %1809 : vector<8x128xf32> to vector<8x128xbf16>
    %c0_927 = arith.constant 0 : index
    %c3584 = arith.constant 3584 : index
    %1811 = vector.load %arg11[%c0_927, %c3584] : memref<8x4096xbf16, #tpu.memory_space<vmem>>, vector<8x128xbf16>
    tpu.vector_store %arg11[%c0_927, %c3584], %1810 {strides = array<i32>} : memref<8x4096xbf16, #tpu.memory_space<vmem>>, vector<8x128xbf16>,
    %c0_928 = arith.constant 0 : index
    %c0_929 = arith.constant 0 : index
    %c0_930 = arith.constant 0 : index
    %1812 = vector.load %arg10[%c0_928, %c0_929, %c0_930] : memref<9x8x128xf32, #tpu.memory_space<vmem>>, vector<1x8x128xf32>
    %1813 = vector.shape_cast %1812 : vector<1x8x128xf32> to vector<8x128xf32>
    %c261 = arith.constant 261 : index
    %1814 = memref.load %arg1[%c261] : memref<288xf32, #tpu.memory_space<smem>>
    %1815 = vector.broadcast %1814 : f32 to vector<8x128xf32>
    %1816 = arith.mulf %1813, %1815 : vector<8x128xf32>
    %c1_931 = arith.constant 1 : index
    %c0_932 = arith.constant 0 : index
    %c0_933 = arith.constant 0 : index
    %1817 = vector.load %arg10[%c1_931, %c0_932, %c0_933] : memref<9x8x128xf32, #tpu.memory_space<vmem>>, vector<1x8x128xf32>
    %1818 = vector.shape_cast %1817 : vector<1x8x128xf32> to vector<8x128xf32>
    %c262 = arith.constant 262 : index
    %1819 = memref.load %arg1[%c262] : memref<288xf32, #tpu.memory_space<smem>>
    %1820 = vector.broadcast %1819 : f32 to vector<8x128xf32>
    %1821 = arith.mulf %1818, %1820 : vector<8x128xf32>
    %1822 = arith.addf %1816, %1821 : vector<8x128xf32>
    %c2_934 = arith.constant 2 : index
    %c0_935 = arith.constant 0 : index
    %c0_936 = arith.constant 0 : index
    %1823 = vector.load %arg10[%c2_934, %c0_935, %c0_936] : memref<9x8x128xf32, #tpu.memory_space<vmem>>, vector<1x8x128xf32>
    %1824 = vector.shape_cast %1823 : vector<1x8x128xf32> to vector<8x128xf32>
    %c263 = arith.constant 263 : index
    %1825 = memref.load %arg1[%c263] : memref<288xf32, #tpu.memory_space<smem>>
    %1826 = vector.broadcast %1825 : f32 to vector<8x128xf32>
    %1827 = arith.mulf %1824, %1826 : vector<8x128xf32>
    %1828 = arith.addf %1822, %1827 : vector<8x128xf32>
    %c3_937 = arith.constant 3 : index
    %c0_938 = arith.constant 0 : index
    %c0_939 = arith.constant 0 : index
    %1829 = vector.load %arg10[%c3_937, %c0_938, %c0_939] : memref<9x8x128xf32, #tpu.memory_space<vmem>>, vector<1x8x128xf32>
    %1830 = vector.shape_cast %1829 : vector<1x8x128xf32> to vector<8x128xf32>
    %c264 = arith.constant 264 : index
    %1831 = memref.load %arg1[%c264] : memref<288xf32, #tpu.memory_space<smem>>
    %1832 = vector.broadcast %1831 : f32 to vector<8x128xf32>
    %1833 = arith.mulf %1830, %1832 : vector<8x128xf32>
    %1834 = arith.addf %1828, %1833 : vector<8x128xf32>
    %c4_940 = arith.constant 4 : index
    %c0_941 = arith.constant 0 : index
    %c0_942 = arith.constant 0 : index
    %1835 = vector.load %arg10[%c4_940, %c0_941, %c0_942] : memref<9x8x128xf32, #tpu.memory_space<vmem>>, vector<1x8x128xf32>
    %1836 = vector.shape_cast %1835 : vector<1x8x128xf32> to vector<8x128xf32>
    %c265 = arith.constant 265 : index
    %1837 = memref.load %arg1[%c265] : memref<288xf32, #tpu.memory_space<smem>>
    %1838 = vector.broadcast %1837 : f32 to vector<8x128xf32>
    %1839 = arith.mulf %1836, %1838 : vector<8x128xf32>
    %1840 = arith.addf %1834, %1839 : vector<8x128xf32>
    %c5_943 = arith.constant 5 : index
    %c0_944 = arith.constant 0 : index
    %c0_945 = arith.constant 0 : index
    %1841 = vector.load %arg10[%c5_943, %c0_944, %c0_945] : memref<9x8x128xf32, #tpu.memory_space<vmem>>, vector<1x8x128xf32>
    %1842 = vector.shape_cast %1841 : vector<1x8x128xf32> to vector<8x128xf32>
    %c266 = arith.constant 266 : index
    %1843 = memref.load %arg1[%c266] : memref<288xf32, #tpu.memory_space<smem>>
    %1844 = vector.broadcast %1843 : f32 to vector<8x128xf32>
    %1845 = arith.mulf %1842, %1844 : vector<8x128xf32>
    %1846 = arith.addf %1840, %1845 : vector<8x128xf32>
    %c6_946 = arith.constant 6 : index
    %c0_947 = arith.constant 0 : index
    %c0_948 = arith.constant 0 : index
    %1847 = vector.load %arg10[%c6_946, %c0_947, %c0_948] : memref<9x8x128xf32, #tpu.memory_space<vmem>>, vector<1x8x128xf32>
    %1848 = vector.shape_cast %1847 : vector<1x8x128xf32> to vector<8x128xf32>
    %c267 = arith.constant 267 : index
    %1849 = memref.load %arg1[%c267] : memref<288xf32, #tpu.memory_space<smem>>
    %1850 = vector.broadcast %1849 : f32 to vector<8x128xf32>
    %1851 = arith.mulf %1848, %1850 : vector<8x128xf32>
    %1852 = arith.addf %1846, %1851 : vector<8x128xf32>
    %c7_949 = arith.constant 7 : index
    %c0_950 = arith.constant 0 : index
    %c0_951 = arith.constant 0 : index
    %1853 = vector.load %arg10[%c7_949, %c0_950, %c0_951] : memref<9x8x128xf32, #tpu.memory_space<vmem>>, vector<1x8x128xf32>
    %1854 = vector.shape_cast %1853 : vector<1x8x128xf32> to vector<8x128xf32>
    %c268 = arith.constant 268 : index
    %1855 = memref.load %arg1[%c268] : memref<288xf32, #tpu.memory_space<smem>>
    %1856 = vector.broadcast %1855 : f32 to vector<8x128xf32>
    %1857 = arith.mulf %1854, %1856 : vector<8x128xf32>
    %1858 = arith.addf %1852, %1857 : vector<8x128xf32>
    %c8_952 = arith.constant 8 : index
    %c0_953 = arith.constant 0 : index
    %c0_954 = arith.constant 0 : index
    %1859 = vector.load %arg10[%c8_952, %c0_953, %c0_954] : memref<9x8x128xf32, #tpu.memory_space<vmem>>, vector<1x8x128xf32>
    %1860 = vector.shape_cast %1859 : vector<1x8x128xf32> to vector<8x128xf32>
    %c269 = arith.constant 269 : index
    %1861 = memref.load %arg1[%c269] : memref<288xf32, #tpu.memory_space<smem>>
    %1862 = vector.broadcast %1861 : f32 to vector<8x128xf32>
    %1863 = arith.mulf %1860, %1862 : vector<8x128xf32>
    %1864 = arith.addf %1858, %1863 : vector<8x128xf32>
    %c29_955 = arith.constant 29 : index
    %1865 = memref.load %arg2[%c29_955] : memref<32xf32, #tpu.memory_space<smem>>
    %1866 = vector.broadcast %1865 : f32 to vector<8x128xf32>
    %1867 = arith.addf %1864, %1866 : vector<8x128xf32>
    %cst_956 = arith.constant 0.000000e+00 : f32
    %1868 = vector.broadcast %cst_956 : f32 to vector<8x128xf32>
    %1869 = arith.maximumf %1867, %1868 : vector<8x128xf32>
    %1870 = arith.truncf %1869 : vector<8x128xf32> to vector<8x128xbf16>
    %c0_957 = arith.constant 0 : index
    %c3712 = arith.constant 3712 : index
    %1871 = vector.load %arg11[%c0_957, %c3712] : memref<8x4096xbf16, #tpu.memory_space<vmem>>, vector<8x128xbf16>
    tpu.vector_store %arg11[%c0_957, %c3712], %1870 {strides = array<i32>} : memref<8x4096xbf16, #tpu.memory_space<vmem>>, vector<8x128xbf16>,
    %c0_958 = arith.constant 0 : index
    %c0_959 = arith.constant 0 : index
    %c0_960 = arith.constant 0 : index
    %1872 = vector.load %arg10[%c0_958, %c0_959, %c0_960] : memref<9x8x128xf32, #tpu.memory_space<vmem>>, vector<1x8x128xf32>
    %1873 = vector.shape_cast %1872 : vector<1x8x128xf32> to vector<8x128xf32>
    %c270 = arith.constant 270 : index
    %1874 = memref.load %arg1[%c270] : memref<288xf32, #tpu.memory_space<smem>>
    %1875 = vector.broadcast %1874 : f32 to vector<8x128xf32>
    %1876 = arith.mulf %1873, %1875 : vector<8x128xf32>
    %c1_961 = arith.constant 1 : index
    %c0_962 = arith.constant 0 : index
    %c0_963 = arith.constant 0 : index
    %1877 = vector.load %arg10[%c1_961, %c0_962, %c0_963] : memref<9x8x128xf32, #tpu.memory_space<vmem>>, vector<1x8x128xf32>
    %1878 = vector.shape_cast %1877 : vector<1x8x128xf32> to vector<8x128xf32>
    %c271 = arith.constant 271 : index
    %1879 = memref.load %arg1[%c271] : memref<288xf32, #tpu.memory_space<smem>>
    %1880 = vector.broadcast %1879 : f32 to vector<8x128xf32>
    %1881 = arith.mulf %1878, %1880 : vector<8x128xf32>
    %1882 = arith.addf %1876, %1881 : vector<8x128xf32>
    %c2_964 = arith.constant 2 : index
    %c0_965 = arith.constant 0 : index
    %c0_966 = arith.constant 0 : index
    %1883 = vector.load %arg10[%c2_964, %c0_965, %c0_966] : memref<9x8x128xf32, #tpu.memory_space<vmem>>, vector<1x8x128xf32>
    %1884 = vector.shape_cast %1883 : vector<1x8x128xf32> to vector<8x128xf32>
    %c272 = arith.constant 272 : index
    %1885 = memref.load %arg1[%c272] : memref<288xf32, #tpu.memory_space<smem>>
    %1886 = vector.broadcast %1885 : f32 to vector<8x128xf32>
    %1887 = arith.mulf %1884, %1886 : vector<8x128xf32>
    %1888 = arith.addf %1882, %1887 : vector<8x128xf32>
    %c3_967 = arith.constant 3 : index
    %c0_968 = arith.constant 0 : index
    %c0_969 = arith.constant 0 : index
    %1889 = vector.load %arg10[%c3_967, %c0_968, %c0_969] : memref<9x8x128xf32, #tpu.memory_space<vmem>>, vector<1x8x128xf32>
    %1890 = vector.shape_cast %1889 : vector<1x8x128xf32> to vector<8x128xf32>
    %c273 = arith.constant 273 : index
    %1891 = memref.load %arg1[%c273] : memref<288xf32, #tpu.memory_space<smem>>
    %1892 = vector.broadcast %1891 : f32 to vector<8x128xf32>
    %1893 = arith.mulf %1890, %1892 : vector<8x128xf32>
    %1894 = arith.addf %1888, %1893 : vector<8x128xf32>
    %c4_970 = arith.constant 4 : index
    %c0_971 = arith.constant 0 : index
    %c0_972 = arith.constant 0 : index
    %1895 = vector.load %arg10[%c4_970, %c0_971, %c0_972] : memref<9x8x128xf32, #tpu.memory_space<vmem>>, vector<1x8x128xf32>
    %1896 = vector.shape_cast %1895 : vector<1x8x128xf32> to vector<8x128xf32>
    %c274 = arith.constant 274 : index
    %1897 = memref.load %arg1[%c274] : memref<288xf32, #tpu.memory_space<smem>>
    %1898 = vector.broadcast %1897 : f32 to vector<8x128xf32>
    %1899 = arith.mulf %1896, %1898 : vector<8x128xf32>
    %1900 = arith.addf %1894, %1899 : vector<8x128xf32>
    %c5_973 = arith.constant 5 : index
    %c0_974 = arith.constant 0 : index
    %c0_975 = arith.constant 0 : index
    %1901 = vector.load %arg10[%c5_973, %c0_974, %c0_975] : memref<9x8x128xf32, #tpu.memory_space<vmem>>, vector<1x8x128xf32>
    %1902 = vector.shape_cast %1901 : vector<1x8x128xf32> to vector<8x128xf32>
    %c275 = arith.constant 275 : index
    %1903 = memref.load %arg1[%c275] : memref<288xf32, #tpu.memory_space<smem>>
    %1904 = vector.broadcast %1903 : f32 to vector<8x128xf32>
    %1905 = arith.mulf %1902, %1904 : vector<8x128xf32>
    %1906 = arith.addf %1900, %1905 : vector<8x128xf32>
    %c6_976 = arith.constant 6 : index
    %c0_977 = arith.constant 0 : index
    %c0_978 = arith.constant 0 : index
    %1907 = vector.load %arg10[%c6_976, %c0_977, %c0_978] : memref<9x8x128xf32, #tpu.memory_space<vmem>>, vector<1x8x128xf32>
    %1908 = vector.shape_cast %1907 : vector<1x8x128xf32> to vector<8x128xf32>
    %c276 = arith.constant 276 : index
    %1909 = memref.load %arg1[%c276] : memref<288xf32, #tpu.memory_space<smem>>
    %1910 = vector.broadcast %1909 : f32 to vector<8x128xf32>
    %1911 = arith.mulf %1908, %1910 : vector<8x128xf32>
    %1912 = arith.addf %1906, %1911 : vector<8x128xf32>
    %c7_979 = arith.constant 7 : index
    %c0_980 = arith.constant 0 : index
    %c0_981 = arith.constant 0 : index
    %1913 = vector.load %arg10[%c7_979, %c0_980, %c0_981] : memref<9x8x128xf32, #tpu.memory_space<vmem>>, vector<1x8x128xf32>
    %1914 = vector.shape_cast %1913 : vector<1x8x128xf32> to vector<8x128xf32>
    %c277 = arith.constant 277 : index
    %1915 = memref.load %arg1[%c277] : memref<288xf32, #tpu.memory_space<smem>>
    %1916 = vector.broadcast %1915 : f32 to vector<8x128xf32>
    %1917 = arith.mulf %1914, %1916 : vector<8x128xf32>
    %1918 = arith.addf %1912, %1917 : vector<8x128xf32>
    %c8_982 = arith.constant 8 : index
    %c0_983 = arith.constant 0 : index
    %c0_984 = arith.constant 0 : index
    %1919 = vector.load %arg10[%c8_982, %c0_983, %c0_984] : memref<9x8x128xf32, #tpu.memory_space<vmem>>, vector<1x8x128xf32>
    %1920 = vector.shape_cast %1919 : vector<1x8x128xf32> to vector<8x128xf32>
    %c278 = arith.constant 278 : index
    %1921 = memref.load %arg1[%c278] : memref<288xf32, #tpu.memory_space<smem>>
    %1922 = vector.broadcast %1921 : f32 to vector<8x128xf32>
    %1923 = arith.mulf %1920, %1922 : vector<8x128xf32>
    %1924 = arith.addf %1918, %1923 : vector<8x128xf32>
    %c30_985 = arith.constant 30 : index
    %1925 = memref.load %arg2[%c30_985] : memref<32xf32, #tpu.memory_space<smem>>
    %1926 = vector.broadcast %1925 : f32 to vector<8x128xf32>
    %1927 = arith.addf %1924, %1926 : vector<8x128xf32>
    %cst_986 = arith.constant 0.000000e+00 : f32
    %1928 = vector.broadcast %cst_986 : f32 to vector<8x128xf32>
    %1929 = arith.maximumf %1927, %1928 : vector<8x128xf32>
    %1930 = arith.truncf %1929 : vector<8x128xf32> to vector<8x128xbf16>
    %c0_987 = arith.constant 0 : index
    %c3840 = arith.constant 3840 : index
    %1931 = vector.load %arg11[%c0_987, %c3840] : memref<8x4096xbf16, #tpu.memory_space<vmem>>, vector<8x128xbf16>
    tpu.vector_store %arg11[%c0_987, %c3840], %1930 {strides = array<i32>} : memref<8x4096xbf16, #tpu.memory_space<vmem>>, vector<8x128xbf16>,
    %c0_988 = arith.constant 0 : index
    %c0_989 = arith.constant 0 : index
    %c0_990 = arith.constant 0 : index
    %1932 = vector.load %arg10[%c0_988, %c0_989, %c0_990] : memref<9x8x128xf32, #tpu.memory_space<vmem>>, vector<1x8x128xf32>
    %1933 = vector.shape_cast %1932 : vector<1x8x128xf32> to vector<8x128xf32>
    %c279 = arith.constant 279 : index
    %1934 = memref.load %arg1[%c279] : memref<288xf32, #tpu.memory_space<smem>>
    %1935 = vector.broadcast %1934 : f32 to vector<8x128xf32>
    %1936 = arith.mulf %1933, %1935 : vector<8x128xf32>
    %c1_991 = arith.constant 1 : index
    %c0_992 = arith.constant 0 : index
    %c0_993 = arith.constant 0 : index
    %1937 = vector.load %arg10[%c1_991, %c0_992, %c0_993] : memref<9x8x128xf32, #tpu.memory_space<vmem>>, vector<1x8x128xf32>
    %1938 = vector.shape_cast %1937 : vector<1x8x128xf32> to vector<8x128xf32>
    %c280 = arith.constant 280 : index
    %1939 = memref.load %arg1[%c280] : memref<288xf32, #tpu.memory_space<smem>>
    %1940 = vector.broadcast %1939 : f32 to vector<8x128xf32>
    %1941 = arith.mulf %1938, %1940 : vector<8x128xf32>
    %1942 = arith.addf %1936, %1941 : vector<8x128xf32>
    %c2_994 = arith.constant 2 : index
    %c0_995 = arith.constant 0 : index
    %c0_996 = arith.constant 0 : index
    %1943 = vector.load %arg10[%c2_994, %c0_995, %c0_996] : memref<9x8x128xf32, #tpu.memory_space<vmem>>, vector<1x8x128xf32>
    %1944 = vector.shape_cast %1943 : vector<1x8x128xf32> to vector<8x128xf32>
    %c281 = arith.constant 281 : index
    %1945 = memref.load %arg1[%c281] : memref<288xf32, #tpu.memory_space<smem>>
    %1946 = vector.broadcast %1945 : f32 to vector<8x128xf32>
    %1947 = arith.mulf %1944, %1946 : vector<8x128xf32>
    %1948 = arith.addf %1942, %1947 : vector<8x128xf32>
    %c3_997 = arith.constant 3 : index
    %c0_998 = arith.constant 0 : index
    %c0_999 = arith.constant 0 : index
    %1949 = vector.load %arg10[%c3_997, %c0_998, %c0_999] : memref<9x8x128xf32, #tpu.memory_space<vmem>>, vector<1x8x128xf32>
    %1950 = vector.shape_cast %1949 : vector<1x8x128xf32> to vector<8x128xf32>
    %c282 = arith.constant 282 : index
    %1951 = memref.load %arg1[%c282] : memref<288xf32, #tpu.memory_space<smem>>
    %1952 = vector.broadcast %1951 : f32 to vector<8x128xf32>
    %1953 = arith.mulf %1950, %1952 : vector<8x128xf32>
    %1954 = arith.addf %1948, %1953 : vector<8x128xf32>
    %c4_1000 = arith.constant 4 : index
    %c0_1001 = arith.constant 0 : index
    %c0_1002 = arith.constant 0 : index
    %1955 = vector.load %arg10[%c4_1000, %c0_1001, %c0_1002] : memref<9x8x128xf32, #tpu.memory_space<vmem>>, vector<1x8x128xf32>
    %1956 = vector.shape_cast %1955 : vector<1x8x128xf32> to vector<8x128xf32>
    %c283 = arith.constant 283 : index
    %1957 = memref.load %arg1[%c283] : memref<288xf32, #tpu.memory_space<smem>>
    %1958 = vector.broadcast %1957 : f32 to vector<8x128xf32>
    %1959 = arith.mulf %1956, %1958 : vector<8x128xf32>
    %1960 = arith.addf %1954, %1959 : vector<8x128xf32>
    %c5_1003 = arith.constant 5 : index
    %c0_1004 = arith.constant 0 : index
    %c0_1005 = arith.constant 0 : index
    %1961 = vector.load %arg10[%c5_1003, %c0_1004, %c0_1005] : memref<9x8x128xf32, #tpu.memory_space<vmem>>, vector<1x8x128xf32>
    %1962 = vector.shape_cast %1961 : vector<1x8x128xf32> to vector<8x128xf32>
    %c284 = arith.constant 284 : index
    %1963 = memref.load %arg1[%c284] : memref<288xf32, #tpu.memory_space<smem>>
    %1964 = vector.broadcast %1963 : f32 to vector<8x128xf32>
    %1965 = arith.mulf %1962, %1964 : vector<8x128xf32>
    %1966 = arith.addf %1960, %1965 : vector<8x128xf32>
    %c6_1006 = arith.constant 6 : index
    %c0_1007 = arith.constant 0 : index
    %c0_1008 = arith.constant 0 : index
    %1967 = vector.load %arg10[%c6_1006, %c0_1007, %c0_1008] : memref<9x8x128xf32, #tpu.memory_space<vmem>>, vector<1x8x128xf32>
    %1968 = vector.shape_cast %1967 : vector<1x8x128xf32> to vector<8x128xf32>
    %c285 = arith.constant 285 : index
    %1969 = memref.load %arg1[%c285] : memref<288xf32, #tpu.memory_space<smem>>
    %1970 = vector.broadcast %1969 : f32 to vector<8x128xf32>
    %1971 = arith.mulf %1968, %1970 : vector<8x128xf32>
    %1972 = arith.addf %1966, %1971 : vector<8x128xf32>
    %c7_1009 = arith.constant 7 : index
    %c0_1010 = arith.constant 0 : index
    %c0_1011 = arith.constant 0 : index
    %1973 = vector.load %arg10[%c7_1009, %c0_1010, %c0_1011] : memref<9x8x128xf32, #tpu.memory_space<vmem>>, vector<1x8x128xf32>
    %1974 = vector.shape_cast %1973 : vector<1x8x128xf32> to vector<8x128xf32>
    %c286 = arith.constant 286 : index
    %1975 = memref.load %arg1[%c286] : memref<288xf32, #tpu.memory_space<smem>>
    %1976 = vector.broadcast %1975 : f32 to vector<8x128xf32>
    %1977 = arith.mulf %1974, %1976 : vector<8x128xf32>
    %1978 = arith.addf %1972, %1977 : vector<8x128xf32>
    %c8_1012 = arith.constant 8 : index
    %c0_1013 = arith.constant 0 : index
    %c0_1014 = arith.constant 0 : index
    %1979 = vector.load %arg10[%c8_1012, %c0_1013, %c0_1014] : memref<9x8x128xf32, #tpu.memory_space<vmem>>, vector<1x8x128xf32>
    %1980 = vector.shape_cast %1979 : vector<1x8x128xf32> to vector<8x128xf32>
    %c287 = arith.constant 287 : index
    %1981 = memref.load %arg1[%c287] : memref<288xf32, #tpu.memory_space<smem>>
    %1982 = vector.broadcast %1981 : f32 to vector<8x128xf32>
    %1983 = arith.mulf %1980, %1982 : vector<8x128xf32>
    %1984 = arith.addf %1978, %1983 : vector<8x128xf32>
    %c31_1015 = arith.constant 31 : index
    %1985 = memref.load %arg2[%c31_1015] : memref<32xf32, #tpu.memory_space<smem>>
    %1986 = vector.broadcast %1985 : f32 to vector<8x128xf32>
    %1987 = arith.addf %1984, %1986 : vector<8x128xf32>
    %cst_1016 = arith.constant 0.000000e+00 : f32
    %1988 = vector.broadcast %cst_1016 : f32 to vector<8x128xf32>
    %1989 = arith.maximumf %1987, %1988 : vector<8x128xf32>
    %1990 = arith.truncf %1989 : vector<8x128xf32> to vector<8x128xbf16>
    %c0_1017 = arith.constant 0 : index
    %c3968 = arith.constant 3968 : index
    %1991 = vector.load %arg11[%c0_1017, %c3968] : memref<8x4096xbf16, #tpu.memory_space<vmem>>, vector<8x128xbf16>
    tpu.vector_store %arg11[%c0_1017, %c3968], %1990 {strides = array<i32>} : memref<8x4096xbf16, #tpu.memory_space<vmem>>, vector<8x128xbf16>,
    %c0_1018 = arith.constant 0 : index
    %c0_1019 = arith.constant 0 : index
    %1992 = vector.load %arg11[%c0_1018, %c0_1019] : memref<8x4096xbf16, #tpu.memory_space<vmem>>, vector<8x4096xbf16>
    %c0_1020 = arith.constant 0 : index
    %c0_1021 = arith.constant 0 : index
    %1993 = vector.load %arg5[%c0_1020, %c0_1021] : memref<4096x64xbf16, #tpu.memory_space<vmem>>, vector<4096x64xbf16>
    %cst_1022 = arith.constant dense<0.000000e+00> : vector<8x64xf32>
    %1994 = tpu.matmul %1992, %1993, %cst_1022 {dimension_numbers = #tpu.dot_dimension_numbers<[1], [0], [0], [1], [0, 0, 1, 1], [], []>} : vector<8x4096xbf16>, vector<4096x64xbf16>, vector<8x64xf32> -> vector<8x64xf32>
    %c0_1023 = arith.constant 0 : index
    %c0_1024 = arith.constant 0 : index
    %1995 = vector.load %arg6[%c0_1023, %c0_1024] : memref<1x64xf32, #tpu.memory_space<vmem>>, vector<1x64xf32>
    %1996 = vector.broadcast %1995 : vector<1x64xf32> to vector<8x64xf32>
    %1997 = arith.addf %1994, %1996 : vector<8x64xf32>
    %cst_1025 = arith.constant 0.000000e+00 : f32
    %1998 = vector.broadcast %cst_1025 : f32 to vector<8x64xf32>
    %1999 = arith.maximumf %1997, %1998 : vector<8x64xf32>
    %2000 = arith.truncf %1999 : vector<8x64xf32> to vector<8x64xbf16>
    %c0_1026 = arith.constant 0 : index
    %c0_1027 = arith.constant 0 : index
    %2001 = vector.load %arg7[%c0_1026, %c0_1027] : memref<64x128xbf16, #tpu.memory_space<vmem>>, vector<64x128xbf16>
    %cst_1028 = arith.constant dense<0.000000e+00> : vector<8x128xf32>
    %2002 = tpu.matmul %2000, %2001, %cst_1028 {dimension_numbers = #tpu.dot_dimension_numbers<[1], [0], [0], [1], [0, 0, 1, 1], [], []>} : vector<8x64xbf16>, vector<64x128xbf16>, vector<8x128xf32> -> vector<8x128xf32>
    %c0_1029 = arith.constant 0 : index
    %c0_1030 = arith.constant 0 : index
    %2003 = vector.load %arg8[%c0_1029, %c0_1030] : memref<1x128xf32, #tpu.memory_space<vmem>>, vector<1x128xf32>
    %2004 = vector.broadcast %2003 : vector<1x128xf32> to vector<8x128xf32>
    %2005 = arith.addf %2002, %2004 : vector<8x128xf32>
    %c0_1031 = arith.constant 0 : index
    %c0_1032 = arith.constant 0 : index
    %2006 = vector.load %arg9[%c0_1031, %c0_1032] : memref<8x128xf32, #tpu.memory_space<vmem>>, vector<8x128xf32>
    tpu.vector_store %arg9[%c0_1031, %c0_1032], %2005 {strides = array<i32>} : memref<8x128xf32, #tpu.memory_space<vmem>>, vector<8x128xf32>,
    return
  }
  func.func @transform_0(%arg0: i32) -> i32 {
    %c0_i32 = arith.constant 0 : i32
    %c0_i32_0 = arith.constant 0 : i32
    return %c0_i32 : i32
  }
  func.func @transform_1(%arg0: i32) -> i32 {
    %c0_i32 = arith.constant 0 : i32
    %c0_i32_0 = arith.constant 0 : i32
    return %c0_i32 : i32
  }
  func.func @transform_2(%arg0: i32) -> (i32, i32, i32) {
    %c0_i32 = arith.constant 0 : i32
    %c0_i32_0 = arith.constant 0 : i32
    %c0_i32_1 = arith.constant 0 : i32
    %c0_i32_2 = arith.constant 0 : i32
    return %c0_i32, %c0_i32_0, %c0_i32_1 : i32, i32, i32
  }
  func.func @transform_3(%arg0: i32) -> (i32, i32) {
    %c0_i32 = arith.constant 0 : i32
    %c0_i32_0 = arith.constant 0 : i32
    return %arg0, %c0_i32 : i32, i32
  }
  func.func @transform_4(%arg0: i32) -> (i32, i32) {
    %c0_i32 = arith.constant 0 : i32
    %c0_i32_0 = arith.constant 0 : i32
    %c0_i32_1 = arith.constant 0 : i32
    return %c0_i32, %c0_i32_0 : i32, i32
  }
  func.func @transform_5(%arg0: i32) -> (i32, i32) {
    %c0_i32 = arith.constant 0 : i32
    %c0_i32_0 = arith.constant 0 : i32
    %c0_i32_1 = arith.constant 0 : i32
    return %c0_i32, %c0_i32_0 : i32, i32
  }
  func.func @transform_6(%arg0: i32) -> (i32, i32) {
    %c0_i32 = arith.constant 0 : i32
    %c0_i32_0 = arith.constant 0 : i32
    %c0_i32_1 = arith.constant 0 : i32
    return %c0_i32, %c0_i32_0 : i32, i32
  }
  func.func @transform_7(%arg0: i32) -> (i32, i32) {
    %c0_i32 = arith.constant 0 : i32
    %c0_i32_0 = arith.constant 0 : i32
    %c0_i32_1 = arith.constant 0 : i32
    return %c0_i32, %c0_i32_0 : i32, i32
  }
  func.func @transform_8(%arg0: i32) -> (i32, i32) {
    %c0_i32 = arith.constant 0 : i32
    %c0_i32_0 = arith.constant 0 : i32
    return %arg0, %c0_i32 : i32, i32
  }
}

</mosaic_0001>

<llo_original>
// kernel: squeeze.1
$region0: #{squeeze.1}
  %s0 = inlined_call_operand.vmem [shape: f32[2,1,8,16], index: 0, kind: input, shape index: {}]
  %s1 = inlined_call_operand.vmem [shape: f32[2,128], index: 1, kind: output, shape index: {}]
  $region1: #{squeeze.1} parent=0
    #allocation0 [shape = 'u8[4096]{0}', space=vmem, size = 0x1000, scoped, tag = 'scoped mem for output reshape']
    %s2 = smov 3
    %v3 = vld [vmem:[%s0] ss:$8 sm:%s2]
    %vm4 = vcmask 130048
    %5 = vst.msk [vmem:[#allocation0] sm:$0x3] %vm4, %v3
    %s6 = scalar_lea.vmem %s0, 7
    %s7 = smov 3
    %v8 = vld [vmem:[%s6] ss:$8 sm:%s7]
    %9 = vrot.lane.b32.xlu0 %v8, 112
    %v10 = vpop.permute.xlu0 %9
    %vm11 = vcmask 1048448
    %12 = vst.msk [vmem:[#allocation0] sm:$0x3] %vm11, %v10
    %s13 = scalar_lea.vmem %s0, 6
    %s14 = smov 3
    %v15 = vld [vmem:[%s13] ss:$8 sm:%s14]
    %16 = vrot.lane.b32.xlu0 %v15, 96
    %v17 = vpop.permute.xlu0 %16
    %vm18 = vcmask 917248
    %19 = vst.msk [vmem:[#allocation0] sm:$0x3] %vm18, %v17
    %s20 = scalar_lea.vmem %s0, 5
    %s21 = smov 3
    %v22 = vld [vmem:[%s20] ss:$8 sm:%s21]
    %23 = vrot.lane.b32.xlu0 %v22, 80
    %v24 = vpop.permute.xlu0 %23
    %vm25 = vcmask 786048
    %26 = vst.msk [vmem:[#allocation0] sm:$0x3] %vm25, %v24
    %s27 = scalar_lea.vmem %s0, 4
    %s28 = smov 3
    %v29 = vld [vmem:[%s27] ss:$8 sm:%s28]
    %30 = vrot.lane.b32.xlu0 %v29, 64
    %v31 = vpop.permute.xlu0 %30
    %vm32 = vcmask 654848
    %33 = vst.msk [vmem:[#allocation0] sm:$0x3] %vm32, %v31
    %s34 = scalar_lea.vmem %s0, 3
    %s35 = smov 3
    %v36 = vld [vmem:[%s34] ss:$8 sm:%s35]
    %37 = vrot.lane.b32.xlu0 %v36, 48
    %v38 = vpop.permute.xlu0 %37
    %vm39 = vcmask 523648
    %40 = vst.msk [vmem:[#allocation0] sm:$0x3] %vm39, %v38
    %s41 = scalar_lea.vmem %s0, 2
    %s42 = smov 3
    %v43 = vld [vmem:[%s41] ss:$8 sm:%s42]
    %44 = vrot.lane.b32.xlu0 %v43, 32
    %v45 = vpop.permute.xlu0 %44
    %vm46 = vcmask 392448
    %47 = vst.msk [vmem:[#allocation0] sm:$0x3] %vm46, %v45
    %s48 = scalar_lea.vmem %s0, 1
    %s49 = smov 3
    %v50 = vld [vmem:[%s48] ss:$8 sm:%s49]
    %51 = vrot.lane.b32.xlu0 %v50, 16
    %v52 = vpop.permute.xlu0 %51
    %vm53 = vcmask 261248
    %54 = vst.msk [vmem:[#allocation0] sm:$0x3] %vm53, %v52
    %s56 = sshllo.u32 0, 2
    %v58 = vld [vmem:[#allocation0] sm:%s56]
    %s59 = sshllo.u32 0, 2
    %60 = vst [vmem:[%s1] sm:%s59] %v58

// kernel: classification_cnn1_forward.1
$region0: #{classification_cnn1_forward.1}
  #allocation0 [shape = 'u32[]', space=smem, size = 0x4, offset = 0x4, fixed_abs, tag = 'smem constant byte address 0x4 - core index']
  #allocation1 [shape = 'u32[144,128]{1,0:T(1,128)}', space=vmem, size = 0x12000, scoped, tag = 'internal scratch']
  #allocation2 [shape = 'f32[9,8,128]{2,1,0:T(8,128)}', space=vmem, size = 0x9000, scoped, tag = 'scratch operand']
  #allocation3 [shape = 'bf16[8,4096]{1,0:T(8,128)(2,1)}', space=vmem, size = 0x10000, scoped, tag = 'scratch operand']
  %s0 = inlined_call_operand.vmem [shape: f32[288], index: 0, kind: input, shape index: {}]
  %s1 = inlined_call_operand.vmem [shape: f32[32], index: 1, kind: input, shape index: {}]
  %s2 = inlined_call_operand.vmem [shape: f32[9,1,128], index: 2, kind: input, shape index: {}]
  %s3 = inlined_call_operand.vmem [shape: f32[8,128], index: 3, kind: input, shape index: {}]
  %s4 = inlined_call_operand.vmem [shape: bf16[4096,64], index: 4, kind: input, shape index: {}]
  %s5 = inlined_call_operand.vmem [shape: f32[1,64], index: 5, kind: input, shape index: {}]
  %s6 = inlined_call_operand.vmem [shape: bf16[64,128], index: 6, kind: input, shape index: {}]
  %s7 = inlined_call_operand.vmem [shape: f32[1,128], index: 7, kind: input, shape index: {}]
  %s8 = inlined_call_operand.vmem [shape: f32[8,128], index: 8, kind: output, shape index: {}]
  %s9 = sld [smem:[#allocation0]]
  $region50: #{classification_cnn1_forward.1} parent=0
    _
  %s11 = ssub.s32 1, %s9
  %s12 = scalar_select 0, %s11, %s9
  $region1: #{classification_cnn1_forward.1} parent=0
    #allocation4 [shape = 'u8[1536]{0}', space=smem, size = 0x600, scoped, tag = 'input window, operand 0, single buffered']
    #allocation5 [shape = 's32[1]{0}', space=sflag, size = 0x4, scoped, tag = 'scoped memory for classification_cnn1_forward.1']
    #allocation6 [shape = 'u8[512]{0}', space=smem, size = 0x200, scoped, tag = 'input window, operand 1, single buffered']
    #allocation7 [shape = 's32[1]{0}', space=sflag, size = 0x4, scoped, tag = 'scoped memory for classification_cnn1_forward.1']
    %13 = vsyncpa [#allocation5], 0
    %14 = vsyncpa [#allocation7], 0
    // Predicated region
    $region2: #{classification_cnn1_forward.1} parent=1 // pred_check
      _
    $region3: #{classification_cnn1_forward.1} parent=1 // pred_check_branch
      %16 = sbr.rel (0) target = $region5
    $region4: #{classification_cnn1_forward.1} parent=1 // pred_region
      %s18 = ssub.s32 48, 48
      %19 = vsyncadd [#allocation5], %s18
      %s21 = sshll.u32 %s0, 4
      %s22 = int_to_ptr.vmem [resolvable:$true] %s21
      %24 = dma.vmem_to_smem %s22, 48, [#allocation4], [#allocation5]
    $region5: #{classification_cnn1_forward.1} parent=1 // pred_fallthru
      _
    // Predicated region
    $region6: #{classification_cnn1_forward.1} parent=1 // pred_check
      _
    $region7: #{classification_cnn1_forward.1} parent=1 // pred_check_branch
      %26 = sbr.rel (0) target = $region9
    $region8: #{classification_cnn1_forward.1} parent=1 // pred_region
      %s28 = ssub.s32 16, 16
      %29 = vsyncadd [#allocation7], %s28
      %s31 = sshll.u32 %s1, 4
      %s32 = int_to_ptr.vmem [resolvable:$true] %s31
      %34 = dma.vmem_to_smem %s32, 16, [#allocation6], [#allocation7]
    $region9: #{classification_cnn1_forward.1} parent=1 // pred_fallthru
      _
    // Predicated region
    $region10: #{classification_cnn1_forward.1} parent=1 // pred_check
      _
    $region11: #{classification_cnn1_forward.1} parent=1 // pred_check_branch
      %36 = sbr.rel (0) target = $region13
    $region12: #{classification_cnn1_forward.1} parent=1 // pred_region
      _
    $region13: #{classification_cnn1_forward.1} parent=1 // pred_fallthru
      _
    // Predicated region
    $region14: #{classification_cnn1_forward.1} parent=1 // pred_check
      _
    $region15: #{classification_cnn1_forward.1} parent=1 // pred_check_branch
      %38 = sbr.rel (0) target = $region17
    $region16: #{classification_cnn1_forward.1} parent=1 // pred_region
      _
    $region17: #{classification_cnn1_forward.1} parent=1 // pred_fallthru
      _
    // Predicated region
    $region18: #{classification_cnn1_forward.1} parent=1 // pred_check
      _
    $region19: #{classification_cnn1_forward.1} parent=1 // pred_check_branch
      %40 = sbr.rel (0) target = $region21
    $region20: #{classification_cnn1_forward.1} parent=1 // pred_region
      _
    $region21: #{classification_cnn1_forward.1} parent=1 // pred_fallthru
      _
    // Predicated region
    $region22: #{classification_cnn1_forward.1} parent=1 // pred_check
      _
    $region23: #{classification_cnn1_forward.1} parent=1 // pred_check_branch
      %42 = sbr.rel (0) target = $region25
    $region24: #{classification_cnn1_forward.1} parent=1 // pred_region
      _
    $region25: #{classification_cnn1_forward.1} parent=1 // pred_fallthru
      _
    // Predicated region
    $region26: #{classification_cnn1_forward.1} parent=1 // pred_check
      _
    $region27: #{classification_cnn1_forward.1} parent=1 // pred_check_branch
      %44 = sbr.rel (0) target = $region29
    $region28: #{classification_cnn1_forward.1} parent=1 // pred_region
      _
    $region29: #{classification_cnn1_forward.1} parent=1 // pred_fallthru
      _
    // Predicated region
    $region30: #{classification_cnn1_forward.1} parent=1 // pred_check
      _
    $region31: #{classification_cnn1_forward.1} parent=1 // pred_check_branch
      %46 = sbr.rel (0) target = $region33
    $region32: #{classification_cnn1_forward.1} parent=1 // pred_region
      _
    $region33: #{classification_cnn1_forward.1} parent=1 // pred_fallthru
      _
    // Predicated region
    $region34: #{classification_cnn1_forward.1} parent=1 // pred_check
      _
    $region35: #{classification_cnn1_forward.1} parent=1 // pred_check_branch
      %48 = sbr.rel (0) target = $region37
    $region36: #{classification_cnn1_forward.1} parent=1 // pred_region
      %49 = dma.done [#allocation5], 48
    $region37: #{classification_cnn1_forward.1} parent=1 // pred_fallthru
      _
    // Predicated region
    $region38: #{classification_cnn1_forward.1} parent=1 // pred_check
      _
    $region39: #{classification_cnn1_forward.1} parent=1 // pred_check_branch
      %51 = sbr.rel (0) target = $region41
    $region40: #{classification_cnn1_forward.1} parent=1 // pred_region
      %52 = dma.done [#allocation7], 16
    $region41: #{classification_cnn1_forward.1} parent=1 // pred_fallthru
      _
    %53 = sfence
    %v55 = vld [vmem:[%s3] sm:$0xff]
    %56 = vrot.lane.b32.xlu0 %v55, 17
    %v57 = vpop.permute.xlu0 %56
    %v58 = vld [vmem:[%s2] sm:$0x1]
    %v60 = vlaneseq
    %v61 = vshrl.u32 %v60, 7
    %v62 = vsub.s32 0, %v61
    %v63 = vrot.slane %v58, %v62
    %v65 = vmul.f32 %v57, %v63
    %66 = vst [vmem:[#allocation2] sm:$0xff] %v65
    %67 = vrot.lane.b32.xlu0 %v55, 16
    %v68 = vpop.permute.xlu0 %67
    %s69 = scalar_lea.vmem %s2, 1
    %v70 = vld [vmem:[%s69] sm:$0x1]
    %v72 = vlaneseq
    %v73 = vshrl.u32 %v72, 7
    %v74 = vsub.s32 0, %v73
    %v75 = vrot.slane %v70, %v74
    %v77 = vmul.f32 %v68, %v75
    %s78 = scalar_lea.vmem [#allocation2], 8
    %79 = vst [vmem:[%s78] sm:$0xff] %v77
    %80 = vrot.lane.b32.xlu0 %v55, 15
    %v81 = vpop.permute.xlu0 %80
    %s82 = scalar_lea.vmem %s2, 2
    %v83 = vld [vmem:[%s82] sm:$0x1]
    %v85 = vlaneseq
    %v86 = vshrl.u32 %v85, 7
    %v87 = vsub.s32 0, %v86
    %v88 = vrot.slane %v83, %v87
    %v90 = vmul.f32 %v81, %v88
    %s91 = scalar_lea.vmem [#allocation2], 16
    %92 = vst [vmem:[%s91] sm:$0xff] %v90
    %93 = vrot.lane.b32.xlu0 %v55, 1
    %v94 = vpop.permute.xlu0 %93
    %s95 = scalar_lea.vmem %s2, 3
    %v96 = vld [vmem:[%s95] sm:$0x1]
    %v98 = vlaneseq
    %v99 = vshrl.u32 %v98, 7
    %v100 = vsub.s32 0, %v99
    %v101 = vrot.slane %v96, %v100
    %v103 = vmul.f32 %v94, %v101
    %s104 = scalar_lea.vmem [#allocation2], 24
    %105 = vst [vmem:[%s104] sm:$0xff] %v103
    %s106 = scalar_lea.vmem %s2, 4
    %v107 = vld [vmem:[%s106] sm:$0x1]
    %v109 = vlaneseq
    %v110 = vshrl.u32 %v109, 7
    %v111 = vsub.s32 0, %v110
    %v112 = vrot.slane %v107, %v111
    %v114 = vmul.f32 %v55, %v112
    %s115 = scalar_lea.vmem [#allocation2], 32
    %116 = vst [vmem:[%s115] sm:$0xff] %v114
    %117 = vrot.lane.b32.xlu0 %v55, 127
    %v118 = vpop.permute.xlu0 %117
    %s119 = scalar_lea.vmem %s2, 5
    %v120 = vld [vmem:[%s119] sm:$0x1]
    %v122 = vlaneseq
    %v123 = vshrl.u32 %v122, 7
    %v124 = vsub.s32 0, %v123
    %v125 = vrot.slane %v120, %v124
    %v127 = vmul.f32 %v118, %v125
    %s128 = scalar_lea.vmem [#allocation2], 40
    %129 = vst [vmem:[%s128] sm:$0xff] %v127
    %130 = vrot.lane.b32.xlu0 %v55, 113
    %v131 = vpop.permute.xlu0 %130
    %s132 = scalar_lea.vmem %s2, 6
    %v133 = vld [vmem:[%s132] sm:$0x1]
    %v135 = vlaneseq
    %v136 = vshrl.u32 %v135, 7
    %v137 = vsub.s32 0, %v136
    %v138 = vrot.slane %v133, %v137
    %v140 = vmul.f32 %v131, %v138
    %s141 = scalar_lea.vmem [#allocation2], 48
    %142 = vst [vmem:[%s141] sm:$0xff] %v140
    %143 = vrot.lane.b32.xlu0 %v55, 112
    %v144 = vpop.permute.xlu0 %143
    %s145 = scalar_lea.vmem %s2, 7
    %v146 = vld [vmem:[%s145] sm:$0x1]
    %v148 = vlaneseq
    %v149 = vshrl.u32 %v148, 7
    %v150 = vsub.s32 0, %v149
    %v151 = vrot.slane %v146, %v150
    %v153 = vmul.f32 %v144, %v151
    %s154 = scalar_lea.vmem [#allocation2], 56
    %155 = vst [vmem:[%s154] sm:$0xff] %v153
    %156 = vrot.lane.b32.xlu0 %v55, 111
    %v157 = vpop.permute.xlu0 %156
    %s158 = scalar_lea.vmem %s2, 8
    %v159 = vld [vmem:[%s158] sm:$0x1]
    %v161 = vlaneseq
    %v162 = vshrl.u32 %v161, 7
    %v163 = vsub.s32 0, %v162
    %v164 = vrot.slane %v159, %v163
    %v166 = vmul.f32 %v157, %v164
    %s167 = scalar_lea.vmem [#allocation2], 64
    %168 = vst [vmem:[%s167] sm:$0xff] %v166
    %v169 = vld [vmem:[#allocation2] sm:$0xff]
    %s170 = sld [smem:[#allocation4]]
    %v171 = vstv %s170
    %v172 = vmul.f32 %v169, %v171
    %v173 = vld [vmem:[%s78] sm:$0xff]
    %s174 = sld [smem:[#allocation4 + $0x1]]
    %v175 = vstv %s174
    %v176 = vmul.f32 %v173, %v175
    %v177 = vadd.f32 %v172, %v176
    %v178 = vld [vmem:[%s91] sm:$0xff]
    %s179 = sld [smem:[#allocation4 + $0x2]]
    %v180 = vstv %s179
    %v181 = vmul.f32 %v178, %v180
    %v182 = vadd.f32 %v177, %v181
    %v183 = vld [vmem:[%s104] sm:$0xff]
    %s184 = sld [smem:[#allocation4 + $0x3]]
    %v185 = vstv %s184
    %v186 = vmul.f32 %v183, %v185
    %v187 = vadd.f32 %v182, %v186
    %v188 = vld [vmem:[%s115] sm:$0xff]
    %s189 = sld [smem:[#allocation4 + $0x4]]
    %v190 = vstv %s189
    %v191 = vmul.f32 %v188, %v190
    %v192 = vadd.f32 %v187, %v191
    %v193 = vld [vmem:[%s128] sm:$0xff]
    %s194 = sld [smem:[#allocation4 + $0x5]]
    %v195 = vstv %s194
    %v196 = vmul.f32 %v193, %v195
    %v197 = vadd.f32 %v192, %v196
    %v198 = vld [vmem:[%s141] sm:$0xff]
    %s199 = sld [smem:[#allocation4 + $0x6]]
    %v200 = vstv %s199
    %v201 = vmul.f32 %v198, %v200
    %v202 = vadd.f32 %v197, %v201
    %v203 = vld [vmem:[%s154] sm:$0xff]
    %s204 = sld [smem:[#allocation4 + $0x7]]
    %v205 = vstv %s204
    %v206 = vmul.f32 %v203, %v205
    %v207 = vadd.f32 %v202, %v206
    %v208 = vld [vmem:[%s167] sm:$0xff]
    %s209 = sld [smem:[#allocation4 + $0x8]]
    %v210 = vstv %s209
    %v211 = vmul.f32 %v208, %v210
    %v212 = vadd.f32 %v207, %v211
    %s213 = sld [smem:[#allocation6]]
    %v214 = vstv %s213
    %v215 = vadd.f32 %v212, %v214
    %v216 = vmax.f32 %v215, 0.0
    %v217 = vpack.c.bf16 %v216, %v216
    %218 = vst [vmem:[#allocation3] sm:$0xf] %v217
    %v219 = vld [vmem:[#allocation2] sm:$0xff]
    %s220 = sld [smem:[#allocation4 + $0x9]]
    %v221 = vstv %s220
    %v222 = vmul.f32 %v219, %v221
    %v223 = vld [vmem:[%s78] sm:$0xff]
    %s224 = sld [smem:[#allocation4 + $0xa]]
    %v225 = vstv %s224
    %v226 = vmul.f32 %v223, %v225
    %v227 = vadd.f32 %v222, %v226
    %v228 = vld [vmem:[%s91] sm:$0xff]
    %s229 = sld [smem:[#allocation4 + $0xb]]
    %v230 = vstv %s229
    %v231 = vmul.f32 %v228, %v230
    %v232 = vadd.f32 %v227, %v231
    %v233 = vld [vmem:[%s104] sm:$0xff]
    %s234 = sld [smem:[#allocation4 + $0xc]]
    %v235 = vstv %s234
    %v236 = vmul.f32 %v233, %v235
    %v237 = vadd.f32 %v232, %v236
    %v238 = vld [vmem:[%s115] sm:$0xff]
    %s239 = sld [smem:[#allocation4 + $0xd]]
    %v240 = vstv %s239
    %v241 = vmul.f32 %v238, %v240
    %v242 = vadd.f32 %v237, %v241
    %v243 = vld [vmem:[%s128] sm:$0xff]
    %s244 = sld [smem:[#allocation4 + $0xe]]
    %v245 = vstv %s244
    %v246 = vmul.f32 %v243, %v245
    %v247 = vadd.f32 %v242, %v246
    %v248 = vld [vmem:[%s141] sm:$0xff]
    %s249 = sld [smem:[#allocation4 + $0xf]]
    %v250 = vstv %s249
    %v251 = vmul.f32 %v248, %v250
    %v252 = vadd.f32 %v247, %v251
    %v253 = vld [vmem:[%s154] sm:$0xff]
    %s254 = sld [smem:[#allocation4 + $0x10]]
    %v255 = vstv %s254
    %v256 = vmul.f32 %v253, %v255
    %v257 = vadd.f32 %v252, %v256
    %v258 = vld [vmem:[%s167] sm:$0xff]
    %s259 = sld [smem:[#allocation4 + $0x11]]
    %v260 = vstv %s259
    %v261 = vmul.f32 %v258, %v260
    %v262 = vadd.f32 %v257, %v261
    %s263 = sld [smem:[#allocation6 + $0x1]]
    %v264 = vstv %s263
    %v265 = vadd.f32 %v262, %v264
    %v266 = vmax.f32 %v265, 0.0
    %v267 = vpack.c.bf16 %v266, %v266
    %268 = vst [vmem:[#allocation3 + $0x4] sm:$0xf] %v267
    %v269 = vld [vmem:[#allocation2] sm:$0xff]
    %s270 = sld [smem:[#allocation4 + $0x12]]
    %v271 = vstv %s270
    %v272 = vmul.f32 %v269, %v271
    %v273 = vld [vmem:[%s78] sm:$0xff]
    %s274 = sld [smem:[#allocation4 + $0x13]]
    %v275 = vstv %s274
    %v276 = vmul.f32 %v273, %v275
    %v277 = vadd.f32 %v272, %v276
    %v278 = vld [vmem:[%s91] sm:$0xff]
    %s279 = sld [smem:[#allocation4 + $0x14]]
    %v280 = vstv %s279
    %v281 = vmul.f32 %v278, %v280
    %v282 = vadd.f32 %v277, %v281
    %v283 = vld [vmem:[%s104] sm:$0xff]
    %s284 = sld [smem:[#allocation4 + $0x15]]
    %v285 = vstv %s284
    %v286 = vmul.f32 %v283, %v285
    %v287 = vadd.f32 %v282, %v286
    %v288 = vld [vmem:[%s115] sm:$0xff]
    %s289 = sld [smem:[#allocation4 + $0x16]]
    %v290 = vstv %s289
    %v291 = vmul.f32 %v288, %v290
    %v292 = vadd.f32 %v287, %v291
    %v293 = vld [vmem:[%s128] sm:$0xff]
    %s294 = sld [smem:[#allocation4 + $0x17]]
    %v295 = vstv %s294
    %v296 = vmul.f32 %v293, %v295
    %v297 = vadd.f32 %v292, %v296
    %v298 = vld [vmem:[%s141] sm:$0xff]
    %s299 = sld [smem:[#allocation4 + $0x18]]
    %v300 = vstv %s299
    %v301 = vmul.f32 %v298, %v300
    %v302 = vadd.f32 %v297, %v301
    %v303 = vld [vmem:[%s154] sm:$0xff]
    %s304 = sld [smem:[#allocation4 + $0x19]]
    %v305 = vstv %s304
    %v306 = vmul.f32 %v303, %v305
    %v307 = vadd.f32 %v302, %v306
    %v308 = vld [vmem:[%s167] sm:$0xff]
    %s309 = sld [smem:[#allocation4 + $0x1a]]
    %v310 = vstv %s309
    %v311 = vmul.f32 %v308, %v310
    %v312 = vadd.f32 %v307, %v311
    %s313 = sld [smem:[#allocation6 + $0x2]]
    %v314 = vstv %s313
    %v315 = vadd.f32 %v312, %v314
    %v316 = vmax.f32 %v315, 0.0
    %v317 = vpack.c.bf16 %v316, %v316
    %318 = vst [vmem:[#allocation3 + $0x8] sm:$0xf] %v317
    %v319 = vld [vmem:[#allocation2] sm:$0xff]
    %s320 = sld [smem:[#allocation4 + $0x1b]]
    %v321 = vstv %s320
    %v322 = vmul.f32 %v319, %v321
    %v323 = vld [vmem:[%s78] sm:$0xff]
    %s324 = sld [smem:[#allocation4 + $0x1c]]
    %v325 = vstv %s324
    %v326 = vmul.f32 %v323, %v325
    %v327 = vadd.f32 %v322, %v326
    %v328 = vld [vmem:[%s91] sm:$0xff]
    %s329 = sld [smem:[#allocation4 + $0x1d]]
    %v330 = vstv %s329
    %v331 = vmul.f32 %v328, %v330
    %v332 = vadd.f32 %v327, %v331
    %v333 = vld [vmem:[%s104] sm:$0xff]
    %s334 = sld [smem:[#allocation4 + $0x1e]]
    %v335 = vstv %s334
    %v336 = vmul.f32 %v333, %v335
    %v337 = vadd.f32 %v332, %v336
    %v338 = vld [vmem:[%s115] sm:$0xff]
    %s339 = sld [smem:[#allocation4 + $0x1f]]
    %v340 = vstv %s339
    %v341 = vmul.f32 %v338, %v340
    %v342 = vadd.f32 %v337, %v341
    %v343 = vld [vmem:[%s128] sm:$0xff]
    %s344 = sld [smem:[#allocation4 + $0x20]]
    %v345 = vstv %s344
    %v346 = vmul.f32 %v343, %v345
    %v347 = vadd.f32 %v342, %v346
    %v348 = vld [vmem:[%s141] sm:$0xff]
    %s349 = sld [smem:[#allocation4 + $0x21]]
    %v350 = vstv %s349
    %v351 = vmul.f32 %v348, %v350
    %v352 = vadd.f32 %v347, %v351
    %v353 = vld [vmem:[%s154] sm:$0xff]
    %s354 = sld [smem:[#allocation4 + $0x22]]
    %v355 = vstv %s354
    %v356 = vmul.f32 %v353, %v355
    %v357 = vadd.f32 %v352, %v356
    %v358 = vld [vmem:[%s167] sm:$0xff]
    %s359 = sld [smem:[#allocation4 + $0x23]]
    %v360 = vstv %s359
    %v361 = vmul.f32 %v358, %v360
    %v362 = vadd.f32 %v357, %v361
    %s363 = sld [smem:[#allocation6 + $0x3]]
    %v364 = vstv %s363
    %v365 = vadd.f32 %v362, %v364
    %v366 = vmax.f32 %v365, 0.0
    %v367 = vpack.c.bf16 %v366, %v366
    %368 = vst [vmem:[#allocation3 + $0xc] sm:$0xf] %v367
    %v369 = vld [vmem:[#allocation2] sm:$0xff]
    %s370 = sld [smem:[#allocation4 + $0x24]]
    %v371 = vstv %s370
    %v372 = vmul.f32 %v369, %v371
    %v373 = vld [vmem:[%s78] sm:$0xff]
    %s374 = sld [smem:[#allocation4 + $0x25]]
    %v375 = vstv %s374
    %v376 = vmul.f32 %v373, %v375
    %v377 = vadd.f32 %v372, %v376
    %v378 = vld [vmem:[%s91] sm:$0xff]
    %s379 = sld [smem:[#allocation4 + $0x26]]
    %v380 = vstv %s379
    %v381 = vmul.f32 %v378, %v380
    %v382 = vadd.f32 %v377, %v381
    %v383 = vld [vmem:[%s104] sm:$0xff]
    %s384 = sld [smem:[#allocation4 + $0x27]]
    %v385 = vstv %s384
    %v386 = vmul.f32 %v383, %v385
    %v387 = vadd.f32 %v382, %v386
    %v388 = vld [vmem:[%s115] sm:$0xff]
    %s389 = sld [smem:[#allocation4 + $0x28]]
    %v390 = vstv %s389
    %v391 = vmul.f32 %v388, %v390
    %v392 = vadd.f32 %v387, %v391
    %v393 = vld [vmem:[%s128] sm:$0xff]
    %s394 = sld [smem:[#allocation4 + $0x29]]
    %v395 = vstv %s394
    %v396 = vmul.f32 %v393, %v395
    %v397 = vadd.f32 %v392, %v396
    %v398 = vld [vmem:[%s141] sm:$0xff]
    %s399 = sld [smem:[#allocation4 + $0x2a]]
    %v400 = vstv %s399
    %v401 = vmul.f32 %v398, %v400
    %v402 = vadd.f32 %v397, %v401
    %v403 = vld [vmem:[%s154] sm:$0xff]
    %s404 = sld [smem:[#allocation4 + $0x2b]]
    %v405 = vstv %s404
    %v406 = vmul.f32 %v403, %v405
    %v407 = vadd.f32 %v402, %v406
    %v408 = vld [vmem:[%s167] sm:$0xff]
    %s409 = sld [smem:[#allocation4 + $0x2c]]
    %v410 = vstv %s409
    %v411 = vmul.f32 %v408, %v410
    %v412 = vadd.f32 %v407, %v411
    %s413 = sld [smem:[#allocation6 + $0x4]]
    %v414 = vstv %s413
    %v415 = vadd.f32 %v412, %v414
    %v416 = vmax.f32 %v415, 0.0
    %v417 = vpack.c.bf16 %v416, %v416
    %418 = vst [vmem:[#allocation3 + $0x10] sm:$0xf] %v417
    %v419 = vld [vmem:[#allocation2] sm:$0xff]
    %s420 = sld [smem:[#allocation4 + $0x2d]]
    %v421 = vstv %s420
    %v422 = vmul.f32 %v419, %v421
    %v423 = vld [vmem:[%s78] sm:$0xff]
    %s424 = sld [smem:[#allocation4 + $0x2e]]
    %v425 = vstv %s424
    %v426 = vmul.f32 %v423, %v425
    %v427 = vadd.f32 %v422, %v426
    %v428 = vld [vmem:[%s91] sm:$0xff]
    %s429 = sld [smem:[#allocation4 + $0x2f]]
    %v430 = vstv %s429
    %v431 = vmul.f32 %v428, %v430
    %v432 = vadd.f32 %v427, %v431
    %v433 = vld [vmem:[%s104] sm:$0xff]
    %s434 = sld [smem:[#allocation4 + $0x30]]
    %v435 = vstv %s434
    %v436 = vmul.f32 %v433, %v435
    %v437 = vadd.f32 %v432, %v436
    %v438 = vld [vmem:[%s115] sm:$0xff]
    %s439 = sld [smem:[#allocation4 + $0x31]]
    %v440 = vstv %s439
    %v441 = vmul.f32 %v438, %v440
    %v442 = vadd.f32 %v437, %v441
    %v443 = vld [vmem:[%s128] sm:$0xff]
    %s444 = sld [smem:[#allocation4 + $0x32]]
    %v445 = vstv %s444
    %v446 = vmul.f32 %v443, %v445
    %v447 = vadd.f32 %v442, %v446
    %v448 = vld [vmem:[%s141] sm:$0xff]
    %s449 = sld [smem:[#allocation4 + $0x33]]
    %v450 = vstv %s449
    %v451 = vmul.f32 %v448, %v450
    %v452 = vadd.f32 %v447, %v451
    %v453 = vld [vmem:[%s154] sm:$0xff]
    %s454 = sld [smem:[#allocation4 + $0x34]]
    %v455 = vstv %s454
    %v456 = vmul.f32 %v453, %v455
    %v457 = vadd.f32 %v452, %v456
    %v458 = vld [vmem:[%s167] sm:$0xff]
    %s459 = sld [smem:[#allocation4 + $0x35]]
    %v460 = vstv %s459
    %v461 = vmul.f32 %v458, %v460
    %v462 = vadd.f32 %v457, %v461
    %s463 = sld [smem:[#allocation6 + $0x5]]
    %v464 = vstv %s463
    %v465 = vadd.f32 %v462, %v464
    %v466 = vmax.f32 %v465, 0.0
    %v467 = vpack.c.bf16 %v466, %v466
    %468 = vst [vmem:[#allocation3 + $0x14] sm:$0xf] %v467
    %v469 = vld [vmem:[#allocation2] sm:$0xff]
    %s470 = sld [smem:[#allocation4 + $0x36]]
    %v471 = vstv %s470
    %v472 = vmul.f32 %v469, %v471
    %v473 = vld [vmem:[%s78] sm:$0xff]
    %s474 = sld [smem:[#allocation4 + $0x37]]
    %v475 = vstv %s474
    %v476 = vmul.f32 %v473, %v475
    %v477 = vadd.f32 %v472, %v476
    %v478 = vld [vmem:[%s91] sm:$0xff]
    %s479 = sld [smem:[#allocation4 + $0x38]]
    %v480 = vstv %s479
    %v481 = vmul.f32 %v478, %v480
    %v482 = vadd.f32 %v477, %v481
    %v483 = vld [vmem:[%s104] sm:$0xff]
    %s484 = sld [smem:[#allocation4 + $0x39]]
    %v485 = vstv %s484
    %v486 = vmul.f32 %v483, %v485
    %v487 = vadd.f32 %v482, %v486
    %v488 = vld [vmem:[%s115] sm:$0xff]
    %s489 = sld [smem:[#allocation4 + $0x3a]]
    %v490 = vstv %s489
    %v491 = vmul.f32 %v488, %v490
    %v492 = vadd.f32 %v487, %v491
    %v493 = vld [vmem:[%s128] sm:$0xff]
    %s494 = sld [smem:[#allocation4 + $0x3b]]
    %v495 = vstv %s494
    %v496 = vmul.f32 %v493, %v495
    %v497 = vadd.f32 %v492, %v496
    %v498 = vld [vmem:[%s141] sm:$0xff]
    %s499 = sld [smem:[#allocation4 + $0x3c]]
    %v500 = vstv %s499
    %v501 = vmul.f32 %v498, %v500
    %v502 = vadd.f32 %v497, %v501
    %v503 = vld [vmem:[%s154] sm:$0xff]
    %s504 = sld [smem:[#allocation4 + $0x3d]]
    %v505 = vstv %s504
    %v506 = vmul.f32 %v503, %v505
    %v507 = vadd.f32 %v502, %v506
    %v508 = vld [vmem:[%s167] sm:$0xff]
    %s509 = sld [smem:[#allocation4 + $0x3e]]
    %v510 = vstv %s509
    %v511 = vmul.f32 %v508, %v510
    %v512 = vadd.f32 %v507, %v511
    %s513 = sld [smem:[#allocation6 + $0x6]]
    %v514 = vstv %s513
    %v515 = vadd.f32 %v512, %v514
    %v516 = vmax.f32 %v515, 0.0
    %v517 = vpack.c.bf16 %v516, %v516
    %518 = vst [vmem:[#allocation3 + $0x18] sm:$0xf] %v517
    %v519 = vld [vmem:[#allocation2] sm:$0xff]
    %s520 = sld [smem:[#allocation4 + $0x3f]]
    %v521 = vstv %s520
    %v522 = vmul.f32 %v519, %v521
    %v523 = vld [vmem:[%s78] sm:$0xff]
    %s524 = sld [smem:[#allocation4 + $0x40]]
    %v525 = vstv %s524
    %v526 = vmul.f32 %v523, %v525
    %v527 = vadd.f32 %v522, %v526
    %v528 = vld [vmem:[%s91] sm:$0xff]
    %s529 = sld [smem:[#allocation4 + $0x41]]
    %v530 = vstv %s529
    %v531 = vmul.f32 %v528, %v530
    %v532 = vadd.f32 %v527, %v531
    %v533 = vld [vmem:[%s104] sm:$0xff]
    %s534 = sld [smem:[#allocation4 + $0x42]]
    %v535 = vstv %s534
    %v536 = vmul.f32 %v533, %v535
    %v537 = vadd.f32 %v532, %v536
    %v538 = vld [vmem:[%s115] sm:$0xff]
    %s539 = sld [smem:[#allocation4 + $0x43]]
    %v540 = vstv %s539
    %v541 = vmul.f32 %v538, %v540
    %v542 = vadd.f32 %v537, %v541
    %v543 = vld [vmem:[%s128] sm:$0xff]
    %s544 = sld [smem:[#allocation4 + $0x44]]
    %v545 = vstv %s544
    %v546 = vmul.f32 %v543, %v545
    %v547 = vadd.f32 %v542, %v546
    %v548 = vld [vmem:[%s141] sm:$0xff]
    %s549 = sld [smem:[#allocation4 + $0x45]]
    %v550 = vstv %s549
    %v551 = vmul.f32 %v548, %v550
    %v552 = vadd.f32 %v547, %v551
    %v553 = vld [vmem:[%s154] sm:$0xff]
    %s554 = sld [smem:[#allocation4 + $0x46]]
    %v555 = vstv %s554
    %v556 = vmul.f32 %v553, %v555
    %v557 = vadd.f32 %v552, %v556
    %v558 = vld [vmem:[%s167] sm:$0xff]
    %s559 = sld [smem:[#allocation4 + $0x47]]
    %v560 = vstv %s559
    %v561 = vmul.f32 %v558, %v560
    %v562 = vadd.f32 %v557, %v561
    %s563 = sld [smem:[#allocation6 + $0x7]]
    %v564 = vstv %s563
    %v565 = vadd.f32 %v562, %v564
    %v566 = vmax.f32 %v565, 0.0
    %v567 = vpack.c.bf16 %v566, %v566
    %568 = vst [vmem:[#allocation3 + $0x1c] sm:$0xf] %v567
    %v569 = vld [vmem:[#allocation2] sm:$0xff]
    %s570 = sld [smem:[#allocation4 + $0x48]]
    %v571 = vstv %s570
    %v572 = vmul.f32 %v569, %v571
    %v573 = vld [vmem:[%s78] sm:$0xff]
    %s574 = sld [smem:[#allocation4 + $0x49]]
    %v575 = vstv %s574
    %v576 = vmul.f32 %v573, %v575
    %v577 = vadd.f32 %v572, %v576
    %v578 = vld [vmem:[%s91] sm:$0xff]
    %s579 = sld [smem:[#allocation4 + $0x4a]]
    %v580 = vstv %s579
    %v581 = vmul.f32 %v578, %v580
    %v582 = vadd.f32 %v577, %v581
    %v583 = vld [vmem:[%s104] sm:$0xff]
    %s584 = sld [smem:[#allocation4 + $0x4b]]
    %v585 = vstv %s584
    %v586 = vmul.f32 %v583, %v585
    %v587 = vadd.f32 %v582, %v586
    %v588 = vld [vmem:[%s115] sm:$0xff]
    %s589 = sld [smem:[#allocation4 + $0x4c]]
    %v590 = vstv %s589
    %v591 = vmul.f32 %v588, %v590
    %v592 = vadd.f32 %v587, %v591
    %v593 = vld [vmem:[%s128] sm:$0xff]
    %s594 = sld [smem:[#allocation4 + $0x4d]]
    %v595 = vstv %s594
    %v596 = vmul.f32 %v593, %v595
    %v597 = vadd.f32 %v592, %v596
    %v598 = vld [vmem:[%s141] sm:$0xff]
    %s599 = sld [smem:[#allocation4 + $0x4e]]
    %v600 = vstv %s599
    %v601 = vmul.f32 %v598, %v600
    %v602 = vadd.f32 %v597, %v601
    %v603 = vld [vmem:[%s154] sm:$0xff]
    %s604 = sld [smem:[#allocation4 + $0x4f]]
    %v605 = vstv %s604
    %v606 = vmul.f32 %v603, %v605
    %v607 = vadd.f32 %v602, %v606
    %v608 = vld [vmem:[%s167] sm:$0xff]
    %s609 = sld [smem:[#allocation4 + $0x50]]
    %v610 = vstv %s609
    %v611 = vmul.f32 %v608, %v610
    %v612 = vadd.f32 %v607, %v611
    %s613 = sld [smem:[#allocation6 + $0x8]]
    %v614 = vstv %s613
    %v615 = vadd.f32 %v612, %v614
    %v616 = vmax.f32 %v615, 0.0
    %v617 = vpack.c.bf16 %v616, %v616
    %618 = vst [vmem:[#allocation3 + $0x20] sm:$0xf] %v617
    %v619 = vld [vmem:[#allocation2] sm:$0xff]
    %s620 = sld [smem:[#allocation4 + $0x51]]
    %v621 = vstv %s620
    %v622 = vmul.f32 %v619, %v621
    %v623 = vld [vmem:[%s78] sm:$0xff]
    %s624 = sld [smem:[#allocation4 + $0x52]]
    %v625 = vstv %s624
    %v626 = vmul.f32 %v623, %v625
    %v627 = vadd.f32 %v622, %v626
    %v628 = vld [vmem:[%s91] sm:$0xff]
    %s629 = sld [smem:[#allocation4 + $0x53]]
    %v630 = vstv %s629
    %v631 = vmul.f32 %v628, %v630
    %v632 = vadd.f32 %v627, %v631
    %v633 = vld [vmem:[%s104] sm:$0xff]
    %s634 = sld [smem:[#allocation4 + $0x54]]
    %v635 = vstv %s634
    %v636 = vmul.f32 %v633, %v635
    %v637 = vadd.f32 %v632, %v636
    %v638 = vld [vmem:[%s115] sm:$0xff]
    %s639 = sld [smem:[#allocation4 + $0x55]]
    %v640 = vstv %s639
    %v641 = vmul.f32 %v638, %v640
    %v642 = vadd.f32 %v637, %v641
    %v643 = vld [vmem:[%s128] sm:$0xff]
    %s644 = sld [smem:[#allocation4 + $0x56]]
    %v645 = vstv %s644
    %v646 = vmul.f32 %v643, %v645
    %v647 = vadd.f32 %v642, %v646
    %v648 = vld [vmem:[%s141] sm:$0xff]
    %s649 = sld [smem:[#allocation4 + $0x57]]
    %v650 = vstv %s649
    %v651 = vmul.f32 %v648, %v650
    %v652 = vadd.f32 %v647, %v651
    %v653 = vld [vmem:[%s154] sm:$0xff]
    %s654 = sld [smem:[#allocation4 + $0x58]]
    %v655 = vstv %s654
    %v656 = vmul.f32 %v653, %v655
    %v657 = vadd.f32 %v652, %v656
    %v658 = vld [vmem:[%s167] sm:$0xff]
    %s659 = sld [smem:[#allocation4 + $0x59]]
    %v660 = vstv %s659
    %v661 = vmul.f32 %v658, %v660
    %v662 = vadd.f32 %v657, %v661
    %s663 = sld [smem:[#allocation6 + $0x9]]
    %v664 = vstv %s663
    %v665 = vadd.f32 %v662, %v664
    %v666 = vmax.f32 %v665, 0.0
    %v667 = vpack.c.bf16 %v666, %v666
    %668 = vst [vmem:[#allocation3 + $0x24] sm:$0xf] %v667
    %v669 = vld [vmem:[#allocation2] sm:$0xff]
    %s670 = sld [smem:[#allocation4 + $0x5a]]
    %v671 = vstv %s670
    %v672 = vmul.f32 %v669, %v671
    %v673 = vld [vmem:[%s78] sm:$0xff]
    %s674 = sld [smem:[#allocation4 + $0x5b]]
    %v675 = vstv %s674
    %v676 = vmul.f32 %v673, %v675
    %v677 = vadd.f32 %v672, %v676
    %v678 = vld [vmem:[%s91] sm:$0xff]
    %s679 = sld [smem:[#allocation4 + $0x5c]]
    %v680 = vstv %s679
    %v681 = vmul.f32 %v678, %v680
    %v682 = vadd.f32 %v677, %v681
    %v683 = vld [vmem:[%s104] sm:$0xff]
    %s684 = sld [smem:[#allocation4 + $0x5d]]
    %v685 = vstv %s684
    %v686 = vmul.f32 %v683, %v685
    %v687 = vadd.f32 %v682, %v686
    %v688 = vld [vmem:[%s115] sm:$0xff]
    %s689 = sld [smem:[#allocation4 + $0x5e]]
    %v690 = vstv %s689
    %v691 = vmul.f32 %v688, %v690
    %v692 = vadd.f32 %v687, %v691
    %v693 = vld [vmem:[%s128] sm:$0xff]
    %s694 = sld [smem:[#allocation4 + $0x5f]]
    %v695 = vstv %s694
    %v696 = vmul.f32 %v693, %v695
    %v697 = vadd.f32 %v692, %v696
    %v698 = vld [vmem:[%s141] sm:$0xff]
    %s699 = sld [smem:[#allocation4 + $0x60]]
    %v700 = vstv %s699
    %v701 = vmul.f32 %v698, %v700
    %v702 = vadd.f32 %v697, %v701
    %v703 = vld [vmem:[%s154] sm:$0xff]
    %s704 = sld [smem:[#allocation4 + $0x61]]
    %v705 = vstv %s704
    %v706 = vmul.f32 %v703, %v705
    %v707 = vadd.f32 %v702, %v706
    %v708 = vld [vmem:[%s167] sm:$0xff]
    %s709 = sld [smem:[#allocation4 + $0x62]]
    %v710 = vstv %s709
    %v711 = vmul.f32 %v708, %v710
    %v712 = vadd.f32 %v707, %v711
    %s713 = sld [smem:[#allocation6 + $0xa]]
    %v714 = vstv %s713
    %v715 = vadd.f32 %v712, %v714
    %v716 = vmax.f32 %v715, 0.0
    %v717 = vpack.c.bf16 %v716, %v716
    %718 = vst [vmem:[#allocation3 + $0x28] sm:$0xf] %v717
    %v719 = vld [vmem:[#allocation2] sm:$0xff]
    %s720 = sld [smem:[#allocation4 + $0x63]]
    %v721 = vstv %s720
    %v722 = vmul.f32 %v719, %v721
    %v723 = vld [vmem:[%s78] sm:$0xff]
    %s724 = sld [smem:[#allocation4 + $0x64]]
    %v725 = vstv %s724
    %v726 = vmul.f32 %v723, %v725
    %v727 = vadd.f32 %v722, %v726
    %v728 = vld [vmem:[%s91] sm:$0xff]
    %s729 = sld [smem:[#allocation4 + $0x65]]
    %v730 = vstv %s729
    %v731 = vmul.f32 %v728, %v730
    %v732 = vadd.f32 %v727, %v731
    %v733 = vld [vmem:[%s104] sm:$0xff]
    %s734 = sld [smem:[#allocation4 + $0x66]]
    %v735 = vstv %s734
    %v736 = vmul.f32 %v733, %v735
    %v737 = vadd.f32 %v732, %v736
    %v738 = vld [vmem:[%s115] sm:$0xff]
    %s739 = sld [smem:[#allocation4 + $0x67]]
    %v740 = vstv %s739
    %v741 = vmul.f32 %v738, %v740
    %v742 = vadd.f32 %v737, %v741
    %v743 = vld [vmem:[%s128] sm:$0xff]
    %s744 = sld [smem:[#allocation4 + $0x68]]
    %v745 = vstv %s744
    %v746 = vmul.f32 %v743, %v745
    %v747 = vadd.f32 %v742, %v746
    %v748 = vld [vmem:[%s141] sm:$0xff]
    %s749 = sld [smem:[#allocation4 + $0x69]]
    %v750 = vstv %s749
    %v751 = vmul.f32 %v748, %v750
    %v752 = vadd.f32 %v747, %v751
    %v753 = vld [vmem:[%s154] sm:$0xff]
    %s754 = sld [smem:[#allocation4 + $0x6a]]
    %v755 = vstv %s754
    %v756 = vmul.f32 %v753, %v755
    %v757 = vadd.f32 %v752, %v756
    %v758 = vld [vmem:[%s167] sm:$0xff]
    %s759 = sld [smem:[#allocation4 + $0x6b]]
    %v760 = vstv %s759
    %v761 = vmul.f32 %v758, %v760
    %v762 = vadd.f32 %v757, %v761
    %s763 = sld [smem:[#allocation6 + $0xb]]
    %v764 = vstv %s763
    %v765 = vadd.f32 %v762, %v764
    %v766 = vmax.f32 %v765, 0.0
    %v767 = vpack.c.bf16 %v766, %v766
    %768 = vst [vmem:[#allocation3 + $0x2c] sm:$0xf] %v767
    %v769 = vld [vmem:[#allocation2] sm:$0xff]
    %s770 = sld [smem:[#allocation4 + $0x6c]]
    %v771 = vstv %s770
    %v772 = vmul.f32 %v769, %v771
    %v773 = vld [vmem:[%s78] sm:$0xff]
    %s774 = sld [smem:[#allocation4 + $0x6d]]
    %v775 = vstv %s774
    %v776 = vmul.f32 %v773, %v775
    %v777 = vadd.f32 %v772, %v776
    %v778 = vld [vmem:[%s91] sm:$0xff]
    %s779 = sld [smem:[#allocation4 + $0x6e]]
    %v780 = vstv %s779
    %v781 = vmul.f32 %v778, %v780
    %v782 = vadd.f32 %v777, %v781
    %v783 = vld [vmem:[%s104] sm:$0xff]
    %s784 = sld [smem:[#allocation4 + $0x6f]]
    %v785 = vstv %s784
    %v786 = vmul.f32 %v783, %v785
    %v787 = vadd.f32 %v782, %v786
    %v788 = vld [vmem:[%s115] sm:$0xff]
    %s789 = sld [smem:[#allocation4 + $0x70]]
    %v790 = vstv %s789
    %v791 = vmul.f32 %v788, %v790
    %v792 = vadd.f32 %v787, %v791
    %v793 = vld [vmem:[%s128] sm:$0xff]
    %s794 = sld [smem:[#allocation4 + $0x71]]
    %v795 = vstv %s794
    %v796 = vmul.f32 %v793, %v795
    %v797 = vadd.f32 %v792, %v796
    %v798 = vld [vmem:[%s141] sm:$0xff]
    %s799 = sld [smem:[#allocation4 + $0x72]]
    %v800 = vstv %s799
    %v801 = vmul.f32 %v798, %v800
    %v802 = vadd.f32 %v797, %v801
    %v803 = vld [vmem:[%s154] sm:$0xff]
    %s804 = sld [smem:[#allocation4 + $0x73]]
    %v805 = vstv %s804
    %v806 = vmul.f32 %v803, %v805
    %v807 = vadd.f32 %v802, %v806
    %v808 = vld [vmem:[%s167] sm:$0xff]
    %s809 = sld [smem:[#allocation4 + $0x74]]
    %v810 = vstv %s809
    %v811 = vmul.f32 %v808, %v810
    %v812 = vadd.f32 %v807, %v811
    %s813 = sld [smem:[#allocation6 + $0xc]]
    %v814 = vstv %s813
    %v815 = vadd.f32 %v812, %v814
    %v816 = vmax.f32 %v815, 0.0
    %v817 = vpack.c.bf16 %v816, %v816
    %818 = vst [vmem:[#allocation3 + $0x30] sm:$0xf] %v817
    %v819 = vld [vmem:[#allocation2] sm:$0xff]
    %s820 = sld [smem:[#allocation4 + $0x75]]
    %v821 = vstv %s820
    %v822 = vmul.f32 %v819, %v821
    %v823 = vld [vmem:[%s78] sm:$0xff]
    %s824 = sld [smem:[#allocation4 + $0x76]]
    %v825 = vstv %s824
    %v826 = vmul.f32 %v823, %v825
    %v827 = vadd.f32 %v822, %v826
    %v828 = vld [vmem:[%s91] sm:$0xff]
    %s829 = sld [smem:[#allocation4 + $0x77]]
    %v830 = vstv %s829
    %v831 = vmul.f32 %v828, %v830
    %v832 = vadd.f32 %v827, %v831
    %v833 = vld [vmem:[%s104] sm:$0xff]
    %s834 = sld [smem:[#allocation4 + $0x78]]
    %v835 = vstv %s834
    %v836 = vmul.f32 %v833, %v835
    %v837 = vadd.f32 %v832, %v836
    %v838 = vld [vmem:[%s115] sm:$0xff]
    %s839 = sld [smem:[#allocation4 + $0x79]]
    %v840 = vstv %s839
    %v841 = vmul.f32 %v838, %v840
    %v842 = vadd.f32 %v837, %v841
    %v843 = vld [vmem:[%s128] sm:$0xff]
    %s844 = sld [smem:[#allocation4 + $0x7a]]
    %v845 = vstv %s844
    %v846 = vmul.f32 %v843, %v845
    %v847 = vadd.f32 %v842, %v846
    %v848 = vld [vmem:[%s141] sm:$0xff]
    %s849 = sld [smem:[#allocation4 + $0x7b]]
    %v850 = vstv %s849
    %v851 = vmul.f32 %v848, %v850
    %v852 = vadd.f32 %v847, %v851
    %v853 = vld [vmem:[%s154] sm:$0xff]
    %s854 = sld [smem:[#allocation4 + $0x7c]]
    %v855 = vstv %s854
    %v856 = vmul.f32 %v853, %v855
    %v857 = vadd.f32 %v852, %v856
    %v858 = vld [vmem:[%s167] sm:$0xff]
    %s859 = sld [smem:[#allocation4 + $0x7d]]
    %v860 = vstv %s859
    %v861 = vmul.f32 %v858, %v860
    %v862 = vadd.f32 %v857, %v861
    %s863 = sld [smem:[#allocation6 + $0xd]]
    %v864 = vstv %s863
    %v865 = vadd.f32 %v862, %v864
    %v866 = vmax.f32 %v865, 0.0
    %v867 = vpack.c.bf16 %v866, %v866
    %868 = vst [vmem:[#allocation3 + $0x34] sm:$0xf] %v867
    %v869 = vld [vmem:[#allocation2] sm:$0xff]
    %s870 = sld [smem:[#allocation4 + $0x7e]]
    %v871 = vstv %s870
    %v872 = vmul.f32 %v869, %v871
    %v873 = vld [vmem:[%s78] sm:$0xff]
    %s874 = sld [smem:[#allocation4 + $0x7f]]
    %v875 = vstv %s874
    %v876 = vmul.f32 %v873, %v875
    %v877 = vadd.f32 %v872, %v876
    %v878 = vld [vmem:[%s91] sm:$0xff]
    %s879 = sld [smem:[#allocation4 + $0x80]]
    %v880 = vstv %s879
    %v881 = vmul.f32 %v878, %v880
    %v882 = vadd.f32 %v877, %v881
    %v883 = vld [vmem:[%s104] sm:$0xff]
    %s884 = sld [smem:[#allocation4 + $0x81]]
    %v885 = vstv %s884
    %v886 = vmul.f32 %v883, %v885
    %v887 = vadd.f32 %v882, %v886
    %v888 = vld [vmem:[%s115] sm:$0xff]
    %s889 = sld [smem:[#allocation4 + $0x82]]
    %v890 = vstv %s889
    %v891 = vmul.f32 %v888, %v890
    %v892 = vadd.f32 %v887, %v891
    %v893 = vld [vmem:[%s128] sm:$0xff]
    %s894 = sld [smem:[#allocation4 + $0x83]]
    %v895 = vstv %s894
    %v896 = vmul.f32 %v893, %v895
    %v897 = vadd.f32 %v892, %v896
    %v898 = vld [vmem:[%s141] sm:$0xff]
    %s899 = sld [smem:[#allocation4 + $0x84]]
    %v900 = vstv %s899
    %v901 = vmul.f32 %v898, %v900
    %v902 = vadd.f32 %v897, %v901
    %v903 = vld [vmem:[%s154] sm:$0xff]
    %s904 = sld [smem:[#allocation4 + $0x85]]
    %v905 = vstv %s904
    %v906 = vmul.f32 %v903, %v905
    %v907 = vadd.f32 %v902, %v906
    %v908 = vld [vmem:[%s167] sm:$0xff]
    %s909 = sld [smem:[#allocation4 + $0x86]]
    %v910 = vstv %s909
    %v911 = vmul.f32 %v908, %v910
    %v912 = vadd.f32 %v907, %v911
    %s913 = sld [smem:[#allocation6 + $0xe]]
    %v914 = vstv %s913
    %v915 = vadd.f32 %v912, %v914
    %v916 = vmax.f32 %v915, 0.0
    %v917 = vpack.c.bf16 %v916, %v916
    %918 = vst [vmem:[#allocation3 + $0x38] sm:$0xf] %v917
    %v919 = vld [vmem:[#allocation2] sm:$0xff]
    %s920 = sld [smem:[#allocation4 + $0x87]]
    %v921 = vstv %s920
    %v922 = vmul.f32 %v919, %v921
    %v923 = vld [vmem:[%s78] sm:$0xff]
    %s924 = sld [smem:[#allocation4 + $0x88]]
    %v925 = vstv %s924
    %v926 = vmul.f32 %v923, %v925
    %v927 = vadd.f32 %v922, %v926
    %v928 = vld [vmem:[%s91] sm:$0xff]
    %s929 = sld [smem:[#allocation4 + $0x89]]
    %v930 = vstv %s929
    %v931 = vmul.f32 %v928, %v930
    %v932 = vadd.f32 %v927, %v931
    %v933 = vld [vmem:[%s104] sm:$0xff]
    %s934 = sld [smem:[#allocation4 + $0x8a]]
    %v935 = vstv %s934
    %v936 = vmul.f32 %v933, %v935
    %v937 = vadd.f32 %v932, %v936
    %v938 = vld [vmem:[%s115] sm:$0xff]
    %s939 = sld [smem:[#allocation4 + $0x8b]]
    %v940 = vstv %s939
    %v941 = vmul.f32 %v938, %v940
    %v942 = vadd.f32 %v937, %v941
    %v943 = vld [vmem:[%s128] sm:$0xff]
    %s944 = sld [smem:[#allocation4 + $0x8c]]
    %v945 = vstv %s944
    %v946 = vmul.f32 %v943, %v945
    %v947 = vadd.f32 %v942, %v946
    %v948 = vld [vmem:[%s141] sm:$0xff]
    %s949 = sld [smem:[#allocation4 + $0x8d]]
    %v950 = vstv %s949
    %v951 = vmul.f32 %v948, %v950
    %v952 = vadd.f32 %v947, %v951
    %v953 = vld [vmem:[%s154] sm:$0xff]
    %s954 = sld [smem:[#allocation4 + $0x8e]]
    %v955 = vstv %s954
    %v956 = vmul.f32 %v953, %v955
    %v957 = vadd.f32 %v952, %v956
    %v958 = vld [vmem:[%s167] sm:$0xff]
    %s959 = sld [smem:[#allocation4 + $0x8f]]
    %v960 = vstv %s959
    %v961 = vmul.f32 %v958, %v960
    %v962 = vadd.f32 %v957, %v961
    %s963 = sld [smem:[#allocation6 + $0xf]]
    %v964 = vstv %s963
    %v965 = vadd.f32 %v962, %v964
    %v966 = vmax.f32 %v965, 0.0
    %v967 = vpack.c.bf16 %v966, %v966
    %968 = vst [vmem:[#allocation3 + $0x3c] sm:$0xf] %v967
    %v969 = vld [vmem:[#allocation2] sm:$0xff]
    %s970 = sld [smem:[#allocation4 + $0x90]]
    %v971 = vstv %s970
    %v972 = vmul.f32 %v969, %v971
    %v973 = vld [vmem:[%s78] sm:$0xff]
    %s974 = sld [smem:[#allocation4 + $0x91]]
    %v975 = vstv %s974
    %v976 = vmul.f32 %v973, %v975
    %v977 = vadd.f32 %v972, %v976
    %v978 = vld [vmem:[%s91] sm:$0xff]
    %s979 = sld [smem:[#allocation4 + $0x92]]
    %v980 = vstv %s979
    %v981 = vmul.f32 %v978, %v980
    %v982 = vadd.f32 %v977, %v981
    %v983 = vld [vmem:[%s104] sm:$0xff]
    %s984 = sld [smem:[#allocation4 + $0x93]]
    %v985 = vstv %s984
    %v986 = vmul.f32 %v983, %v985
    %v987 = vadd.f32 %v982, %v986
    %v988 = vld [vmem:[%s115] sm:$0xff]
    %s989 = sld [smem:[#allocation4 + $0x94]]
    %v990 = vstv %s989
    %v991 = vmul.f32 %v988, %v990
    %v992 = vadd.f32 %v987, %v991
    %v993 = vld [vmem:[%s128] sm:$0xff]
    %s994 = sld [smem:[#allocation4 + $0x95]]
    %v995 = vstv %s994
    %v996 = vmul.f32 %v993, %v995
    %v997 = vadd.f32 %v992, %v996
    %v998 = vld [vmem:[%s141] sm:$0xff]
    %s999 = sld [smem:[#allocation4 + $0x96]]
    %v1000 = vstv %s999
    %v1001 = vmul.f32 %v998, %v1000
    %v1002 = vadd.f32 %v997, %v1001
    %v1003 = vld [vmem:[%s154] sm:$0xff]
    %s1004 = sld [smem:[#allocation4 + $0x97]]
    %v1005 = vstv %s1004
    %v1006 = vmul.f32 %v1003, %v1005
    %v1007 = vadd.f32 %v1002, %v1006
    %v1008 = vld [vmem:[%s167] sm:$0xff]
    %s1009 = sld [smem:[#allocation4 + $0x98]]
    %v1010 = vstv %s1009
    %v1011 = vmul.f32 %v1008, %v1010
    %v1012 = vadd.f32 %v1007, %v1011
    %s1013 = sld [smem:[#allocation6 + $0x10]]
    %v1014 = vstv %s1013
    %v1015 = vadd.f32 %v1012, %v1014
    %v1016 = vmax.f32 %v1015, 0.0
    %v1017 = vpack.c.bf16 %v1016, %v1016
    %1018 = vst [vmem:[#allocation3 + $0x40] sm:$0xf] %v1017
    %v1019 = vld [vmem:[#allocation2] sm:$0xff]
    %s1020 = sld [smem:[#allocation4 + $0x99]]
    %v1021 = vstv %s1020
    %v1022 = vmul.f32 %v1019, %v1021
    %v1023 = vld [vmem:[%s78] sm:$0xff]
    %s1024 = sld [smem:[#allocation4 + $0x9a]]
    %v1025 = vstv %s1024
    %v1026 = vmul.f32 %v1023, %v1025
    %v1027 = vadd.f32 %v1022, %v1026
    %v1028 = vld [vmem:[%s91] sm:$0xff]
    %s1029 = sld [smem:[#allocation4 + $0x9b]]
    %v1030 = vstv %s1029
    %v1031 = vmul.f32 %v1028, %v1030
    %v1032 = vadd.f32 %v1027, %v1031
    %v1033 = vld [vmem:[%s104] sm:$0xff]
    %s1034 = sld [smem:[#allocation4 + $0x9c]]
    %v1035 = vstv %s1034
    %v1036 = vmul.f32 %v1033, %v1035
    %v1037 = vadd.f32 %v1032, %v1036
    %v1038 = vld [vmem:[%s115] sm:$0xff]
    %s1039 = sld [smem:[#allocation4 + $0x9d]]
    %v1040 = vstv %s1039
    %v1041 = vmul.f32 %v1038, %v1040
    %v1042 = vadd.f32 %v1037, %v1041
    %v1043 = vld [vmem:[%s128] sm:$0xff]
    %s1044 = sld [smem:[#allocation4 + $0x9e]]
    %v1045 = vstv %s1044
    %v1046 = vmul.f32 %v1043, %v1045
    %v1047 = vadd.f32 %v1042, %v1046
    %v1048 = vld [vmem:[%s141] sm:$0xff]
    %s1049 = sld [smem:[#allocation4 + $0x9f]]
    %v1050 = vstv %s1049
    %v1051 = vmul.f32 %v1048, %v1050
    %v1052 = vadd.f32 %v1047, %v1051
    %v1053 = vld [vmem:[%s154] sm:$0xff]
    %s1054 = sld [smem:[#allocation4 + $0xa0]]
    %v1055 = vstv %s1054
    %v1056 = vmul.f32 %v1053, %v1055
    %v1057 = vadd.f32 %v1052, %v1056
    %v1058 = vld [vmem:[%s167] sm:$0xff]
    %s1059 = sld [smem:[#allocation4 + $0xa1]]
    %v1060 = vstv %s1059
    %v1061 = vmul.f32 %v1058, %v1060
    %v1062 = vadd.f32 %v1057, %v1061
    %s1063 = sld [smem:[#allocation6 + $0x11]]
    %v1064 = vstv %s1063
    %v1065 = vadd.f32 %v1062, %v1064
    %v1066 = vmax.f32 %v1065, 0.0
    %v1067 = vpack.c.bf16 %v1066, %v1066
    %1068 = vst [vmem:[#allocation3 + $0x44] sm:$0xf] %v1067
    %v1069 = vld [vmem:[#allocation2] sm:$0xff]
    %s1070 = sld [smem:[#allocation4 + $0xa2]]
    %v1071 = vstv %s1070
    %v1072 = vmul.f32 %v1069, %v1071
    %v1073 = vld [vmem:[%s78] sm:$0xff]
    %s1074 = sld [smem:[#allocation4 + $0xa3]]
    %v1075 = vstv %s1074
    %v1076 = vmul.f32 %v1073, %v1075
    %v1077 = vadd.f32 %v1072, %v1076
    %v1078 = vld [vmem:[%s91] sm:$0xff]
    %s1079 = sld [smem:[#allocation4 + $0xa4]]
    %v1080 = vstv %s1079
    %v1081 = vmul.f32 %v1078, %v1080
    %v1082 = vadd.f32 %v1077, %v1081
    %v1083 = vld [vmem:[%s104] sm:$0xff]
    %s1084 = sld [smem:[#allocation4 + $0xa5]]
    %v1085 = vstv %s1084
    %v1086 = vmul.f32 %v1083, %v1085
    %v1087 = vadd.f32 %v1082, %v1086
    %v1088 = vld [vmem:[%s115] sm:$0xff]
    %s1089 = sld [smem:[#allocation4 + $0xa6]]
    %v1090 = vstv %s1089
    %v1091 = vmul.f32 %v1088, %v1090
    %v1092 = vadd.f32 %v1087, %v1091
    %v1093 = vld [vmem:[%s128] sm:$0xff]
    %s1094 = sld [smem:[#allocation4 + $0xa7]]
    %v1095 = vstv %s1094
    %v1096 = vmul.f32 %v1093, %v1095
    %v1097 = vadd.f32 %v1092, %v1096
    %v1098 = vld [vmem:[%s141] sm:$0xff]
    %s1099 = sld [smem:[#allocation4 + $0xa8]]
    %v1100 = vstv %s1099
    %v1101 = vmul.f32 %v1098, %v1100
    %v1102 = vadd.f32 %v1097, %v1101
    %v1103 = vld [vmem:[%s154] sm:$0xff]
    %s1104 = sld [smem:[#allocation4 + $0xa9]]
    %v1105 = vstv %s1104
    %v1106 = vmul.f32 %v1103, %v1105
    %v1107 = vadd.f32 %v1102, %v1106
    %v1108 = vld [vmem:[%s167] sm:$0xff]
    %s1109 = sld [smem:[#allocation4 + $0xaa]]
    %v1110 = vstv %s1109
    %v1111 = vmul.f32 %v1108, %v1110
    %v1112 = vadd.f32 %v1107, %v1111
    %s1113 = sld [smem:[#allocation6 + $0x12]]
    %v1114 = vstv %s1113
    %v1115 = vadd.f32 %v1112, %v1114
    %v1116 = vmax.f32 %v1115, 0.0
    %v1117 = vpack.c.bf16 %v1116, %v1116
    %1118 = vst [vmem:[#allocation3 + $0x48] sm:$0xf] %v1117
    %v1119 = vld [vmem:[#allocation2] sm:$0xff]
    %s1120 = sld [smem:[#allocation4 + $0xab]]
    %v1121 = vstv %s1120
    %v1122 = vmul.f32 %v1119, %v1121
    %v1123 = vld [vmem:[%s78] sm:$0xff]
    %s1124 = sld [smem:[#allocation4 + $0xac]]
    %v1125 = vstv %s1124
    %v1126 = vmul.f32 %v1123, %v1125
    %v1127 = vadd.f32 %v1122, %v1126
    %v1128 = vld [vmem:[%s91] sm:$0xff]
    %s1129 = sld [smem:[#allocation4 + $0xad]]
    %v1130 = vstv %s1129
    %v1131 = vmul.f32 %v1128, %v1130
    %v1132 = vadd.f32 %v1127, %v1131
    %v1133 = vld [vmem:[%s104] sm:$0xff]
    %s1134 = sld [smem:[#allocation4 + $0xae]]
    %v1135 = vstv %s1134
    %v1136 = vmul.f32 %v1133, %v1135
    %v1137 = vadd.f32 %v1132, %v1136
    %v1138 = vld [vmem:[%s115] sm:$0xff]
    %s1139 = sld [smem:[#allocation4 + $0xaf]]
    %v1140 = vstv %s1139
    %v1141 = vmul.f32 %v1138, %v1140
    %v1142 = vadd.f32 %v1137, %v1141
    %v1143 = vld [vmem:[%s128] sm:$0xff]
    %s1144 = sld [smem:[#allocation4 + $0xb0]]
    %v1145 = vstv %s1144
    %v1146 = vmul.f32 %v1143, %v1145
    %v1147 = vadd.f32 %v1142, %v1146
    %v1148 = vld [vmem:[%s141] sm:$0xff]
    %s1149 = sld [smem:[#allocation4 + $0xb1]]
    %v1150 = vstv %s1149
    %v1151 = vmul.f32 %v1148, %v1150
    %v1152 = vadd.f32 %v1147, %v1151
    %v1153 = vld [vmem:[%s154] sm:$0xff]
    %s1154 = sld [smem:[#allocation4 + $0xb2]]
    %v1155 = vstv %s1154
    %v1156 = vmul.f32 %v1153, %v1155
    %v1157 = vadd.f32 %v1152, %v1156
    %v1158 = vld [vmem:[%s167] sm:$0xff]
    %s1159 = sld [smem:[#allocation4 + $0xb3]]
    %v1160 = vstv %s1159
    %v1161 = vmul.f32 %v1158, %v1160
    %v1162 = vadd.f32 %v1157, %v1161
    %s1163 = sld [smem:[#allocation6 + $0x13]]
    %v1164 = vstv %s1163
    %v1165 = vadd.f32 %v1162, %v1164
    %v1166 = vmax.f32 %v1165, 0.0
    %v1167 = vpack.c.bf16 %v1166, %v1166
    %1168 = vst [vmem:[#allocation3 + $0x4c] sm:$0xf] %v1167
    %v1169 = vld [vmem:[#allocation2] sm:$0xff]
    %s1170 = sld [smem:[#allocation4 + $0xb4]]
    %v1171 = vstv %s1170
    %v1172 = vmul.f32 %v1169, %v1171
    %v1173 = vld [vmem:[%s78] sm:$0xff]
    %s1174 = sld [smem:[#allocation4 + $0xb5]]
    %v1175 = vstv %s1174
    %v1176 = vmul.f32 %v1173, %v1175
    %v1177 = vadd.f32 %v1172, %v1176
    %v1178 = vld [vmem:[%s91] sm:$0xff]
    %s1179 = sld [smem:[#allocation4 + $0xb6]]
    %v1180 = vstv %s1179
    %v1181 = vmul.f32 %v1178, %v1180
    %v1182 = vadd.f32 %v1177, %v1181
    %v1183 = vld [vmem:[%s104] sm:$0xff]
    %s1184 = sld [smem:[#allocation4 + $0xb7]]
    %v1185 = vstv %s1184
    %v1186 = vmul.f32 %v1183, %v1185
    %v1187 = vadd.f32 %v1182, %v1186
    %v1188 = vld [vmem:[%s115] sm:$0xff]
    %s1189 = sld [smem:[#allocation4 + $0xb8]]
    %v1190 = vstv %s1189
    %v1191 = vmul.f32 %v1188, %v1190
    %v1192 = vadd.f32 %v1187, %v1191
    %v1193 = vld [vmem:[%s128] sm:$0xff]
    %s1194 = sld [smem:[#allocation4 + $0xb9]]
    %v1195 = vstv %s1194
    %v1196 = vmul.f32 %v1193, %v1195
    %v1197 = vadd.f32 %v1192, %v1196
    %v1198 = vld [vmem:[%s141] sm:$0xff]
    %s1199 = sld [smem:[#allocation4 + $0xba]]
    %v1200 = vstv %s1199
    %v1201 = vmul.f32 %v1198, %v1200
    %v1202 = vadd.f32 %v1197, %v1201
    %v1203 = vld [vmem:[%s154] sm:$0xff]
    %s1204 = sld [smem:[#allocation4 + $0xbb]]
    %v1205 = vstv %s1204
    %v1206 = vmul.f32 %v1203, %v1205
    %v1207 = vadd.f32 %v1202, %v1206
    %v1208 = vld [vmem:[%s167] sm:$0xff]
    %s1209 = sld [smem:[#allocation4 + $0xbc]]
    %v1210 = vstv %s1209
    %v1211 = vmul.f32 %v1208, %v1210
    %v1212 = vadd.f32 %v1207, %v1211
    %s1213 = sld [smem:[#allocation6 + $0x14]]
    %v1214 = vstv %s1213
    %v1215 = vadd.f32 %v1212, %v1214
    %v1216 = vmax.f32 %v1215, 0.0
    %v1217 = vpack.c.bf16 %v1216, %v1216
    %1218 = vst [vmem:[#allocation3 + $0x50] sm:$0xf] %v1217
    %v1219 = vld [vmem:[#allocation2] sm:$0xff]
    %s1220 = sld [smem:[#allocation4 + $0xbd]]
    %v1221 = vstv %s1220
    %v1222 = vmul.f32 %v1219, %v1221
    %v1223 = vld [vmem:[%s78] sm:$0xff]
    %s1224 = sld [smem:[#allocation4 + $0xbe]]
    %v1225 = vstv %s1224
    %v1226 = vmul.f32 %v1223, %v1225
    %v1227 = vadd.f32 %v1222, %v1226
    %v1228 = vld [vmem:[%s91] sm:$0xff]
    %s1229 = sld [smem:[#allocation4 + $0xbf]]
    %v1230 = vstv %s1229
    %v1231 = vmul.f32 %v1228, %v1230
    %v1232 = vadd.f32 %v1227, %v1231
    %v1233 = vld [vmem:[%s104] sm:$0xff]
    %s1234 = sld [smem:[#allocation4 + $0xc0]]
    %v1235 = vstv %s1234
    %v1236 = vmul.f32 %v1233, %v1235
    %v1237 = vadd.f32 %v1232, %v1236
    %v1238 = vld [vmem:[%s115] sm:$0xff]
    %s1239 = sld [smem:[#allocation4 + $0xc1]]
    %v1240 = vstv %s1239
    %v1241 = vmul.f32 %v1238, %v1240
    %v1242 = vadd.f32 %v1237, %v1241
    %v1243 = vld [vmem:[%s128] sm:$0xff]
    %s1244 = sld [smem:[#allocation4 + $0xc2]]
    %v1245 = vstv %s1244
    %v1246 = vmul.f32 %v1243, %v1245
    %v1247 = vadd.f32 %v1242, %v1246
    %v1248 = vld [vmem:[%s141] sm:$0xff]
    %s1249 = sld [smem:[#allocation4 + $0xc3]]
    %v1250 = vstv %s1249
    %v1251 = vmul.f32 %v1248, %v1250
    %v1252 = vadd.f32 %v1247, %v1251
    %v1253 = vld [vmem:[%s154] sm:$0xff]
    %s1254 = sld [smem:[#allocation4 + $0xc4]]
    %v1255 = vstv %s1254
    %v1256 = vmul.f32 %v1253, %v1255
    %v1257 = vadd.f32 %v1252, %v1256
    %v1258 = vld [vmem:[%s167] sm:$0xff]
    %s1259 = sld [smem:[#allocation4 + $0xc5]]
    %v1260 = vstv %s1259
    %v1261 = vmul.f32 %v1258, %v1260
    %v1262 = vadd.f32 %v1257, %v1261
    %s1263 = sld [smem:[#allocation6 + $0x15]]
    %v1264 = vstv %s1263
    %v1265 = vadd.f32 %v1262, %v1264
    %v1266 = vmax.f32 %v1265, 0.0
    %v1267 = vpack.c.bf16 %v1266, %v1266
    %1268 = vst [vmem:[#allocation3 + $0x54] sm:$0xf] %v1267
    %v1269 = vld [vmem:[#allocation2] sm:$0xff]
    %s1270 = sld [smem:[#allocation4 + $0xc6]]
    %v1271 = vstv %s1270
    %v1272 = vmul.f32 %v1269, %v1271
    %v1273 = vld [vmem:[%s78] sm:$0xff]
    %s1274 = sld [smem:[#allocation4 + $0xc7]]
    %v1275 = vstv %s1274
    %v1276 = vmul.f32 %v1273, %v1275
    %v1277 = vadd.f32 %v1272, %v1276
    %v1278 = vld [vmem:[%s91] sm:$0xff]
    %s1279 = sld [smem:[#allocation4 + $0xc8]]
    %v1280 = vstv %s1279
    %v1281 = vmul.f32 %v1278, %v1280
    %v1282 = vadd.f32 %v1277, %v1281
    %v1283 = vld [vmem:[%s104] sm:$0xff]
    %s1284 = sld [smem:[#allocation4 + $0xc9]]
    %v1285 = vstv %s1284
    %v1286 = vmul.f32 %v1283, %v1285
    %v1287 = vadd.f32 %v1282, %v1286
    %v1288 = vld [vmem:[%s115] sm:$0xff]
    %s1289 = sld [smem:[#allocation4 + $0xca]]
    %v1290 = vstv %s1289
    %v1291 = vmul.f32 %v1288, %v1290
    %v1292 = vadd.f32 %v1287, %v1291
    %v1293 = vld [vmem:[%s128] sm:$0xff]
    %s1294 = sld [smem:[#allocation4 + $0xcb]]
    %v1295 = vstv %s1294
    %v1296 = vmul.f32 %v1293, %v1295
    %v1297 = vadd.f32 %v1292, %v1296
    %v1298 = vld [vmem:[%s141] sm:$0xff]
    %s1299 = sld [smem:[#allocation4 + $0xcc]]
    %v1300 = vstv %s1299
    %v1301 = vmul.f32 %v1298, %v1300
    %v1302 = vadd.f32 %v1297, %v1301
    %v1303 = vld [vmem:[%s154] sm:$0xff]
    %s1304 = sld [smem:[#allocation4 + $0xcd]]
    %v1305 = vstv %s1304
    %v1306 = vmul.f32 %v1303, %v1305
    %v1307 = vadd.f32 %v1302, %v1306
    %v1308 = vld [vmem:[%s167] sm:$0xff]
    %s1309 = sld [smem:[#allocation4 + $0xce]]
    %v1310 = vstv %s1309
    %v1311 = vmul.f32 %v1308, %v1310
    %v1312 = vadd.f32 %v1307, %v1311
    %s1313 = sld [smem:[#allocation6 + $0x16]]
    %v1314 = vstv %s1313
    %v1315 = vadd.f32 %v1312, %v1314
    %v1316 = vmax.f32 %v1315, 0.0
    %v1317 = vpack.c.bf16 %v1316, %v1316
    %1318 = vst [vmem:[#allocation3 + $0x58] sm:$0xf] %v1317
    %v1319 = vld [vmem:[#allocation2] sm:$0xff]
    %s1320 = sld [smem:[#allocation4 + $0xcf]]
    %v1321 = vstv %s1320
    %v1322 = vmul.f32 %v1319, %v1321
    %v1323 = vld [vmem:[%s78] sm:$0xff]
    %s1324 = sld [smem:[#allocation4 + $0xd0]]
    %v1325 = vstv %s1324
    %v1326 = vmul.f32 %v1323, %v1325
    %v1327 = vadd.f32 %v1322, %v1326
    %v1328 = vld [vmem:[%s91] sm:$0xff]
    %s1329 = sld [smem:[#allocation4 + $0xd1]]
    %v1330 = vstv %s1329
    %v1331 = vmul.f32 %v1328, %v1330
    %v1332 = vadd.f32 %v1327, %v1331
    %v1333 = vld [vmem:[%s104] sm:$0xff]
    %s1334 = sld [smem:[#allocation4 + $0xd2]]
    %v1335 = vstv %s1334
    %v1336 = vmul.f32 %v1333, %v1335
    %v1337 = vadd.f32 %v1332, %v1336
    %v1338 = vld [vmem:[%s115] sm:$0xff]
    %s1339 = sld [smem:[#allocation4 + $0xd3]]
    %v1340 = vstv %s1339
    %v1341 = vmul.f32 %v1338, %v1340
    %v1342 = vadd.f32 %v1337, %v1341
    %v1343 = vld [vmem:[%s128] sm:$0xff]
    %s1344 = sld [smem:[#allocation4 + $0xd4]]
    %v1345 = vstv %s1344
    %v1346 = vmul.f32 %v1343, %v1345
    %v1347 = vadd.f32 %v1342, %v1346
    %v1348 = vld [vmem:[%s141] sm:$0xff]
    %s1349 = sld [smem:[#allocation4 + $0xd5]]
    %v1350 = vstv %s1349
    %v1351 = vmul.f32 %v1348, %v1350
    %v1352 = vadd.f32 %v1347, %v1351
    %v1353 = vld [vmem:[%s154] sm:$0xff]
    %s1354 = sld [smem:[#allocation4 + $0xd6]]
    %v1355 = vstv %s1354
    %v1356 = vmul.f32 %v1353, %v1355
    %v1357 = vadd.f32 %v1352, %v1356
    %v1358 = vld [vmem:[%s167] sm:$0xff]
    %s1359 = sld [smem:[#allocation4 + $0xd7]]
    %v1360 = vstv %s1359
    %v1361 = vmul.f32 %v1358, %v1360
    %v1362 = vadd.f32 %v1357, %v1361
    %s1363 = sld [smem:[#allocation6 + $0x17]]
    %v1364 = vstv %s1363
    %v1365 = vadd.f32 %v1362, %v1364
    %v1366 = vmax.f32 %v1365, 0.0
    %v1367 = vpack.c.bf16 %v1366, %v1366
    %1368 = vst [vmem:[#allocation3 + $0x5c] sm:$0xf] %v1367
    %v1369 = vld [vmem:[#allocation2] sm:$0xff]
    %s1370 = sld [smem:[#allocation4 + $0xd8]]
    %v1371 = vstv %s1370
    %v1372 = vmul.f32 %v1369, %v1371
    %v1373 = vld [vmem:[%s78] sm:$0xff]
    %s1374 = sld [smem:[#allocation4 + $0xd9]]
    %v1375 = vstv %s1374
    %v1376 = vmul.f32 %v1373, %v1375
    %v1377 = vadd.f32 %v1372, %v1376
    %v1378 = vld [vmem:[%s91] sm:$0xff]
    %s1379 = sld [smem:[#allocation4 + $0xda]]
    %v1380 = vstv %s1379
    %v1381 = vmul.f32 %v1378, %v1380
    %v1382 = vadd.f32 %v1377, %v1381
    %v1383 = vld [vmem:[%s104] sm:$0xff]
    %s1384 = sld [smem:[#allocation4 + $0xdb]]
    %v1385 = vstv %s1384
    %v1386 = vmul.f32 %v1383, %v1385
    %v1387 = vadd.f32 %v1382, %v1386
    %v1388 = vld [vmem:[%s115] sm:$0xff]
    %s1389 = sld [smem:[#allocation4 + $0xdc]]
    %v1390 = vstv %s1389
    %v1391 = vmul.f32 %v1388, %v1390
    %v1392 = vadd.f32 %v1387, %v1391
    %v1393 = vld [vmem:[%s128] sm:$0xff]
    %s1394 = sld [smem:[#allocation4 + $0xdd]]
    %v1395 = vstv %s1394
    %v1396 = vmul.f32 %v1393, %v1395
    %v1397 = vadd.f32 %v1392, %v1396
    %v1398 = vld [vmem:[%s141] sm:$0xff]
    %s1399 = sld [smem:[#allocation4 + $0xde]]
    %v1400 = vstv %s1399
    %v1401 = vmul.f32 %v1398, %v1400
    %v1402 = vadd.f32 %v1397, %v1401
    %v1403 = vld [vmem:[%s154] sm:$0xff]
    %s1404 = sld [smem:[#allocation4 + $0xdf]]
    %v1405 = vstv %s1404
    %v1406 = vmul.f32 %v1403, %v1405
    %v1407 = vadd.f32 %v1402, %v1406
    %v1408 = vld [vmem:[%s167] sm:$0xff]
    %s1409 = sld [smem:[#allocation4 + $0xe0]]
    %v1410 = vstv %s1409
    %v1411 = vmul.f32 %v1408, %v1410
    %v1412 = vadd.f32 %v1407, %v1411
    %s1413 = sld [smem:[#allocation6 + $0x18]]
    %v1414 = vstv %s1413
    %v1415 = vadd.f32 %v1412, %v1414
    %v1416 = vmax.f32 %v1415, 0.0
    %v1417 = vpack.c.bf16 %v1416, %v1416
    %1418 = vst [vmem:[#allocation3 + $0x60] sm:$0xf] %v1417
    %v1419 = vld [vmem:[#allocation2] sm:$0xff]
    %s1420 = sld [smem:[#allocation4 + $0xe1]]
    %v1421 = vstv %s1420
    %v1422 = vmul.f32 %v1419, %v1421
    %v1423 = vld [vmem:[%s78] sm:$0xff]
    %s1424 = sld [smem:[#allocation4 + $0xe2]]
    %v1425 = vstv %s1424
    %v1426 = vmul.f32 %v1423, %v1425
    %v1427 = vadd.f32 %v1422, %v1426
    %v1428 = vld [vmem:[%s91] sm:$0xff]
    %s1429 = sld [smem:[#allocation4 + $0xe3]]
    %v1430 = vstv %s1429
    %v1431 = vmul.f32 %v1428, %v1430
    %v1432 = vadd.f32 %v1427, %v1431
    %v1433 = vld [vmem:[%s104] sm:$0xff]
    %s1434 = sld [smem:[#allocation4 + $0xe4]]
    %v1435 = vstv %s1434
    %v1436 = vmul.f32 %v1433, %v1435
    %v1437 = vadd.f32 %v1432, %v1436
    %v1438 = vld [vmem:[%s115] sm:$0xff]
    %s1439 = sld [smem:[#allocation4 + $0xe5]]
    %v1440 = vstv %s1439
    %v1441 = vmul.f32 %v1438, %v1440
    %v1442 = vadd.f32 %v1437, %v1441
    %v1443 = vld [vmem:[%s128] sm:$0xff]
    %s1444 = sld [smem:[#allocation4 + $0xe6]]
    %v1445 = vstv %s1444
    %v1446 = vmul.f32 %v1443, %v1445
    %v1447 = vadd.f32 %v1442, %v1446
    %v1448 = vld [vmem:[%s141] sm:$0xff]
    %s1449 = sld [smem:[#allocation4 + $0xe7]]
    %v1450 = vstv %s1449
    %v1451 = vmul.f32 %v1448, %v1450
    %v1452 = vadd.f32 %v1447, %v1451
    %v1453 = vld [vmem:[%s154] sm:$0xff]
    %s1454 = sld [smem:[#allocation4 + $0xe8]]
    %v1455 = vstv %s1454
    %v1456 = vmul.f32 %v1453, %v1455
    %v1457 = vadd.f32 %v1452, %v1456
    %v1458 = vld [vmem:[%s167] sm:$0xff]
    %s1459 = sld [smem:[#allocation4 + $0xe9]]
    %v1460 = vstv %s1459
    %v1461 = vmul.f32 %v1458, %v1460
    %v1462 = vadd.f32 %v1457, %v1461
    %s1463 = sld [smem:[#allocation6 + $0x19]]
    %v1464 = vstv %s1463
    %v1465 = vadd.f32 %v1462, %v1464
    %v1466 = vmax.f32 %v1465, 0.0
    %v1467 = vpack.c.bf16 %v1466, %v1466
    %1468 = vst [vmem:[#allocation3 + $0x64] sm:$0xf] %v1467
    %v1469 = vld [vmem:[#allocation2] sm:$0xff]
    %s1470 = sld [smem:[#allocation4 + $0xea]]
    %v1471 = vstv %s1470
    %v1472 = vmul.f32 %v1469, %v1471
    %v1473 = vld [vmem:[%s78] sm:$0xff]
    %s1474 = sld [smem:[#allocation4 + $0xeb]]
    %v1475 = vstv %s1474
    %v1476 = vmul.f32 %v1473, %v1475
    %v1477 = vadd.f32 %v1472, %v1476
    %v1478 = vld [vmem:[%s91] sm:$0xff]
    %s1479 = sld [smem:[#allocation4 + $0xec]]
    %v1480 = vstv %s1479
    %v1481 = vmul.f32 %v1478, %v1480
    %v1482 = vadd.f32 %v1477, %v1481
    %v1483 = vld [vmem:[%s104] sm:$0xff]
    %s1484 = sld [smem:[#allocation4 + $0xed]]
    %v1485 = vstv %s1484
    %v1486 = vmul.f32 %v1483, %v1485
    %v1487 = vadd.f32 %v1482, %v1486
    %v1488 = vld [vmem:[%s115] sm:$0xff]
    %s1489 = sld [smem:[#allocation4 + $0xee]]
    %v1490 = vstv %s1489
    %v1491 = vmul.f32 %v1488, %v1490
    %v1492 = vadd.f32 %v1487, %v1491
    %v1493 = vld [vmem:[%s128] sm:$0xff]
    %s1494 = sld [smem:[#allocation4 + $0xef]]
    %v1495 = vstv %s1494
    %v1496 = vmul.f32 %v1493, %v1495
    %v1497 = vadd.f32 %v1492, %v1496
    %v1498 = vld [vmem:[%s141] sm:$0xff]
    %s1499 = sld [smem:[#allocation4 + $0xf0]]
    %v1500 = vstv %s1499
    %v1501 = vmul.f32 %v1498, %v1500
    %v1502 = vadd.f32 %v1497, %v1501
    %v1503 = vld [vmem:[%s154] sm:$0xff]
    %s1504 = sld [smem:[#allocation4 + $0xf1]]
    %v1505 = vstv %s1504
    %v1506 = vmul.f32 %v1503, %v1505
    %v1507 = vadd.f32 %v1502, %v1506
    %v1508 = vld [vmem:[%s167] sm:$0xff]
    %s1509 = sld [smem:[#allocation4 + $0xf2]]
    %v1510 = vstv %s1509
    %v1511 = vmul.f32 %v1508, %v1510
    %v1512 = vadd.f32 %v1507, %v1511
    %s1513 = sld [smem:[#allocation6 + $0x1a]]
    %v1514 = vstv %s1513
    %v1515 = vadd.f32 %v1512, %v1514
    %v1516 = vmax.f32 %v1515, 0.0
    %v1517 = vpack.c.bf16 %v1516, %v1516
    %1518 = vst [vmem:[#allocation3 + $0x68] sm:$0xf] %v1517
    %v1519 = vld [vmem:[#allocation2] sm:$0xff]
    %s1520 = sld [smem:[#allocation4 + $0xf3]]
    %v1521 = vstv %s1520
    %v1522 = vmul.f32 %v1519, %v1521
    %v1523 = vld [vmem:[%s78] sm:$0xff]
    %s1524 = sld [smem:[#allocation4 + $0xf4]]
    %v1525 = vstv %s1524
    %v1526 = vmul.f32 %v1523, %v1525
    %v1527 = vadd.f32 %v1522, %v1526
    %v1528 = vld [vmem:[%s91] sm:$0xff]
    %s1529 = sld [smem:[#allocation4 + $0xf5]]
    %v1530 = vstv %s1529
    %v1531 = vmul.f32 %v1528, %v1530
    %v1532 = vadd.f32 %v1527, %v1531
    %v1533 = vld [vmem:[%s104] sm:$0xff]
    %s1534 = sld [smem:[#allocation4 + $0xf6]]
    %v1535 = vstv %s1534
    %v1536 = vmul.f32 %v1533, %v1535
    %v1537 = vadd.f32 %v1532, %v1536
    %v1538 = vld [vmem:[%s115] sm:$0xff]
    %s1539 = sld [smem:[#allocation4 + $0xf7]]
    %v1540 = vstv %s1539
    %v1541 = vmul.f32 %v1538, %v1540
    %v1542 = vadd.f32 %v1537, %v1541
    %v1543 = vld [vmem:[%s128] sm:$0xff]
    %s1544 = sld [smem:[#allocation4 + $0xf8]]
    %v1545 = vstv %s1544
    %v1546 = vmul.f32 %v1543, %v1545
    %v1547 = vadd.f32 %v1542, %v1546
    %v1548 = vld [vmem:[%s141] sm:$0xff]
    %s1549 = sld [smem:[#allocation4 + $0xf9]]
    %v1550 = vstv %s1549
    %v1551 = vmul.f32 %v1548, %v1550
    %v1552 = vadd.f32 %v1547, %v1551
    %v1553 = vld [vmem:[%s154] sm:$0xff]
    %s1554 = sld [smem:[#allocation4 + $0xfa]]
    %v1555 = vstv %s1554
    %v1556 = vmul.f32 %v1553, %v1555
    %v1557 = vadd.f32 %v1552, %v1556
    %v1558 = vld [vmem:[%s167] sm:$0xff]
    %s1559 = sld [smem:[#allocation4 + $0xfb]]
    %v1560 = vstv %s1559
    %v1561 = vmul.f32 %v1558, %v1560
    %v1562 = vadd.f32 %v1557, %v1561
    %s1563 = sld [smem:[#allocation6 + $0x1b]]
    %v1564 = vstv %s1563
    %v1565 = vadd.f32 %v1562, %v1564
    %v1566 = vmax.f32 %v1565, 0.0
    %v1567 = vpack.c.bf16 %v1566, %v1566
    %1568 = vst [vmem:[#allocation3 + $0x6c] sm:$0xf] %v1567
    %v1569 = vld [vmem:[#allocation2] sm:$0xff]
    %s1570 = sld [smem:[#allocation4 + $0xfc]]
    %v1571 = vstv %s1570
    %v1572 = vmul.f32 %v1569, %v1571
    %v1573 = vld [vmem:[%s78] sm:$0xff]
    %s1574 = sld [smem:[#allocation4 + $0xfd]]
    %v1575 = vstv %s1574
    %v1576 = vmul.f32 %v1573, %v1575
    %v1577 = vadd.f32 %v1572, %v1576
    %v1578 = vld [vmem:[%s91] sm:$0xff]
    %s1579 = sld [smem:[#allocation4 + $0xfe]]
    %v1580 = vstv %s1579
    %v1581 = vmul.f32 %v1578, %v1580
    %v1582 = vadd.f32 %v1577, %v1581
    %v1583 = vld [vmem:[%s104] sm:$0xff]
    %s1584 = sld [smem:[#allocation4 + $0xff]]
    %v1585 = vstv %s1584
    %v1586 = vmul.f32 %v1583, %v1585
    %v1587 = vadd.f32 %v1582, %v1586
    %v1588 = vld [vmem:[%s115] sm:$0xff]
    %s1589 = sld [smem:[#allocation4 + $0x100]]
    %v1590 = vstv %s1589
    %v1591 = vmul.f32 %v1588, %v1590
    %v1592 = vadd.f32 %v1587, %v1591
    %v1593 = vld [vmem:[%s128] sm:$0xff]
    %s1594 = sld [smem:[#allocation4 + $0x101]]
    %v1595 = vstv %s1594
    %v1596 = vmul.f32 %v1593, %v1595
    %v1597 = vadd.f32 %v1592, %v1596
    %v1598 = vld [vmem:[%s141] sm:$0xff]
    %s1599 = sld [smem:[#allocation4 + $0x102]]
    %v1600 = vstv %s1599
    %v1601 = vmul.f32 %v1598, %v1600
    %v1602 = vadd.f32 %v1597, %v1601
    %v1603 = vld [vmem:[%s154] sm:$0xff]
    %s1604 = sld [smem:[#allocation4 + $0x103]]
    %v1605 = vstv %s1604
    %v1606 = vmul.f32 %v1603, %v1605
    %v1607 = vadd.f32 %v1602, %v1606
    %v1608 = vld [vmem:[%s167] sm:$0xff]
    %s1609 = sld [smem:[#allocation4 + $0x104]]
    %v1610 = vstv %s1609
    %v1611 = vmul.f32 %v1608, %v1610
    %v1612 = vadd.f32 %v1607, %v1611
    %s1613 = sld [smem:[#allocation6 + $0x1c]]
    %v1614 = vstv %s1613
    %v1615 = vadd.f32 %v1612, %v1614
    %v1616 = vmax.f32 %v1615, 0.0
    %v1617 = vpack.c.bf16 %v1616, %v1616
    %1618 = vst [vmem:[#allocation3 + $0x70] sm:$0xf] %v1617
    %v1619 = vld [vmem:[#allocation2] sm:$0xff]
    %s1620 = sld [smem:[#allocation4 + $0x105]]
    %v1621 = vstv %s1620
    %v1622 = vmul.f32 %v1619, %v1621
    %v1623 = vld [vmem:[%s78] sm:$0xff]
    %s1624 = sld [smem:[#allocation4 + $0x106]]
    %v1625 = vstv %s1624
    %v1626 = vmul.f32 %v1623, %v1625
    %v1627 = vadd.f32 %v1622, %v1626
    %v1628 = vld [vmem:[%s91] sm:$0xff]
    %s1629 = sld [smem:[#allocation4 + $0x107]]
    %v1630 = vstv %s1629
    %v1631 = vmul.f32 %v1628, %v1630
    %v1632 = vadd.f32 %v1627, %v1631
    %v1633 = vld [vmem:[%s104] sm:$0xff]
    %s1634 = sld [smem:[#allocation4 + $0x108]]
    %v1635 = vstv %s1634
    %v1636 = vmul.f32 %v1633, %v1635
    %v1637 = vadd.f32 %v1632, %v1636
    %v1638 = vld [vmem:[%s115] sm:$0xff]
    %s1639 = sld [smem:[#allocation4 + $0x109]]
    %v1640 = vstv %s1639
    %v1641 = vmul.f32 %v1638, %v1640
    %v1642 = vadd.f32 %v1637, %v1641
    %v1643 = vld [vmem:[%s128] sm:$0xff]
    %s1644 = sld [smem:[#allocation4 + $0x10a]]
    %v1645 = vstv %s1644
    %v1646 = vmul.f32 %v1643, %v1645
    %v1647 = vadd.f32 %v1642, %v1646
    %v1648 = vld [vmem:[%s141] sm:$0xff]
    %s1649 = sld [smem:[#allocation4 + $0x10b]]
    %v1650 = vstv %s1649
    %v1651 = vmul.f32 %v1648, %v1650
    %v1652 = vadd.f32 %v1647, %v1651
    %v1653 = vld [vmem:[%s154] sm:$0xff]
    %s1654 = sld [smem:[#allocation4 + $0x10c]]
    %v1655 = vstv %s1654
    %v1656 = vmul.f32 %v1653, %v1655
    %v1657 = vadd.f32 %v1652, %v1656
    %v1658 = vld [vmem:[%s167] sm:$0xff]
    %s1659 = sld [smem:[#allocation4 + $0x10d]]
    %v1660 = vstv %s1659
    %v1661 = vmul.f32 %v1658, %v1660
    %v1662 = vadd.f32 %v1657, %v1661
    %s1663 = sld [smem:[#allocation6 + $0x1d]]
    %v1664 = vstv %s1663
    %v1665 = vadd.f32 %v1662, %v1664
    %v1666 = vmax.f32 %v1665, 0.0
    %v1667 = vpack.c.bf16 %v1666, %v1666
    %1668 = vst [vmem:[#allocation3 + $0x74] sm:$0xf] %v1667
    %v1669 = vld [vmem:[#allocation2] sm:$0xff]
    %s1670 = sld [smem:[#allocation4 + $0x10e]]
    %v1671 = vstv %s1670
    %v1672 = vmul.f32 %v1669, %v1671
    %v1673 = vld [vmem:[%s78] sm:$0xff]
    %s1674 = sld [smem:[#allocation4 + $0x10f]]
    %v1675 = vstv %s1674
    %v1676 = vmul.f32 %v1673, %v1675
    %v1677 = vadd.f32 %v1672, %v1676
    %v1678 = vld [vmem:[%s91] sm:$0xff]
    %s1679 = sld [smem:[#allocation4 + $0x110]]
    %v1680 = vstv %s1679
    %v1681 = vmul.f32 %v1678, %v1680
    %v1682 = vadd.f32 %v1677, %v1681
    %v1683 = vld [vmem:[%s104] sm:$0xff]
    %s1684 = sld [smem:[#allocation4 + $0x111]]
    %v1685 = vstv %s1684
    %v1686 = vmul.f32 %v1683, %v1685
    %v1687 = vadd.f32 %v1682, %v1686
    %v1688 = vld [vmem:[%s115] sm:$0xff]
    %s1689 = sld [smem:[#allocation4 + $0x112]]
    %v1690 = vstv %s1689
    %v1691 = vmul.f32 %v1688, %v1690
    %v1692 = vadd.f32 %v1687, %v1691
    %v1693 = vld [vmem:[%s128] sm:$0xff]
    %s1694 = sld [smem:[#allocation4 + $0x113]]
    %v1695 = vstv %s1694
    %v1696 = vmul.f32 %v1693, %v1695
    %v1697 = vadd.f32 %v1692, %v1696
    %v1698 = vld [vmem:[%s141] sm:$0xff]
    %s1699 = sld [smem:[#allocation4 + $0x114]]
    %v1700 = vstv %s1699
    %v1701 = vmul.f32 %v1698, %v1700
    %v1702 = vadd.f32 %v1697, %v1701
    %v1703 = vld [vmem:[%s154] sm:$0xff]
    %s1704 = sld [smem:[#allocation4 + $0x115]]
    %v1705 = vstv %s1704
    %v1706 = vmul.f32 %v1703, %v1705
    %v1707 = vadd.f32 %v1702, %v1706
    %v1708 = vld [vmem:[%s167] sm:$0xff]
    %s1709 = sld [smem:[#allocation4 + $0x116]]
    %v1710 = vstv %s1709
    %v1711 = vmul.f32 %v1708, %v1710
    %v1712 = vadd.f32 %v1707, %v1711
    %s1713 = sld [smem:[#allocation6 + $0x1e]]
    %v1714 = vstv %s1713
    %v1715 = vadd.f32 %v1712, %v1714
    %v1716 = vmax.f32 %v1715, 0.0
    %v1717 = vpack.c.bf16 %v1716, %v1716
    %1718 = vst [vmem:[#allocation3 + $0x78] sm:$0xf] %v1717
    %v1719 = vld [vmem:[#allocation2] sm:$0xff]
    %s1720 = sld [smem:[#allocation4 + $0x117]]
    %v1721 = vstv %s1720
    %v1722 = vmul.f32 %v1719, %v1721
    %v1723 = vld [vmem:[%s78] sm:$0xff]
    %s1724 = sld [smem:[#allocation4 + $0x118]]
    %v1725 = vstv %s1724
    %v1726 = vmul.f32 %v1723, %v1725
    %v1727 = vadd.f32 %v1722, %v1726
    %v1728 = vld [vmem:[%s91] sm:$0xff]
    %s1729 = sld [smem:[#allocation4 + $0x119]]
    %v1730 = vstv %s1729
    %v1731 = vmul.f32 %v1728, %v1730
    %v1732 = vadd.f32 %v1727, %v1731
    %v1733 = vld [vmem:[%s104] sm:$0xff]
    %s1734 = sld [smem:[#allocation4 + $0x11a]]
    %v1735 = vstv %s1734
    %v1736 = vmul.f32 %v1733, %v1735
    %v1737 = vadd.f32 %v1732, %v1736
    %v1738 = vld [vmem:[%s115] sm:$0xff]
    %s1739 = sld [smem:[#allocation4 + $0x11b]]
    %v1740 = vstv %s1739
    %v1741 = vmul.f32 %v1738, %v1740
    %v1742 = vadd.f32 %v1737, %v1741
    %v1743 = vld [vmem:[%s128] sm:$0xff]
    %s1744 = sld [smem:[#allocation4 + $0x11c]]
    %v1745 = vstv %s1744
    %v1746 = vmul.f32 %v1743, %v1745
    %v1747 = vadd.f32 %v1742, %v1746
    %v1748 = vld [vmem:[%s141] sm:$0xff]
    %s1749 = sld [smem:[#allocation4 + $0x11d]]
    %v1750 = vstv %s1749
    %v1751 = vmul.f32 %v1748, %v1750
    %v1752 = vadd.f32 %v1747, %v1751
    %v1753 = vld [vmem:[%s154] sm:$0xff]
    %s1754 = sld [smem:[#allocation4 + $0x11e]]
    %v1755 = vstv %s1754
    %v1756 = vmul.f32 %v1753, %v1755
    %v1757 = vadd.f32 %v1752, %v1756
    %v1758 = vld [vmem:[%s167] sm:$0xff]
    %s1759 = sld [smem:[#allocation4 + $0x11f]]
    %v1760 = vstv %s1759
    %v1761 = vmul.f32 %v1758, %v1760
    %v1762 = vadd.f32 %v1757, %v1761
    %s1763 = sld [smem:[#allocation6 + $0x1f]]
    %v1764 = vstv %s1763
    %v1765 = vadd.f32 %v1762, %v1764
    %v1766 = vmax.f32 %v1765, 0.0
    %v1767 = vpack.c.bf16 %v1766, %v1766
    %1768 = vst [vmem:[#allocation3 + $0x7c] sm:$0xf] %v1767
    %v1769 = vld [vmem:[#allocation3] sm:$0xff]
    %v1770 = vld [vmem:[#allocation3 + $0x8] sm:$0xff]
    %v1771 = vld [vmem:[#allocation3 + $0x10] sm:$0xff]
    %v1772 = vld [vmem:[#allocation3 + $0x18] sm:$0xff]
    %v1773 = vld [vmem:[#allocation3 + $0x20] sm:$0xff]
    %v1774 = vld [vmem:[#allocation3 + $0x28] sm:$0xff]
    %v1775 = vld [vmem:[#allocation3 + $0x30] sm:$0xff]
    %v1776 = vld [vmem:[#allocation3 + $0x38] sm:$0xff]
    %v1777 = vld [vmem:[#allocation3 + $0x40] sm:$0xff]
    %v1778 = vld [vmem:[#allocation3 + $0x48] sm:$0xff]
    %v1779 = vld [vmem:[#allocation3 + $0x50] sm:$0xff]
    %v1780 = vld [vmem:[#allocation3 + $0x58] sm:$0xff]
    %v1781 = vld [vmem:[#allocation3 + $0x60] sm:$0xff]
    %v1782 = vld [vmem:[#allocation3 + $0x68] sm:$0xff]
    %v1783 = vld [vmem:[#allocation3 + $0x70] sm:$0xff]
    %v1784 = vld [vmem:[#allocation3 + $0x78] sm:$0xff]
    %v1785 = vld [vmem:[%s4] sm:$0xf]
    %v1786 = vld [vmem:[%s4 + $0x4] sm:$0xf]
    %v1787 = vld [vmem:[%s4 + $0x8] sm:$0xf]
    %v1788 = vld [vmem:[%s4 + $0xc] sm:$0xf]
    %v1789 = vld [vmem:[%s4 + $0x10] sm:$0xf]
    %v1790 = vld [vmem:[%s4 + $0x14] sm:$0xf]
    %v1791 = vld [vmem:[%s4 + $0x18] sm:$0xf]
    %v1792 = vld [vmem:[%s4 + $0x1c] sm:$0xf]
    %v1793 = vld [vmem:[%s4 + $0x20] sm:$0xf]
    %v1794 = vld [vmem:[%s4 + $0x24] sm:$0xf]
    %v1795 = vld [vmem:[%s4 + $0x28] sm:$0xf]
    %v1796 = vld [vmem:[%s4 + $0x2c] sm:$0xf]
    %v1797 = vld [vmem:[%s4 + $0x30] sm:$0xf]
    %v1798 = vld [vmem:[%s4 + $0x34] sm:$0xf]
    %v1799 = vld [vmem:[%s4 + $0x38] sm:$0xf]
    %v1800 = vld [vmem:[%s4 + $0x3c] sm:$0xf]
    %v1801 = vld [vmem:[%s4 + $0x40] sm:$0xf]
    %v1802 = vld [vmem:[%s4 + $0x44] sm:$0xf]
    %v1803 = vld [vmem:[%s4 + $0x48] sm:$0xf]
    %v1804 = vld [vmem:[%s4 + $0x4c] sm:$0xf]
    %v1805 = vld [vmem:[%s4 + $0x50] sm:$0xf]
    %v1806 = vld [vmem:[%s4 + $0x54] sm:$0xf]
    %v1807 = vld [vmem:[%s4 + $0x58] sm:$0xf]
    %v1808 = vld [vmem:[%s4 + $0x5c] sm:$0xf]
    %v1809 = vld [vmem:[%s4 + $0x60] sm:$0xf]
    %v1810 = vld [vmem:[%s4 + $0x64] sm:$0xf]
    %v1811 = vld [vmem:[%s4 + $0x68] sm:$0xf]
    %v1812 = vld [vmem:[%s4 + $0x6c] sm:$0xf]
    %v1813 = vld [vmem:[%s4 + $0x70] sm:$0xf]
    %v1814 = vld [vmem:[%s4 + $0x74] sm:$0xf]
    %v1815 = vld [vmem:[%s4 + $0x78] sm:$0xf]
    %v1816 = vld [vmem:[%s4 + $0x7c] sm:$0xf]
    %v1817 = vld [vmem:[%s4 + $0x80] sm:$0xf]
    %v1818 = vld [vmem:[%s4 + $0x84] sm:$0xf]
    %v1819 = vld [vmem:[%s4 + $0x88] sm:$0xf]
    %v1820 = vld [vmem:[%s4 + $0x8c] sm:$0xf]
    %v1821 = vld [vmem:[%s4 + $0x90] sm:$0xf]
    %v1822 = vld [vmem:[%s4 + $0x94] sm:$0xf]
    %v1823 = vld [vmem:[%s4 + $0x98] sm:$0xf]
    %v1824 = vld [vmem:[%s4 + $0x9c] sm:$0xf]
    %v1825 = vld [vmem:[%s4 + $0xa0] sm:$0xf]
    %v1826 = vld [vmem:[%s4 + $0xa4] sm:$0xf]
    %v1827 = vld [vmem:[%s4 + $0xa8] sm:$0xf]
    %v1828 = vld [vmem:[%s4 + $0xac] sm:$0xf]
    %v1829 = vld [vmem:[%s4 + $0xb0] sm:$0xf]
    %v1830 = vld [vmem:[%s4 + $0xb4] sm:$0xf]
    %v1831 = vld [vmem:[%s4 + $0xb8] sm:$0xf]
    %v1832 = vld [vmem:[%s4 + $0xbc] sm:$0xf]
    %v1833 = vld [vmem:[%s4 + $0xc0] sm:$0xf]
    %v1834 = vld [vmem:[%s4 + $0xc4] sm:$0xf]
    %v1835 = vld [vmem:[%s4 + $0xc8] sm:$0xf]
    %v1836 = vld [vmem:[%s4 + $0xcc] sm:$0xf]
    %v1837 = vld [vmem:[%s4 + $0xd0] sm:$0xf]
    %v1838 = vld [vmem:[%s4 + $0xd4] sm:$0xf]
    %v1839 = vld [vmem:[%s4 + $0xd8] sm:$0xf]
    %v1840 = vld [vmem:[%s4 + $0xdc] sm:$0xf]
    %v1841 = vld [vmem:[%s4 + $0xe0] sm:$0xf]
    %v1842 = vld [vmem:[%s4 + $0xe4] sm:$0xf]
    %v1843 = vld [vmem:[%s4 + $0xe8] sm:$0xf]
    %v1844 = vld [vmem:[%s4 + $0xec] sm:$0xf]
    %v1845 = vld [vmem:[%s4 + $0xf0] sm:$0xf]
    %v1846 = vld [vmem:[%s4 + $0xf4] sm:$0xf]
    %v1847 = vld [vmem:[%s4 + $0xf8] sm:$0xf]
    %v1848 = vld [vmem:[%s4 + $0xfc] sm:$0xf]
    %v1849 = vld [vmem:[%s4 + $0x100] sm:$0xf]
    %v1850 = vld [vmem:[%s4 + $0x104] sm:$0xf]
    %v1851 = vld [vmem:[%s4 + $0x108] sm:$0xf]
    %v1852 = vld [vmem:[%s4 + $0x10c] sm:$0xf]
    %v1853 = vld [vmem:[%s4 + $0x110] sm:$0xf]
    %v1854 = vld [vmem:[%s4 + $0x114] sm:$0xf]
    %v1855 = vld [vmem:[%s4 + $0x118] sm:$0xf]
    %v1856 = vld [vmem:[%s4 + $0x11c] sm:$0xf]
    %v1857 = vld [vmem:[%s4 + $0x120] sm:$0xf]
    %v1858 = vld [vmem:[%s4 + $0x124] sm:$0xf]
    %v1859 = vld [vmem:[%s4 + $0x128] sm:$0xf]
    %v1860 = vld [vmem:[%s4 + $0x12c] sm:$0xf]
    %v1861 = vld [vmem:[%s4 + $0x130] sm:$0xf]
    %v1862 = vld [vmem:[%s4 + $0x134] sm:$0xf]
    %v1863 = vld [vmem:[%s4 + $0x138] sm:$0xf]
    %v1864 = vld [vmem:[%s4 + $0x13c] sm:$0xf]
    %v1865 = vld [vmem:[%s4 + $0x140] sm:$0xf]
    %v1866 = vld [vmem:[%s4 + $0x144] sm:$0xf]
    %v1867 = vld [vmem:[%s4 + $0x148] sm:$0xf]
    %v1868 = vld [vmem:[%s4 + $0x14c] sm:$0xf]
    %v1869 = vld [vmem:[%s4 + $0x150] sm:$0xf]
    %v1870 = vld [vmem:[%s4 + $0x154] sm:$0xf]
    %v1871 = vld [vmem:[%s4 + $0x158] sm:$0xf]
    %v1872 = vld [vmem:[%s4 + $0x15c] sm:$0xf]
    %v1873 = vld [vmem:[%s4 + $0x160] sm:$0xf]
    %v1874 = vld [vmem:[%s4 + $0x164] sm:$0xf]
    %v1875 = vld [vmem:[%s4 + $0x168] sm:$0xf]
    %v1876 = vld [vmem:[%s4 + $0x16c] sm:$0xf]
    %v1877 = vld [vmem:[%s4 + $0x170] sm:$0xf]
    %v1878 = vld [vmem:[%s4 + $0x174] sm:$0xf]
    %v1879 = vld [vmem:[%s4 + $0x178] sm:$0xf]
    %v1880 = vld [vmem:[%s4 + $0x17c] sm:$0xf]
    %v1881 = vld [vmem:[%s4 + $0x180] sm:$0xf]
    %v1882 = vld [vmem:[%s4 + $0x184] sm:$0xf]
    %v1883 = vld [vmem:[%s4 + $0x188] sm:$0xf]
    %v1884 = vld [vmem:[%s4 + $0x18c] sm:$0xf]
    %v1885 = vld [vmem:[%s4 + $0x190] sm:$0xf]
    %v1886 = vld [vmem:[%s4 + $0x194] sm:$0xf]
    %v1887 = vld [vmem:[%s4 + $0x198] sm:$0xf]
    %v1888 = vld [vmem:[%s4 + $0x19c] sm:$0xf]
    %v1889 = vld [vmem:[%s4 + $0x1a0] sm:$0xf]
    %v1890 = vld [vmem:[%s4 + $0x1a4] sm:$0xf]
    %v1891 = vld [vmem:[%s4 + $0x1a8] sm:$0xf]
    %v1892 = vld [vmem:[%s4 + $0x1ac] sm:$0xf]
    %v1893 = vld [vmem:[%s4 + $0x1b0] sm:$0xf]
    %v1894 = vld [vmem:[%s4 + $0x1b4] sm:$0xf]
    %v1895 = vld [vmem:[%s4 + $0x1b8] sm:$0xf]
    %v1896 = vld [vmem:[%s4 + $0x1bc] sm:$0xf]
    %v1897 = vld [vmem:[%s4 + $0x1c0] sm:$0xf]
    %v1898 = vld [vmem:[%s4 + $0x1c4] sm:$0xf]
    %v1899 = vld [vmem:[%s4 + $0x1c8] sm:$0xf]
    %v1900 = vld [vmem:[%s4 + $0x1cc] sm:$0xf]
    %v1901 = vld [vmem:[%s4 + $0x1d0] sm:$0xf]
    %v1902 = vld [vmem:[%s4 + $0x1d4] sm:$0xf]
    %v1903 = vld [vmem:[%s4 + $0x1d8] sm:$0xf]
    %v1904 = vld [vmem:[%s4 + $0x1dc] sm:$0xf]
    %v1905 = vld [vmem:[%s4 + $0x1e0] sm:$0xf]
    %v1906 = vld [vmem:[%s4 + $0x1e4] sm:$0xf]
    %v1907 = vld [vmem:[%s4 + $0x1e8] sm:$0xf]
    %v1908 = vld [vmem:[%s4 + $0x1ec] sm:$0xf]
    %v1909 = vld [vmem:[%s4 + $0x1f0] sm:$0xf]
    %v1910 = vld [vmem:[%s4 + $0x1f4] sm:$0xf]
    %v1911 = vld [vmem:[%s4 + $0x1f8] sm:$0xf]
    %v1912 = vld [vmem:[%s4 + $0x1fc] sm:$0xf]
    %v1913 = vld [vmem:[%s4 + $0x200] sm:$0xf]
    %v1914 = vld [vmem:[%s4 + $0x204] sm:$0xf]
    %v1915 = vld [vmem:[%s4 + $0x208] sm:$0xf]
    %v1916 = vld [vmem:[%s4 + $0x20c] sm:$0xf]
    %v1917 = vld [vmem:[%s4 + $0x210] sm:$0xf]
    %v1918 = vld [vmem:[%s4 + $0x214] sm:$0xf]
    %v1919 = vld [vmem:[%s4 + $0x218] sm:$0xf]
    %v1920 = vld [vmem:[%s4 + $0x21c] sm:$0xf]
    %v1921 = vld [vmem:[%s4 + $0x220] sm:$0xf]
    %v1922 = vld [vmem:[%s4 + $0x224] sm:$0xf]
    %v1923 = vld [vmem:[%s4 + $0x228] sm:$0xf]
    %v1924 = vld [vmem:[%s4 + $0x22c] sm:$0xf]
    %v1925 = vld [vmem:[%s4 + $0x230] sm:$0xf]
    %v1926 = vld [vmem:[%s4 + $0x234] sm:$0xf]
    %v1927 = vld [vmem:[%s4 + $0x238] sm:$0xf]
    %v1928 = vld [vmem:[%s4 + $0x23c] sm:$0xf]
    %v1929 = vld [vmem:[%s4 + $0x240] sm:$0xf]
    %v1930 = vld [vmem:[%s4 + $0x244] sm:$0xf]
    %v1931 = vld [vmem:[%s4 + $0x248] sm:$0xf]
    %v1932 = vld [vmem:[%s4 + $0x24c] sm:$0xf]
    %v1933 = vld [vmem:[%s4 + $0x250] sm:$0xf]
    %v1934 = vld [vmem:[%s4 + $0x254] sm:$0xf]
    %v1935 = vld [vmem:[%s4 + $0x258] sm:$0xf]
    %v1936 = vld [vmem:[%s4 + $0x25c] sm:$0xf]
    %v1937 = vld [vmem:[%s4 + $0x260] sm:$0xf]
    %v1938 = vld [vmem:[%s4 + $0x264] sm:$0xf]
    %v1939 = vld [vmem:[%s4 + $0x268] sm:$0xf]
    %v1940 = vld [vmem:[%s4 + $0x26c] sm:$0xf]
    %v1941 = vld [vmem:[%s4 + $0x270] sm:$0xf]
    %v1942 = vld [vmem:[%s4 + $0x274] sm:$0xf]
    %v1943 = vld [vmem:[%s4 + $0x278] sm:$0xf]
    %v1944 = vld [vmem:[%s4 + $0x27c] sm:$0xf]
    %v1945 = vld [vmem:[%s4 + $0x280] sm:$0xf]
    %v1946 = vld [vmem:[%s4 + $0x284] sm:$0xf]
    %v1947 = vld [vmem:[%s4 + $0x288] sm:$0xf]
    %v1948 = vld [vmem:[%s4 + $0x28c] sm:$0xf]
    %v1949 = vld [vmem:[%s4 + $0x290] sm:$0xf]
    %v1950 = vld [vmem:[%s4 + $0x294] sm:$0xf]
    %v1951 = vld [vmem:[%s4 + $0x298] sm:$0xf]
    %v1952 = vld [vmem:[%s4 + $0x29c] sm:$0xf]
    %v1953 = vld [vmem:[%s4 + $0x2a0] sm:$0xf]
    %v1954 = vld [vmem:[%s4 + $0x2a4] sm:$0xf]
    %v1955 = vld [vmem:[%s4 + $0x2a8] sm:$0xf]
    %v1956 = vld [vmem:[%s4 + $0x2ac] sm:$0xf]
    %v1957 = vld [vmem:[%s4 + $0x2b0] sm:$0xf]
    %v1958 = vld [vmem:[%s4 + $0x2b4] sm:$0xf]
    %v1959 = vld [vmem:[%s4 + $0x2b8] sm:$0xf]
    %v1960 = vld [vmem:[%s4 + $0x2bc] sm:$0xf]
    %v1961 = vld [vmem:[%s4 + $0x2c0] sm:$0xf]
    %v1962 = vld [vmem:[%s4 + $0x2c4] sm:$0xf]
    %v1963 = vld [vmem:[%s4 + $0x2c8] sm:$0xf]
    %v1964 = vld [vmem:[%s4 + $0x2cc] sm:$0xf]
    %v1965 = vld [vmem:[%s4 + $0x2d0] sm:$0xf]
    %v1966 = vld [vmem:[%s4 + $0x2d4] sm:$0xf]
    %v1967 = vld [vmem:[%s4 + $0x2d8] sm:$0xf]
    %v1968 = vld [vmem:[%s4 + $0x2dc] sm:$0xf]
    %v1969 = vld [vmem:[%s4 + $0x2e0] sm:$0xf]
    %v1970 = vld [vmem:[%s4 + $0x2e4] sm:$0xf]
    %v1971 = vld [vmem:[%s4 + $0x2e8] sm:$0xf]
    %v1972 = vld [vmem:[%s4 + $0x2ec] sm:$0xf]
    %v1973 = vld [vmem:[%s4 + $0x2f0] sm:$0xf]
    %v1974 = vld [vmem:[%s4 + $0x2f4] sm:$0xf]
    %v1975 = vld [vmem:[%s4 + $0x2f8] sm:$0xf]
    %v1976 = vld [vmem:[%s4 + $0x2fc] sm:$0xf]
    %v1977 = vld [vmem:[%s4 + $0x300] sm:$0xf]
    %v1978 = vld [vmem:[%s4 + $0x304] sm:$0xf]
    %v1979 = vld [vmem:[%s4 + $0x308] sm:$0xf]
    %v1980 = vld [vmem:[%s4 + $0x30c] sm:$0xf]
    %v1981 = vld [vmem:[%s4 + $0x310] sm:$0xf]
    %v1982 = vld [vmem:[%s4 + $0x314] sm:$0xf]
    %v1983 = vld [vmem:[%s4 + $0x318] sm:$0xf]
    %v1984 = vld [vmem:[%s4 + $0x31c] sm:$0xf]
    %v1985 = vld [vmem:[%s4 + $0x320] sm:$0xf]
    %v1986 = vld [vmem:[%s4 + $0x324] sm:$0xf]
    %v1987 = vld [vmem:[%s4 + $0x328] sm:$0xf]
    %v1988 = vld [vmem:[%s4 + $0x32c] sm:$0xf]
    %v1989 = vld [vmem:[%s4 + $0x330] sm:$0xf]
    %v1990 = vld [vmem:[%s4 + $0x334] sm:$0xf]
    %v1991 = vld [vmem:[%s4 + $0x338] sm:$0xf]
    %v1992 = vld [vmem:[%s4 + $0x33c] sm:$0xf]
    %v1993 = vld [vmem:[%s4 + $0x340] sm:$0xf]
    %v1994 = vld [vmem:[%s4 + $0x344] sm:$0xf]
    %v1995 = vld [vmem:[%s4 + $0x348] sm:$0xf]
    %v1996 = vld [vmem:[%s4 + $0x34c] sm:$0xf]
    %v1997 = vld [vmem:[%s4 + $0x350] sm:$0xf]
    %v1998 = vld [vmem:[%s4 + $0x354] sm:$0xf]
    %v1999 = vld [vmem:[%s4 + $0x358] sm:$0xf]
    %v2000 = vld [vmem:[%s4 + $0x35c] sm:$0xf]
    %v2001 = vld [vmem:[%s4 + $0x360] sm:$0xf]
    %v2002 = vld [vmem:[%s4 + $0x364] sm:$0xf]
    %v2003 = vld [vmem:[%s4 + $0x368] sm:$0xf]
    %v2004 = vld [vmem:[%s4 + $0x36c] sm:$0xf]
    %v2005 = vld [vmem:[%s4 + $0x370] sm:$0xf]
    %v2006 = vld [vmem:[%s4 + $0x374] sm:$0xf]
    %v2007 = vld [vmem:[%s4 + $0x378] sm:$0xf]
    %v2008 = vld [vmem:[%s4 + $0x37c] sm:$0xf]
    %v2009 = vld [vmem:[%s4 + $0x380] sm:$0xf]
    %v2010 = vld [vmem:[%s4 + $0x384] sm:$0xf]
    %v2011 = vld [vmem:[%s4 + $0x388] sm:$0xf]
    %v2012 = vld [vmem:[%s4 + $0x38c] sm:$0xf]
    %v2013 = vld [vmem:[%s4 + $0x390] sm:$0xf]
    %v2014 = vld [vmem:[%s4 + $0x394] sm:$0xf]
    %v2015 = vld [vmem:[%s4 + $0x398] sm:$0xf]
    %v2016 = vld [vmem:[%s4 + $0x39c] sm:$0xf]
    %v2017 = vld [vmem:[%s4 + $0x3a0] sm:$0xf]
    %v2018 = vld [vmem:[%s4 + $0x3a4] sm:$0xf]
    %v2019 = vld [vmem:[%s4 + $0x3a8] sm:$0xf]
    %v2020 = vld [vmem:[%s4 + $0x3ac] sm:$0xf]
    %v2021 = vld [vmem:[%s4 + $0x3b0] sm:$0xf]
    %v2022 = vld [vmem:[%s4 + $0x3b4] sm:$0xf]
    %v2023 = vld [vmem:[%s4 + $0x3b8] sm:$0xf]
    %v2024 = vld [vmem:[%s4 + $0x3bc] sm:$0xf]
    %v2025 = vld [vmem:[%s4 + $0x3c0] sm:$0xf]
    %v2026 = vld [vmem:[%s4 + $0x3c4] sm:$0xf]
    %v2027 = vld [vmem:[%s4 + $0x3c8] sm:$0xf]
    %v2028 = vld [vmem:[%s4 + $0x3cc] sm:$0xf]
    %v2029 = vld [vmem:[%s4 + $0x3d0] sm:$0xf]
    %v2030 = vld [vmem:[%s4 + $0x3d4] sm:$0xf]
    %v2031 = vld [vmem:[%s4 + $0x3d8] sm:$0xf]
    %v2032 = vld [vmem:[%s4 + $0x3dc] sm:$0xf]
    %v2033 = vld [vmem:[%s4 + $0x3e0] sm:$0xf]
    %v2034 = vld [vmem:[%s4 + $0x3e4] sm:$0xf]
    %v2035 = vld [vmem:[%s4 + $0x3e8] sm:$0xf]
    %v2036 = vld [vmem:[%s4 + $0x3ec] sm:$0xf]
    %v2037 = vld [vmem:[%s4 + $0x3f0] sm:$0xf]
    %v2038 = vld [vmem:[%s4 + $0x3f4] sm:$0xf]
    %v2039 = vld [vmem:[%s4 + $0x3f8] sm:$0xf]
    %v2040 = vld [vmem:[%s4 + $0x3fc] sm:$0xf]
    %v2041 = vld [vmem:[%s4 + $0x400] sm:$0xf]
    %v2042 = vld [vmem:[%s4 + $0x404] sm:$0xf]
    %v2043 = vld [vmem:[%s4 + $0x408] sm:$0xf]
    %v2044 = vld [vmem:[%s4 + $0x40c] sm:$0xf]
    %v2045 = vld [vmem:[%s4 + $0x410] sm:$0xf]
    %v2046 = vld [vmem:[%s4 + $0x414] sm:$0xf]
    %v2047 = vld [vmem:[%s4 + $0x418] sm:$0xf]
    %v2048 = vld [vmem:[%s4 + $0x41c] sm:$0xf]
    %v2049 = vld [vmem:[%s4 + $0x420] sm:$0xf]
    %v2050 = vld [vmem:[%s4 + $0x424] sm:$0xf]
    %v2051 = vld [vmem:[%s4 + $0x428] sm:$0xf]
    %v2052 = vld [vmem:[%s4 + $0x42c] sm:$0xf]
    %v2053 = vld [vmem:[%s4 + $0x430] sm:$0xf]
    %v2054 = vld [vmem:[%s4 + $0x434] sm:$0xf]
    %v2055 = vld [vmem:[%s4 + $0x438] sm:$0xf]
    %v2056 = vld [vmem:[%s4 + $0x43c] sm:$0xf]
    %v2057 = vld [vmem:[%s4 + $0x440] sm:$0xf]
    %v2058 = vld [vmem:[%s4 + $0x444] sm:$0xf]
    %v2059 = vld [vmem:[%s4 + $0x448] sm:$0xf]
    %v2060 = vld [vmem:[%s4 + $0x44c] sm:$0xf]
    %v2061 = vld [vmem:[%s4 + $0x450] sm:$0xf]
    %v2062 = vld [vmem:[%s4 + $0x454] sm:$0xf]
    %v2063 = vld [vmem:[%s4 + $0x458] sm:$0xf]
    %v2064 = vld [vmem:[%s4 + $0x45c] sm:$0xf]
    %v2065 = vld [vmem:[%s4 + $0x460] sm:$0xf]
    %v2066 = vld [vmem:[%s4 + $0x464] sm:$0xf]
    %v2067 = vld [vmem:[%s4 + $0x468] sm:$0xf]
    %v2068 = vld [vmem:[%s4 + $0x46c] sm:$0xf]
    %v2069 = vld [vmem:[%s4 + $0x470] sm:$0xf]
    %v2070 = vld [vmem:[%s4 + $0x474] sm:$0xf]
    %v2071 = vld [vmem:[%s4 + $0x478] sm:$0xf]
    %v2072 = vld [vmem:[%s4 + $0x47c] sm:$0xf]
    %v2073 = vld [vmem:[%s4 + $0x480] sm:$0xf]
    %v2074 = vld [vmem:[%s4 + $0x484] sm:$0xf]
    %v2075 = vld [vmem:[%s4 + $0x488] sm:$0xf]
    %v2076 = vld [vmem:[%s4 + $0x48c] sm:$0xf]
    %v2077 = vld [vmem:[%s4 + $0x490] sm:$0xf]
    %v2078 = vld [vmem:[%s4 + $0x494] sm:$0xf]
    %v2079 = vld [vmem:[%s4 + $0x498] sm:$0xf]
    %v2080 = vld [vmem:[%s4 + $0x49c] sm:$0xf]
    %v2081 = vld [vmem:[%s4 + $0x4a0] sm:$0xf]
    %v2082 = vld [vmem:[%s4 + $0x4a4] sm:$0xf]
    %v2083 = vld [vmem:[%s4 + $0x4a8] sm:$0xf]
    %v2084 = vld [vmem:[%s4 + $0x4ac] sm:$0xf]
    %v2085 = vld [vmem:[%s4 + $0x4b0] sm:$0xf]
    %v2086 = vld [vmem:[%s4 + $0x4b4] sm:$0xf]
    %v2087 = vld [vmem:[%s4 + $0x4b8] sm:$0xf]
    %v2088 = vld [vmem:[%s4 + $0x4bc] sm:$0xf]
    %v2089 = vld [vmem:[%s4 + $0x4c0] sm:$0xf]
    %v2090 = vld [vmem:[%s4 + $0x4c4] sm:$0xf]
    %v2091 = vld [vmem:[%s4 + $0x4c8] sm:$0xf]
    %v2092 = vld [vmem:[%s4 + $0x4cc] sm:$0xf]
    %v2093 = vld [vmem:[%s4 + $0x4d0] sm:$0xf]
    %v2094 = vld [vmem:[%s4 + $0x4d4] sm:$0xf]
    %v2095 = vld [vmem:[%s4 + $0x4d8] sm:$0xf]
    %v2096 = vld [vmem:[%s4 + $0x4dc] sm:$0xf]
    %v2097 = vld [vmem:[%s4 + $0x4e0] sm:$0xf]
    %v2098 = vld [vmem:[%s4 + $0x4e4] sm:$0xf]
    %v2099 = vld [vmem:[%s4 + $0x4e8] sm:$0xf]
    %v2100 = vld [vmem:[%s4 + $0x4ec] sm:$0xf]
    %v2101 = vld [vmem:[%s4 + $0x4f0] sm:$0xf]
    %v2102 = vld [vmem:[%s4 + $0x4f4] sm:$0xf]
    %v2103 = vld [vmem:[%s4 + $0x4f8] sm:$0xf]
    %v2104 = vld [vmem:[%s4 + $0x4fc] sm:$0xf]
    %v2105 = vld [vmem:[%s4 + $0x500] sm:$0xf]
    %v2106 = vld [vmem:[%s4 + $0x504] sm:$0xf]
    %v2107 = vld [vmem:[%s4 + $0x508] sm:$0xf]
    %v2108 = vld [vmem:[%s4 + $0x50c] sm:$0xf]
    %v2109 = vld [vmem:[%s4 + $0x510] sm:$0xf]
    %v2110 = vld [vmem:[%s4 + $0x514] sm:$0xf]
    %v2111 = vld [vmem:[%s4 + $0x518] sm:$0xf]
    %v2112 = vld [vmem:[%s4 + $0x51c] sm:$0xf]
    %v2113 = vld [vmem:[%s4 + $0x520] sm:$0xf]
    %v2114 = vld [vmem:[%s4 + $0x524] sm:$0xf]
    %v2115 = vld [vmem:[%s4 + $0x528] sm:$0xf]
    %v2116 = vld [vmem:[%s4 + $0x52c] sm:$0xf]
    %v2117 = vld [vmem:[%s4 + $0x530] sm:$0xf]
    %v2118 = vld [vmem:[%s4 + $0x534] sm:$0xf]
    %v2119 = vld [vmem:[%s4 + $0x538] sm:$0xf]
    %v2120 = vld [vmem:[%s4 + $0x53c] sm:$0xf]
    %v2121 = vld [vmem:[%s4 + $0x540] sm:$0xf]
    %v2122 = vld [vmem:[%s4 + $0x544] sm:$0xf]
    %v2123 = vld [vmem:[%s4 + $0x548] sm:$0xf]
    %v2124 = vld [vmem:[%s4 + $0x54c] sm:$0xf]
    %v2125 = vld [vmem:[%s4 + $0x550] sm:$0xf]
    %v2126 = vld [vmem:[%s4 + $0x554] sm:$0xf]
    %v2127 = vld [vmem:[%s4 + $0x558] sm:$0xf]
    %v2128 = vld [vmem:[%s4 + $0x55c] sm:$0xf]
    %v2129 = vld [vmem:[%s4 + $0x560] sm:$0xf]
    %v2130 = vld [vmem:[%s4 + $0x564] sm:$0xf]
    %v2131 = vld [vmem:[%s4 + $0x568] sm:$0xf]
    %v2132 = vld [vmem:[%s4 + $0x56c] sm:$0xf]
    %v2133 = vld [vmem:[%s4 + $0x570] sm:$0xf]
    %v2134 = vld [vmem:[%s4 + $0x574] sm:$0xf]
    %v2135 = vld [vmem:[%s4 + $0x578] sm:$0xf]
    %v2136 = vld [vmem:[%s4 + $0x57c] sm:$0xf]
    %v2137 = vld [vmem:[%s4 + $0x580] sm:$0xf]
    %v2138 = vld [vmem:[%s4 + $0x584] sm:$0xf]
    %v2139 = vld [vmem:[%s4 + $0x588] sm:$0xf]
    %v2140 = vld [vmem:[%s4 + $0x58c] sm:$0xf]
    %v2141 = vld [vmem:[%s4 + $0x590] sm:$0xf]
    %v2142 = vld [vmem:[%s4 + $0x594] sm:$0xf]
    %v2143 = vld [vmem:[%s4 + $0x598] sm:$0xf]
    %v2144 = vld [vmem:[%s4 + $0x59c] sm:$0xf]
    %v2145 = vld [vmem:[%s4 + $0x5a0] sm:$0xf]
    %v2146 = vld [vmem:[%s4 + $0x5a4] sm:$0xf]
    %v2147 = vld [vmem:[%s4 + $0x5a8] sm:$0xf]
    %v2148 = vld [vmem:[%s4 + $0x5ac] sm:$0xf]
    %v2149 = vld [vmem:[%s4 + $0x5b0] sm:$0xf]
    %v2150 = vld [vmem:[%s4 + $0x5b4] sm:$0xf]
    %v2151 = vld [vmem:[%s4 + $0x5b8] sm:$0xf]
    %v2152 = vld [vmem:[%s4 + $0x5bc] sm:$0xf]
    %v2153 = vld [vmem:[%s4 + $0x5c0] sm:$0xf]
    %v2154 = vld [vmem:[%s4 + $0x5c4] sm:$0xf]
    %v2155 = vld [vmem:[%s4 + $0x5c8] sm:$0xf]
    %v2156 = vld [vmem:[%s4 + $0x5cc] sm:$0xf]
    %v2157 = vld [vmem:[%s4 + $0x5d0] sm:$0xf]
    %v2158 = vld [vmem:[%s4 + $0x5d4] sm:$0xf]
    %v2159 = vld [vmem:[%s4 + $0x5d8] sm:$0xf]
    %v2160 = vld [vmem:[%s4 + $0x5dc] sm:$0xf]
    %v2161 = vld [vmem:[%s4 + $0x5e0] sm:$0xf]
    %v2162 = vld [vmem:[%s4 + $0x5e4] sm:$0xf]
    %v2163 = vld [vmem:[%s4 + $0x5e8] sm:$0xf]
    %v2164 = vld [vmem:[%s4 + $0x5ec] sm:$0xf]
    %v2165 = vld [vmem:[%s4 + $0x5f0] sm:$0xf]
    %v2166 = vld [vmem:[%s4 + $0x5f4] sm:$0xf]
    %v2167 = vld [vmem:[%s4 + $0x5f8] sm:$0xf]
    %v2168 = vld [vmem:[%s4 + $0x5fc] sm:$0xf]
    %v2169 = vld [vmem:[%s4 + $0x600] sm:$0xf]
    %v2170 = vld [vmem:[%s4 + $0x604] sm:$0xf]
    %v2171 = vld [vmem:[%s4 + $0x608] sm:$0xf]
    %v2172 = vld [vmem:[%s4 + $0x60c] sm:$0xf]
    %v2173 = vld [vmem:[%s4 + $0x610] sm:$0xf]
    %v2174 = vld [vmem:[%s4 + $0x614] sm:$0xf]
    %v2175 = vld [vmem:[%s4 + $0x618] sm:$0xf]
    %v2176 = vld [vmem:[%s4 + $0x61c] sm:$0xf]
    %v2177 = vld [vmem:[%s4 + $0x620] sm:$0xf]
    %v2178 = vld [vmem:[%s4 + $0x624] sm:$0xf]
    %v2179 = vld [vmem:[%s4 + $0x628] sm:$0xf]
    %v2180 = vld [vmem:[%s4 + $0x62c] sm:$0xf]
    %v2181 = vld [vmem:[%s4 + $0x630] sm:$0xf]
    %v2182 = vld [vmem:[%s4 + $0x634] sm:$0xf]
    %v2183 = vld [vmem:[%s4 + $0x638] sm:$0xf]
    %v2184 = vld [vmem:[%s4 + $0x63c] sm:$0xf]
    %v2185 = vld [vmem:[%s4 + $0x640] sm:$0xf]
    %v2186 = vld [vmem:[%s4 + $0x644] sm:$0xf]
    %v2187 = vld [vmem:[%s4 + $0x648] sm:$0xf]
    %v2188 = vld [vmem:[%s4 + $0x64c] sm:$0xf]
    %v2189 = vld [vmem:[%s4 + $0x650] sm:$0xf]
    %v2190 = vld [vmem:[%s4 + $0x654] sm:$0xf]
    %v2191 = vld [vmem:[%s4 + $0x658] sm:$0xf]
    %v2192 = vld [vmem:[%s4 + $0x65c] sm:$0xf]
    %v2193 = vld [vmem:[%s4 + $0x660] sm:$0xf]
    %v2194 = vld [vmem:[%s4 + $0x664] sm:$0xf]
    %v2195 = vld [vmem:[%s4 + $0x668] sm:$0xf]
    %v2196 = vld [vmem:[%s4 + $0x66c] sm:$0xf]
    %v2197 = vld [vmem:[%s4 + $0x670] sm:$0xf]
    %v2198 = vld [vmem:[%s4 + $0x674] sm:$0xf]
    %v2199 = vld [vmem:[%s4 + $0x678] sm:$0xf]
    %v2200 = vld [vmem:[%s4 + $0x67c] sm:$0xf]
    %v2201 = vld [vmem:[%s4 + $0x680] sm:$0xf]
    %v2202 = vld [vmem:[%s4 + $0x684] sm:$0xf]
    %v2203 = vld [vmem:[%s4 + $0x688] sm:$0xf]
    %v2204 = vld [vmem:[%s4 + $0x68c] sm:$0xf]
    %v2205 = vld [vmem:[%s4 + $0x690] sm:$0xf]
    %v2206 = vld [vmem:[%s4 + $0x694] sm:$0xf]
    %v2207 = vld [vmem:[%s4 + $0x698] sm:$0xf]
    %v2208 = vld [vmem:[%s4 + $0x69c] sm:$0xf]
    %v2209 = vld [vmem:[%s4 + $0x6a0] sm:$0xf]
    %v2210 = vld [vmem:[%s4 + $0x6a4] sm:$0xf]
    %v2211 = vld [vmem:[%s4 + $0x6a8] sm:$0xf]
    %v2212 = vld [vmem:[%s4 + $0x6ac] sm:$0xf]
    %v2213 = vld [vmem:[%s4 + $0x6b0] sm:$0xf]
    %v2214 = vld [vmem:[%s4 + $0x6b4] sm:$0xf]
    %v2215 = vld [vmem:[%s4 + $0x6b8] sm:$0xf]
    %v2216 = vld [vmem:[%s4 + $0x6bc] sm:$0xf]
    %v2217 = vld [vmem:[%s4 + $0x6c0] sm:$0xf]
    %v2218 = vld [vmem:[%s4 + $0x6c4] sm:$0xf]
    %v2219 = vld [vmem:[%s4 + $0x6c8] sm:$0xf]
    %v2220 = vld [vmem:[%s4 + $0x6cc] sm:$0xf]
    %v2221 = vld [vmem:[%s4 + $0x6d0] sm:$0xf]
    %v2222 = vld [vmem:[%s4 + $0x6d4] sm:$0xf]
    %v2223 = vld [vmem:[%s4 + $0x6d8] sm:$0xf]
    %v2224 = vld [vmem:[%s4 + $0x6dc] sm:$0xf]
    %v2225 = vld [vmem:[%s4 + $0x6e0] sm:$0xf]
    %v2226 = vld [vmem:[%s4 + $0x6e4] sm:$0xf]
    %v2227 = vld [vmem:[%s4 + $0x6e8] sm:$0xf]
    %v2228 = vld [vmem:[%s4 + $0x6ec] sm:$0xf]
    %v2229 = vld [vmem:[%s4 + $0x6f0] sm:$0xf]
    %v2230 = vld [vmem:[%s4 + $0x6f4] sm:$0xf]
    %v2231 = vld [vmem:[%s4 + $0x6f8] sm:$0xf]
    %v2232 = vld [vmem:[%s4 + $0x6fc] sm:$0xf]
    %v2233 = vld [vmem:[%s4 + $0x700] sm:$0xf]
    %v2234 = vld [vmem:[%s4 + $0x704] sm:$0xf]
    %v2235 = vld [vmem:[%s4 + $0x708] sm:$0xf]
    %v2236 = vld [vmem:[%s4 + $0x70c] sm:$0xf]
    %v2237 = vld [vmem:[%s4 + $0x710] sm:$0xf]
    %v2238 = vld [vmem:[%s4 + $0x714] sm:$0xf]
    %v2239 = vld [vmem:[%s4 + $0x718] sm:$0xf]
    %v2240 = vld [vmem:[%s4 + $0x71c] sm:$0xf]
    %v2241 = vld [vmem:[%s4 + $0x720] sm:$0xf]
    %v2242 = vld [vmem:[%s4 + $0x724] sm:$0xf]
    %v2243 = vld [vmem:[%s4 + $0x728] sm:$0xf]
    %v2244 = vld [vmem:[%s4 + $0x72c] sm:$0xf]
    %v2245 = vld [vmem:[%s4 + $0x730] sm:$0xf]
    %v2246 = vld [vmem:[%s4 + $0x734] sm:$0xf]
    %v2247 = vld [vmem:[%s4 + $0x738] sm:$0xf]
    %v2248 = vld [vmem:[%s4 + $0x73c] sm:$0xf]
    %v2249 = vld [vmem:[%s4 + $0x740] sm:$0xf]
    %v2250 = vld [vmem:[%s4 + $0x744] sm:$0xf]
    %v2251 = vld [vmem:[%s4 + $0x748] sm:$0xf]
    %v2252 = vld [vmem:[%s4 + $0x74c] sm:$0xf]
    %v2253 = vld [vmem:[%s4 + $0x750] sm:$0xf]
    %v2254 = vld [vmem:[%s4 + $0x754] sm:$0xf]
    %v2255 = vld [vmem:[%s4 + $0x758] sm:$0xf]
    %v2256 = vld [vmem:[%s4 + $0x75c] sm:$0xf]
    %v2257 = vld [vmem:[%s4 + $0x760] sm:$0xf]
    %v2258 = vld [vmem:[%s4 + $0x764] sm:$0xf]
    %v2259 = vld [vmem:[%s4 + $0x768] sm:$0xf]
    %v2260 = vld [vmem:[%s4 + $0x76c] sm:$0xf]
    %v2261 = vld [vmem:[%s4 + $0x770] sm:$0xf]
    %v2262 = vld [vmem:[%s4 + $0x774] sm:$0xf]
    %v2263 = vld [vmem:[%s4 + $0x778] sm:$0xf]
    %v2264 = vld [vmem:[%s4 + $0x77c] sm:$0xf]
    %v2265 = vld [vmem:[%s4 + $0x780] sm:$0xf]
    %v2266 = vld [vmem:[%s4 + $0x784] sm:$0xf]
    %v2267 = vld [vmem:[%s4 + $0x788] sm:$0xf]
    %v2268 = vld [vmem:[%s4 + $0x78c] sm:$0xf]
    %v2269 = vld [vmem:[%s4 + $0x790] sm:$0xf]
    %v2270 = vld [vmem:[%s4 + $0x794] sm:$0xf]
    %v2271 = vld [vmem:[%s4 + $0x798] sm:$0xf]
    %v2272 = vld [vmem:[%s4 + $0x79c] sm:$0xf]
    %v2273 = vld [vmem:[%s4 + $0x7a0] sm:$0xf]
    %v2274 = vld [vmem:[%s4 + $0x7a4] sm:$0xf]
    %v2275 = vld [vmem:[%s4 + $0x7a8] sm:$0xf]
    %v2276 = vld [vmem:[%s4 + $0x7ac] sm:$0xf]
    %v2277 = vld [vmem:[%s4 + $0x7b0] sm:$0xf]
    %v2278 = vld [vmem:[%s4 + $0x7b4] sm:$0xf]
    %v2279 = vld [vmem:[%s4 + $0x7b8] sm:$0xf]
    %v2280 = vld [vmem:[%s4 + $0x7bc] sm:$0xf]
    %v2281 = vld [vmem:[%s4 + $0x7c0] sm:$0xf]
    %v2282 = vld [vmem:[%s4 + $0x7c4] sm:$0xf]
    %v2283 = vld [vmem:[%s4 + $0x7c8] sm:$0xf]
    %v2284 = vld [vmem:[%s4 + $0x7cc] sm:$0xf]
    %v2285 = vld [vmem:[%s4 + $0x7d0] sm:$0xf]
    %v2286 = vld [vmem:[%s4 + $0x7d4] sm:$0xf]
    %v2287 = vld [vmem:[%s4 + $0x7d8] sm:$0xf]
    %v2288 = vld [vmem:[%s4 + $0x7dc] sm:$0xf]
    %v2289 = vld [vmem:[%s4 + $0x7e0] sm:$0xf]
    %v2290 = vld [vmem:[%s4 + $0x7e4] sm:$0xf]
    %v2291 = vld [vmem:[%s4 + $0x7e8] sm:$0xf]
    %v2292 = vld [vmem:[%s4 + $0x7ec] sm:$0xf]
    %v2293 = vld [vmem:[%s4 + $0x7f0] sm:$0xf]
    %v2294 = vld [vmem:[%s4 + $0x7f4] sm:$0xf]
    %v2295 = vld [vmem:[%s4 + $0x7f8] sm:$0xf]
    %v2296 = vld [vmem:[%s4 + $0x7fc] sm:$0xf]
    %v2297 = vld [vmem:[%s5] sm:$0x1]
    %v2299 = vlaneseq
    %v2300 = vshrl.u32 %v2299, 7
    %v2301 = vsub.s32 0, %v2300
    %v2302 = vrot.slane %v2297, %v2301
    %v2320 = vunpack.c.l.b16 %v1769
    %v2321 = vunpack.c.h.b16 %v1769
    %v2322 = vunpack.c.l.b16 %v1770
    %v2323 = vunpack.c.h.b16 %v1770
    %v2324 = vunpack.c.l.b16 %v1771
    %v2325 = vunpack.c.h.b16 %v1771
    %v2326 = vunpack.c.l.b16 %v1772
    %v2327 = vunpack.c.h.b16 %v1772
    %v2328 = vunpack.c.l.b16 %v1773
    %v2329 = vunpack.c.h.b16 %v1773
    %v2330 = vunpack.c.l.b16 %v1774
    %v2331 = vunpack.c.h.b16 %v1774
    %v2332 = vunpack.c.l.b16 %v1775
    %v2333 = vunpack.c.h.b16 %v1775
    %v2334 = vunpack.c.l.b16 %v1776
    %v2335 = vunpack.c.h.b16 %v1776
    %v2336 = vunpack.c.l.b16 %v1777
    %v2337 = vunpack.c.h.b16 %v1777
    %v2338 = vunpack.c.l.b16 %v1778
    %v2339 = vunpack.c.h.b16 %v1778
    %v2340 = vunpack.c.l.b16 %v1779
    %v2341 = vunpack.c.h.b16 %v1779
    %v2342 = vunpack.c.l.b16 %v1780
    %v2343 = vunpack.c.h.b16 %v1780
    %v2344 = vunpack.c.l.b16 %v1781
    %v2345 = vunpack.c.h.b16 %v1781
    %v2346 = vunpack.c.l.b16 %v1782
    %v2347 = vunpack.c.h.b16 %v1782
    %v2348 = vunpack.c.l.b16 %v1783
    %v2349 = vunpack.c.h.b16 %v1783
    %v2350 = vunpack.c.l.b16 %v1784
    %v2351 = vunpack.c.h.b16 %v1784
    %v2352 = vpack.c.b16 %v2320, %v2320
    %v2353 = vpack.c.b16 %v2321, %v2321
    %v2354 = vpack.c.b16 %v2322, %v2322
    %v2355 = vpack.c.b16 %v2323, %v2323
    %v2356 = vpack.c.b16 %v2324, %v2324
    %v2357 = vpack.c.b16 %v2325, %v2325
    %v2358 = vpack.c.b16 %v2326, %v2326
    %v2359 = vpack.c.b16 %v2327, %v2327
    %v2360 = vpack.c.b16 %v2328, %v2328
    %v2361 = vpack.c.b16 %v2329, %v2329
    %v2362 = vpack.c.b16 %v2330, %v2330
    %v2363 = vpack.c.b16 %v2331, %v2331
    %v2364 = vpack.c.b16 %v2332, %v2332
    %v2365 = vpack.c.b16 %v2333, %v2333
    %v2366 = vpack.c.b16 %v2334, %v2334
    %v2367 = vpack.c.b16 %v2335, %v2335
    %v2368 = vpack.c.b16 %v2336, %v2336
    %v2369 = vpack.c.b16 %v2337, %v2337
    %v2370 = vpack.c.b16 %v2338, %v2338
    %v2371 = vpack.c.b16 %v2339, %v2339
    %v2372 = vpack.c.b16 %v2340, %v2340
    %v2373 = vpack.c.b16 %v2341, %v2341
    %v2374 = vpack.c.b16 %v2342, %v2342
    %v2375 = vpack.c.b16 %v2343, %v2343
    %v2376 = vpack.c.b16 %v2344, %v2344
    %v2377 = vpack.c.b16 %v2345, %v2345
    %v2378 = vpack.c.b16 %v2346, %v2346
    %v2379 = vpack.c.b16 %v2347, %v2347
    %v2380 = vpack.c.b16 %v2348, %v2348
    %v2381 = vpack.c.b16 %v2349, %v2349
    %v2382 = vpack.c.b16 %v2350, %v2350
    %v2383 = vpack.c.b16 %v2351, %v2351
    %v2928 = vunpack.c.l.b16 %v1785
    %v2929 = vunpack.c.l.b16 %v1786
    %v2930 = vunpack.c.l.b16 %v1787
    %v2931 = vunpack.c.l.b16 %v1788
    %v2932 = vunpack.c.l.b16 %v1789
    %v2933 = vunpack.c.l.b16 %v1790
    %v2934 = vunpack.c.l.b16 %v1791
    %v2935 = vunpack.c.l.b16 %v1792
    %v2936 = vunpack.c.l.b16 %v1793
    %v2937 = vunpack.c.l.b16 %v1794
    %v2938 = vunpack.c.l.b16 %v1795
    %v2939 = vunpack.c.l.b16 %v1796
    %v2940 = vunpack.c.l.b16 %v1797
    %v2941 = vunpack.c.l.b16 %v1798
    %v2942 = vunpack.c.l.b16 %v1799
    %v2943 = vunpack.c.l.b16 %v1800
    %v2944 = vunpack.c.l.b16 %v1801
    %v2945 = vunpack.c.l.b16 %v1802
    %v2946 = vunpack.c.l.b16 %v1803
    %v2947 = vunpack.c.l.b16 %v1804
    %v2948 = vunpack.c.l.b16 %v1805
    %v2949 = vunpack.c.l.b16 %v1806
    %v2950 = vunpack.c.l.b16 %v1807
    %v2951 = vunpack.c.l.b16 %v1808
    %v2952 = vunpack.c.l.b16 %v1809
    %v2953 = vunpack.c.l.b16 %v1810
    %v2954 = vunpack.c.l.b16 %v1811
    %v2955 = vunpack.c.l.b16 %v1812
    %v2956 = vunpack.c.l.b16 %v1813
    %v2957 = vunpack.c.l.b16 %v1814
    %v2958 = vunpack.c.l.b16 %v1815
    %v2959 = vunpack.c.l.b16 %v1816
    %v2960 = vunpack.c.l.b16 %v1817
    %v2961 = vunpack.c.l.b16 %v1818
    %v2962 = vunpack.c.l.b16 %v1819
    %v2963 = vunpack.c.l.b16 %v1820
    %v2964 = vunpack.c.l.b16 %v1821
    %v2965 = vunpack.c.l.b16 %v1822
    %v2966 = vunpack.c.l.b16 %v1823
    %v2967 = vunpack.c.l.b16 %v1824
    %v2968 = vunpack.c.l.b16 %v1825
    %v2969 = vunpack.c.l.b16 %v1826
    %v2970 = vunpack.c.l.b16 %v1827
    %v2971 = vunpack.c.l.b16 %v1828
    %v2972 = vunpack.c.l.b16 %v1829
    %v2973 = vunpack.c.l.b16 %v1830
    %v2974 = vunpack.c.l.b16 %v1831
    %v2975 = vunpack.c.l.b16 %v1832
    %v2976 = vunpack.c.l.b16 %v1833
    %v2977 = vunpack.c.l.b16 %v1834
    %v2978 = vunpack.c.l.b16 %v1835
    %v2979 = vunpack.c.l.b16 %v1836
    %v2980 = vunpack.c.l.b16 %v1837
    %v2981 = vunpack.c.l.b16 %v1838
    %v2982 = vunpack.c.l.b16 %v1839
    %v2983 = vunpack.c.l.b16 %v1840
    %v2984 = vunpack.c.l.b16 %v1841
    %v2985 = vunpack.c.l.b16 %v1842
    %v2986 = vunpack.c.l.b16 %v1843
    %v2987 = vunpack.c.l.b16 %v1844
    %v2988 = vunpack.c.l.b16 %v1845
    %v2989 = vunpack.c.l.b16 %v1846
    %v2990 = vunpack.c.l.b16 %v1847
    %v2991 = vunpack.c.l.b16 %v1848
    %v2992 = vunpack.c.l.b16 %v1849
    %v2993 = vunpack.c.l.b16 %v1850
    %v2994 = vunpack.c.l.b16 %v1851
    %v2995 = vunpack.c.l.b16 %v1852
    %v2996 = vunpack.c.l.b16 %v1853
    %v2997 = vunpack.c.l.b16 %v1854
    %v2998 = vunpack.c.l.b16 %v1855
    %v2999 = vunpack.c.l.b16 %v1856
    %v3000 = vunpack.c.l.b16 %v1857
    %v3001 = vunpack.c.l.b16 %v1858
    %v3002 = vunpack.c.l.b16 %v1859
    %v3003 = vunpack.c.l.b16 %v1860
    %v3004 = vunpack.c.l.b16 %v1861
    %v3005 = vunpack.c.l.b16 %v1862
    %v3006 = vunpack.c.l.b16 %v1863
    %v3007 = vunpack.c.l.b16 %v1864
    %v3008 = vunpack.c.l.b16 %v1865
    %v3009 = vunpack.c.l.b16 %v1866
    %v3010 = vunpack.c.l.b16 %v1867
    %v3011 = vunpack.c.l.b16 %v1868
    %v3012 = vunpack.c.l.b16 %v1869
    %v3013 = vunpack.c.l.b16 %v1870
    %v3014 = vunpack.c.l.b16 %v1871
    %v3015 = vunpack.c.l.b16 %v1872
    %v3016 = vunpack.c.l.b16 %v1873
    %v3017 = vunpack.c.l.b16 %v1874
    %v3018 = vunpack.c.l.b16 %v1875
    %v3019 = vunpack.c.l.b16 %v1876
    %v3020 = vunpack.c.l.b16 %v1877
    %v3021 = vunpack.c.l.b16 %v1878
    %v3022 = vunpack.c.l.b16 %v1879
    %v3023 = vunpack.c.l.b16 %v1880
    %v3024 = vunpack.c.l.b16 %v1881
    %v3025 = vunpack.c.l.b16 %v1882
    %v3026 = vunpack.c.l.b16 %v1883
    %v3027 = vunpack.c.l.b16 %v1884
    %v3028 = vunpack.c.l.b16 %v1885
    %v3029 = vunpack.c.l.b16 %v1886
    %v3030 = vunpack.c.l.b16 %v1887
    %v3031 = vunpack.c.l.b16 %v1888
    %v3032 = vunpack.c.l.b16 %v1889
    %v3033 = vunpack.c.l.b16 %v1890
    %v3034 = vunpack.c.l.b16 %v1891
    %v3035 = vunpack.c.l.b16 %v1892
    %v3036 = vunpack.c.l.b16 %v1893
    %v3037 = vunpack.c.l.b16 %v1894
    %v3038 = vunpack.c.l.b16 %v1895
    %v3039 = vunpack.c.l.b16 %v1896
    %v3040 = vunpack.c.l.b16 %v1897
    %v3041 = vunpack.c.l.b16 %v1898
    %v3042 = vunpack.c.l.b16 %v1899
    %v3043 = vunpack.c.l.b16 %v1900
    %v3044 = vunpack.c.l.b16 %v1901
    %v3045 = vunpack.c.l.b16 %v1902
    %v3046 = vunpack.c.l.b16 %v1903
    %v3047 = vunpack.c.l.b16 %v1904
    %v3048 = vunpack.c.l.b16 %v1905
    %v3049 = vunpack.c.l.b16 %v1906
    %v3050 = vunpack.c.l.b16 %v1907
    %v3051 = vunpack.c.l.b16 %v1908
    %v3052 = vunpack.c.l.b16 %v1909
    %v3053 = vunpack.c.l.b16 %v1910
    %v3054 = vunpack.c.l.b16 %v1911
    %v3055 = vunpack.c.l.b16 %v1912
    %v3056 = vunpack.c.l.b16 %v1913
    %v3057 = vunpack.c.l.b16 %v1914
    %v3058 = vunpack.c.l.b16 %v1915
    %v3059 = vunpack.c.l.b16 %v1916
    %v3060 = vunpack.c.l.b16 %v1917
    %v3061 = vunpack.c.l.b16 %v1918
    %v3062 = vunpack.c.l.b16 %v1919
    %v3063 = vunpack.c.l.b16 %v1920
    %v3064 = vunpack.c.l.b16 %v1921
    %v3065 = vunpack.c.l.b16 %v1922
    %v3066 = vunpack.c.l.b16 %v1923
    %v3067 = vunpack.c.l.b16 %v1924
    %v3068 = vunpack.c.l.b16 %v1925
    %v3069 = vunpack.c.l.b16 %v1926
    %v3070 = vunpack.c.l.b16 %v1927
    %v3071 = vunpack.c.l.b16 %v1928
    %v3072 = vunpack.c.l.b16 %v1929
    %v3073 = vunpack.c.l.b16 %v1930
    %v3074 = vunpack.c.l.b16 %v1931
    %v3075 = vunpack.c.l.b16 %v1932
    %v3076 = vunpack.c.l.b16 %v1933
    %v3077 = vunpack.c.l.b16 %v1934
    %v3078 = vunpack.c.l.b16 %v1935
    %v3079 = vunpack.c.l.b16 %v1936
    %v3080 = vunpack.c.l.b16 %v1937
    %v3081 = vunpack.c.l.b16 %v1938
    %v3082 = vunpack.c.l.b16 %v1939
    %v3083 = vunpack.c.l.b16 %v1940
    %v3084 = vunpack.c.l.b16 %v1941
    %v3085 = vunpack.c.l.b16 %v1942
    %v3086 = vunpack.c.l.b16 %v1943
    %v3087 = vunpack.c.l.b16 %v1944
    %v3088 = vunpack.c.l.b16 %v1945
    %v3089 = vunpack.c.l.b16 %v1946
    %v3090 = vunpack.c.l.b16 %v1947
    %v3091 = vunpack.c.l.b16 %v1948
    %v3092 = vunpack.c.l.b16 %v1949
    %v3093 = vunpack.c.l.b16 %v1950
    %v3094 = vunpack.c.l.b16 %v1951
    %v3095 = vunpack.c.l.b16 %v1952
    %v3096 = vunpack.c.l.b16 %v1953
    %v3097 = vunpack.c.l.b16 %v1954
    %v3098 = vunpack.c.l.b16 %v1955
    %v3099 = vunpack.c.l.b16 %v1956
    %v3100 = vunpack.c.l.b16 %v1957
    %v3101 = vunpack.c.l.b16 %v1958
    %v3102 = vunpack.c.l.b16 %v1959
    %v3103 = vunpack.c.l.b16 %v1960
    %v3104 = vunpack.c.l.b16 %v1961
    %v3105 = vunpack.c.l.b16 %v1962
    %v3106 = vunpack.c.l.b16 %v1963
    %v3107 = vunpack.c.l.b16 %v1964
    %v3108 = vunpack.c.l.b16 %v1965
    %v3109 = vunpack.c.l.b16 %v1966
    %v3110 = vunpack.c.l.b16 %v1967
    %v3111 = vunpack.c.l.b16 %v1968
    %v3112 = vunpack.c.l.b16 %v1969
    %v3113 = vunpack.c.l.b16 %v1970
    %v3114 = vunpack.c.l.b16 %v1971
    %v3115 = vunpack.c.l.b16 %v1972
    %v3116 = vunpack.c.l.b16 %v1973
    %v3117 = vunpack.c.l.b16 %v1974
    %v3118 = vunpack.c.l.b16 %v1975
    %v3119 = vunpack.c.l.b16 %v1976
    %v3120 = vunpack.c.l.b16 %v1977
    %v3121 = vunpack.c.l.b16 %v1978
    %v3122 = vunpack.c.l.b16 %v1979
    %v3123 = vunpack.c.l.b16 %v1980
    %v3124 = vunpack.c.l.b16 %v1981
    %v3125 = vunpack.c.l.b16 %v1982
    %v3126 = vunpack.c.l.b16 %v1983
    %v3127 = vunpack.c.l.b16 %v1984
    %v3128 = vunpack.c.l.b16 %v1985
    %v3129 = vunpack.c.l.b16 %v1986
    %v3130 = vunpack.c.l.b16 %v1987
    %v3131 = vunpack.c.l.b16 %v1988
    %v3132 = vunpack.c.l.b16 %v1989
    %v3133 = vunpack.c.l.b16 %v1990
    %v3134 = vunpack.c.l.b16 %v1991
    %v3135 = vunpack.c.l.b16 %v1992
    %v3136 = vunpack.c.l.b16 %v1993
    %v3137 = vunpack.c.l.b16 %v1994
    %v3138 = vunpack.c.l.b16 %v1995
    %v3139 = vunpack.c.l.b16 %v1996
    %v3140 = vunpack.c.l.b16 %v1997
    %v3141 = vunpack.c.l.b16 %v1998
    %v3142 = vunpack.c.l.b16 %v1999
    %v3143 = vunpack.c.l.b16 %v2000
    %v3144 = vunpack.c.l.b16 %v2001
    %v3145 = vunpack.c.l.b16 %v2002
    %v3146 = vunpack.c.l.b16 %v2003
    %v3147 = vunpack.c.l.b16 %v2004
    %v3148 = vunpack.c.l.b16 %v2005
    %v3149 = vunpack.c.l.b16 %v2006
    %v3150 = vunpack.c.l.b16 %v2007
    %v3151 = vunpack.c.l.b16 %v2008
    %v3152 = vunpack.c.l.b16 %v2009
    %v3153 = vunpack.c.l.b16 %v2010
    %v3154 = vunpack.c.l.b16 %v2011
    %v3155 = vunpack.c.l.b16 %v2012
    %v3156 = vunpack.c.l.b16 %v2013
    %v3157 = vunpack.c.l.b16 %v2014
    %v3158 = vunpack.c.l.b16 %v2015
    %v3159 = vunpack.c.l.b16 %v2016
    %v3160 = vunpack.c.l.b16 %v2017
    %v3161 = vunpack.c.l.b16 %v2018
    %v3162 = vunpack.c.l.b16 %v2019
    %v3163 = vunpack.c.l.b16 %v2020
    %v3164 = vunpack.c.l.b16 %v2021
    %v3165 = vunpack.c.l.b16 %v2022
    %v3166 = vunpack.c.l.b16 %v2023
    %v3167 = vunpack.c.l.b16 %v2024
    %v3168 = vunpack.c.l.b16 %v2025
    %v3169 = vunpack.c.l.b16 %v2026
    %v3170 = vunpack.c.l.b16 %v2027
    %v3171 = vunpack.c.l.b16 %v2028
    %v3172 = vunpack.c.l.b16 %v2029
    %v3173 = vunpack.c.l.b16 %v2030
    %v3174 = vunpack.c.l.b16 %v2031
    %v3175 = vunpack.c.l.b16 %v2032
    %v3176 = vunpack.c.l.b16 %v2033
    %v3177 = vunpack.c.l.b16 %v2034
    %v3178 = vunpack.c.l.b16 %v2035
    %v3179 = vunpack.c.l.b16 %v2036
    %v3180 = vunpack.c.l.b16 %v2037
    %v3181 = vunpack.c.l.b16 %v2038
    %v3182 = vunpack.c.l.b16 %v2039
    %v3183 = vunpack.c.l.b16 %v2040
    %v3184 = vunpack.c.l.b16 %v2041
    %v3185 = vunpack.c.l.b16 %v2042
    %v3186 = vunpack.c.l.b16 %v2043
    %v3187 = vunpack.c.l.b16 %v2044
    %v3188 = vunpack.c.l.b16 %v2045
    %v3189 = vunpack.c.l.b16 %v2046
    %v3190 = vunpack.c.l.b16 %v2047
    %v3191 = vunpack.c.l.b16 %v2048
    %v3192 = vunpack.c.l.b16 %v2049
    %v3193 = vunpack.c.l.b16 %v2050
    %v3194 = vunpack.c.l.b16 %v2051
    %v3195 = vunpack.c.l.b16 %v2052
    %v3196 = vunpack.c.l.b16 %v2053
    %v3197 = vunpack.c.l.b16 %v2054
    %v3198 = vunpack.c.l.b16 %v2055
    %v3199 = vunpack.c.l.b16 %v2056
    %v3200 = vunpack.c.l.b16 %v2057
    %v3201 = vunpack.c.l.b16 %v2058
    %v3202 = vunpack.c.l.b16 %v2059
    %v3203 = vunpack.c.l.b16 %v2060
    %v3204 = vunpack.c.l.b16 %v2061
    %v3205 = vunpack.c.l.b16 %v2062
    %v3206 = vunpack.c.l.b16 %v2063
    %v3207 = vunpack.c.l.b16 %v2064
    %v3208 = vunpack.c.l.b16 %v2065
    %v3209 = vunpack.c.l.b16 %v2066
    %v3210 = vunpack.c.l.b16 %v2067
    %v3211 = vunpack.c.l.b16 %v2068
    %v3212 = vunpack.c.l.b16 %v2069
    %v3213 = vunpack.c.l.b16 %v2070
    %v3214 = vunpack.c.l.b16 %v2071
    %v3215 = vunpack.c.l.b16 %v2072
    %v3216 = vunpack.c.l.b16 %v2073
    %v3217 = vunpack.c.l.b16 %v2074
    %v3218 = vunpack.c.l.b16 %v2075
    %v3219 = vunpack.c.l.b16 %v2076
    %v3220 = vunpack.c.l.b16 %v2077
    %v3221 = vunpack.c.l.b16 %v2078
    %v3222 = vunpack.c.l.b16 %v2079
    %v3223 = vunpack.c.l.b16 %v2080
    %v3224 = vunpack.c.l.b16 %v2081
    %v3225 = vunpack.c.l.b16 %v2082
    %v3226 = vunpack.c.l.b16 %v2083
    %v3227 = vunpack.c.l.b16 %v2084
    %v3228 = vunpack.c.l.b16 %v2085
    %v3229 = vunpack.c.l.b16 %v2086
    %v3230 = vunpack.c.l.b16 %v2087
    %v3231 = vunpack.c.l.b16 %v2088
    %v3232 = vunpack.c.l.b16 %v2089
    %v3233 = vunpack.c.l.b16 %v2090
    %v3234 = vunpack.c.l.b16 %v2091
    %v3235 = vunpack.c.l.b16 %v2092
    %v3236 = vunpack.c.l.b16 %v2093
    %v3237 = vunpack.c.l.b16 %v2094
    %v3238 = vunpack.c.l.b16 %v2095
    %v3239 = vunpack.c.l.b16 %v2096
    %v3240 = vunpack.c.l.b16 %v2097
    %v3241 = vunpack.c.l.b16 %v2098
    %v3242 = vunpack.c.l.b16 %v2099
    %v3243 = vunpack.c.l.b16 %v2100
    %v3244 = vunpack.c.l.b16 %v2101
    %v3245 = vunpack.c.l.b16 %v2102
    %v3246 = vunpack.c.l.b16 %v2103
    %v3247 = vunpack.c.l.b16 %v2104
    %v3248 = vunpack.c.l.b16 %v2105
    %v3249 = vunpack.c.l.b16 %v2106
    %v3250 = vunpack.c.l.b16 %v2107
    %v3251 = vunpack.c.l.b16 %v2108
    %v3252 = vunpack.c.l.b16 %v2109
    %v3253 = vunpack.c.l.b16 %v2110
    %v3254 = vunpack.c.l.b16 %v2111
    %v3255 = vunpack.c.l.b16 %v2112
    %v3256 = vunpack.c.l.b16 %v2113
    %v3257 = vunpack.c.l.b16 %v2114
    %v3258 = vunpack.c.l.b16 %v2115
    %v3259 = vunpack.c.l.b16 %v2116
    %v3260 = vunpack.c.l.b16 %v2117
    %v3261 = vunpack.c.l.b16 %v2118
    %v3262 = vunpack.c.l.b16 %v2119
    %v3263 = vunpack.c.l.b16 %v2120
    %v3264 = vunpack.c.l.b16 %v2121
    %v3265 = vunpack.c.l.b16 %v2122
    %v3266 = vunpack.c.l.b16 %v2123
    %v3267 = vunpack.c.l.b16 %v2124
    %v3268 = vunpack.c.l.b16 %v2125
    %v3269 = vunpack.c.l.b16 %v2126
    %v3270 = vunpack.c.l.b16 %v2127
    %v3271 = vunpack.c.l.b16 %v2128
    %v3272 = vunpack.c.l.b16 %v2129
    %v3273 = vunpack.c.l.b16 %v2130
    %v3274 = vunpack.c.l.b16 %v2131
    %v3275 = vunpack.c.l.b16 %v2132
    %v3276 = vunpack.c.l.b16 %v2133
    %v3277 = vunpack.c.l.b16 %v2134
    %v3278 = vunpack.c.l.b16 %v2135
    %v3279 = vunpack.c.l.b16 %v2136
    %v3280 = vunpack.c.l.b16 %v2137
    %v3281 = vunpack.c.l.b16 %v2138
    %v3282 = vunpack.c.l.b16 %v2139
    %v3283 = vunpack.c.l.b16 %v2140
    %v3284 = vunpack.c.l.b16 %v2141
    %v3285 = vunpack.c.l.b16 %v2142
    %v3286 = vunpack.c.l.b16 %v2143
    %v3287 = vunpack.c.l.b16 %v2144
    %v3288 = vunpack.c.l.b16 %v2145
    %v3289 = vunpack.c.l.b16 %v2146
    %v3290 = vunpack.c.l.b16 %v2147
    %v3291 = vunpack.c.l.b16 %v2148
    %v3292 = vunpack.c.l.b16 %v2149
    %v3293 = vunpack.c.l.b16 %v2150
    %v3294 = vunpack.c.l.b16 %v2151
    %v3295 = vunpack.c.l.b16 %v2152
    %v3296 = vunpack.c.l.b16 %v2153
    %v3297 = vunpack.c.l.b16 %v2154
    %v3298 = vunpack.c.l.b16 %v2155
    %v3299 = vunpack.c.l.b16 %v2156
    %v3300 = vunpack.c.l.b16 %v2157
    %v3301 = vunpack.c.l.b16 %v2158
    %v3302 = vunpack.c.l.b16 %v2159
    %v3303 = vunpack.c.l.b16 %v2160
    %v3304 = vunpack.c.l.b16 %v2161
    %v3305 = vunpack.c.l.b16 %v2162
    %v3306 = vunpack.c.l.b16 %v2163
    %v3307 = vunpack.c.l.b16 %v2164
    %v3308 = vunpack.c.l.b16 %v2165
    %v3309 = vunpack.c.l.b16 %v2166
    %v3310 = vunpack.c.l.b16 %v2167
    %v3311 = vunpack.c.l.b16 %v2168
    %v3312 = vunpack.c.l.b16 %v2169
    %v3313 = vunpack.c.l.b16 %v2170
    %v3314 = vunpack.c.l.b16 %v2171
    %v3315 = vunpack.c.l.b16 %v2172
    %v3316 = vunpack.c.l.b16 %v2173
    %v3317 = vunpack.c.l.b16 %v2174
    %v3318 = vunpack.c.l.b16 %v2175
    %v3319 = vunpack.c.l.b16 %v2176
    %v3320 = vunpack.c.l.b16 %v2177
    %v3321 = vunpack.c.l.b16 %v2178
    %v3322 = vunpack.c.l.b16 %v2179
    %v3323 = vunpack.c.l.b16 %v2180
    %v3324 = vunpack.c.l.b16 %v2181
    %v3325 = vunpack.c.l.b16 %v2182
    %v3326 = vunpack.c.l.b16 %v2183
    %v3327 = vunpack.c.l.b16 %v2184
    %v3328 = vunpack.c.l.b16 %v2185
    %v3329 = vunpack.c.l.b16 %v2186
    %v3330 = vunpack.c.l.b16 %v2187
    %v3331 = vunpack.c.l.b16 %v2188
    %v3332 = vunpack.c.l.b16 %v2189
    %v3333 = vunpack.c.l.b16 %v2190
    %v3334 = vunpack.c.l.b16 %v2191
    %v3335 = vunpack.c.l.b16 %v2192
    %v3336 = vunpack.c.l.b16 %v2193
    %v3337 = vunpack.c.l.b16 %v2194
    %v3338 = vunpack.c.l.b16 %v2195
    %v3339 = vunpack.c.l.b16 %v2196
    %v3340 = vunpack.c.l.b16 %v2197
    %v3341 = vunpack.c.l.b16 %v2198
    %v3342 = vunpack.c.l.b16 %v2199
    %v3343 = vunpack.c.l.b16 %v2200
    %v3344 = vunpack.c.l.b16 %v2201
    %v3345 = vunpack.c.l.b16 %v2202
    %v3346 = vunpack.c.l.b16 %v2203
    %v3347 = vunpack.c.l.b16 %v2204
    %v3348 = vunpack.c.l.b16 %v2205
    %v3349 = vunpack.c.l.b16 %v2206
    %v3350 = vunpack.c.l.b16 %v2207
    %v3351 = vunpack.c.l.b16 %v2208
    %v3352 = vunpack.c.l.b16 %v2209
    %v3353 = vunpack.c.l.b16 %v2210
    %v3354 = vunpack.c.l.b16 %v2211
    %v3355 = vunpack.c.l.b16 %v2212
    %v3356 = vunpack.c.l.b16 %v2213
    %v3357 = vunpack.c.l.b16 %v2214
    %v3358 = vunpack.c.l.b16 %v2215
    %v3359 = vunpack.c.l.b16 %v2216
    %v3360 = vunpack.c.l.b16 %v2217
    %v3361 = vunpack.c.l.b16 %v2218
    %v3362 = vunpack.c.l.b16 %v2219
    %v3363 = vunpack.c.l.b16 %v2220
    %v3364 = vunpack.c.l.b16 %v2221
    %v3365 = vunpack.c.l.b16 %v2222
    %v3366 = vunpack.c.l.b16 %v2223
    %v3367 = vunpack.c.l.b16 %v2224
    %v3368 = vunpack.c.l.b16 %v2225
    %v3369 = vunpack.c.l.b16 %v2226
    %v3370 = vunpack.c.l.b16 %v2227
    %v3371 = vunpack.c.l.b16 %v2228
    %v3372 = vunpack.c.l.b16 %v2229
    %v3373 = vunpack.c.l.b16 %v2230
    %v3374 = vunpack.c.l.b16 %v2231
    %v3375 = vunpack.c.l.b16 %v2232
    %v3376 = vunpack.c.l.b16 %v2233
    %v3377 = vunpack.c.l.b16 %v2234
    %v3378 = vunpack.c.l.b16 %v2235
    %v3379 = vunpack.c.l.b16 %v2236
    %v3380 = vunpack.c.l.b16 %v2237
    %v3381 = vunpack.c.l.b16 %v2238
    %v3382 = vunpack.c.l.b16 %v2239
    %v3383 = vunpack.c.l.b16 %v2240
    %v3384 = vunpack.c.l.b16 %v2241
    %v3385 = vunpack.c.l.b16 %v2242
    %v3386 = vunpack.c.l.b16 %v2243
    %v3387 = vunpack.c.l.b16 %v2244
    %v3388 = vunpack.c.l.b16 %v2245
    %v3389 = vunpack.c.l.b16 %v2246
    %v3390 = vunpack.c.l.b16 %v2247
    %v3391 = vunpack.c.l.b16 %v2248
    %v3392 = vunpack.c.l.b16 %v2249
    %v3393 = vunpack.c.l.b16 %v2250
    %v3394 = vunpack.c.l.b16 %v2251
    %v3395 = vunpack.c.l.b16 %v2252
    %v3396 = vunpack.c.l.b16 %v2253
    %v3397 = vunpack.c.l.b16 %v2254
    %v3398 = vunpack.c.l.b16 %v2255
    %v3399 = vunpack.c.l.b16 %v2256
    %v3400 = vunpack.c.l.b16 %v2257
    %v3401 = vunpack.c.l.b16 %v2258
    %v3402 = vunpack.c.l.b16 %v2259
    %v3403 = vunpack.c.l.b16 %v2260
    %v3404 = vunpack.c.l.b16 %v2261
    %v3405 = vunpack.c.l.b16 %v2262
    %v3406 = vunpack.c.l.b16 %v2263
    %v3407 = vunpack.c.l.b16 %v2264
    %v3408 = vunpack.c.l.b16 %v2265
    %v3409 = vunpack.c.l.b16 %v2266
    %v3410 = vunpack.c.l.b16 %v2267
    %v3411 = vunpack.c.l.b16 %v2268
    %v3412 = vunpack.c.l.b16 %v2269
    %v3413 = vunpack.c.l.b16 %v2270
    %v3414 = vunpack.c.l.b16 %v2271
    %v3415 = vunpack.c.l.b16 %v2272
    %v3416 = vunpack.c.l.b16 %v2273
    %v3417 = vunpack.c.l.b16 %v2274
    %v3418 = vunpack.c.l.b16 %v2275
    %v3419 = vunpack.c.l.b16 %v2276
    %v3420 = vunpack.c.l.b16 %v2277
    %v3421 = vunpack.c.l.b16 %v2278
    %v3422 = vunpack.c.l.b16 %v2279
    %v3423 = vunpack.c.l.b16 %v2280
    %v3424 = vunpack.c.l.b16 %v2281
    %v3425 = vunpack.c.l.b16 %v2282
    %v3426 = vunpack.c.l.b16 %v2283
    %v3427 = vunpack.c.l.b16 %v2284
    %v3428 = vunpack.c.l.b16 %v2285
    %v3429 = vunpack.c.l.b16 %v2286
    %v3430 = vunpack.c.l.b16 %v2287
    %v3431 = vunpack.c.l.b16 %v2288
    %v3432 = vunpack.c.l.b16 %v2289
    %v3433 = vunpack.c.l.b16 %v2290
    %v3434 = vunpack.c.l.b16 %v2291
    %v3435 = vunpack.c.l.b16 %v2292
    %v3436 = vunpack.c.l.b16 %v2293
    %v3437 = vunpack.c.l.b16 %v2294
    %v3438 = vunpack.c.l.b16 %v2295
    %v3439 = vunpack.c.l.b16 %v2296
    %v3440 = vpack.c.b16 %v2929, %v2928
    %v3441 = vpack.c.b16 %v2931, %v2930
    %v3442 = vpack.c.b16 %v2933, %v2932
    %v3443 = vpack.c.b16 %v2935, %v2934
    %v3444 = vpack.c.b16 %v2937, %v2936
    %v3445 = vpack.c.b16 %v2939, %v2938
    %v3446 = vpack.c.b16 %v2941, %v2940
    %v3447 = vpack.c.b16 %v2943, %v2942
    %v3448 = vpack.c.b16 %v2945, %v2944
    %v3449 = vpack.c.b16 %v2947, %v2946
    %v3450 = vpack.c.b16 %v2949, %v2948
    %v3451 = vpack.c.b16 %v2951, %v2950
    %v3452 = vpack.c.b16 %v2953, %v2952
    %v3453 = vpack.c.b16 %v2955, %v2954
    %v3454 = vpack.c.b16 %v2957, %v2956
    %v3455 = vpack.c.b16 %v2959, %v2958
    %v3456 = vpack.c.b16 %v2961, %v2960
    %v3457 = vpack.c.b16 %v2963, %v2962
    %v3458 = vpack.c.b16 %v2965, %v2964
    %v3459 = vpack.c.b16 %v2967, %v2966
    %v3460 = vpack.c.b16 %v2969, %v2968
    %v3461 = vpack.c.b16 %v2971, %v2970
    %v3462 = vpack.c.b16 %v2973, %v2972
    %v3463 = vpack.c.b16 %v2975, %v2974
    %v3464 = vpack.c.b16 %v2977, %v2976
    %v3465 = vpack.c.b16 %v2979, %v2978
    %v3466 = vpack.c.b16 %v2981, %v2980
    %v3467 = vpack.c.b16 %v2983, %v2982
    %v3468 = vpack.c.b16 %v2985, %v2984
    %v3469 = vpack.c.b16 %v2987, %v2986
    %v3470 = vpack.c.b16 %v2989, %v2988
    %v3471 = vpack.c.b16 %v2991, %v2990
    %v3472 = vpack.c.b16 %v2993, %v2992
    %v3473 = vpack.c.b16 %v2995, %v2994
    %v3474 = vpack.c.b16 %v2997, %v2996
    %v3475 = vpack.c.b16 %v2999, %v2998
    %v3476 = vpack.c.b16 %v3001, %v3000
    %v3477 = vpack.c.b16 %v3003, %v3002
    %v3478 = vpack.c.b16 %v3005, %v3004
    %v3479 = vpack.c.b16 %v3007, %v3006
    %v3480 = vpack.c.b16 %v3009, %v3008
    %v3481 = vpack.c.b16 %v3011, %v3010
    %v3482 = vpack.c.b16 %v3013, %v3012
    %v3483 = vpack.c.b16 %v3015, %v3014
    %v3484 = vpack.c.b16 %v3017, %v3016
    %v3485 = vpack.c.b16 %v3019, %v3018
    %v3486 = vpack.c.b16 %v3021, %v3020
    %v3487 = vpack.c.b16 %v3023, %v3022
    %v3488 = vpack.c.b16 %v3025, %v3024
    %v3489 = vpack.c.b16 %v3027, %v3026
    %v3490 = vpack.c.b16 %v3029, %v3028
    %v3491 = vpack.c.b16 %v3031, %v3030
    %v3492 = vpack.c.b16 %v3033, %v3032
    %v3493 = vpack.c.b16 %v3035, %v3034
    %v3494 = vpack.c.b16 %v3037, %v3036
    %v3495 = vpack.c.b16 %v3039, %v3038
    %v3496 = vpack.c.b16 %v3041, %v3040
    %v3497 = vpack.c.b16 %v3043, %v3042
    %v3498 = vpack.c.b16 %v3045, %v3044
    %v3499 = vpack.c.b16 %v3047, %v3046
    %v3500 = vpack.c.b16 %v3049, %v3048
    %v3501 = vpack.c.b16 %v3051, %v3050
    %v3502 = vpack.c.b16 %v3053, %v3052
    %v3503 = vpack.c.b16 %v3055, %v3054
    %v3504 = vpack.c.b16 %v3057, %v3056
    %v3505 = vpack.c.b16 %v3059, %v3058
    %v3506 = vpack.c.b16 %v3061, %v3060
    %v3507 = vpack.c.b16 %v3063, %v3062
    %v3508 = vpack.c.b16 %v3065, %v3064
    %v3509 = vpack.c.b16 %v3067, %v3066
    %v3510 = vpack.c.b16 %v3069, %v3068
    %v3511 = vpack.c.b16 %v3071, %v3070
    %v3512 = vpack.c.b16 %v3073, %v3072
    %v3513 = vpack.c.b16 %v3075, %v3074
    %v3514 = vpack.c.b16 %v3077, %v3076
    %v3515 = vpack.c.b16 %v3079, %v3078
    %v3516 = vpack.c.b16 %v3081, %v3080
    %v3517 = vpack.c.b16 %v3083, %v3082
    %v3518 = vpack.c.b16 %v3085, %v3084
    %v3519 = vpack.c.b16 %v3087, %v3086
    %v3520 = vpack.c.b16 %v3089, %v3088
    %v3521 = vpack.c.b16 %v3091, %v3090
    %v3522 = vpack.c.b16 %v3093, %v3092
    %v3523 = vpack.c.b16 %v3095, %v3094
    %v3524 = vpack.c.b16 %v3097, %v3096
    %v3525 = vpack.c.b16 %v3099, %v3098
    %v3526 = vpack.c.b16 %v3101, %v3100
    %v3527 = vpack.c.b16 %v3103, %v3102
    %v3528 = vpack.c.b16 %v3105, %v3104
    %v3529 = vpack.c.b16 %v3107, %v3106
    %v3530 = vpack.c.b16 %v3109, %v3108
    %v3531 = vpack.c.b16 %v3111, %v3110
    %v3532 = vpack.c.b16 %v3113, %v3112
    %v3533 = vpack.c.b16 %v3115, %v3114
    %v3534 = vpack.c.b16 %v3117, %v3116
    %v3535 = vpack.c.b16 %v3119, %v3118
    %v3536 = vpack.c.b16 %v3121, %v3120
    %v3537 = vpack.c.b16 %v3123, %v3122
    %v3538 = vpack.c.b16 %v3125, %v3124
    %v3539 = vpack.c.b16 %v3127, %v3126
    %v3540 = vpack.c.b16 %v3129, %v3128
    %v3541 = vpack.c.b16 %v3131, %v3130
    %v3542 = vpack.c.b16 %v3133, %v3132
    %v3543 = vpack.c.b16 %v3135, %v3134
    %v3544 = vpack.c.b16 %v3137, %v3136
    %v3545 = vpack.c.b16 %v3139, %v3138
    %v3546 = vpack.c.b16 %v3141, %v3140
    %v3547 = vpack.c.b16 %v3143, %v3142
    %v3548 = vpack.c.b16 %v3145, %v3144
    %v3549 = vpack.c.b16 %v3147, %v3146
    %v3550 = vpack.c.b16 %v3149, %v3148
    %v3551 = vpack.c.b16 %v3151, %v3150
    %v3552 = vpack.c.b16 %v3153, %v3152
    %v3553 = vpack.c.b16 %v3155, %v3154
    %v3554 = vpack.c.b16 %v3157, %v3156
    %v3555 = vpack.c.b16 %v3159, %v3158
    %v3556 = vpack.c.b16 %v3161, %v3160
    %v3557 = vpack.c.b16 %v3163, %v3162
    %v3558 = vpack.c.b16 %v3165, %v3164
    %v3559 = vpack.c.b16 %v3167, %v3166
    %v3560 = vpack.c.b16 %v3169, %v3168
    %v3561 = vpack.c.b16 %v3171, %v3170
    %v3562 = vpack.c.b16 %v3173, %v3172
    %v3563 = vpack.c.b16 %v3175, %v3174
    %v3564 = vpack.c.b16 %v3177, %v3176
    %v3565 = vpack.c.b16 %v3179, %v3178
    %v3566 = vpack.c.b16 %v3181, %v3180
    %v3567 = vpack.c.b16 %v3183, %v3182
    %v3568 = vpack.c.b16 %v3185, %v3184
    %v3569 = vpack.c.b16 %v3187, %v3186
    %v3570 = vpack.c.b16 %v3189, %v3188
    %v3571 = vpack.c.b16 %v3191, %v3190
    %v3572 = vpack.c.b16 %v3193, %v3192
    %v3573 = vpack.c.b16 %v3195, %v3194
    %v3574 = vpack.c.b16 %v3197, %v3196
    %v3575 = vpack.c.b16 %v3199, %v3198
    %v3576 = vpack.c.b16 %v3201, %v3200
    %v3577 = vpack.c.b16 %v3203, %v3202
    %v3578 = vpack.c.b16 %v3205, %v3204
    %v3579 = vpack.c.b16 %v3207, %v3206
    %v3580 = vpack.c.b16 %v3209, %v3208
    %v3581 = vpack.c.b16 %v3211, %v3210
    %v3582 = vpack.c.b16 %v3213, %v3212
    %v3583 = vpack.c.b16 %v3215, %v3214
    %v3584 = vpack.c.b16 %v3217, %v3216
    %v3585 = vpack.c.b16 %v3219, %v3218
    %v3586 = vpack.c.b16 %v3221, %v3220
    %v3587 = vpack.c.b16 %v3223, %v3222
    %v3588 = vpack.c.b16 %v3225, %v3224
    %v3589 = vpack.c.b16 %v3227, %v3226
    %v3590 = vpack.c.b16 %v3229, %v3228
    %v3591 = vpack.c.b16 %v3231, %v3230
    %v3592 = vpack.c.b16 %v3233, %v3232
    %v3593 = vpack.c.b16 %v3235, %v3234
    %v3594 = vpack.c.b16 %v3237, %v3236
    %v3595 = vpack.c.b16 %v3239, %v3238
    %v3596 = vpack.c.b16 %v3241, %v3240
    %v3597 = vpack.c.b16 %v3243, %v3242
    %v3598 = vpack.c.b16 %v3245, %v3244
    %v3599 = vpack.c.b16 %v3247, %v3246
    %v3600 = vpack.c.b16 %v3249, %v3248
    %v3601 = vpack.c.b16 %v3251, %v3250
    %v3602 = vpack.c.b16 %v3253, %v3252
    %v3603 = vpack.c.b16 %v3255, %v3254
    %v3604 = vpack.c.b16 %v3257, %v3256
    %v3605 = vpack.c.b16 %v3259, %v3258
    %v3606 = vpack.c.b16 %v3261, %v3260
    %v3607 = vpack.c.b16 %v3263, %v3262
    %v3608 = vpack.c.b16 %v3265, %v3264
    %v3609 = vpack.c.b16 %v3267, %v3266
    %v3610 = vpack.c.b16 %v3269, %v3268
    %v3611 = vpack.c.b16 %v3271, %v3270
    %v3612 = vpack.c.b16 %v3273, %v3272
    %v3613 = vpack.c.b16 %v3275, %v3274
    %v3614 = vpack.c.b16 %v3277, %v3276
    %v3615 = vpack.c.b16 %v3279, %v3278
    %v3616 = vpack.c.b16 %v3281, %v3280
    %v3617 = vpack.c.b16 %v3283, %v3282
    %v3618 = vpack.c.b16 %v3285, %v3284
    %v3619 = vpack.c.b16 %v3287, %v3286
    %v3620 = vpack.c.b16 %v3289, %v3288
    %v3621 = vpack.c.b16 %v3291, %v3290
    %v3622 = vpack.c.b16 %v3293, %v3292
    %v3623 = vpack.c.b16 %v3295, %v3294
    %v3624 = vpack.c.b16 %v3297, %v3296
    %v3625 = vpack.c.b16 %v3299, %v3298
    %v3626 = vpack.c.b16 %v3301, %v3300
    %v3627 = vpack.c.b16 %v3303, %v3302
    %v3628 = vpack.c.b16 %v3305, %v3304
    %v3629 = vpack.c.b16 %v3307, %v3306
    %v3630 = vpack.c.b16 %v3309, %v3308
    %v3631 = vpack.c.b16 %v3311, %v3310
    %v3632 = vpack.c.b16 %v3313, %v3312
    %v3633 = vpack.c.b16 %v3315, %v3314
    %v3634 = vpack.c.b16 %v3317, %v3316
    %v3635 = vpack.c.b16 %v3319, %v3318
    %v3636 = vpack.c.b16 %v3321, %v3320
    %v3637 = vpack.c.b16 %v3323, %v3322
    %v3638 = vpack.c.b16 %v3325, %v3324
    %v3639 = vpack.c.b16 %v3327, %v3326
    %v3640 = vpack.c.b16 %v3329, %v3328
    %v3641 = vpack.c.b16 %v3331, %v3330
    %v3642 = vpack.c.b16 %v3333, %v3332
    %v3643 = vpack.c.b16 %v3335, %v3334
    %v3644 = vpack.c.b16 %v3337, %v3336
    %v3645 = vpack.c.b16 %v3339, %v3338
    %v3646 = vpack.c.b16 %v3341, %v3340
    %v3647 = vpack.c.b16 %v3343, %v3342
    %v3648 = vpack.c.b16 %v3345, %v3344
    %v3649 = vpack.c.b16 %v3347, %v3346
    %v3650 = vpack.c.b16 %v3349, %v3348
    %v3651 = vpack.c.b16 %v3351, %v3350
    %v3652 = vpack.c.b16 %v3353, %v3352
    %v3653 = vpack.c.b16 %v3355, %v3354
    %v3654 = vpack.c.b16 %v3357, %v3356
    %v3655 = vpack.c.b16 %v3359, %v3358
    %v3656 = vpack.c.b16 %v3361, %v3360
    %v3657 = vpack.c.b16 %v3363, %v3362
    %v3658 = vpack.c.b16 %v3365, %v3364
    %v3659 = vpack.c.b16 %v3367, %v3366
    %v3660 = vpack.c.b16 %v3369, %v3368
    %v3661 = vpack.c.b16 %v3371, %v3370
    %v3662 = vpack.c.b16 %v3373, %v3372
    %v3663 = vpack.c.b16 %v3375, %v3374
    %v3664 = vpack.c.b16 %v3377, %v3376
    %v3665 = vpack.c.b16 %v3379, %v3378
    %v3666 = vpack.c.b16 %v3381, %v3380
    %v3667 = vpack.c.b16 %v3383, %v3382
    %v3668 = vpack.c.b16 %v3385, %v3384
    %v3669 = vpack.c.b16 %v3387, %v3386
    %v3670 = vpack.c.b16 %v3389, %v3388
    %v3671 = vpack.c.b16 %v3391, %v3390
    %v3672 = vpack.c.b16 %v3393, %v3392
    %v3673 = vpack.c.b16 %v3395, %v3394
    %v3674 = vpack.c.b16 %v3397, %v3396
    %v3675 = vpack.c.b16 %v3399, %v3398
    %v3676 = vpack.c.b16 %v3401, %v3400
    %v3677 = vpack.c.b16 %v3403, %v3402
    %v3678 = vpack.c.b16 %v3405, %v3404
    %v3679 = vpack.c.b16 %v3407, %v3406
    %v3680 = vpack.c.b16 %v3409, %v3408
    %v3681 = vpack.c.b16 %v3411, %v3410
    %v3682 = vpack.c.b16 %v3413, %v3412
    %v3683 = vpack.c.b16 %v3415, %v3414
    %v3684 = vpack.c.b16 %v3417, %v3416
    %v3685 = vpack.c.b16 %v3419, %v3418
    %v3686 = vpack.c.b16 %v3421, %v3420
    %v3687 = vpack.c.b16 %v3423, %v3422
    %v3688 = vpack.c.b16 %v3425, %v3424
    %v3689 = vpack.c.b16 %v3427, %v3426
    %v3690 = vpack.c.b16 %v3429, %v3428
    %v3691 = vpack.c.b16 %v3431, %v3430
    %v3692 = vpack.c.b16 %v3433, %v3432
    %v3693 = vpack.c.b16 %v3435, %v3434
    %v3694 = vpack.c.b16 %v3437, %v3436
    %v3695 = vpack.c.b16 %v3439, %v3438
    %3952 = vmatprep.subr.bf16.mxu0 0
    %3953 = vmatpush1.bf16.msra.mxu0 %v3440
    %3954 = vmatprep.subr.bf16.mxu0 0
    %3955 = vmatpush1.bf16.msra.mxu0 %v3441
    %3956 = vmatprep.subr.bf16.mxu0 0
    %3957 = vmatpush1.bf16.msra.mxu0 %v3442
    %3958 = vmatprep.subr.bf16.mxu0 0
    %3959 = vmatpush1.bf16.msra.mxu0 %v3443
    %3960 = vmatprep.subr.bf16.mxu0 0
    %3961 = vmatpush1.bf16.msra.mxu0 %v3444
    %3962 = vmatprep.subr.bf16.mxu0 0
    %3963 = vmatpush1.bf16.msra.mxu0 %v3445
    %3964 = vmatprep.subr.bf16.mxu0 0
    %3965 = vmatpush1.bf16.msra.mxu0 %v3446
    %3966 = vmatprep.subr.bf16.mxu0 0
    %3967 = vmatpush1.bf16.msra.mxu0 %v3447
    %3968 = vmatprep.subr.bf16.mxu0 0
    %3969 = vmatpush1.bf16.msra.mxu0 %v3448
    %3970 = vmatprep.subr.bf16.mxu0 0
    %3971 = vmatpush1.bf16.msra.mxu0 %v3449
    %3972 = vmatprep.subr.bf16.mxu0 0
    %3973 = vmatpush1.bf16.msra.mxu0 %v3450
    %3974 = vmatprep.subr.bf16.mxu0 0
    %3975 = vmatpush1.bf16.msra.mxu0 %v3451
    %3976 = vmatprep.subr.bf16.mxu0 0
    %3977 = vmatpush1.bf16.msra.mxu0 %v3452
    %3978 = vmatprep.subr.bf16.mxu0 0
    %3979 = vmatpush1.bf16.msra.mxu0 %v3453
    %3980 = vmatprep.subr.bf16.mxu0 0
    %3981 = vmatpush1.bf16.msra.mxu0 %v3454
    %3982 = vmatprep.subr.bf16.mxu0 0
    %3983 = vmatpush1.bf16.msra.mxu0 %v3455
    %3984 = vmatprep.mubr.bf16.mxu0 %v2353
    %3985 = vmatmul.mubr.bf16.gmra.mrb[0].mxu0 %v2352
    %v3986 = vpop.f32.mrb[0].mxu0
    %v3987 = vadd.f32 %v2302, %v3986
    %v3988 = vpop.f32.mrb[0].mxu0
    %v3989 = vpop.f32.mrb[0].mxu0
    %v3990 = vpop.f32.mrb[0].mxu0
    %3991 = vdwg.mxu0
    %3992 = vmatprep.subr.bf16.mxu0 0
    %3993 = vmatpush1.bf16.msra.mxu0 %v3456
    %3994 = vmatprep.subr.bf16.mxu0 0
    %3995 = vmatpush1.bf16.msra.mxu0 %v3457
    %3996 = vmatprep.subr.bf16.mxu0 0
    %3997 = vmatpush1.bf16.msra.mxu0 %v3458
    %3998 = vmatprep.subr.bf16.mxu0 0
    %3999 = vmatpush1.bf16.msra.mxu0 %v3459
    %4000 = vmatprep.subr.bf16.mxu0 0
    %4001 = vmatpush1.bf16.msra.mxu0 %v3460
    %4002 = vmatprep.subr.bf16.mxu0 0
    %4003 = vmatpush1.bf16.msra.mxu0 %v3461
    %4004 = vmatprep.subr.bf16.mxu0 0
    %4005 = vmatpush1.bf16.msra.mxu0 %v3462
    %4006 = vmatprep.subr.bf16.mxu0 0
    %4007 = vmatpush1.bf16.msra.mxu0 %v3463
    %4008 = vmatprep.subr.bf16.mxu0 0
    %4009 = vmatpush1.bf16.msra.mxu0 %v3464
    %4010 = vmatprep.subr.bf16.mxu0 0
    %4011 = vmatpush1.bf16.msra.mxu0 %v3465
    %4012 = vmatprep.subr.bf16.mxu0 0
    %4013 = vmatpush1.bf16.msra.mxu0 %v3466
    %4014 = vmatprep.subr.bf16.mxu0 0
    %4015 = vmatpush1.bf16.msra.mxu0 %v3467
    %4016 = vmatprep.subr.bf16.mxu0 0
    %4017 = vmatpush1.bf16.msra.mxu0 %v3468
    %4018 = vmatprep.subr.bf16.mxu0 0
    %4019 = vmatpush1.bf16.msra.mxu0 %v3469
    %4020 = vmatprep.subr.bf16.mxu0 0
    %4021 = vmatpush1.bf16.msra.mxu0 %v3470
    %4022 = vmatprep.subr.bf16.mxu0 0
    %4023 = vmatpush1.bf16.msra.mxu0 %v3471
    %4024 = vmatprep.mubr.bf16.mxu0 %v2355
    %4025 = vmatmul.mubr.bf16.gmra.mrb[0].mxu0 %v2354
    %v4026 = vpop.f32.mrb[0].mxu0
    %v4027 = vadd.f32 %v3987, %v4026
    %v4028 = vpop.f32.mrb[0].mxu0
    %v4029 = vpop.f32.mrb[0].mxu0
    %v4030 = vpop.f32.mrb[0].mxu0
    %4031 = vdwg.mxu0
    %4032 = vmatprep.subr.bf16.mxu0 0
    %4033 = vmatpush1.bf16.msra.mxu0 %v3472
    %4034 = vmatprep.subr.bf16.mxu0 0
    %4035 = vmatpush1.bf16.msra.mxu0 %v3473
    %4036 = vmatprep.subr.bf16.mxu0 0
    %4037 = vmatpush1.bf16.msra.mxu0 %v3474
    %4038 = vmatprep.subr.bf16.mxu0 0
    %4039 = vmatpush1.bf16.msra.mxu0 %v3475
    %4040 = vmatprep.subr.bf16.mxu0 0
    %4041 = vmatpush1.bf16.msra.mxu0 %v3476
    %4042 = vmatprep.subr.bf16.mxu0 0
    %4043 = vmatpush1.bf16.msra.mxu0 %v3477
    %4044 = vmatprep.subr.bf16.mxu0 0
    %4045 = vmatpush1.bf16.msra.mxu0 %v3478
    %4046 = vmatprep.subr.bf16.mxu0 0
    %4047 = vmatpush1.bf16.msra.mxu0 %v3479
    %4048 = vmatprep.subr.bf16.mxu0 0
    %4049 = vmatpush1.bf16.msra.mxu0 %v3480
    %4050 = vmatprep.subr.bf16.mxu0 0
    %4051 = vmatpush1.bf16.msra.mxu0 %v3481
    %4052 = vmatprep.subr.bf16.mxu0 0
    %4053 = vmatpush1.bf16.msra.mxu0 %v3482
    %4054 = vmatprep.subr.bf16.mxu0 0
    %4055 = vmatpush1.bf16.msra.mxu0 %v3483
    %4056 = vmatprep.subr.bf16.mxu0 0
    %4057 = vmatpush1.bf16.msra.mxu0 %v3484
    %4058 = vmatprep.subr.bf16.mxu0 0
    %4059 = vmatpush1.bf16.msra.mxu0 %v3485
    %4060 = vmatprep.subr.bf16.mxu0 0
    %4061 = vmatpush1.bf16.msra.mxu0 %v3486
    %4062 = vmatprep.subr.bf16.mxu0 0
    %4063 = vmatpush1.bf16.msra.mxu0 %v3487
    %4064 = vmatprep.mubr.bf16.mxu0 %v2357
    %4065 = vmatmul.mubr.bf16.gmra.mrb[0].mxu0 %v2356
    %v4066 = vpop.f32.mrb[0].mxu0
    %v4067 = vadd.f32 %v4027, %v4066
    %v4068 = vpop.f32.mrb[0].mxu0
    %v4069 = vpop.f32.mrb[0].mxu0
    %v4070 = vpop.f32.mrb[0].mxu0
    %4071 = vdwg.mxu0
    %4072 = vmatprep.subr.bf16.mxu0 0
    %4073 = vmatpush1.bf16.msra.mxu0 %v3488
    %4074 = vmatprep.subr.bf16.mxu0 0
    %4075 = vmatpush1.bf16.msra.mxu0 %v3489
    %4076 = vmatprep.subr.bf16.mxu0 0
    %4077 = vmatpush1.bf16.msra.mxu0 %v3490
    %4078 = vmatprep.subr.bf16.mxu0 0
    %4079 = vmatpush1.bf16.msra.mxu0 %v3491
    %4080 = vmatprep.subr.bf16.mxu0 0
    %4081 = vmatpush1.bf16.msra.mxu0 %v3492
    %4082 = vmatprep.subr.bf16.mxu0 0
    %4083 = vmatpush1.bf16.msra.mxu0 %v3493
    %4084 = vmatprep.subr.bf16.mxu0 0
    %4085 = vmatpush1.bf16.msra.mxu0 %v3494
    %4086 = vmatprep.subr.bf16.mxu0 0
    %4087 = vmatpush1.bf16.msra.mxu0 %v3495
    %4088 = vmatprep.subr.bf16.mxu0 0
    %4089 = vmatpush1.bf16.msra.mxu0 %v3496
    %4090 = vmatprep.subr.bf16.mxu0 0
    %4091 = vmatpush1.bf16.msra.mxu0 %v3497
    %4092 = vmatprep.subr.bf16.mxu0 0
    %4093 = vmatpush1.bf16.msra.mxu0 %v3498
    %4094 = vmatprep.subr.bf16.mxu0 0
    %4095 = vmatpush1.bf16.msra.mxu0 %v3499
    %4096 = vmatprep.subr.bf16.mxu0 0
    %4097 = vmatpush1.bf16.msra.mxu0 %v3500
    %4098 = vmatprep.subr.bf16.mxu0 0
    %4099 = vmatpush1.bf16.msra.mxu0 %v3501
    %4100 = vmatprep.subr.bf16.mxu0 0
    %4101 = vmatpush1.bf16.msra.mxu0 %v3502
    %4102 = vmatprep.subr.bf16.mxu0 0
    %4103 = vmatpush1.bf16.msra.mxu0 %v3503
    %4104 = vmatprep.mubr.bf16.mxu0 %v2359
    %4105 = vmatmul.mubr.bf16.gmra.mrb[0].mxu0 %v2358
    %v4106 = vpop.f32.mrb[0].mxu0
    %v4107 = vadd.f32 %v4067, %v4106
    %v4108 = vpop.f32.mrb[0].mxu0
    %v4109 = vpop.f32.mrb[0].mxu0
    %v4110 = vpop.f32.mrb[0].mxu0
    %4111 = vdwg.mxu0
    %4112 = vmatprep.subr.bf16.mxu0 0
    %4113 = vmatpush1.bf16.msra.mxu0 %v3504
    %4114 = vmatprep.subr.bf16.mxu0 0
    %4115 = vmatpush1.bf16.msra.mxu0 %v3505
    %4116 = vmatprep.subr.bf16.mxu0 0
    %4117 = vmatpush1.bf16.msra.mxu0 %v3506
    %4118 = vmatprep.subr.bf16.mxu0 0
    %4119 = vmatpush1.bf16.msra.mxu0 %v3507
    %4120 = vmatprep.subr.bf16.mxu0 0
    %4121 = vmatpush1.bf16.msra.mxu0 %v3508
    %4122 = vmatprep.subr.bf16.mxu0 0
    %4123 = vmatpush1.bf16.msra.mxu0 %v3509
    %4124 = vmatprep.subr.bf16.mxu0 0
    %4125 = vmatpush1.bf16.msra.mxu0 %v3510
    %4126 = vmatprep.subr.bf16.mxu0 0
    %4127 = vmatpush1.bf16.msra.mxu0 %v3511
    %4128 = vmatprep.subr.bf16.mxu0 0
    %4129 = vmatpush1.bf16.msra.mxu0 %v3512
    %4130 = vmatprep.subr.bf16.mxu0 0
    %4131 = vmatpush1.bf16.msra.mxu0 %v3513
    %4132 = vmatprep.subr.bf16.mxu0 0
    %4133 = vmatpush1.bf16.msra.mxu0 %v3514
    %4134 = vmatprep.subr.bf16.mxu0 0
    %4135 = vmatpush1.bf16.msra.mxu0 %v3515
    %4136 = vmatprep.subr.bf16.mxu0 0
    %4137 = vmatpush1.bf16.msra.mxu0 %v3516
    %4138 = vmatprep.subr.bf16.mxu0 0
    %4139 = vmatpush1.bf16.msra.mxu0 %v3517
    %4140 = vmatprep.subr.bf16.mxu0 0
    %4141 = vmatpush1.bf16.msra.mxu0 %v3518
    %4142 = vmatprep.subr.bf16.mxu0 0
    %4143 = vmatpush1.bf16.msra.mxu0 %v3519
    %4144 = vmatprep.mubr.bf16.mxu0 %v2361
    %4145 = vmatmul.mubr.bf16.gmra.mrb[0].mxu0 %v2360
    %v4146 = vpop.f32.mrb[0].mxu0
    %v4147 = vadd.f32 %v4107, %v4146
    %v4148 = vpop.f32.mrb[0].mxu0
    %v4149 = vpop.f32.mrb[0].mxu0
    %v4150 = vpop.f32.mrb[0].mxu0
    %4151 = vdwg.mxu0
    %4152 = vmatprep.subr.bf16.mxu0 0
    %4153 = vmatpush1.bf16.msra.mxu0 %v3520
    %4154 = vmatprep.subr.bf16.mxu0 0
    %4155 = vmatpush1.bf16.msra.mxu0 %v3521
    %4156 = vmatprep.subr.bf16.mxu0 0
    %4157 = vmatpush1.bf16.msra.mxu0 %v3522
    %4158 = vmatprep.subr.bf16.mxu0 0
    %4159 = vmatpush1.bf16.msra.mxu0 %v3523
    %4160 = vmatprep.subr.bf16.mxu0 0
    %4161 = vmatpush1.bf16.msra.mxu0 %v3524
    %4162 = vmatprep.subr.bf16.mxu0 0
    %4163 = vmatpush1.bf16.msra.mxu0 %v3525
    %4164 = vmatprep.subr.bf16.mxu0 0
    %4165 = vmatpush1.bf16.msra.mxu0 %v3526
    %4166 = vmatprep.subr.bf16.mxu0 0
    %4167 = vmatpush1.bf16.msra.mxu0 %v3527
    %4168 = vmatprep.subr.bf16.mxu0 0
    %4169 = vmatpush1.bf16.msra.mxu0 %v3528
    %4170 = vmatprep.subr.bf16.mxu0 0
    %4171 = vmatpush1.bf16.msra.mxu0 %v3529
    %4172 = vmatprep.subr.bf16.mxu0 0
    %4173 = vmatpush1.bf16.msra.mxu0 %v3530
    %4174 = vmatprep.subr.bf16.mxu0 0
    %4175 = vmatpush1.bf16.msra.mxu0 %v3531
    %4176 = vmatprep.subr.bf16.mxu0 0
    %4177 = vmatpush1.bf16.msra.mxu0 %v3532
    %4178 = vmatprep.subr.bf16.mxu0 0
    %4179 = vmatpush1.bf16.msra.mxu0 %v3533
    %4180 = vmatprep.subr.bf16.mxu0 0
    %4181 = vmatpush1.bf16.msra.mxu0 %v3534
    %4182 = vmatprep.subr.bf16.mxu0 0
    %4183 = vmatpush1.bf16.msra.mxu0 %v3535
    %4184 = vmatprep.mubr.bf16.mxu0 %v2363
    %4185 = vmatmul.mubr.bf16.gmra.mrb[0].mxu0 %v2362
    %v4186 = vpop.f32.mrb[0].mxu0
    %v4187 = vadd.f32 %v4147, %v4186
    %v4188 = vpop.f32.mrb[0].mxu0
    %v4189 = vpop.f32.mrb[0].mxu0
    %v4190 = vpop.f32.mrb[0].mxu0
    %4191 = vdwg.mxu0
    %4192 = vmatprep.subr.bf16.mxu0 0
    %4193 = vmatpush1.bf16.msra.mxu0 %v3536
    %4194 = vmatprep.subr.bf16.mxu0 0
    %4195 = vmatpush1.bf16.msra.mxu0 %v3537
    %4196 = vmatprep.subr.bf16.mxu0 0
    %4197 = vmatpush1.bf16.msra.mxu0 %v3538
    %4198 = vmatprep.subr.bf16.mxu0 0
    %4199 = vmatpush1.bf16.msra.mxu0 %v3539
    %4200 = vmatprep.subr.bf16.mxu0 0
    %4201 = vmatpush1.bf16.msra.mxu0 %v3540
    %4202 = vmatprep.subr.bf16.mxu0 0
    %4203 = vmatpush1.bf16.msra.mxu0 %v3541
    %4204 = vmatprep.subr.bf16.mxu0 0
    %4205 = vmatpush1.bf16.msra.mxu0 %v3542
    %4206 = vmatprep.subr.bf16.mxu0 0
    %4207 = vmatpush1.bf16.msra.mxu0 %v3543
    %4208 = vmatprep.subr.bf16.mxu0 0
    %4209 = vmatpush1.bf16.msra.mxu0 %v3544
    %4210 = vmatprep.subr.bf16.mxu0 0
    %4211 = vmatpush1.bf16.msra.mxu0 %v3545
    %4212 = vmatprep.subr.bf16.mxu0 0
    %4213 = vmatpush1.bf16.msra.mxu0 %v3546
    %4214 = vmatprep.subr.bf16.mxu0 0
    %4215 = vmatpush1.bf16.msra.mxu0 %v3547
    %4216 = vmatprep.subr.bf16.mxu0 0
    %4217 = vmatpush1.bf16.msra.mxu0 %v3548
    %4218 = vmatprep.subr.bf16.mxu0 0
    %4219 = vmatpush1.bf16.msra.mxu0 %v3549
    %4220 = vmatprep.subr.bf16.mxu0 0
    %4221 = vmatpush1.bf16.msra.mxu0 %v3550
    %4222 = vmatprep.subr.bf16.mxu0 0
    %4223 = vmatpush1.bf16.msra.mxu0 %v3551
    %4224 = vmatprep.mubr.bf16.mxu0 %v2365
    %4225 = vmatmul.mubr.bf16.gmra.mrb[0].mxu0 %v2364
    %v4226 = vpop.f32.mrb[0].mxu0
    %v4227 = vadd.f32 %v4187, %v4226
    %v4228 = vpop.f32.mrb[0].mxu0
    %v4229 = vpop.f32.mrb[0].mxu0
    %v4230 = vpop.f32.mrb[0].mxu0
    %4231 = vdwg.mxu0
    %4232 = vmatprep.subr.bf16.mxu0 0
    %4233 = vmatpush1.bf16.msra.mxu0 %v3552
    %4234 = vmatprep.subr.bf16.mxu0 0
    %4235 = vmatpush1.bf16.msra.mxu0 %v3553
    %4236 = vmatprep.subr.bf16.mxu0 0
    %4237 = vmatpush1.bf16.msra.mxu0 %v3554
    %4238 = vmatprep.subr.bf16.mxu0 0
    %4239 = vmatpush1.bf16.msra.mxu0 %v3555
    %4240 = vmatprep.subr.bf16.mxu0 0
    %4241 = vmatpush1.bf16.msra.mxu0 %v3556
    %4242 = vmatprep.subr.bf16.mxu0 0
    %4243 = vmatpush1.bf16.msra.mxu0 %v3557
    %4244 = vmatprep.subr.bf16.mxu0 0
    %4245 = vmatpush1.bf16.msra.mxu0 %v3558
    %4246 = vmatprep.subr.bf16.mxu0 0
    %4247 = vmatpush1.bf16.msra.mxu0 %v3559
    %4248 = vmatprep.subr.bf16.mxu0 0
    %4249 = vmatpush1.bf16.msra.mxu0 %v3560
    %4250 = vmatprep.subr.bf16.mxu0 0
    %4251 = vmatpush1.bf16.msra.mxu0 %v3561
    %4252 = vmatprep.subr.bf16.mxu0 0
    %4253 = vmatpush1.bf16.msra.mxu0 %v3562
    %4254 = vmatprep.subr.bf16.mxu0 0
    %4255 = vmatpush1.bf16.msra.mxu0 %v3563
    %4256 = vmatprep.subr.bf16.mxu0 0
    %4257 = vmatpush1.bf16.msra.mxu0 %v3564
    %4258 = vmatprep.subr.bf16.mxu0 0
    %4259 = vmatpush1.bf16.msra.mxu0 %v3565
    %4260 = vmatprep.subr.bf16.mxu0 0
    %4261 = vmatpush1.bf16.msra.mxu0 %v3566
    %4262 = vmatprep.subr.bf16.mxu0 0
    %4263 = vmatpush1.bf16.msra.mxu0 %v3567
    %4264 = vmatprep.mubr.bf16.mxu0 %v2367
    %4265 = vmatmul.mubr.bf16.gmra.mrb[0].mxu0 %v2366
    %v4266 = vpop.f32.mrb[0].mxu0
    %v4267 = vadd.f32 %v4227, %v4266
    %v4268 = vpop.f32.mrb[0].mxu0
    %v4269 = vpop.f32.mrb[0].mxu0
    %v4270 = vpop.f32.mrb[0].mxu0
    %4271 = vdwg.mxu0
    %4272 = vmatprep.subr.bf16.mxu0 0
    %4273 = vmatpush1.bf16.msra.mxu0 %v3568
    %4274 = vmatprep.subr.bf16.mxu0 0
    %4275 = vmatpush1.bf16.msra.mxu0 %v3569
    %4276 = vmatprep.subr.bf16.mxu0 0
    %4277 = vmatpush1.bf16.msra.mxu0 %v3570
    %4278 = vmatprep.subr.bf16.mxu0 0
    %4279 = vmatpush1.bf16.msra.mxu0 %v3571
    %4280 = vmatprep.subr.bf16.mxu0 0
    %4281 = vmatpush1.bf16.msra.mxu0 %v3572
    %4282 = vmatprep.subr.bf16.mxu0 0
    %4283 = vmatpush1.bf16.msra.mxu0 %v3573
    %4284 = vmatprep.subr.bf16.mxu0 0
    %4285 = vmatpush1.bf16.msra.mxu0 %v3574
    %4286 = vmatprep.subr.bf16.mxu0 0
    %4287 = vmatpush1.bf16.msra.mxu0 %v3575
    %4288 = vmatprep.subr.bf16.mxu0 0
    %4289 = vmatpush1.bf16.msra.mxu0 %v3576
    %4290 = vmatprep.subr.bf16.mxu0 0
    %4291 = vmatpush1.bf16.msra.mxu0 %v3577
    %4292 = vmatprep.subr.bf16.mxu0 0
    %4293 = vmatpush1.bf16.msra.mxu0 %v3578
    %4294 = vmatprep.subr.bf16.mxu0 0
    %4295 = vmatpush1.bf16.msra.mxu0 %v3579
    %4296 = vmatprep.subr.bf16.mxu0 0
    %4297 = vmatpush1.bf16.msra.mxu0 %v3580
    %4298 = vmatprep.subr.bf16.mxu0 0
    %4299 = vmatpush1.bf16.msra.mxu0 %v3581
    %4300 = vmatprep.subr.bf16.mxu0 0
    %4301 = vmatpush1.bf16.msra.mxu0 %v3582
    %4302 = vmatprep.subr.bf16.mxu0 0
    %4303 = vmatpush1.bf16.msra.mxu0 %v3583
    %4304 = vmatprep.mubr.bf16.mxu0 %v2369
    %4305 = vmatmul.mubr.bf16.gmra.mrb[0].mxu0 %v2368
    %v4306 = vpop.f32.mrb[0].mxu0
    %v4307 = vadd.f32 %v4267, %v4306
    %v4308 = vpop.f32.mrb[0].mxu0
    %v4309 = vpop.f32.mrb[0].mxu0
    %v4310 = vpop.f32.mrb[0].mxu0
    %4311 = vdwg.mxu0
    %4312 = vmatprep.subr.bf16.mxu0 0
    %4313 = vmatpush1.bf16.msra.mxu0 %v3584
    %4314 = vmatprep.subr.bf16.mxu0 0
    %4315 = vmatpush1.bf16.msra.mxu0 %v3585
    %4316 = vmatprep.subr.bf16.mxu0 0
    %4317 = vmatpush1.bf16.msra.mxu0 %v3586
    %4318 = vmatprep.subr.bf16.mxu0 0
    %4319 = vmatpush1.bf16.msra.mxu0 %v3587
    %4320 = vmatprep.subr.bf16.mxu0 0
    %4321 = vmatpush1.bf16.msra.mxu0 %v3588
    %4322 = vmatprep.subr.bf16.mxu0 0
    %4323 = vmatpush1.bf16.msra.mxu0 %v3589
    %4324 = vmatprep.subr.bf16.mxu0 0
    %4325 = vmatpush1.bf16.msra.mxu0 %v3590
    %4326 = vmatprep.subr.bf16.mxu0 0
    %4327 = vmatpush1.bf16.msra.mxu0 %v3591
    %4328 = vmatprep.subr.bf16.mxu0 0
    %4329 = vmatpush1.bf16.msra.mxu0 %v3592
    %4330 = vmatprep.subr.bf16.mxu0 0
    %4331 = vmatpush1.bf16.msra.mxu0 %v3593
    %4332 = vmatprep.subr.bf16.mxu0 0
    %4333 = vmatpush1.bf16.msra.mxu0 %v3594
    %4334 = vmatprep.subr.bf16.mxu0 0
    %4335 = vmatpush1.bf16.msra.mxu0 %v3595
    %4336 = vmatprep.subr.bf16.mxu0 0
    %4337 = vmatpush1.bf16.msra.mxu0 %v3596
    %4338 = vmatprep.subr.bf16.mxu0 0
    %4339 = vmatpush1.bf16.msra.mxu0 %v3597
    %4340 = vmatprep.subr.bf16.mxu0 0
    %4341 = vmatpush1.bf16.msra.mxu0 %v3598
    %4342 = vmatprep.subr.bf16.mxu0 0
    %4343 = vmatpush1.bf16.msra.mxu0 %v3599
    %4344 = vmatprep.mubr.bf16.mxu0 %v2371
    %4345 = vmatmul.mubr.bf16.gmra.mrb[0].mxu0 %v2370
    %v4346 = vpop.f32.mrb[0].mxu0
    %v4347 = vadd.f32 %v4307, %v4346
    %v4348 = vpop.f32.mrb[0].mxu0
    %v4349 = vpop.f32.mrb[0].mxu0
    %v4350 = vpop.f32.mrb[0].mxu0
    %4351 = vdwg.mxu0
    %4352 = vmatprep.subr.bf16.mxu0 0
    %4353 = vmatpush1.bf16.msra.mxu0 %v3600
    %4354 = vmatprep.subr.bf16.mxu0 0
    %4355 = vmatpush1.bf16.msra.mxu0 %v3601
    %4356 = vmatprep.subr.bf16.mxu0 0
    %4357 = vmatpush1.bf16.msra.mxu0 %v3602
    %4358 = vmatprep.subr.bf16.mxu0 0
    %4359 = vmatpush1.bf16.msra.mxu0 %v3603
    %4360 = vmatprep.subr.bf16.mxu0 0
    %4361 = vmatpush1.bf16.msra.mxu0 %v3604
    %4362 = vmatprep.subr.bf16.mxu0 0
    %4363 = vmatpush1.bf16.msra.mxu0 %v3605
    %4364 = vmatprep.subr.bf16.mxu0 0
    %4365 = vmatpush1.bf16.msra.mxu0 %v3606
    %4366 = vmatprep.subr.bf16.mxu0 0
    %4367 = vmatpush1.bf16.msra.mxu0 %v3607
    %4368 = vmatprep.subr.bf16.mxu0 0
    %4369 = vmatpush1.bf16.msra.mxu0 %v3608
    %4370 = vmatprep.subr.bf16.mxu0 0
    %4371 = vmatpush1.bf16.msra.mxu0 %v3609
    %4372 = vmatprep.subr.bf16.mxu0 0
    %4373 = vmatpush1.bf16.msra.mxu0 %v3610
    %4374 = vmatprep.subr.bf16.mxu0 0
    %4375 = vmatpush1.bf16.msra.mxu0 %v3611
    %4376 = vmatprep.subr.bf16.mxu0 0
    %4377 = vmatpush1.bf16.msra.mxu0 %v3612
    %4378 = vmatprep.subr.bf16.mxu0 0
    %4379 = vmatpush1.bf16.msra.mxu0 %v3613
    %4380 = vmatprep.subr.bf16.mxu0 0
    %4381 = vmatpush1.bf16.msra.mxu0 %v3614
    %4382 = vmatprep.subr.bf16.mxu0 0
    %4383 = vmatpush1.bf16.msra.mxu0 %v3615
    %4384 = vmatprep.mubr.bf16.mxu0 %v2373
    %4385 = vmatmul.mubr.bf16.gmra.mrb[0].mxu0 %v2372
    %v4386 = vpop.f32.mrb[0].mxu0
    %v4387 = vadd.f32 %v4347, %v4386
    %v4388 = vpop.f32.mrb[0].mxu0
    %v4389 = vpop.f32.mrb[0].mxu0
    %v4390 = vpop.f32.mrb[0].mxu0
    %4391 = vdwg.mxu0
    %4392 = vmatprep.subr.bf16.mxu0 0
    %4393 = vmatpush1.bf16.msra.mxu0 %v3616
    %4394 = vmatprep.subr.bf16.mxu0 0
    %4395 = vmatpush1.bf16.msra.mxu0 %v3617
    %4396 = vmatprep.subr.bf16.mxu0 0
    %4397 = vmatpush1.bf16.msra.mxu0 %v3618
    %4398 = vmatprep.subr.bf16.mxu0 0
    %4399 = vmatpush1.bf16.msra.mxu0 %v3619
    %4400 = vmatprep.subr.bf16.mxu0 0
    %4401 = vmatpush1.bf16.msra.mxu0 %v3620
    %4402 = vmatprep.subr.bf16.mxu0 0
    %4403 = vmatpush1.bf16.msra.mxu0 %v3621
    %4404 = vmatprep.subr.bf16.mxu0 0
    %4405 = vmatpush1.bf16.msra.mxu0 %v3622
    %4406 = vmatprep.subr.bf16.mxu0 0
    %4407 = vmatpush1.bf16.msra.mxu0 %v3623
    %4408 = vmatprep.subr.bf16.mxu0 0
    %4409 = vmatpush1.bf16.msra.mxu0 %v3624
    %4410 = vmatprep.subr.bf16.mxu0 0
    %4411 = vmatpush1.bf16.msra.mxu0 %v3625
    %4412 = vmatprep.subr.bf16.mxu0 0
    %4413 = vmatpush1.bf16.msra.mxu0 %v3626
    %4414 = vmatprep.subr.bf16.mxu0 0
    %4415 = vmatpush1.bf16.msra.mxu0 %v3627
    %4416 = vmatprep.subr.bf16.mxu0 0
    %4417 = vmatpush1.bf16.msra.mxu0 %v3628
    %4418 = vmatprep.subr.bf16.mxu0 0
    %4419 = vmatpush1.bf16.msra.mxu0 %v3629
    %4420 = vmatprep.subr.bf16.mxu0 0
    %4421 = vmatpush1.bf16.msra.mxu0 %v3630
    %4422 = vmatprep.subr.bf16.mxu0 0
    %4423 = vmatpush1.bf16.msra.mxu0 %v3631
    %4424 = vmatprep.mubr.bf16.mxu0 %v2375
    %4425 = vmatmul.mubr.bf16.gmra.mrb[0].mxu0 %v2374
    %v4426 = vpop.f32.mrb[0].mxu0
    %v4427 = vadd.f32 %v4387, %v4426
    %v4428 = vpop.f32.mrb[0].mxu0
    %v4429 = vpop.f32.mrb[0].mxu0
    %v4430 = vpop.f32.mrb[0].mxu0
    %4431 = vdwg.mxu0
    %4432 = vmatprep.subr.bf16.mxu0 0
    %4433 = vmatpush1.bf16.msra.mxu0 %v3632
    %4434 = vmatprep.subr.bf16.mxu0 0
    %4435 = vmatpush1.bf16.msra.mxu0 %v3633
    %4436 = vmatprep.subr.bf16.mxu0 0
    %4437 = vmatpush1.bf16.msra.mxu0 %v3634
    %4438 = vmatprep.subr.bf16.mxu0 0
    %4439 = vmatpush1.bf16.msra.mxu0 %v3635
    %4440 = vmatprep.subr.bf16.mxu0 0
    %4441 = vmatpush1.bf16.msra.mxu0 %v3636
    %4442 = vmatprep.subr.bf16.mxu0 0
    %4443 = vmatpush1.bf16.msra.mxu0 %v3637
    %4444 = vmatprep.subr.bf16.mxu0 0
    %4445 = vmatpush1.bf16.msra.mxu0 %v3638
    %4446 = vmatprep.subr.bf16.mxu0 0
    %4447 = vmatpush1.bf16.msra.mxu0 %v3639
    %4448 = vmatprep.subr.bf16.mxu0 0
    %4449 = vmatpush1.bf16.msra.mxu0 %v3640
    %4450 = vmatprep.subr.bf16.mxu0 0
    %4451 = vmatpush1.bf16.msra.mxu0 %v3641
    %4452 = vmatprep.subr.bf16.mxu0 0
    %4453 = vmatpush1.bf16.msra.mxu0 %v3642
    %4454 = vmatprep.subr.bf16.mxu0 0
    %4455 = vmatpush1.bf16.msra.mxu0 %v3643
    %4456 = vmatprep.subr.bf16.mxu0 0
    %4457 = vmatpush1.bf16.msra.mxu0 %v3644
    %4458 = vmatprep.subr.bf16.mxu0 0
    %4459 = vmatpush1.bf16.msra.mxu0 %v3645
    %4460 = vmatprep.subr.bf16.mxu0 0
    %4461 = vmatpush1.bf16.msra.mxu0 %v3646
    %4462 = vmatprep.subr.bf16.mxu0 0
    %4463 = vmatpush1.bf16.msra.mxu0 %v3647
    %4464 = vmatprep.mubr.bf16.mxu0 %v2377
    %4465 = vmatmul.mubr.bf16.gmra.mrb[0].mxu0 %v2376
    %v4466 = vpop.f32.mrb[0].mxu0
    %v4467 = vadd.f32 %v4427, %v4466
    %v4468 = vpop.f32.mrb[0].mxu0
    %v4469 = vpop.f32.mrb[0].mxu0
    %v4470 = vpop.f32.mrb[0].mxu0
    %4471 = vdwg.mxu0
    %4472 = vmatprep.subr.bf16.mxu0 0
    %4473 = vmatpush1.bf16.msra.mxu0 %v3648
    %4474 = vmatprep.subr.bf16.mxu0 0
    %4475 = vmatpush1.bf16.msra.mxu0 %v3649
    %4476 = vmatprep.subr.bf16.mxu0 0
    %4477 = vmatpush1.bf16.msra.mxu0 %v3650
    %4478 = vmatprep.subr.bf16.mxu0 0
    %4479 = vmatpush1.bf16.msra.mxu0 %v3651
    %4480 = vmatprep.subr.bf16.mxu0 0
    %4481 = vmatpush1.bf16.msra.mxu0 %v3652
    %4482 = vmatprep.subr.bf16.mxu0 0
    %4483 = vmatpush1.bf16.msra.mxu0 %v3653
    %4484 = vmatprep.subr.bf16.mxu0 0
    %4485 = vmatpush1.bf16.msra.mxu0 %v3654
    %4486 = vmatprep.subr.bf16.mxu0 0
    %4487 = vmatpush1.bf16.msra.mxu0 %v3655
    %4488 = vmatprep.subr.bf16.mxu0 0
    %4489 = vmatpush1.bf16.msra.mxu0 %v3656
    %4490 = vmatprep.subr.bf16.mxu0 0
    %4491 = vmatpush1.bf16.msra.mxu0 %v3657
    %4492 = vmatprep.subr.bf16.mxu0 0
    %4493 = vmatpush1.bf16.msra.mxu0 %v3658
    %4494 = vmatprep.subr.bf16.mxu0 0
    %4495 = vmatpush1.bf16.msra.mxu0 %v3659
    %4496 = vmatprep.subr.bf16.mxu0 0
    %4497 = vmatpush1.bf16.msra.mxu0 %v3660
    %4498 = vmatprep.subr.bf16.mxu0 0
    %4499 = vmatpush1.bf16.msra.mxu0 %v3661
    %4500 = vmatprep.subr.bf16.mxu0 0
    %4501 = vmatpush1.bf16.msra.mxu0 %v3662
    %4502 = vmatprep.subr.bf16.mxu0 0
    %4503 = vmatpush1.bf16.msra.mxu0 %v3663
    %4504 = vmatprep.mubr.bf16.mxu0 %v2379
    %4505 = vmatmul.mubr.bf16.gmra.mrb[0].mxu0 %v2378
    %v4506 = vpop.f32.mrb[0].mxu0
    %v4507 = vadd.f32 %v4467, %v4506
    %v4508 = vpop.f32.mrb[0].mxu0
    %v4509 = vpop.f32.mrb[0].mxu0
    %v4510 = vpop.f32.mrb[0].mxu0
    %4511 = vdwg.mxu0
    %4512 = vmatprep.subr.bf16.mxu0 0
    %4513 = vmatpush1.bf16.msra.mxu0 %v3664
    %4514 = vmatprep.subr.bf16.mxu0 0
    %4515 = vmatpush1.bf16.msra.mxu0 %v3665
    %4516 = vmatprep.subr.bf16.mxu0 0
    %4517 = vmatpush1.bf16.msra.mxu0 %v3666
    %4518 = vmatprep.subr.bf16.mxu0 0
    %4519 = vmatpush1.bf16.msra.mxu0 %v3667
    %4520 = vmatprep.subr.bf16.mxu0 0
    %4521 = vmatpush1.bf16.msra.mxu0 %v3668
    %4522 = vmatprep.subr.bf16.mxu0 0
    %4523 = vmatpush1.bf16.msra.mxu0 %v3669
    %4524 = vmatprep.subr.bf16.mxu0 0
    %4525 = vmatpush1.bf16.msra.mxu0 %v3670
    %4526 = vmatprep.subr.bf16.mxu0 0
    %4527 = vmatpush1.bf16.msra.mxu0 %v3671
    %4528 = vmatprep.subr.bf16.mxu0 0
    %4529 = vmatpush1.bf16.msra.mxu0 %v3672
    %4530 = vmatprep.subr.bf16.mxu0 0
    %4531 = vmatpush1.bf16.msra.mxu0 %v3673
    %4532 = vmatprep.subr.bf16.mxu0 0
    %4533 = vmatpush1.bf16.msra.mxu0 %v3674
    %4534 = vmatprep.subr.bf16.mxu0 0
    %4535 = vmatpush1.bf16.msra.mxu0 %v3675
    %4536 = vmatprep.subr.bf16.mxu0 0
    %4537 = vmatpush1.bf16.msra.mxu0 %v3676
    %4538 = vmatprep.subr.bf16.mxu0 0
    %4539 = vmatpush1.bf16.msra.mxu0 %v3677
    %4540 = vmatprep.subr.bf16.mxu0 0
    %4541 = vmatpush1.bf16.msra.mxu0 %v3678
    %4542 = vmatprep.subr.bf16.mxu0 0
    %4543 = vmatpush1.bf16.msra.mxu0 %v3679
    %4544 = vmatprep.mubr.bf16.mxu0 %v2381
    %4545 = vmatmul.mubr.bf16.gmra.mrb[0].mxu0 %v2380
    %v4546 = vpop.f32.mrb[0].mxu0
    %v4547 = vadd.f32 %v4507, %v4546
    %v4548 = vpop.f32.mrb[0].mxu0
    %v4549 = vpop.f32.mrb[0].mxu0
    %v4550 = vpop.f32.mrb[0].mxu0
    %4551 = vdwg.mxu0
    %4552 = vmatprep.subr.bf16.mxu0 0
    %4553 = vmatpush1.bf16.msra.mxu0 %v3680
    %4554 = vmatprep.subr.bf16.mxu0 0
    %4555 = vmatpush1.bf16.msra.mxu0 %v3681
    %4556 = vmatprep.subr.bf16.mxu0 0
    %4557 = vmatpush1.bf16.msra.mxu0 %v3682
    %4558 = vmatprep.subr.bf16.mxu0 0
    %4559 = vmatpush1.bf16.msra.mxu0 %v3683
    %4560 = vmatprep.subr.bf16.mxu0 0
    %4561 = vmatpush1.bf16.msra.mxu0 %v3684
    %4562 = vmatprep.subr.bf16.mxu0 0
    %4563 = vmatpush1.bf16.msra.mxu0 %v3685
    %4564 = vmatprep.subr.bf16.mxu0 0
    %4565 = vmatpush1.bf16.msra.mxu0 %v3686
    %4566 = vmatprep.subr.bf16.mxu0 0
    %4567 = vmatpush1.bf16.msra.mxu0 %v3687
    %4568 = vmatprep.subr.bf16.mxu0 0
    %4569 = vmatpush1.bf16.msra.mxu0 %v3688
    %4570 = vmatprep.subr.bf16.mxu0 0
    %4571 = vmatpush1.bf16.msra.mxu0 %v3689
    %4572 = vmatprep.subr.bf16.mxu0 0
    %4573 = vmatpush1.bf16.msra.mxu0 %v3690
    %4574 = vmatprep.subr.bf16.mxu0 0
    %4575 = vmatpush1.bf16.msra.mxu0 %v3691
    %4576 = vmatprep.subr.bf16.mxu0 0
    %4577 = vmatpush1.bf16.msra.mxu0 %v3692
    %4578 = vmatprep.subr.bf16.mxu0 0
    %4579 = vmatpush1.bf16.msra.mxu0 %v3693
    %4580 = vmatprep.subr.bf16.mxu0 0
    %4581 = vmatpush1.bf16.msra.mxu0 %v3694
    %4582 = vmatprep.subr.bf16.mxu0 0
    %4583 = vmatpush1.bf16.msra.mxu0 %v3695
    %4584 = vmatprep.mubr.bf16.mxu0 %v2383
    %4585 = vmatmul.mubr.bf16.gmra.mrb[0].mxu0 %v2382
    %v4586 = vpop.f32.mrb[0].mxu0
    %v4587 = vadd.f32 %v4547, %v4586
    %v4588 = vpop.f32.mrb[0].mxu0
    %v4589 = vpop.f32.mrb[0].mxu0
    %v4590 = vpop.f32.mrb[0].mxu0
    %4591 = vdwg.mxu0
    %v4592 = vmax.f32 %v4587, 0.0
    %v4593 = vpack.c.bf16 %v4592, %v4592
    %v4594 = vld [vmem:[%s6] sm:$0xf]
    %v4595 = vld [vmem:[%s6 + $0x4] sm:$0xf]
    %v4596 = vld [vmem:[%s6 + $0x8] sm:$0xf]
    %v4597 = vld [vmem:[%s6 + $0xc] sm:$0xf]
    %v4598 = vld [vmem:[%s6 + $0x10] sm:$0xf]
    %v4599 = vld [vmem:[%s6 + $0x14] sm:$0xf]
    %v4600 = vld [vmem:[%s6 + $0x18] sm:$0xf]
    %v4601 = vld [vmem:[%s6 + $0x1c] sm:$0xf]
    %v4602 = vld [vmem:[%s7] sm:$0x1]
    %v4604 = vlaneseq
    %v4605 = vshrl.u32 %v4604, 7
    %v4606 = vsub.s32 0, %v4605
    %v4607 = vrot.slane %v4602, %v4606
    %v4617 = vunpack.c.l.b16 %v4594
    %v4618 = vunpack.c.l.b16 %v4595
    %v4619 = vunpack.c.l.b16 %v4596
    %v4620 = vunpack.c.l.b16 %v4597
    %v4621 = vunpack.c.l.b16 %v4598
    %v4622 = vunpack.c.l.b16 %v4599
    %v4623 = vunpack.c.l.b16 %v4600
    %v4624 = vunpack.c.l.b16 %v4601
    %v4625 = vpack.c.b16 %v4618, %v4617
    %v4626 = vpack.c.b16 %v4620, %v4619
    %v4627 = vpack.c.b16 %v4622, %v4621
    %v4628 = vpack.c.b16 %v4624, %v4623
    %vm4633 = vcmask 523264
    %v4635 = vsel %vm4633, %v4593, 0
    %4637 = vmatprep.subr.bf16.mxu0 0
    %4638 = vmatpush1.bf16.msra.mxu0 %v4625
    %4639 = vmatprep.subr.bf16.mxu0 0
    %4640 = vmatpush1.bf16.msra.mxu0 %v4626
    %4641 = vmatprep.subr.bf16.mxu0 0
    %4642 = vmatpush1.bf16.msra.mxu0 %v4627
    %4643 = vmatprep.subr.bf16.mxu0 0
    %4644 = vmatpush1.bf16.msra.mxu0 %v4628
    %4645 = vmatprep.subr.bf16.mxu0 0
    %4646 = vmatpush1.bf16.msra.mxu0 0
    %4647 = vmatprep.subr.bf16.mxu0 0
    %4648 = vmatpush1.bf16.msra.mxu0 0
    %4649 = vmatprep.subr.bf16.mxu0 0
    %4650 = vmatpush1.bf16.msra.mxu0 0
    %4651 = vmatprep.subr.bf16.mxu0 0
    %4652 = vmatpush1.bf16.msra.mxu0 0
    %4653 = vmatprep.subr.bf16.mxu0 0
    %4654 = vmatpush1.bf16.msra.mxu0 0
    %4655 = vmatprep.subr.bf16.mxu0 0
    %4656 = vmatpush1.bf16.msra.mxu0 0
    %4657 = vmatprep.subr.bf16.mxu0 0
    %4658 = vmatpush1.bf16.msra.mxu0 0
    %4659 = vmatprep.subr.bf16.mxu0 0
    %4660 = vmatpush1.bf16.msra.mxu0 0
    %4661 = vmatprep.subr.bf16.mxu0 0
    %4662 = vmatpush1.bf16.msra.mxu0 0
    %4663 = vmatprep.subr.bf16.mxu0 0
    %4664 = vmatpush1.bf16.msra.mxu0 0
    %4665 = vmatprep.subr.bf16.mxu0 0
    %4666 = vmatpush1.bf16.msra.mxu0 0
    %4667 = vmatprep.subr.bf16.mxu0 0
    %4668 = vmatpush1.bf16.msra.mxu0 0
    %4669 = vmatprep.mubr.bf16.mxu0 0
    %4670 = vmatmul.mubr.bf16.gmra.mrb[0].mxu0 %v4635
    %v4671 = vpop.f32.mrb[0].mxu0
    %v4672 = vadd.f32 %v4607, %v4671
    %v4673 = vpop.f32.mrb[0].mxu0
    %v4674 = vpop.f32.mrb[0].mxu0
    %v4675 = vpop.f32.mrb[0].mxu0
    %4676 = vdwg.mxu0
    %4677 = vst [vmem:[%s8] sm:$0xff] %v4672
    // Predicated region
    $region42: #{classification_cnn1_forward.1} parent=1 // pred_check
      _
    $region43: #{classification_cnn1_forward.1} parent=1 // pred_check_branch
      %4679 = sbr.rel (0) target = $region45
    $region44: #{classification_cnn1_forward.1} parent=1 // pred_region
      _
    $region45: #{classification_cnn1_forward.1} parent=1 // pred_fallthru
      _
    // Predicated region
    $region46: #{classification_cnn1_forward.1} parent=1 // pred_check
      _
    $region47: #{classification_cnn1_forward.1} parent=1 // pred_check_branch
      %4681 = sbr.rel (0) target = $region49
    $region48: #{classification_cnn1_forward.1} parent=1 // pred_region
      _
    $region49: #{classification_cnn1_forward.1} parent=1 // pred_fallthru
      _
    %4682 = vsyncpa [#allocation5], 1
    %4683 = vsyncpa [#allocation7], 1

</llo_original>
